<compile_context>
chip_gen: v7x
topology: tpu7x:2x2x1
jax: 0.10.0
libtpu: 0.0.40
codegen_flags: <defaults>
</compile_context>

<pallas_src>
import functools
import math

import numpy as np
import jax
import jax.numpy as jnp
from jax import lax
from jax.experimental import pallas as pl
from jax.experimental.pallas import tpu as pltpu

COMPUTE_DTYPE = jnp.bfloat16      # MXU-native operand dtype; accumulation is f32


def _vmem_limit_bytes():
    """~75% of physical VMEM (v5e/v6e -> 96 MiB, v7x -> 48 MiB); 32 MiB fallback."""
    try:
        cap = pltpu.get_tpu_info().vmem_capacity_bytes
        return int(min(96 * 1024 * 1024, cap * 3 // 4))
    except Exception:
        return 32 * 1024 * 1024


def _pick_tile(dim, max_tile, align):
    """Largest divisor of `dim` <= max_tile that is a multiple of `align`.
    Falls back to the full dimension (a full-extent block is always legal).
    TODO(synk): pad ragged dims instead of falling back to full extent."""
    if dim <= max_tile:
        return dim
    for t in range(max_tile, align - 1, -1):
        if dim % t == 0 and t % align == 0:
            return t
    return dim


# ----------------------------------------------------------------------------
# Kernel 1: tiled dense linear layer  y = x @ W + b   (bf16 operands, f32 acc)
#   grid = (M//tm, N//tn, K//tk), f32 accumulator in VMEM scratch,
#   init on k==0, bias-add + writeback on the last K step.
# ----------------------------------------------------------------------------
def linear_kernel(x_ref, w_ref, b_ref, o_ref, acc_ref):
    k = pl.program_id(2)

    @pl.when(k == 0)
    def _init():
        acc_ref[...] = jnp.zeros_like(acc_ref)

    acc_ref[...] += jnp.dot(x_ref[...], w_ref[...],
                            preferred_element_type=jnp.float32)

    @pl.when(k == pl.num_programs(2) - 1)
    def _finalize():
        o_ref[...] = (acc_ref[...] + b_ref[...]).astype(o_ref.dtype)


def linear(x2d, w, b, *, tm=512, tn=512, tk=512, out_dtype=None):
    """x2d: (M, K), w: (K, N), b: (N,) f32 -> (M, N) in out_dtype."""
    M, K = x2d.shape
    Kw, N = w.shape
    assert K == Kw and b.shape == (N,)
    if out_dtype is None:
        out_dtype = x2d.dtype

    tm = _pick_tile(M, tm, 8)      # sublane dim of x / out blocks
    tn = _pick_tile(N, tn, 128)    # lane dim of w / b / out blocks
    tk = _pick_tile(K, tk, 128)    # lane dim of x block, sublane dim of w block
    grid = (M // tm, N // tn, K // tk)

    return pl.pallas_call(
        linear_kernel,
        out_shape=jax.ShapeDtypeStruct((M, N), out_dtype),
        grid=grid,
        in_specs=[
            pl.BlockSpec((tm, tk), lambda i, j, k: (i, k)),
            pl.BlockSpec((tk, tn), lambda i, j, k: (k, j)),
            pl.BlockSpec((1, tn), lambda i, j, k: (0, j)),
        ],
        out_specs=pl.BlockSpec((tm, tn), lambda i, j, k: (i, j)),
        scratch_shapes=[pltpu.VMEM((tm, tn), jnp.float32)],
        compiler_params=pltpu.CompilerParams(
            dimension_semantics=("parallel", "parallel", "arbitrary"),
            vmem_limit_bytes=_vmem_limit_bytes()),
    )(x2d, w, jnp.asarray(b, jnp.float32).reshape(1, N))


# ----------------------------------------------------------------------------
# Kernel 2: flash-style causal attention over the fused (B, S, 3D) QKV tensor
#   grid = (B, nq, nkv), KV axis last & "arbitrary".
#   All heads of the Q tile are processed per step; online softmax with
#   per-head m/l/acc scratch; K/V index_map clamped for causal DMA pruning.
# ----------------------------------------------------------------------------
def flash_attn_kernel(q_ref, k_ref, v_ref, o_ref, m_sc, l_sc, acc_sc, *,
                      scale, n_heads, head_dim):
    qi = pl.program_id(1)
    ki = pl.program_id(2)

    @pl.when(ki == 0)
    def _init():
        m_sc[...] = jnp.full_like(m_sc, -jnp.inf)
        l_sc[...] = jnp.zeros_like(l_sc)
        acc_sc[...] = jnp.zeros_like(acc_sc)

    # Visible KV tiles only.  ki > qi steps are fully dead: the clamped K/V
    # index_map keeps the resident block (no DMA) and nothing below runs.
    @pl.when(ki <= qi)
    def _update():
        q = q_ref[0]           # (bq,  D) bf16, resident across the ki loop
        k = k_ref[0]           # (bkv, D) bf16
        v = v_ref[0]           # (bkv, D) bf16
        bq, bkv = q.shape[0], k.shape[0]

        # Causal predicate in global coords (bq == bkv, aligned tiles):
        #   visible  <=>  ki*bkv + col <= qi*bq + row
        row = lax.broadcasted_iota(jnp.int32, (bq, bkv), 0)
        col = lax.broadcasted_iota(jnp.int32, (bq, bkv), 1)
        visible = col <= row + (qi - ki) * bq
        mask_value = jnp.float32(jnp.finfo(jnp.float32).min)

        for h in range(n_heads):                 # all heads per grid step
            sl = slice(h * head_dim, (h + 1) * head_dim)
            # QK^T on the MXU (bf16 operands, f32 acc); no K transpose, scale
            # folded into the f32 scores (Q stays untouched/resident).
            s = lax.dot_general(q[:, sl], k[:, sl],
                                dimension_numbers=(((1,), (1,)), ((), ())),
                                preferred_element_type=jnp.float32) * scale
            s = jnp.where(visible, s, mask_value)

            m_prev = m_sc[h]
            m_new = jnp.maximum(m_prev, jnp.max(s, axis=-1, keepdims=True))
            alpha = jnp.exp(m_prev - m_new)
            p = jnp.exp(s - m_new)
            l_sc[h] = alpha * l_sc[h] + jnp.sum(p, axis=-1, keepdims=True)
            acc_sc[h] = alpha * acc_sc[h] + jnp.dot(
                p.astype(v.dtype), v[:, sl], preferred_element_type=jnp.float32)
            m_sc[h] = m_new

    # Last visible KV tile for this Q row: normalize and write the head-merged
    # lane-dense (bq, D) output slab (DMA'd back as one dense block).
    @pl.when(ki == qi)
    def _finalize():
        for h in range(n_heads):
            sl = slice(h * head_dim, (h + 1) * head_dim)
            inv_l = pl.reciprocal(l_sc[h], approx=True)
            o_ref[0, :, sl] = (acc_sc[h] * inv_l).astype(o_ref.dtype)


def flash_causal_attention(qkv, n_heads, *, block_q=128):
    """qkv: (B, S, 3*D) with columns [q | k | v]  ->  (B, S, D), causal."""
    B, S, three_d = qkv.shape
    D = three_d // 3
    hd = D // n_heads
    assert n_heads * hd == D
    assert D % 128 == 0, "hidden dim must be a multiple of the 128-lane width"
    scale = 1.0 / math.sqrt(hd)

    bq = _pick_tile(S, block_q, 8)   # bkv == bq -> tile-level causal pruning is exact
    nq = S // bq

    q_spec = pl.BlockSpec((1, bq, D), lambda b, qi, ki: (b, qi, 0))
    # Clamp: ki > qi re-selects the already-resident diagonal block -> no DMA.
    k_spec = pl.BlockSpec((1, bq, D), lambda b, qi, ki: (b, jnp.minimum(ki, qi), 1))
    v_spec = pl.BlockSpec((1, bq, D), lambda b, qi, ki: (b, jnp.minimum(ki, qi), 2))
    o_spec = pl.BlockSpec((1, bq, D), lambda b, qi, ki: (b, qi, 0))

    return pl.pallas_call(
        functools.partial(flash_attn_kernel, scale=scale, n_heads=n_heads,
                          head_dim=hd),
        out_shape=jax.ShapeDtypeStruct((B, S, D), qkv.dtype),
        grid=(B, nq, nq),
        in_specs=[q_spec, k_spec, v_spec],
        out_specs=o_spec,
        scratch_shapes=[
            pltpu.VMEM((n_heads, bq, 1), jnp.float32),    # running max  m
            pltpu.VMEM((n_heads, bq, 1), jnp.float32),    # running sum  l
            pltpu.VMEM((n_heads, bq, hd), jnp.float32),   # output accumulator
        ],
        compiler_params=pltpu.CompilerParams(
            dimension_semantics=("parallel", "parallel", "arbitrary"),
            vmem_limit_bytes=_vmem_limit_bytes()),
    )(qkv, qkv, qkv)


# ----------------------------------------------------------------------------
# Full SelfAttention.forward (layer_past=None, mask=None, eval-mode dropout)
# ----------------------------------------------------------------------------
def self_attention_forward(x, params, n_heads):
    B, S, D = x.shape
    assert D % n_heads == 0

    dt = COMPUTE_DTYPE
    x2d = x.reshape(B * S, D).astype(dt)
    w_attn = params["w_attn"].astype(dt)
    w_proj = params["w_proj"].astype(dt)
    b_attn = params["b_attn"].astype(jnp.float32)
    b_proj = params["b_proj"].astype(jnp.float32)

    # c_attn: one fused (B*S, 3D) bf16 activation; no jnp.split copies.
    qkv = linear(x2d, w_attn, b_attn, out_dtype=dt).reshape(B, S, 3 * D)

    # Attention reads q/k/v windows straight out of the fused tensor and writes
    # the head-merged (B, S, D) output -> no head split/merge transposes.
    attn = flash_causal_attention(qkv, n_heads)

    # c_proj back to the caller's dtype.
    out = linear(attn.reshape(B * S, D), w_proj, b_proj, out_dtype=x.dtype)
    return out.reshape(B, S, D)


# ----------------------------------------------------------------------------
# Pure-JAX f32 reference (same math, no Pallas) for a sanity check
# ----------------------------------------------------------------------------
def reference_forward(x, params, n_heads):
    B, S, D = x.shape
    hd = D // n_heads
    qkv = x @ params["w_attn"] + params["b_attn"]
    q, k, v = jnp.split(qkv, 3, axis=2)
    qh = q.reshape(B, S, n_heads, hd).transpose(0, 2, 1, 3)
    kh = k.reshape(B, S, n_heads, hd).transpose(0, 2, 1, 3)
    vh = v.reshape(B, S, n_heads, hd).transpose(0, 2, 1, 3)
    w = jnp.einsum("bhqd,bhkd->bhqk", qh, kh) / jnp.sqrt(jnp.float32(hd))
    causal = jnp.tril(jnp.ones((S, S), dtype=bool))
    w = jnp.where(causal[None, None], w, jnp.finfo(w.dtype).min)
    p = jax.nn.softmax(w, axis=-1)
    o = jnp.einsum("bhqk,bhkd->bhqd", p, vh)
    o = o.transpose(0, 2, 1, 3).reshape(B, S, D)
    return o @ params["w_proj"] + params["b_proj"]


if __name__ == "__main__":
    # Small but tiling-exercising shapes: 2x2 attention tile grid per batch,
    # head_dim = 32, lane-dense D = 128.
    B, S, D, H = 2, 256, 128, 4

    key = jax.random.PRNGKey(0)
    kx, k1, k2, k3, k4 = jax.random.split(key, 5)

    bound = 1.0 / np.sqrt(D)   # PyTorch-Linear-like uniform init bounds
    params = {
        "w_attn": jax.random.uniform(k1, (D, 3 * D), jnp.float32, -bound, bound),
        "b_attn": jax.random.uniform(k2, (3 * D,), jnp.float32, -bound, bound),
        "w_proj": jax.random.uniform(k3, (D, D), jnp.float32, -bound, bound),
        "b_proj": jax.random.uniform(k4, (D,), jnp.float32, -bound, bound),
    }
    x = jax.random.normal(kx, (B, S, D), jnp.float32)

    fwd = jax.jit(self_attention_forward, static_argnames=("n_heads",))
    out = jax.block_until_ready(fwd(x, params, n_heads=H))

    ref = jax.block_until_ready(reference_forward(x, params, H))
    # bf16 MXU operands / bf16 HBM activations (f32 accumulation) vs. the pure
    # f32 reference -> ~1e-3 relative error; tolerance sized accordingly.
    np.testing.assert_allclose(np.asarray(out, dtype=np.float32),
                               np.asarray(ref, dtype=np.float32),
                               rtol=2e-2, atol=2e-2)

    print("KERNEL_OK")
</pallas_src>

<mosaic_0001>
module attributes {stable_mosaic.version = 11 : i64} {
  func.func @linear_kernel(%arg0: i32, %arg1: i32, %arg2: i32, %arg3: memref<512x128xbf16, #tpu.memory_space<vmem>>, %arg4: memref<128x384xbf16, #tpu.memory_space<vmem>>, %arg5: memref<1x384xf32, #tpu.memory_space<vmem>>, %arg6: memref<512x384xbf16, #tpu.memory_space<vmem>>, %arg7: memref<512x384xf32, #tpu.memory_space<vmem>>) attributes {dimension_semantics = [#tpu.dimension_semantics<parallel>, #tpu.dimension_semantics<parallel>, #tpu.dimension_semantics<arbitrary>], iteration_bounds = array<i64: 1, 1, 1>, scalar_prefetch = 0 : i64, scratch_operands = 1 : i64, tpu.core_type = #tpu.core_type<tc>, window_params = [{transform_indices = @transform_0, window_bounds = array<i64: 512, 128>}, {transform_indices = @transform_1, window_bounds = array<i64: 128, 384>}, {transform_indices = @transform_2, window_bounds = array<i64: 1, 384>}, {transform_indices = @transform_3, window_bounds = array<i64: 512, 384>}]} {
    %c0_i32 = arith.constant 0 : i32
    %0 = arith.cmpi eq, %arg2, %c0_i32 : i32
    %1 = arith.extui %0 : i1 to i32
    %c0_i32_0 = arith.constant 0 : i32
    %2 = arith.cmpi ne, %1, %c0_i32_0 : i32
    scf.if %2 {
      %cst_10 = arith.constant 0.000000e+00 : f32
      %12 = vector.broadcast %cst_10 : f32 to vector<512x384xf32>
      %c0_11 = arith.constant 0 : index
      %c0_12 = arith.constant 0 : index
      %13 = vector.load %arg7[%c0_11, %c0_12] : memref<512x384xf32, #tpu.memory_space<vmem>>, vector<512x384xf32>
      tpu.vector_store %arg7[%c0_11, %c0_12], %12 {strides = array<i32>} : memref<512x384xf32, #tpu.memory_space<vmem>>, vector<512x384xf32>,
    } else {
    }
    %c0 = arith.constant 0 : index
    %c0_1 = arith.constant 0 : index
    %3 = vector.load %arg7[%c0, %c0_1] : memref<512x384xf32, #tpu.memory_space<vmem>>, vector<512x384xf32>
    %c0_2 = arith.constant 0 : index
    %c0_3 = arith.constant 0 : index
    %4 = vector.load %arg3[%c0_2, %c0_3] : memref<512x128xbf16, #tpu.memory_space<vmem>>, vector<512x128xbf16>
    %c0_4 = arith.constant 0 : index
    %c0_5 = arith.constant 0 : index
    %5 = vector.load %arg4[%c0_4, %c0_5] : memref<128x384xbf16, #tpu.memory_space<vmem>>, vector<128x384xbf16>
    %cst = arith.constant dense<0.000000e+00> : vector<512x384xf32>
    %6 = tpu.matmul %4, %5, %cst {dimension_numbers = #tpu.dot_dimension_numbers<[1], [0], [0], [1], [0, 0, 1, 1], [], []>} : vector<512x128xbf16>, vector<128x384xbf16>, vector<512x384xf32> -> vector<512x384xf32>
    %7 = arith.addf %3, %6 : vector<512x384xf32>
    %c0_6 = arith.constant 0 : index
    %c0_7 = arith.constant 0 : index
    %8 = vector.load %arg7[%c0_6, %c0_7] : memref<512x384xf32, #tpu.memory_space<vmem>>, vector<512x384xf32>
    tpu.vector_store %arg7[%c0_6, %c0_7], %7 {strides = array<i32>} : memref<512x384xf32, #tpu.memory_space<vmem>>, vector<512x384xf32>,
    %c0_i32_8 = arith.constant 0 : i32
    %9 = arith.cmpi eq, %arg2, %c0_i32_8 : i32
    %10 = arith.extui %9 : i1 to i32
    %c0_i32_9 = arith.constant 0 : i32
    %11 = arith.cmpi ne, %10, %c0_i32_9 : i32
    scf.if %11 {
      %c0_10 = arith.constant 0 : index
      %c0_11 = arith.constant 0 : index
      %12 = vector.load %arg7[%c0_10, %c0_11] : memref<512x384xf32, #tpu.memory_space<vmem>>, vector<512x384xf32>
      %c0_12 = arith.constant 0 : index
      %c0_13 = arith.constant 0 : index
      %13 = vector.load %arg5[%c0_12, %c0_13] : memref<1x384xf32, #tpu.memory_space<vmem>>, vector<1x384xf32>
      %14 = vector.broadcast %13 : vector<1x384xf32> to vector<512x384xf32>
      %15 = arith.addf %12, %14 : vector<512x384xf32>
      %16 = arith.truncf %15 : vector<512x384xf32> to vector<512x384xbf16>
      %c0_14 = arith.constant 0 : index
      %c0_15 = arith.constant 0 : index
      %17 = vector.load %arg6[%c0_14, %c0_15] : memref<512x384xbf16, #tpu.memory_space<vmem>>, vector<512x384xbf16>
      tpu.vector_store %arg6[%c0_14, %c0_15], %16 {strides = array<i32>} : memref<512x384xbf16, #tpu.memory_space<vmem>>, vector<512x384xbf16>,
    } else {
    }
    return
  }
  func.func @transform_0(%arg0: i32, %arg1: i32, %arg2: i32) -> (i32, i32) {
    %c0_i32 = arith.constant 0 : i32
    return %arg0, %arg2 : i32, i32
  }
  func.func @transform_1(%arg0: i32, %arg1: i32, %arg2: i32) -> (i32, i32) {
    %c0_i32 = arith.constant 0 : i32
    return %arg2, %arg1 : i32, i32
  }
  func.func @transform_2(%arg0: i32, %arg1: i32, %arg2: i32) -> (i32, i32) {
    %c0_i32 = arith.constant 0 : i32
    %c0_i32_0 = arith.constant 0 : i32
    return %c0_i32, %arg1 : i32, i32
  }
  func.func @transform_3(%arg0: i32, %arg1: i32, %arg2: i32) -> (i32, i32) {
    %c0_i32 = arith.constant 0 : i32
    return %arg0, %arg1 : i32, i32
  }
}

module attributes {stable_mosaic.version = 11 : i64} {
  func.func @linear_kernel(%arg0: i32, %arg1: i32, %arg2: i32, %arg3: memref<512x128xbf16, #tpu.memory_space<vmem>>, %arg4: memref<128x128xbf16, #tpu.memory_space<vmem>>, %arg5: memref<1x128xf32, #tpu.memory_space<vmem>>, %arg6: memref<512x128xf32, #tpu.memory_space<vmem>>, %arg7: memref<512x128xf32, #tpu.memory_space<vmem>>) attributes {dimension_semantics = [#tpu.dimension_semantics<parallel>, #tpu.dimension_semantics<parallel>, #tpu.dimension_semantics<arbitrary>], iteration_bounds = array<i64: 1, 1, 1>, scalar_prefetch = 0 : i64, scratch_operands = 1 : i64, tpu.core_type = #tpu.core_type<tc>, window_params = [{transform_indices = @transform_0, window_bounds = array<i64: 512, 128>}, {transform_indices = @transform_1, window_bounds = array<i64: 128, 128>}, {transform_indices = @transform_2, window_bounds = array<i64: 1, 128>}, {transform_indices = @transform_3, window_bounds = array<i64: 512, 128>}]} {
    %c0_i32 = arith.constant 0 : i32
    %0 = arith.cmpi eq, %arg2, %c0_i32 : i32
    %1 = arith.extui %0 : i1 to i32
    %c0_i32_0 = arith.constant 0 : i32
    %2 = arith.cmpi ne, %1, %c0_i32_0 : i32
    scf.if %2 {
      %cst_10 = arith.constant 0.000000e+00 : f32
      %12 = vector.broadcast %cst_10 : f32 to vector<512x128xf32>
      %c0_11 = arith.constant 0 : index
      %c0_12 = arith.constant 0 : index
      %13 = vector.load %arg7[%c0_11, %c0_12] : memref<512x128xf32, #tpu.memory_space<vmem>>, vector<512x128xf32>
      tpu.vector_store %arg7[%c0_11, %c0_12], %12 {strides = array<i32>} : memref<512x128xf32, #tpu.memory_space<vmem>>, vector<512x128xf32>,
    } else {
    }
    %c0 = arith.constant 0 : index
    %c0_1 = arith.constant 0 : index
    %3 = vector.load %arg7[%c0, %c0_1] : memref<512x128xf32, #tpu.memory_space<vmem>>, vector<512x128xf32>
    %c0_2 = arith.constant 0 : index
    %c0_3 = arith.constant 0 : index
    %4 = vector.load %arg3[%c0_2, %c0_3] : memref<512x128xbf16, #tpu.memory_space<vmem>>, vector<512x128xbf16>
    %c0_4 = arith.constant 0 : index
    %c0_5 = arith.constant 0 : index
    %5 = vector.load %arg4[%c0_4, %c0_5] : memref<128x128xbf16, #tpu.memory_space<vmem>>, vector<128x128xbf16>
    %cst = arith.constant dense<0.000000e+00> : vector<512x128xf32>
    %6 = tpu.matmul %4, %5, %cst {dimension_numbers = #tpu.dot_dimension_numbers<[1], [0], [0], [1], [0, 0, 1, 1], [], []>} : vector<512x128xbf16>, vector<128x128xbf16>, vector<512x128xf32> -> vector<512x128xf32>
    %7 = arith.addf %3, %6 : vector<512x128xf32>
    %c0_6 = arith.constant 0 : index
    %c0_7 = arith.constant 0 : index
    %8 = vector.load %arg7[%c0_6, %c0_7] : memref<512x128xf32, #tpu.memory_space<vmem>>, vector<512x128xf32>
    tpu.vector_store %arg7[%c0_6, %c0_7], %7 {strides = array<i32>} : memref<512x128xf32, #tpu.memory_space<vmem>>, vector<512x128xf32>,
    %c0_i32_8 = arith.constant 0 : i32
    %9 = arith.cmpi eq, %arg2, %c0_i32_8 : i32
    %10 = arith.extui %9 : i1 to i32
    %c0_i32_9 = arith.constant 0 : i32
    %11 = arith.cmpi ne, %10, %c0_i32_9 : i32
    scf.if %11 {
      %c0_10 = arith.constant 0 : index
      %c0_11 = arith.constant 0 : index
      %12 = vector.load %arg7[%c0_10, %c0_11] : memref<512x128xf32, #tpu.memory_space<vmem>>, vector<512x128xf32>
      %c0_12 = arith.constant 0 : index
      %c0_13 = arith.constant 0 : index
      %13 = vector.load %arg5[%c0_12, %c0_13] : memref<1x128xf32, #tpu.memory_space<vmem>>, vector<1x128xf32>
      %14 = vector.broadcast %13 : vector<1x128xf32> to vector<512x128xf32>
      %15 = arith.addf %12, %14 : vector<512x128xf32>
      %c0_14 = arith.constant 0 : index
      %c0_15 = arith.constant 0 : index
      %16 = vector.load %arg6[%c0_14, %c0_15] : memref<512x128xf32, #tpu.memory_space<vmem>>, vector<512x128xf32>
      tpu.vector_store %arg6[%c0_14, %c0_15], %15 {strides = array<i32>} : memref<512x128xf32, #tpu.memory_space<vmem>>, vector<512x128xf32>,
    } else {
    }
    return
  }
  func.func @transform_0(%arg0: i32, %arg1: i32, %arg2: i32) -> (i32, i32) {
    %c0_i32 = arith.constant 0 : i32
    return %arg0, %arg2 : i32, i32
  }
  func.func @transform_1(%arg0: i32, %arg1: i32, %arg2: i32) -> (i32, i32) {
    %c0_i32 = arith.constant 0 : i32
    return %arg2, %arg1 : i32, i32
  }
  func.func @transform_2(%arg0: i32, %arg1: i32, %arg2: i32) -> (i32, i32) {
    %c0_i32 = arith.constant 0 : i32
    %c0_i32_0 = arith.constant 0 : i32
    return %c0_i32, %arg1 : i32, i32
  }
  func.func @transform_3(%arg0: i32, %arg1: i32, %arg2: i32) -> (i32, i32) {
    %c0_i32 = arith.constant 0 : i32
    return %arg0, %arg1 : i32, i32
  }
}

module attributes {stable_mosaic.version = 11 : i64} {
  func.func @flash_attn_kernel(%arg0: i32, %arg1: i32, %arg2: i32, %arg3: memref<1x128x128xbf16, #tpu.memory_space<vmem>>, %arg4: memref<1x128x128xbf16, #tpu.memory_space<vmem>>, %arg5: memref<1x128x128xbf16, #tpu.memory_space<vmem>>, %arg6: memref<1x128x128xbf16, #tpu.memory_space<vmem>>, %arg7: memref<4x128x1xf32, #tpu.memory_space<vmem>>, %arg8: memref<4x128x1xf32, #tpu.memory_space<vmem>>, %arg9: memref<4x128x32xf32, #tpu.memory_space<vmem>>) attributes {dimension_semantics = [#tpu.dimension_semantics<parallel>, #tpu.dimension_semantics<parallel>, #tpu.dimension_semantics<arbitrary>], iteration_bounds = array<i64: 2, 2, 2>, scalar_prefetch = 0 : i64, scratch_operands = 3 : i64, tpu.core_type = #tpu.core_type<tc>, window_params = [{transform_indices = @transform_0, window_bounds = array<i64: 1, 128, 128>}, {transform_indices = @transform_1, window_bounds = array<i64: 1, 128, 128>}, {transform_indices = @transform_2, window_bounds = array<i64: 1, 128, 128>}, {transform_indices = @transform_3, window_bounds = array<i64: 1, 128, 128>}]} {
    %c0_i32 = arith.constant 0 : i32
    %0 = arith.cmpi eq, %arg2, %c0_i32 : i32
    %1 = arith.extui %0 : i1 to i32
    %c0_i32_0 = arith.constant 0 : i32
    %2 = arith.cmpi ne, %1, %c0_i32_0 : i32
    scf.if %2 {
      %cst = arith.constant 0xFF800000 : f32
      %9 = vector.broadcast %cst : f32 to vector<4x128x1xf32>
      %c0 = arith.constant 0 : index
      %c0_3 = arith.constant 0 : index
      %c0_4 = arith.constant 0 : index
      %10 = vector.load %arg7[%c0, %c0_3, %c0_4] : memref<4x128x1xf32, #tpu.memory_space<vmem>>, vector<4x128x1xf32>
      tpu.vector_store %arg7[%c0, %c0_3, %c0_4], %9 {strides = array<i32>} : memref<4x128x1xf32, #tpu.memory_space<vmem>>, vector<4x128x1xf32>,
      %cst_5 = arith.constant 0.000000e+00 : f32
      %11 = vector.broadcast %cst_5 : f32 to vector<4x128x1xf32>
      %c0_6 = arith.constant 0 : index
      %c0_7 = arith.constant 0 : index
      %c0_8 = arith.constant 0 : index
      %12 = vector.load %arg8[%c0_6, %c0_7, %c0_8] : memref<4x128x1xf32, #tpu.memory_space<vmem>>, vector<4x128x1xf32>
      tpu.vector_store %arg8[%c0_6, %c0_7, %c0_8], %11 {strides = array<i32>} : memref<4x128x1xf32, #tpu.memory_space<vmem>>, vector<4x128x1xf32>,
      %cst_9 = arith.constant 0.000000e+00 : f32
      %13 = vector.broadcast %cst_9 : f32 to vector<4x128x32xf32>
      %c0_10 = arith.constant 0 : index
      %c0_11 = arith.constant 0 : index
      %c0_12 = arith.constant 0 : index
      %14 = vector.load %arg9[%c0_10, %c0_11, %c0_12] : memref<4x128x32xf32, #tpu.memory_space<vmem>>, vector<4x128x32xf32>
      tpu.vector_store %arg9[%c0_10, %c0_11, %c0_12], %13 {strides = array<i32>} : memref<4x128x32xf32, #tpu.memory_space<vmem>>, vector<4x128x32xf32>,
    } else {
    }
    %3 = arith.cmpi sle, %arg2, %arg1 : i32
    %4 = arith.extui %3 : i1 to i32
    %c0_i32_1 = arith.constant 0 : i32
    %5 = arith.cmpi ne, %4, %c0_i32_1 : i32
    scf.if %5 {
      %c0 = arith.constant 0 : index
      %c0_3 = arith.constant 0 : index
      %c0_4 = arith.constant 0 : index
      %9 = vector.load %arg3[%c0, %c0_3, %c0_4] : memref<1x128x128xbf16, #tpu.memory_space<vmem>>, vector<1x128x128xbf16>
      %10 = vector.shape_cast %9 : vector<1x128x128xbf16> to vector<128x128xbf16>
      %c0_5 = arith.constant 0 : index
      %c0_6 = arith.constant 0 : index
      %c0_7 = arith.constant 0 : index
      %11 = vector.load %arg4[%c0_5, %c0_6, %c0_7] : memref<1x128x128xbf16, #tpu.memory_space<vmem>>, vector<1x128x128xbf16>
      %12 = vector.shape_cast %11 : vector<1x128x128xbf16> to vector<128x128xbf16>
      %c0_8 = arith.constant 0 : index
      %c0_9 = arith.constant 0 : index
      %c0_10 = arith.constant 0 : index
      %13 = vector.load %arg5[%c0_8, %c0_9, %c0_10] : memref<1x128x128xbf16, #tpu.memory_space<vmem>>, vector<1x128x128xbf16>
      %14 = vector.shape_cast %13 : vector<1x128x128xbf16> to vector<128x128xbf16>
      %15 = tpu.iota {dimensions = array<i32: 0>} : vector<128x128xi32>
      %16 = tpu.iota {dimensions = array<i32: 1>} : vector<128x128xi32>
      %17 = arith.subi %arg1, %arg2 : i32
      %c128_i32 = arith.constant 128 : i32
      %18 = arith.muli %17, %c128_i32 : i32
      %19 = vector.broadcast %18 : i32 to vector<128x128xi32>
      %20 = arith.addi %15, %19 : vector<128x128xi32>
      %21 = arith.cmpi sle, %16, %20 : vector<128x128xi32>
      %22 = vector.extract_strided_slice %10 {offsets = [0, 0], sizes = [128, 32], strides = [1, 1]} : vector<128x128xbf16> to vector<128x32xbf16>
      %23 = vector.extract_strided_slice %12 {offsets = [0, 0], sizes = [128, 32], strides = [1, 1]} : vector<128x128xbf16> to vector<128x32xbf16>
      %cst = arith.constant dense<0.000000e+00> : vector<128x128xf32>
      %24 = tpu.matmul %22, %23, %cst {dimension_numbers = #tpu.dot_dimension_numbers<[1], [1], [0], [0], [0, 0, 1, 0], [], []>} : vector<128x32xbf16>, vector<128x32xbf16>, vector<128x128xf32> -> vector<128x128xf32>
      %cst_11 = arith.constant 0.176776692 : f32
      %25 = vector.broadcast %cst_11 : f32 to vector<128x128xf32>
      %26 = arith.mulf %24, %25 : vector<128x128xf32>
      %cst_12 = arith.constant -3.40282347E+38 : f32
      %27 = vector.broadcast %cst_12 : f32 to vector<128x128xf32>
      %28 = arith.select %21, %26, %27 : vector<128x128xi1>, vector<128x128xf32>
      %c0_13 = arith.constant 0 : index
      %c0_14 = arith.constant 0 : index
      %c0_15 = arith.constant 0 : index
      %29 = vector.load %arg7[%c0_13, %c0_14, %c0_15] : memref<4x128x1xf32, #tpu.memory_space<vmem>>, vector<1x128x1xf32>
      %30 = vector.shape_cast %29 : vector<1x128x1xf32> to vector<128x1xf32>
      %cst_16 = arith.constant dense<0xFF800000> : vector<128xf32>
      %31 = vector.multi_reduction <maximumf>, %28, %cst_16 [1] : vector<128x128xf32> to vector<128xf32>
      %32 = vector.shape_cast %31 : vector<128xf32> to vector<128x1xf32>
      %33 = arith.maximumf %30, %32 : vector<128x1xf32>
      %34 = arith.subf %30, %33 : vector<128x1xf32>
      %35 = math.exp %34 : vector<128x1xf32>
      %36 = vector.broadcast %33 : vector<128x1xf32> to vector<128x128xf32>
      %37 = arith.subf %28, %36 : vector<128x128xf32>
      %38 = math.exp %37 : vector<128x128xf32>
      %c0_17 = arith.constant 0 : index
      %c0_18 = arith.constant 0 : index
      %c0_19 = arith.constant 0 : index
      %39 = vector.load %arg8[%c0_17, %c0_18, %c0_19] : memref<4x128x1xf32, #tpu.memory_space<vmem>>, vector<1x128x1xf32>
      %40 = vector.shape_cast %39 : vector<1x128x1xf32> to vector<128x1xf32>
      %41 = arith.mulf %35, %40 : vector<128x1xf32>
      %cst_20 = arith.constant dense<0.000000e+00> : vector<128xf32>
      %42 = vector.multi_reduction <add>, %38, %cst_20 [1] : vector<128x128xf32> to vector<128xf32>
      %43 = vector.shape_cast %42 : vector<128xf32> to vector<128x1xf32>
      %44 = arith.addf %41, %43 : vector<128x1xf32>
      %c0_21 = arith.constant 0 : index
      %c0_22 = arith.constant 0 : index
      %c0_23 = arith.constant 0 : index
      %45 = vector.load %arg8[%c0_21, %c0_22, %c0_23] : memref<4x128x1xf32, #tpu.memory_space<vmem>>, vector<1x128x1xf32>
      %46 = vector.shape_cast %45 : vector<1x128x1xf32> to vector<128x1xf32>
      %47 = vector.shape_cast %44 : vector<128x1xf32> to vector<1x128x1xf32>
      tpu.vector_store %arg8[%c0_21, %c0_22, %c0_23], %47 {strides = array<i32>} : memref<4x128x1xf32, #tpu.memory_space<vmem>>, vector<1x128x1xf32>,
      %c0_24 = arith.constant 0 : index
      %c0_25 = arith.constant 0 : index
      %c0_26 = arith.constant 0 : index
      %48 = vector.load %arg9[%c0_24, %c0_25, %c0_26] : memref<4x128x32xf32, #tpu.memory_space<vmem>>, vector<1x128x32xf32>
      %49 = vector.shape_cast %48 : vector<1x128x32xf32> to vector<128x32xf32>
      %50 = vector.broadcast %35 : vector<128x1xf32> to vector<128x32xf32>
      %51 = arith.mulf %50, %49 : vector<128x32xf32>
      %52 = arith.truncf %38 : vector<128x128xf32> to vector<128x128xbf16>
      %53 = vector.extract_strided_slice %14 {offsets = [0, 0], sizes = [128, 32], strides = [1, 1]} : vector<128x128xbf16> to vector<128x32xbf16>
      %cst_27 = arith.constant dense<0.000000e+00> : vector<128x32xf32>
      %54 = tpu.matmul %52, %53, %cst_27 {dimension_numbers = #tpu.dot_dimension_numbers<[1], [0], [0], [1], [0, 0, 1, 1], [], []>} : vector<128x128xbf16>, vector<128x32xbf16>, vector<128x32xf32> -> vector<128x32xf32>
      %55 = arith.addf %51, %54 : vector<128x32xf32>
      %c0_28 = arith.constant 0 : index
      %c0_29 = arith.constant 0 : index
      %c0_30 = arith.constant 0 : index
      %56 = vector.load %arg9[%c0_28, %c0_29, %c0_30] : memref<4x128x32xf32, #tpu.memory_space<vmem>>, vector<1x128x32xf32>
      %57 = vector.shape_cast %56 : vector<1x128x32xf32> to vector<128x32xf32>
      %58 = vector.shape_cast %55 : vector<128x32xf32> to vector<1x128x32xf32>
      tpu.vector_store %arg9[%c0_28, %c0_29, %c0_30], %58 {strides = array<i32>} : memref<4x128x32xf32, #tpu.memory_space<vmem>>, vector<1x128x32xf32>,
      %c0_31 = arith.constant 0 : index
      %c0_32 = arith.constant 0 : index
      %c0_33 = arith.constant 0 : index
      %59 = vector.load %arg7[%c0_31, %c0_32, %c0_33] : memref<4x128x1xf32, #tpu.memory_space<vmem>>, vector<1x128x1xf32>
      %60 = vector.shape_cast %59 : vector<1x128x1xf32> to vector<128x1xf32>
      %61 = vector.shape_cast %33 : vector<128x1xf32> to vector<1x128x1xf32>
      tpu.vector_store %arg7[%c0_31, %c0_32, %c0_33], %61 {strides = array<i32>} : memref<4x128x1xf32, #tpu.memory_space<vmem>>, vector<1x128x1xf32>,
      %62 = vector.extract_strided_slice %10 {offsets = [0, 32], sizes = [128, 32], strides = [1, 1]} : vector<128x128xbf16> to vector<128x32xbf16>
      %63 = vector.extract_strided_slice %12 {offsets = [0, 32], sizes = [128, 32], strides = [1, 1]} : vector<128x128xbf16> to vector<128x32xbf16>
      %cst_34 = arith.constant dense<0.000000e+00> : vector<128x128xf32>
      %64 = tpu.matmul %62, %63, %cst_34 {dimension_numbers = #tpu.dot_dimension_numbers<[1], [1], [0], [0], [0, 0, 1, 0], [], []>} : vector<128x32xbf16>, vector<128x32xbf16>, vector<128x128xf32> -> vector<128x128xf32>
      %cst_35 = arith.constant 0.176776692 : f32
      %65 = vector.broadcast %cst_35 : f32 to vector<128x128xf32>
      %66 = arith.mulf %64, %65 : vector<128x128xf32>
      %cst_36 = arith.constant -3.40282347E+38 : f32
      %67 = vector.broadcast %cst_36 : f32 to vector<128x128xf32>
      %68 = arith.select %21, %66, %67 : vector<128x128xi1>, vector<128x128xf32>
      %c1 = arith.constant 1 : index
      %c0_37 = arith.constant 0 : index
      %c0_38 = arith.constant 0 : index
      %69 = vector.load %arg7[%c1, %c0_37, %c0_38] : memref<4x128x1xf32, #tpu.memory_space<vmem>>, vector<1x128x1xf32>
      %70 = vector.shape_cast %69 : vector<1x128x1xf32> to vector<128x1xf32>
      %cst_39 = arith.constant dense<0xFF800000> : vector<128xf32>
      %71 = vector.multi_reduction <maximumf>, %68, %cst_39 [1] : vector<128x128xf32> to vector<128xf32>
      %72 = vector.shape_cast %71 : vector<128xf32> to vector<128x1xf32>
      %73 = arith.maximumf %70, %72 : vector<128x1xf32>
      %74 = arith.subf %70, %73 : vector<128x1xf32>
      %75 = math.exp %74 : vector<128x1xf32>
      %76 = vector.broadcast %73 : vector<128x1xf32> to vector<128x128xf32>
      %77 = arith.subf %68, %76 : vector<128x128xf32>
      %78 = math.exp %77 : vector<128x128xf32>
      %c1_40 = arith.constant 1 : index
      %c0_41 = arith.constant 0 : index
      %c0_42 = arith.constant 0 : index
      %79 = vector.load %arg8[%c1_40, %c0_41, %c0_42] : memref<4x128x1xf32, #tpu.memory_space<vmem>>, vector<1x128x1xf32>
      %80 = vector.shape_cast %79 : vector<1x128x1xf32> to vector<128x1xf32>
      %81 = arith.mulf %75, %80 : vector<128x1xf32>
      %cst_43 = arith.constant dense<0.000000e+00> : vector<128xf32>
      %82 = vector.multi_reduction <add>, %78, %cst_43 [1] : vector<128x128xf32> to vector<128xf32>
      %83 = vector.shape_cast %82 : vector<128xf32> to vector<128x1xf32>
      %84 = arith.addf %81, %83 : vector<128x1xf32>
      %c1_44 = arith.constant 1 : index
      %c0_45 = arith.constant 0 : index
      %c0_46 = arith.constant 0 : index
      %85 = vector.load %arg8[%c1_44, %c0_45, %c0_46] : memref<4x128x1xf32, #tpu.memory_space<vmem>>, vector<1x128x1xf32>
      %86 = vector.shape_cast %85 : vector<1x128x1xf32> to vector<128x1xf32>
      %87 = vector.shape_cast %84 : vector<128x1xf32> to vector<1x128x1xf32>
      tpu.vector_store %arg8[%c1_44, %c0_45, %c0_46], %87 {strides = array<i32>} : memref<4x128x1xf32, #tpu.memory_space<vmem>>, vector<1x128x1xf32>,
      %c1_47 = arith.constant 1 : index
      %c0_48 = arith.constant 0 : index
      %c0_49 = arith.constant 0 : index
      %88 = vector.load %arg9[%c1_47, %c0_48, %c0_49] : memref<4x128x32xf32, #tpu.memory_space<vmem>>, vector<1x128x32xf32>
      %89 = vector.shape_cast %88 : vector<1x128x32xf32> to vector<128x32xf32>
      %90 = vector.broadcast %75 : vector<128x1xf32> to vector<128x32xf32>
      %91 = arith.mulf %90, %89 : vector<128x32xf32>
      %92 = arith.truncf %78 : vector<128x128xf32> to vector<128x128xbf16>
      %93 = vector.extract_strided_slice %14 {offsets = [0, 32], sizes = [128, 32], strides = [1, 1]} : vector<128x128xbf16> to vector<128x32xbf16>
      %cst_50 = arith.constant dense<0.000000e+00> : vector<128x32xf32>
      %94 = tpu.matmul %92, %93, %cst_50 {dimension_numbers = #tpu.dot_dimension_numbers<[1], [0], [0], [1], [0, 0, 1, 1], [], []>} : vector<128x128xbf16>, vector<128x32xbf16>, vector<128x32xf32> -> vector<128x32xf32>
      %95 = arith.addf %91, %94 : vector<128x32xf32>
      %c1_51 = arith.constant 1 : index
      %c0_52 = arith.constant 0 : index
      %c0_53 = arith.constant 0 : index
      %96 = vector.load %arg9[%c1_51, %c0_52, %c0_53] : memref<4x128x32xf32, #tpu.memory_space<vmem>>, vector<1x128x32xf32>
      %97 = vector.shape_cast %96 : vector<1x128x32xf32> to vector<128x32xf32>
      %98 = vector.shape_cast %95 : vector<128x32xf32> to vector<1x128x32xf32>
      tpu.vector_store %arg9[%c1_51, %c0_52, %c0_53], %98 {strides = array<i32>} : memref<4x128x32xf32, #tpu.memory_space<vmem>>, vector<1x128x32xf32>,
      %c1_54 = arith.constant 1 : index
      %c0_55 = arith.constant 0 : index
      %c0_56 = arith.constant 0 : index
      %99 = vector.load %arg7[%c1_54, %c0_55, %c0_56] : memref<4x128x1xf32, #tpu.memory_space<vmem>>, vector<1x128x1xf32>
      %100 = vector.shape_cast %99 : vector<1x128x1xf32> to vector<128x1xf32>
      %101 = vector.shape_cast %73 : vector<128x1xf32> to vector<1x128x1xf32>
      tpu.vector_store %arg7[%c1_54, %c0_55, %c0_56], %101 {strides = array<i32>} : memref<4x128x1xf32, #tpu.memory_space<vmem>>, vector<1x128x1xf32>,
      %102 = vector.extract_strided_slice %10 {offsets = [0, 64], sizes = [128, 32], strides = [1, 1]} : vector<128x128xbf16> to vector<128x32xbf16>
      %103 = vector.extract_strided_slice %12 {offsets = [0, 64], sizes = [128, 32], strides = [1, 1]} : vector<128x128xbf16> to vector<128x32xbf16>
      %cst_57 = arith.constant dense<0.000000e+00> : vector<128x128xf32>
      %104 = tpu.matmul %102, %103, %cst_57 {dimension_numbers = #tpu.dot_dimension_numbers<[1], [1], [0], [0], [0, 0, 1, 0], [], []>} : vector<128x32xbf16>, vector<128x32xbf16>, vector<128x128xf32> -> vector<128x128xf32>
      %cst_58 = arith.constant 0.176776692 : f32
      %105 = vector.broadcast %cst_58 : f32 to vector<128x128xf32>
      %106 = arith.mulf %104, %105 : vector<128x128xf32>
      %cst_59 = arith.constant -3.40282347E+38 : f32
      %107 = vector.broadcast %cst_59 : f32 to vector<128x128xf32>
      %108 = arith.select %21, %106, %107 : vector<128x128xi1>, vector<128x128xf32>
      %c2 = arith.constant 2 : index
      %c0_60 = arith.constant 0 : index
      %c0_61 = arith.constant 0 : index
      %109 = vector.load %arg7[%c2, %c0_60, %c0_61] : memref<4x128x1xf32, #tpu.memory_space<vmem>>, vector<1x128x1xf32>
      %110 = vector.shape_cast %109 : vector<1x128x1xf32> to vector<128x1xf32>
      %cst_62 = arith.constant dense<0xFF800000> : vector<128xf32>
      %111 = vector.multi_reduction <maximumf>, %108, %cst_62 [1] : vector<128x128xf32> to vector<128xf32>
      %112 = vector.shape_cast %111 : vector<128xf32> to vector<128x1xf32>
      %113 = arith.maximumf %110, %112 : vector<128x1xf32>
      %114 = arith.subf %110, %113 : vector<128x1xf32>
      %115 = math.exp %114 : vector<128x1xf32>
      %116 = vector.broadcast %113 : vector<128x1xf32> to vector<128x128xf32>
      %117 = arith.subf %108, %116 : vector<128x128xf32>
      %118 = math.exp %117 : vector<128x128xf32>
      %c2_63 = arith.constant 2 : index
      %c0_64 = arith.constant 0 : index
      %c0_65 = arith.constant 0 : index
      %119 = vector.load %arg8[%c2_63, %c0_64, %c0_65] : memref<4x128x1xf32, #tpu.memory_space<vmem>>, vector<1x128x1xf32>
      %120 = vector.shape_cast %119 : vector<1x128x1xf32> to vector<128x1xf32>
      %121 = arith.mulf %115, %120 : vector<128x1xf32>
      %cst_66 = arith.constant dense<0.000000e+00> : vector<128xf32>
      %122 = vector.multi_reduction <add>, %118, %cst_66 [1] : vector<128x128xf32> to vector<128xf32>
      %123 = vector.shape_cast %122 : vector<128xf32> to vector<128x1xf32>
      %124 = arith.addf %121, %123 : vector<128x1xf32>
      %c2_67 = arith.constant 2 : index
      %c0_68 = arith.constant 0 : index
      %c0_69 = arith.constant 0 : index
      %125 = vector.load %arg8[%c2_67, %c0_68, %c0_69] : memref<4x128x1xf32, #tpu.memory_space<vmem>>, vector<1x128x1xf32>
      %126 = vector.shape_cast %125 : vector<1x128x1xf32> to vector<128x1xf32>
      %127 = vector.shape_cast %124 : vector<128x1xf32> to vector<1x128x1xf32>
      tpu.vector_store %arg8[%c2_67, %c0_68, %c0_69], %127 {strides = array<i32>} : memref<4x128x1xf32, #tpu.memory_space<vmem>>, vector<1x128x1xf32>,
      %c2_70 = arith.constant 2 : index
      %c0_71 = arith.constant 0 : index
      %c0_72 = arith.constant 0 : index
      %128 = vector.load %arg9[%c2_70, %c0_71, %c0_72] : memref<4x128x32xf32, #tpu.memory_space<vmem>>, vector<1x128x32xf32>
      %129 = vector.shape_cast %128 : vector<1x128x32xf32> to vector<128x32xf32>
      %130 = vector.broadcast %115 : vector<128x1xf32> to vector<128x32xf32>
      %131 = arith.mulf %130, %129 : vector<128x32xf32>
      %132 = arith.truncf %118 : vector<128x128xf32> to vector<128x128xbf16>
      %133 = vector.extract_strided_slice %14 {offsets = [0, 64], sizes = [128, 32], strides = [1, 1]} : vector<128x128xbf16> to vector<128x32xbf16>
      %cst_73 = arith.constant dense<0.000000e+00> : vector<128x32xf32>
      %134 = tpu.matmul %132, %133, %cst_73 {dimension_numbers = #tpu.dot_dimension_numbers<[1], [0], [0], [1], [0, 0, 1, 1], [], []>} : vector<128x128xbf16>, vector<128x32xbf16>, vector<128x32xf32> -> vector<128x32xf32>
      %135 = arith.addf %131, %134 : vector<128x32xf32>
      %c2_74 = arith.constant 2 : index
      %c0_75 = arith.constant 0 : index
      %c0_76 = arith.constant 0 : index
      %136 = vector.load %arg9[%c2_74, %c0_75, %c0_76] : memref<4x128x32xf32, #tpu.memory_space<vmem>>, vector<1x128x32xf32>
      %137 = vector.shape_cast %136 : vector<1x128x32xf32> to vector<128x32xf32>
      %138 = vector.shape_cast %135 : vector<128x32xf32> to vector<1x128x32xf32>
      tpu.vector_store %arg9[%c2_74, %c0_75, %c0_76], %138 {strides = array<i32>} : memref<4x128x32xf32, #tpu.memory_space<vmem>>, vector<1x128x32xf32>,
      %c2_77 = arith.constant 2 : index
      %c0_78 = arith.constant 0 : index
      %c0_79 = arith.constant 0 : index
      %139 = vector.load %arg7[%c2_77, %c0_78, %c0_79] : memref<4x128x1xf32, #tpu.memory_space<vmem>>, vector<1x128x1xf32>
      %140 = vector.shape_cast %139 : vector<1x128x1xf32> to vector<128x1xf32>
      %141 = vector.shape_cast %113 : vector<128x1xf32> to vector<1x128x1xf32>
      tpu.vector_store %arg7[%c2_77, %c0_78, %c0_79], %141 {strides = array<i32>} : memref<4x128x1xf32, #tpu.memory_space<vmem>>, vector<1x128x1xf32>,
      %142 = vector.extract_strided_slice %10 {offsets = [0, 96], sizes = [128, 32], strides = [1, 1]} : vector<128x128xbf16> to vector<128x32xbf16>
      %143 = vector.extract_strided_slice %12 {offsets = [0, 96], sizes = [128, 32], strides = [1, 1]} : vector<128x128xbf16> to vector<128x32xbf16>
      %cst_80 = arith.constant dense<0.000000e+00> : vector<128x128xf32>
      %144 = tpu.matmul %142, %143, %cst_80 {dimension_numbers = #tpu.dot_dimension_numbers<[1], [1], [0], [0], [0, 0, 1, 0], [], []>} : vector<128x32xbf16>, vector<128x32xbf16>, vector<128x128xf32> -> vector<128x128xf32>
      %cst_81 = arith.constant 0.176776692 : f32
      %145 = vector.broadcast %cst_81 : f32 to vector<128x128xf32>
      %146 = arith.mulf %144, %145 : vector<128x128xf32>
      %cst_82 = arith.constant -3.40282347E+38 : f32
      %147 = vector.broadcast %cst_82 : f32 to vector<128x128xf32>
      %148 = arith.select %21, %146, %147 : vector<128x128xi1>, vector<128x128xf32>
      %c3 = arith.constant 3 : index
      %c0_83 = arith.constant 0 : index
      %c0_84 = arith.constant 0 : index
      %149 = vector.load %arg7[%c3, %c0_83, %c0_84] : memref<4x128x1xf32, #tpu.memory_space<vmem>>, vector<1x128x1xf32>
      %150 = vector.shape_cast %149 : vector<1x128x1xf32> to vector<128x1xf32>
      %cst_85 = arith.constant dense<0xFF800000> : vector<128xf32>
      %151 = vector.multi_reduction <maximumf>, %148, %cst_85 [1] : vector<128x128xf32> to vector<128xf32>
      %152 = vector.shape_cast %151 : vector<128xf32> to vector<128x1xf32>
      %153 = arith.maximumf %150, %152 : vector<128x1xf32>
      %154 = arith.subf %150, %153 : vector<128x1xf32>
      %155 = math.exp %154 : vector<128x1xf32>
      %156 = vector.broadcast %153 : vector<128x1xf32> to vector<128x128xf32>
      %157 = arith.subf %148, %156 : vector<128x128xf32>
      %158 = math.exp %157 : vector<128x128xf32>
      %c3_86 = arith.constant 3 : index
      %c0_87 = arith.constant 0 : index
      %c0_88 = arith.constant 0 : index
      %159 = vector.load %arg8[%c3_86, %c0_87, %c0_88] : memref<4x128x1xf32, #tpu.memory_space<vmem>>, vector<1x128x1xf32>
      %160 = vector.shape_cast %159 : vector<1x128x1xf32> to vector<128x1xf32>
      %161 = arith.mulf %155, %160 : vector<128x1xf32>
      %cst_89 = arith.constant dense<0.000000e+00> : vector<128xf32>
      %162 = vector.multi_reduction <add>, %158, %cst_89 [1] : vector<128x128xf32> to vector<128xf32>
      %163 = vector.shape_cast %162 : vector<128xf32> to vector<128x1xf32>
      %164 = arith.addf %161, %163 : vector<128x1xf32>
      %c3_90 = arith.constant 3 : index
      %c0_91 = arith.constant 0 : index
      %c0_92 = arith.constant 0 : index
      %165 = vector.load %arg8[%c3_90, %c0_91, %c0_92] : memref<4x128x1xf32, #tpu.memory_space<vmem>>, vector<1x128x1xf32>
      %166 = vector.shape_cast %165 : vector<1x128x1xf32> to vector<128x1xf32>
      %167 = vector.shape_cast %164 : vector<128x1xf32> to vector<1x128x1xf32>
      tpu.vector_store %arg8[%c3_90, %c0_91, %c0_92], %167 {strides = array<i32>} : memref<4x128x1xf32, #tpu.memory_space<vmem>>, vector<1x128x1xf32>,
      %c3_93 = arith.constant 3 : index
      %c0_94 = arith.constant 0 : index
      %c0_95 = arith.constant 0 : index
      %168 = vector.load %arg9[%c3_93, %c0_94, %c0_95] : memref<4x128x32xf32, #tpu.memory_space<vmem>>, vector<1x128x32xf32>
      %169 = vector.shape_cast %168 : vector<1x128x32xf32> to vector<128x32xf32>
      %170 = vector.broadcast %155 : vector<128x1xf32> to vector<128x32xf32>
      %171 = arith.mulf %170, %169 : vector<128x32xf32>
      %172 = arith.truncf %158 : vector<128x128xf32> to vector<128x128xbf16>
      %173 = vector.extract_strided_slice %14 {offsets = [0, 96], sizes = [128, 32], strides = [1, 1]} : vector<128x128xbf16> to vector<128x32xbf16>
      %cst_96 = arith.constant dense<0.000000e+00> : vector<128x32xf32>
      %174 = tpu.matmul %172, %173, %cst_96 {dimension_numbers = #tpu.dot_dimension_numbers<[1], [0], [0], [1], [0, 0, 1, 1], [], []>} : vector<128x128xbf16>, vector<128x32xbf16>, vector<128x32xf32> -> vector<128x32xf32>
      %175 = arith.addf %171, %174 : vector<128x32xf32>
      %c3_97 = arith.constant 3 : index
      %c0_98 = arith.constant 0 : index
      %c0_99 = arith.constant 0 : index
      %176 = vector.load %arg9[%c3_97, %c0_98, %c0_99] : memref<4x128x32xf32, #tpu.memory_space<vmem>>, vector<1x128x32xf32>
      %177 = vector.shape_cast %176 : vector<1x128x32xf32> to vector<128x32xf32>
      %178 = vector.shape_cast %175 : vector<128x32xf32> to vector<1x128x32xf32>
      tpu.vector_store %arg9[%c3_97, %c0_98, %c0_99], %178 {strides = array<i32>} : memref<4x128x32xf32, #tpu.memory_space<vmem>>, vector<1x128x32xf32>,
      %c3_100 = arith.constant 3 : index
      %c0_101 = arith.constant 0 : index
      %c0_102 = arith.constant 0 : index
      %179 = vector.load %arg7[%c3_100, %c0_101, %c0_102] : memref<4x128x1xf32, #tpu.memory_space<vmem>>, vector<1x128x1xf32>
      %180 = vector.shape_cast %179 : vector<1x128x1xf32> to vector<128x1xf32>
      %181 = vector.shape_cast %153 : vector<128x1xf32> to vector<1x128x1xf32>
      tpu.vector_store %arg7[%c3_100, %c0_101, %c0_102], %181 {strides = array<i32>} : memref<4x128x1xf32, #tpu.memory_space<vmem>>, vector<1x128x1xf32>,
    } else {
    }
    %6 = arith.cmpi eq, %arg2, %arg1 : i32
    %7 = arith.extui %6 : i1 to i32
    %c0_i32_2 = arith.constant 0 : i32
    %8 = arith.cmpi ne, %7, %c0_i32_2 : i32
    scf.if %8 {
      %c0 = arith.constant 0 : index
      %c0_3 = arith.constant 0 : index
      %c0_4 = arith.constant 0 : index
      %9 = vector.load %arg8[%c0, %c0_3, %c0_4] : memref<4x128x1xf32, #tpu.memory_space<vmem>>, vector<1x128x1xf32>
      %10 = vector.shape_cast %9 : vector<1x128x1xf32> to vector<128x1xf32>
      %11 = tpu.reciprocal %10 {approx = true} : vector<128x1xf32> -> vector<128x1xf32>
      %c0_5 = arith.constant 0 : index
      %c0_6 = arith.constant 0 : index
      %c0_7 = arith.constant 0 : index
      %12 = vector.load %arg9[%c0_5, %c0_6, %c0_7] : memref<4x128x32xf32, #tpu.memory_space<vmem>>, vector<1x128x32xf32>
      %13 = vector.shape_cast %12 : vector<1x128x32xf32> to vector<128x32xf32>
      %14 = vector.broadcast %11 : vector<128x1xf32> to vector<128x32xf32>
      %15 = arith.mulf %13, %14 : vector<128x32xf32>
      %16 = arith.truncf %15 : vector<128x32xf32> to vector<128x32xbf16>
      %c0_8 = arith.constant 0 : index
      %c0_9 = arith.constant 0 : index
      %c0_10 = arith.constant 0 : index
      %17 = vector.load %arg6[%c0_8, %c0_9, %c0_10] : memref<1x128x128xbf16, #tpu.memory_space<vmem>>, vector<1x128x32xbf16>
      %18 = vector.shape_cast %17 : vector<1x128x32xbf16> to vector<128x32xbf16>
      %19 = vector.shape_cast %16 : vector<128x32xbf16> to vector<1x128x32xbf16>
      tpu.vector_store %arg6[%c0_8, %c0_9, %c0_10], %19 {strides = array<i32>} : memref<1x128x128xbf16, #tpu.memory_space<vmem>>, vector<1x128x32xbf16>,
      %c1 = arith.constant 1 : index
      %c0_11 = arith.constant 0 : index
      %c0_12 = arith.constant 0 : index
      %20 = vector.load %arg8[%c1, %c0_11, %c0_12] : memref<4x128x1xf32, #tpu.memory_space<vmem>>, vector<1x128x1xf32>
      %21 = vector.shape_cast %20 : vector<1x128x1xf32> to vector<128x1xf32>
      %22 = tpu.reciprocal %21 {approx = true} : vector<128x1xf32> -> vector<128x1xf32>
      %c1_13 = arith.constant 1 : index
      %c0_14 = arith.constant 0 : index
      %c0_15 = arith.constant 0 : index
      %23 = vector.load %arg9[%c1_13, %c0_14, %c0_15] : memref<4x128x32xf32, #tpu.memory_space<vmem>>, vector<1x128x32xf32>
      %24 = vector.shape_cast %23 : vector<1x128x32xf32> to vector<128x32xf32>
      %25 = vector.broadcast %22 : vector<128x1xf32> to vector<128x32xf32>
      %26 = arith.mulf %24, %25 : vector<128x32xf32>
      %27 = arith.truncf %26 : vector<128x32xf32> to vector<128x32xbf16>
      %c0_16 = arith.constant 0 : index
      %c0_17 = arith.constant 0 : index
      %c32 = arith.constant 32 : index
      %28 = vector.load %arg6[%c0_16, %c0_17, %c32] : memref<1x128x128xbf16, #tpu.memory_space<vmem>>, vector<1x128x32xbf16>
      %29 = vector.shape_cast %28 : vector<1x128x32xbf16> to vector<128x32xbf16>
      %30 = vector.shape_cast %27 : vector<128x32xbf16> to vector<1x128x32xbf16>
      tpu.vector_store %arg6[%c0_16, %c0_17, %c32], %30 {strides = array<i32>} : memref<1x128x128xbf16, #tpu.memory_space<vmem>>, vector<1x128x32xbf16>,
      %c2 = arith.constant 2 : index
      %c0_18 = arith.constant 0 : index
      %c0_19 = arith.constant 0 : index
      %31 = vector.load %arg8[%c2, %c0_18, %c0_19] : memref<4x128x1xf32, #tpu.memory_space<vmem>>, vector<1x128x1xf32>
      %32 = vector.shape_cast %31 : vector<1x128x1xf32> to vector<128x1xf32>
      %33 = tpu.reciprocal %32 {approx = true} : vector<128x1xf32> -> vector<128x1xf32>
      %c2_20 = arith.constant 2 : index
      %c0_21 = arith.constant 0 : index
      %c0_22 = arith.constant 0 : index
      %34 = vector.load %arg9[%c2_20, %c0_21, %c0_22] : memref<4x128x32xf32, #tpu.memory_space<vmem>>, vector<1x128x32xf32>
      %35 = vector.shape_cast %34 : vector<1x128x32xf32> to vector<128x32xf32>
      %36 = vector.broadcast %33 : vector<128x1xf32> to vector<128x32xf32>
      %37 = arith.mulf %35, %36 : vector<128x32xf32>
      %38 = arith.truncf %37 : vector<128x32xf32> to vector<128x32xbf16>
      %c0_23 = arith.constant 0 : index
      %c0_24 = arith.constant 0 : index
      %c64 = arith.constant 64 : index
      %39 = vector.load %arg6[%c0_23, %c0_24, %c64] : memref<1x128x128xbf16, #tpu.memory_space<vmem>>, vector<1x128x32xbf16>
      %40 = vector.shape_cast %39 : vector<1x128x32xbf16> to vector<128x32xbf16>
      %41 = vector.shape_cast %38 : vector<128x32xbf16> to vector<1x128x32xbf16>
      tpu.vector_store %arg6[%c0_23, %c0_24, %c64], %41 {strides = array<i32>} : memref<1x128x128xbf16, #tpu.memory_space<vmem>>, vector<1x128x32xbf16>,
      %c3 = arith.constant 3 : index
      %c0_25 = arith.constant 0 : index
      %c0_26 = arith.constant 0 : index
      %42 = vector.load %arg8[%c3, %c0_25, %c0_26] : memref<4x128x1xf32, #tpu.memory_space<vmem>>, vector<1x128x1xf32>
      %43 = vector.shape_cast %42 : vector<1x128x1xf32> to vector<128x1xf32>
      %44 = tpu.reciprocal %43 {approx = true} : vector<128x1xf32> -> vector<128x1xf32>
      %c3_27 = arith.constant 3 : index
      %c0_28 = arith.constant 0 : index
      %c0_29 = arith.constant 0 : index
      %45 = vector.load %arg9[%c3_27, %c0_28, %c0_29] : memref<4x128x32xf32, #tpu.memory_space<vmem>>, vector<1x128x32xf32>
      %46 = vector.shape_cast %45 : vector<1x128x32xf32> to vector<128x32xf32>
      %47 = vector.broadcast %44 : vector<128x1xf32> to vector<128x32xf32>
      %48 = arith.mulf %46, %47 : vector<128x32xf32>
      %49 = arith.truncf %48 : vector<128x32xf32> to vector<128x32xbf16>
      %c0_30 = arith.constant 0 : index
      %c0_31 = arith.constant 0 : index
      %c96 = arith.constant 96 : index
      %50 = vector.load %arg6[%c0_30, %c0_31, %c96] : memref<1x128x128xbf16, #tpu.memory_space<vmem>>, vector<1x128x32xbf16>
      %51 = vector.shape_cast %50 : vector<1x128x32xbf16> to vector<128x32xbf16>
      %52 = vector.shape_cast %49 : vector<128x32xbf16> to vector<1x128x32xbf16>
      tpu.vector_store %arg6[%c0_30, %c0_31, %c96], %52 {strides = array<i32>} : memref<1x128x128xbf16, #tpu.memory_space<vmem>>, vector<1x128x32xbf16>,
    } else {
    }
    return
  }
  func.func @transform_0(%arg0: i32, %arg1: i32, %arg2: i32) -> (i32, i32, i32) {
    %c0_i32 = arith.constant 0 : i32
    %c0_i32_0 = arith.constant 0 : i32
    return %arg0, %arg1, %c0_i32 : i32, i32, i32
  }
  func.func @transform_1(%arg0: i32, %arg1: i32, %arg2: i32) -> (i32, i32, i32) {
    %0 = arith.minsi %arg2, %arg1 : i32
    %c1_i32 = arith.constant 1 : i32
    %c0_i32 = arith.constant 0 : i32
    return %arg0, %0, %c1_i32 : i32, i32, i32
  }
  func.func @transform_2(%arg0: i32, %arg1: i32, %arg2: i32) -> (i32, i32, i32) {
    %0 = arith.minsi %arg2, %arg1 : i32
    %c2_i32 = arith.constant 2 : i32
    %c0_i32 = arith.constant 0 : i32
    return %arg0, %0, %c2_i32 : i32, i32, i32
  }
  func.func @transform_3(%arg0: i32, %arg1: i32, %arg2: i32) -> (i32, i32, i32) {
    %c0_i32 = arith.constant 0 : i32
    %c0_i32_0 = arith.constant 0 : i32
    return %arg0, %arg1, %c0_i32 : i32, i32, i32
  }
}

</mosaic_0001>

<llo_original>
// kernel: self_attention_forward.5
$region0: #{self_attention_forward.5}
  #allocation0 [shape = 'u32[]', space=smem, size = 0x4, offset = 0x4, fixed_abs, tag = 'smem constant byte address 0x4 - core index']
  #allocation1 [shape = 'u32[144,128]{1,0:T(1,128)}', space=vmem, size = 0x12000, scoped, tag = 'internal scratch']
  #allocation2 [shape = 'f32[512,128]{1,0:T(8,128)}', space=vmem, size = 0x40000, scoped, tag = 'scratch operand']
  %s0 = inlined_call_operand.vmem [shape: bf16[512,128], index: 0, kind: input, shape index: {}]
  %s1 = inlined_call_operand.vmem [shape: bf16[128,128], index: 1, kind: input, shape index: {}]
  %s2 = inlined_call_operand.vmem [shape: f32[1,128], index: 2, kind: input, shape index: {}]
  %s3 = inlined_call_operand.hbm [shape: f32[512,128], index: 3, kind: output, shape index: {}]
  %s4 = sld [smem:[#allocation0]]
  $region30: #{self_attention_forward.5} parent=0
    _
  %s6 = ssub.s32 1, %s4
  %s7 = scalar_select 0, %s6, %s4
  $region1: #{self_attention_forward.5} parent=0
    #allocation3 [shape = 'u8[262144]{0}', space=vmem, size = 0x40000, scoped, tag = 'output window, operand 0, single buffered']
    #allocation4 [shape = 's32[1]{0}', space=sflag, size = 0x4, scoped, tag = 'scoped memory for self_attention_forward.5']
    %8 = vsyncpa [#allocation4], 0
    // Predicated region
    $region2: #{self_attention_forward.5} parent=1 // pred_check
      _
    $region3: #{self_attention_forward.5} parent=1 // pred_check_branch
      %10 = sbr.rel (0) target = $region5
    $region4: #{self_attention_forward.5} parent=1 // pred_region
      _
    $region5: #{self_attention_forward.5} parent=1 // pred_fallthru
      _
    // Predicated region
    $region6: #{self_attention_forward.5} parent=1 // pred_check
      _
    $region7: #{self_attention_forward.5} parent=1 // pred_check_branch
      %12 = sbr.rel (0) target = $region9
    $region8: #{self_attention_forward.5} parent=1 // pred_region
      _
    $region9: #{self_attention_forward.5} parent=1 // pred_fallthru
      _
    // Predicated region
    $region10: #{self_attention_forward.5} parent=1 // pred_check
      _
    $region11: #{self_attention_forward.5} parent=1 // pred_check_branch
      %14 = sbr.rel (0) target = $region13
    $region12: #{self_attention_forward.5} parent=1 // pred_region
      _
    $region13: #{self_attention_forward.5} parent=1 // pred_fallthru
      _
    %p16 = scmp.eq.s32.totalorder 0, 0
    // Predicated region
    $region14: #{self_attention_forward.5} parent=1 // pred_check
      %p17 = pneg %p16
    $region15: #{self_attention_forward.5} parent=1 // pred_check_branch
      %19 = sbr.rel (%p17) target = $region17
    $region16: #{self_attention_forward.5} parent=1 // pred_region
      %20 = vst [vmem:[#allocation2] sm:$0xff] 0.0
      %21 = vst [vmem:[#allocation2 + $0x8] sm:$0xff] 0.0
      %22 = vst [vmem:[#allocation2 + $0x10] sm:$0xff] 0.0
      %23 = vst [vmem:[#allocation2 + $0x18] sm:$0xff] 0.0
      %24 = vst [vmem:[#allocation2 + $0x20] sm:$0xff] 0.0
      %25 = vst [vmem:[#allocation2 + $0x28] sm:$0xff] 0.0
      %26 = vst [vmem:[#allocation2 + $0x30] sm:$0xff] 0.0
      %27 = vst [vmem:[#allocation2 + $0x38] sm:$0xff] 0.0
      %28 = vst [vmem:[#allocation2 + $0x40] sm:$0xff] 0.0
      %29 = vst [vmem:[#allocation2 + $0x48] sm:$0xff] 0.0
      %30 = vst [vmem:[#allocation2 + $0x50] sm:$0xff] 0.0
      %31 = vst [vmem:[#allocation2 + $0x58] sm:$0xff] 0.0
      %32 = vst [vmem:[#allocation2 + $0x60] sm:$0xff] 0.0
      %33 = vst [vmem:[#allocation2 + $0x68] sm:$0xff] 0.0
      %34 = vst [vmem:[#allocation2 + $0x70] sm:$0xff] 0.0
      %35 = vst [vmem:[#allocation2 + $0x78] sm:$0xff] 0.0
      %36 = vst [vmem:[#allocation2 + $0x80] sm:$0xff] 0.0
      %37 = vst [vmem:[#allocation2 + $0x88] sm:$0xff] 0.0
      %38 = vst [vmem:[#allocation2 + $0x90] sm:$0xff] 0.0
      %39 = vst [vmem:[#allocation2 + $0x98] sm:$0xff] 0.0
      %40 = vst [vmem:[#allocation2 + $0xa0] sm:$0xff] 0.0
      %41 = vst [vmem:[#allocation2 + $0xa8] sm:$0xff] 0.0
      %42 = vst [vmem:[#allocation2 + $0xb0] sm:$0xff] 0.0
      %43 = vst [vmem:[#allocation2 + $0xb8] sm:$0xff] 0.0
      %44 = vst [vmem:[#allocation2 + $0xc0] sm:$0xff] 0.0
      %45 = vst [vmem:[#allocation2 + $0xc8] sm:$0xff] 0.0
      %46 = vst [vmem:[#allocation2 + $0xd0] sm:$0xff] 0.0
      %47 = vst [vmem:[#allocation2 + $0xd8] sm:$0xff] 0.0
      %48 = vst [vmem:[#allocation2 + $0xe0] sm:$0xff] 0.0
      %49 = vst [vmem:[#allocation2 + $0xe8] sm:$0xff] 0.0
      %50 = vst [vmem:[#allocation2 + $0xf0] sm:$0xff] 0.0
      %51 = vst [vmem:[#allocation2 + $0xf8] sm:$0xff] 0.0
      %52 = vst [vmem:[#allocation2 + $0x100] sm:$0xff] 0.0
      %53 = vst [vmem:[#allocation2 + $0x108] sm:$0xff] 0.0
      %54 = vst [vmem:[#allocation2 + $0x110] sm:$0xff] 0.0
      %55 = vst [vmem:[#allocation2 + $0x118] sm:$0xff] 0.0
      %56 = vst [vmem:[#allocation2 + $0x120] sm:$0xff] 0.0
      %57 = vst [vmem:[#allocation2 + $0x128] sm:$0xff] 0.0
      %58 = vst [vmem:[#allocation2 + $0x130] sm:$0xff] 0.0
      %59 = vst [vmem:[#allocation2 + $0x138] sm:$0xff] 0.0
      %60 = vst [vmem:[#allocation2 + $0x140] sm:$0xff] 0.0
      %61 = vst [vmem:[#allocation2 + $0x148] sm:$0xff] 0.0
      %62 = vst [vmem:[#allocation2 + $0x150] sm:$0xff] 0.0
      %63 = vst [vmem:[#allocation2 + $0x158] sm:$0xff] 0.0
      %64 = vst [vmem:[#allocation2 + $0x160] sm:$0xff] 0.0
      %65 = vst [vmem:[#allocation2 + $0x168] sm:$0xff] 0.0
      %66 = vst [vmem:[#allocation2 + $0x170] sm:$0xff] 0.0
      %67 = vst [vmem:[#allocation2 + $0x178] sm:$0xff] 0.0
      %68 = vst [vmem:[#allocation2 + $0x180] sm:$0xff] 0.0
      %69 = vst [vmem:[#allocation2 + $0x188] sm:$0xff] 0.0
      %70 = vst [vmem:[#allocation2 + $0x190] sm:$0xff] 0.0
      %71 = vst [vmem:[#allocation2 + $0x198] sm:$0xff] 0.0
      %72 = vst [vmem:[#allocation2 + $0x1a0] sm:$0xff] 0.0
      %73 = vst [vmem:[#allocation2 + $0x1a8] sm:$0xff] 0.0
      %74 = vst [vmem:[#allocation2 + $0x1b0] sm:$0xff] 0.0
      %75 = vst [vmem:[#allocation2 + $0x1b8] sm:$0xff] 0.0
      %76 = vst [vmem:[#allocation2 + $0x1c0] sm:$0xff] 0.0
      %77 = vst [vmem:[#allocation2 + $0x1c8] sm:$0xff] 0.0
      %78 = vst [vmem:[#allocation2 + $0x1d0] sm:$0xff] 0.0
      %79 = vst [vmem:[#allocation2 + $0x1d8] sm:$0xff] 0.0
      %80 = vst [vmem:[#allocation2 + $0x1e0] sm:$0xff] 0.0
      %81 = vst [vmem:[#allocation2 + $0x1e8] sm:$0xff] 0.0
      %82 = vst [vmem:[#allocation2 + $0x1f0] sm:$0xff] 0.0
      %83 = vst [vmem:[#allocation2 + $0x1f8] sm:$0xff] 0.0
    $region17: #{self_attention_forward.5} parent=1 // pred_fallthru
      _
    %v84 = vld [vmem:[#allocation2] sm:$0xff]
    %v85 = vld [vmem:[#allocation2 + $0x8] sm:$0xff]
    %v86 = vld [vmem:[#allocation2 + $0x10] sm:$0xff]
    %v87 = vld [vmem:[#allocation2 + $0x18] sm:$0xff]
    %v88 = vld [vmem:[#allocation2 + $0x20] sm:$0xff]
    %v89 = vld [vmem:[#allocation2 + $0x28] sm:$0xff]
    %v90 = vld [vmem:[#allocation2 + $0x30] sm:$0xff]
    %v91 = vld [vmem:[#allocation2 + $0x38] sm:$0xff]
    %v92 = vld [vmem:[#allocation2 + $0x40] sm:$0xff]
    %v93 = vld [vmem:[#allocation2 + $0x48] sm:$0xff]
    %v94 = vld [vmem:[#allocation2 + $0x50] sm:$0xff]
    %v95 = vld [vmem:[#allocation2 + $0x58] sm:$0xff]
    %v96 = vld [vmem:[#allocation2 + $0x60] sm:$0xff]
    %v97 = vld [vmem:[#allocation2 + $0x68] sm:$0xff]
    %v98 = vld [vmem:[#allocation2 + $0x70] sm:$0xff]
    %v99 = vld [vmem:[#allocation2 + $0x78] sm:$0xff]
    %v100 = vld [vmem:[#allocation2 + $0x80] sm:$0xff]
    %v101 = vld [vmem:[#allocation2 + $0x88] sm:$0xff]
    %v102 = vld [vmem:[#allocation2 + $0x90] sm:$0xff]
    %v103 = vld [vmem:[#allocation2 + $0x98] sm:$0xff]
    %v104 = vld [vmem:[#allocation2 + $0xa0] sm:$0xff]
    %v105 = vld [vmem:[#allocation2 + $0xa8] sm:$0xff]
    %v106 = vld [vmem:[#allocation2 + $0xb0] sm:$0xff]
    %v107 = vld [vmem:[#allocation2 + $0xb8] sm:$0xff]
    %v108 = vld [vmem:[#allocation2 + $0xc0] sm:$0xff]
    %v109 = vld [vmem:[#allocation2 + $0xc8] sm:$0xff]
    %v110 = vld [vmem:[#allocation2 + $0xd0] sm:$0xff]
    %v111 = vld [vmem:[#allocation2 + $0xd8] sm:$0xff]
    %v112 = vld [vmem:[#allocation2 + $0xe0] sm:$0xff]
    %v113 = vld [vmem:[#allocation2 + $0xe8] sm:$0xff]
    %v114 = vld [vmem:[#allocation2 + $0xf0] sm:$0xff]
    %v115 = vld [vmem:[#allocation2 + $0xf8] sm:$0xff]
    %v116 = vld [vmem:[#allocation2 + $0x100] sm:$0xff]
    %v117 = vld [vmem:[#allocation2 + $0x108] sm:$0xff]
    %v118 = vld [vmem:[#allocation2 + $0x110] sm:$0xff]
    %v119 = vld [vmem:[#allocation2 + $0x118] sm:$0xff]
    %v120 = vld [vmem:[#allocation2 + $0x120] sm:$0xff]
    %v121 = vld [vmem:[#allocation2 + $0x128] sm:$0xff]
    %v122 = vld [vmem:[#allocation2 + $0x130] sm:$0xff]
    %v123 = vld [vmem:[#allocation2 + $0x138] sm:$0xff]
    %v124 = vld [vmem:[#allocation2 + $0x140] sm:$0xff]
    %v125 = vld [vmem:[#allocation2 + $0x148] sm:$0xff]
    %v126 = vld [vmem:[#allocation2 + $0x150] sm:$0xff]
    %v127 = vld [vmem:[#allocation2 + $0x158] sm:$0xff]
    %v128 = vld [vmem:[#allocation2 + $0x160] sm:$0xff]
    %v129 = vld [vmem:[#allocation2 + $0x168] sm:$0xff]
    %v130 = vld [vmem:[#allocation2 + $0x170] sm:$0xff]
    %v131 = vld [vmem:[#allocation2 + $0x178] sm:$0xff]
    %v132 = vld [vmem:[#allocation2 + $0x180] sm:$0xff]
    %v133 = vld [vmem:[#allocation2 + $0x188] sm:$0xff]
    %v134 = vld [vmem:[#allocation2 + $0x190] sm:$0xff]
    %v135 = vld [vmem:[#allocation2 + $0x198] sm:$0xff]
    %v136 = vld [vmem:[#allocation2 + $0x1a0] sm:$0xff]
    %v137 = vld [vmem:[#allocation2 + $0x1a8] sm:$0xff]
    %v138 = vld [vmem:[#allocation2 + $0x1b0] sm:$0xff]
    %v139 = vld [vmem:[#allocation2 + $0x1b8] sm:$0xff]
    %v140 = vld [vmem:[#allocation2 + $0x1c0] sm:$0xff]
    %v141 = vld [vmem:[#allocation2 + $0x1c8] sm:$0xff]
    %v142 = vld [vmem:[#allocation2 + $0x1d0] sm:$0xff]
    %v143 = vld [vmem:[#allocation2 + $0x1d8] sm:$0xff]
    %v144 = vld [vmem:[#allocation2 + $0x1e0] sm:$0xff]
    %v145 = vld [vmem:[#allocation2 + $0x1e8] sm:$0xff]
    %v146 = vld [vmem:[#allocation2 + $0x1f0] sm:$0xff]
    %v147 = vld [vmem:[#allocation2 + $0x1f8] sm:$0xff]
    %v148 = vld [vmem:[%s0] sm:$0xf]
    %v149 = vld [vmem:[%s0 + $0x4] sm:$0xf]
    %v150 = vld [vmem:[%s0 + $0x8] sm:$0xf]
    %v151 = vld [vmem:[%s0 + $0xc] sm:$0xf]
    %v152 = vld [vmem:[%s0 + $0x10] sm:$0xf]
    %v153 = vld [vmem:[%s0 + $0x14] sm:$0xf]
    %v154 = vld [vmem:[%s0 + $0x18] sm:$0xf]
    %v155 = vld [vmem:[%s0 + $0x1c] sm:$0xf]
    %v156 = vld [vmem:[%s0 + $0x20] sm:$0xf]
    %v157 = vld [vmem:[%s0 + $0x24] sm:$0xf]
    %v158 = vld [vmem:[%s0 + $0x28] sm:$0xf]
    %v159 = vld [vmem:[%s0 + $0x2c] sm:$0xf]
    %v160 = vld [vmem:[%s0 + $0x30] sm:$0xf]
    %v161 = vld [vmem:[%s0 + $0x34] sm:$0xf]
    %v162 = vld [vmem:[%s0 + $0x38] sm:$0xf]
    %v163 = vld [vmem:[%s0 + $0x3c] sm:$0xf]
    %v164 = vld [vmem:[%s0 + $0x40] sm:$0xf]
    %v165 = vld [vmem:[%s0 + $0x44] sm:$0xf]
    %v166 = vld [vmem:[%s0 + $0x48] sm:$0xf]
    %v167 = vld [vmem:[%s0 + $0x4c] sm:$0xf]
    %v168 = vld [vmem:[%s0 + $0x50] sm:$0xf]
    %v169 = vld [vmem:[%s0 + $0x54] sm:$0xf]
    %v170 = vld [vmem:[%s0 + $0x58] sm:$0xf]
    %v171 = vld [vmem:[%s0 + $0x5c] sm:$0xf]
    %v172 = vld [vmem:[%s0 + $0x60] sm:$0xf]
    %v173 = vld [vmem:[%s0 + $0x64] sm:$0xf]
    %v174 = vld [vmem:[%s0 + $0x68] sm:$0xf]
    %v175 = vld [vmem:[%s0 + $0x6c] sm:$0xf]
    %v176 = vld [vmem:[%s0 + $0x70] sm:$0xf]
    %v177 = vld [vmem:[%s0 + $0x74] sm:$0xf]
    %v178 = vld [vmem:[%s0 + $0x78] sm:$0xf]
    %v179 = vld [vmem:[%s0 + $0x7c] sm:$0xf]
    %v180 = vld [vmem:[%s0 + $0x80] sm:$0xf]
    %v181 = vld [vmem:[%s0 + $0x84] sm:$0xf]
    %v182 = vld [vmem:[%s0 + $0x88] sm:$0xf]
    %v183 = vld [vmem:[%s0 + $0x8c] sm:$0xf]
    %v184 = vld [vmem:[%s0 + $0x90] sm:$0xf]
    %v185 = vld [vmem:[%s0 + $0x94] sm:$0xf]
    %v186 = vld [vmem:[%s0 + $0x98] sm:$0xf]
    %v187 = vld [vmem:[%s0 + $0x9c] sm:$0xf]
    %v188 = vld [vmem:[%s0 + $0xa0] sm:$0xf]
    %v189 = vld [vmem:[%s0 + $0xa4] sm:$0xf]
    %v190 = vld [vmem:[%s0 + $0xa8] sm:$0xf]
    %v191 = vld [vmem:[%s0 + $0xac] sm:$0xf]
    %v192 = vld [vmem:[%s0 + $0xb0] sm:$0xf]
    %v193 = vld [vmem:[%s0 + $0xb4] sm:$0xf]
    %v194 = vld [vmem:[%s0 + $0xb8] sm:$0xf]
    %v195 = vld [vmem:[%s0 + $0xbc] sm:$0xf]
    %v196 = vld [vmem:[%s0 + $0xc0] sm:$0xf]
    %v197 = vld [vmem:[%s0 + $0xc4] sm:$0xf]
    %v198 = vld [vmem:[%s0 + $0xc8] sm:$0xf]
    %v199 = vld [vmem:[%s0 + $0xcc] sm:$0xf]
    %v200 = vld [vmem:[%s0 + $0xd0] sm:$0xf]
    %v201 = vld [vmem:[%s0 + $0xd4] sm:$0xf]
    %v202 = vld [vmem:[%s0 + $0xd8] sm:$0xf]
    %v203 = vld [vmem:[%s0 + $0xdc] sm:$0xf]
    %v204 = vld [vmem:[%s0 + $0xe0] sm:$0xf]
    %v205 = vld [vmem:[%s0 + $0xe4] sm:$0xf]
    %v206 = vld [vmem:[%s0 + $0xe8] sm:$0xf]
    %v207 = vld [vmem:[%s0 + $0xec] sm:$0xf]
    %v208 = vld [vmem:[%s0 + $0xf0] sm:$0xf]
    %v209 = vld [vmem:[%s0 + $0xf4] sm:$0xf]
    %v210 = vld [vmem:[%s0 + $0xf8] sm:$0xf]
    %v211 = vld [vmem:[%s0 + $0xfc] sm:$0xf]
    %v212 = vld [vmem:[%s1] sm:$0xf]
    %v213 = vld [vmem:[%s1 + $0x4] sm:$0xf]
    %v214 = vld [vmem:[%s1 + $0x8] sm:$0xf]
    %v215 = vld [vmem:[%s1 + $0xc] sm:$0xf]
    %v216 = vld [vmem:[%s1 + $0x10] sm:$0xf]
    %v217 = vld [vmem:[%s1 + $0x14] sm:$0xf]
    %v218 = vld [vmem:[%s1 + $0x18] sm:$0xf]
    %v219 = vld [vmem:[%s1 + $0x1c] sm:$0xf]
    %v220 = vld [vmem:[%s1 + $0x20] sm:$0xf]
    %v221 = vld [vmem:[%s1 + $0x24] sm:$0xf]
    %v222 = vld [vmem:[%s1 + $0x28] sm:$0xf]
    %v223 = vld [vmem:[%s1 + $0x2c] sm:$0xf]
    %v224 = vld [vmem:[%s1 + $0x30] sm:$0xf]
    %v225 = vld [vmem:[%s1 + $0x34] sm:$0xf]
    %v226 = vld [vmem:[%s1 + $0x38] sm:$0xf]
    %v227 = vld [vmem:[%s1 + $0x3c] sm:$0xf]
    %v292 = vunpack.c.l.b16 %v148
    %v293 = vunpack.c.l.b16 %v149
    %v294 = vunpack.c.l.b16 %v150
    %v295 = vunpack.c.l.b16 %v151
    %v296 = vunpack.c.l.b16 %v152
    %v297 = vunpack.c.l.b16 %v153
    %v298 = vunpack.c.l.b16 %v154
    %v299 = vunpack.c.l.b16 %v155
    %v300 = vunpack.c.l.b16 %v156
    %v301 = vunpack.c.l.b16 %v157
    %v302 = vunpack.c.l.b16 %v158
    %v303 = vunpack.c.l.b16 %v159
    %v304 = vunpack.c.l.b16 %v160
    %v305 = vunpack.c.l.b16 %v161
    %v306 = vunpack.c.l.b16 %v162
    %v307 = vunpack.c.l.b16 %v163
    %v308 = vunpack.c.l.b16 %v164
    %v309 = vunpack.c.l.b16 %v165
    %v310 = vunpack.c.l.b16 %v166
    %v311 = vunpack.c.l.b16 %v167
    %v312 = vunpack.c.l.b16 %v168
    %v313 = vunpack.c.l.b16 %v169
    %v314 = vunpack.c.l.b16 %v170
    %v315 = vunpack.c.l.b16 %v171
    %v316 = vunpack.c.l.b16 %v172
    %v317 = vunpack.c.l.b16 %v173
    %v318 = vunpack.c.l.b16 %v174
    %v319 = vunpack.c.l.b16 %v175
    %v320 = vunpack.c.l.b16 %v176
    %v321 = vunpack.c.l.b16 %v177
    %v322 = vunpack.c.l.b16 %v178
    %v323 = vunpack.c.l.b16 %v179
    %v324 = vunpack.c.l.b16 %v180
    %v325 = vunpack.c.l.b16 %v181
    %v326 = vunpack.c.l.b16 %v182
    %v327 = vunpack.c.l.b16 %v183
    %v328 = vunpack.c.l.b16 %v184
    %v329 = vunpack.c.l.b16 %v185
    %v330 = vunpack.c.l.b16 %v186
    %v331 = vunpack.c.l.b16 %v187
    %v332 = vunpack.c.l.b16 %v188
    %v333 = vunpack.c.l.b16 %v189
    %v334 = vunpack.c.l.b16 %v190
    %v335 = vunpack.c.l.b16 %v191
    %v336 = vunpack.c.l.b16 %v192
    %v337 = vunpack.c.l.b16 %v193
    %v338 = vunpack.c.l.b16 %v194
    %v339 = vunpack.c.l.b16 %v195
    %v340 = vunpack.c.l.b16 %v196
    %v341 = vunpack.c.l.b16 %v197
    %v342 = vunpack.c.l.b16 %v198
    %v343 = vunpack.c.l.b16 %v199
    %v344 = vunpack.c.l.b16 %v200
    %v345 = vunpack.c.l.b16 %v201
    %v346 = vunpack.c.l.b16 %v202
    %v347 = vunpack.c.l.b16 %v203
    %v348 = vunpack.c.l.b16 %v204
    %v349 = vunpack.c.l.b16 %v205
    %v350 = vunpack.c.l.b16 %v206
    %v351 = vunpack.c.l.b16 %v207
    %v352 = vunpack.c.l.b16 %v208
    %v353 = vunpack.c.l.b16 %v209
    %v354 = vunpack.c.l.b16 %v210
    %v355 = vunpack.c.l.b16 %v211
    %v356 = vpack.c.b16 %v293, %v292
    %v357 = vpack.c.b16 %v295, %v294
    %v358 = vpack.c.b16 %v297, %v296
    %v359 = vpack.c.b16 %v299, %v298
    %v360 = vpack.c.b16 %v301, %v300
    %v361 = vpack.c.b16 %v303, %v302
    %v362 = vpack.c.b16 %v305, %v304
    %v363 = vpack.c.b16 %v307, %v306
    %v364 = vpack.c.b16 %v309, %v308
    %v365 = vpack.c.b16 %v311, %v310
    %v366 = vpack.c.b16 %v313, %v312
    %v367 = vpack.c.b16 %v315, %v314
    %v368 = vpack.c.b16 %v317, %v316
    %v369 = vpack.c.b16 %v319, %v318
    %v370 = vpack.c.b16 %v321, %v320
    %v371 = vpack.c.b16 %v323, %v322
    %v372 = vpack.c.b16 %v325, %v324
    %v373 = vpack.c.b16 %v327, %v326
    %v374 = vpack.c.b16 %v329, %v328
    %v375 = vpack.c.b16 %v331, %v330
    %v376 = vpack.c.b16 %v333, %v332
    %v377 = vpack.c.b16 %v335, %v334
    %v378 = vpack.c.b16 %v337, %v336
    %v379 = vpack.c.b16 %v339, %v338
    %v380 = vpack.c.b16 %v341, %v340
    %v381 = vpack.c.b16 %v343, %v342
    %v382 = vpack.c.b16 %v345, %v344
    %v383 = vpack.c.b16 %v347, %v346
    %v384 = vpack.c.b16 %v349, %v348
    %v385 = vpack.c.b16 %v351, %v350
    %v386 = vpack.c.b16 %v353, %v352
    %v387 = vpack.c.b16 %v355, %v354
    %v436 = vunpack.c.l.b16 %v212
    %v437 = vunpack.c.l.b16 %v213
    %v438 = vunpack.c.l.b16 %v214
    %v439 = vunpack.c.l.b16 %v215
    %v440 = vunpack.c.l.b16 %v216
    %v441 = vunpack.c.l.b16 %v217
    %v442 = vunpack.c.l.b16 %v218
    %v443 = vunpack.c.l.b16 %v219
    %v444 = vunpack.c.l.b16 %v220
    %v445 = vunpack.c.l.b16 %v221
    %v446 = vunpack.c.l.b16 %v222
    %v447 = vunpack.c.l.b16 %v223
    %v448 = vunpack.c.l.b16 %v224
    %v449 = vunpack.c.l.b16 %v225
    %v450 = vunpack.c.l.b16 %v226
    %v451 = vunpack.c.l.b16 %v227
    %v452 = vpack.c.b16 %v437, %v436
    %v453 = vpack.c.b16 %v439, %v438
    %v454 = vpack.c.b16 %v441, %v440
    %v455 = vpack.c.b16 %v443, %v442
    %v456 = vpack.c.b16 %v445, %v444
    %v457 = vpack.c.b16 %v447, %v446
    %v458 = vpack.c.b16 %v449, %v448
    %v459 = vpack.c.b16 %v451, %v450
    %468 = vmatprep.subr.bf16.mxu0 0
    %469 = vmatpush1.bf16.msra.mxu0 %v452
    %470 = vmatprep.subr.bf16.mxu0 0
    %471 = vmatpush1.bf16.msra.mxu0 %v453
    %472 = vmatprep.subr.bf16.mxu0 0
    %473 = vmatpush1.bf16.msra.mxu0 %v454
    %474 = vmatprep.subr.bf16.mxu0 0
    %475 = vmatpush1.bf16.msra.mxu0 %v455
    %476 = vmatprep.subr.bf16.mxu0 0
    %477 = vmatpush1.bf16.msra.mxu0 %v456
    %478 = vmatprep.subr.bf16.mxu0 0
    %479 = vmatpush1.bf16.msra.mxu0 %v457
    %480 = vmatprep.subr.bf16.mxu0 0
    %481 = vmatpush1.bf16.msra.mxu0 %v458
    %482 = vmatprep.subr.bf16.mxu0 0
    %483 = vmatpush1.bf16.msra.mxu0 %v459
    %484 = vmatprep.subr.bf16.mxu0 0
    %485 = vmatpush1.bf16.msra.mxu0 0
    %486 = vmatprep.subr.bf16.mxu0 0
    %487 = vmatpush1.bf16.msra.mxu0 0
    %488 = vmatprep.subr.bf16.mxu0 0
    %489 = vmatpush1.bf16.msra.mxu0 0
    %490 = vmatprep.subr.bf16.mxu0 0
    %491 = vmatpush1.bf16.msra.mxu0 0
    %492 = vmatprep.subr.bf16.mxu0 0
    %493 = vmatpush1.bf16.msra.mxu0 0
    %494 = vmatprep.subr.bf16.mxu0 0
    %495 = vmatpush1.bf16.msra.mxu0 0
    %496 = vmatprep.subr.bf16.mxu0 0
    %497 = vmatpush1.bf16.msra.mxu0 0
    %498 = vmatprep.subr.bf16.mxu0 0
    %499 = vmatpush1.bf16.msra.mxu0 0
    %500 = vmatprep.mubr.bf16.mxu0 0
    %501 = vmatmul.mubr.bf16.gmra.mrb[0].mxu0 %v356
    %v502 = vpop.f32.mrb[0].mxu0
    %v503 = vadd.f32 0.0, %v502
    %v504 = vpop.f32.mrb[0].mxu0
    %v505 = vpop.f32.mrb[0].mxu0
    %v506 = vadd.f32 0.0, %v505
    %v507 = vpop.f32.mrb[0].mxu0
    %508 = vmatprep.mubr.bf16.mxu0 0
    %509 = vmatmul.mubr.bf16.gmra.mrb[0].mxu0 %v357
    %v510 = vpop.f32.mrb[0].mxu0
    %v511 = vadd.f32 0.0, %v510
    %v512 = vpop.f32.mrb[0].mxu0
    %v513 = vpop.f32.mrb[0].mxu0
    %v514 = vadd.f32 0.0, %v513
    %v515 = vpop.f32.mrb[0].mxu0
    %516 = vmatprep.mubr.bf16.mxu0 0
    %517 = vmatmul.mubr.bf16.gmra.mrb[0].mxu0 %v358
    %v518 = vpop.f32.mrb[0].mxu0
    %v519 = vadd.f32 0.0, %v518
    %v520 = vpop.f32.mrb[0].mxu0
    %v521 = vpop.f32.mrb[0].mxu0
    %v522 = vadd.f32 0.0, %v521
    %v523 = vpop.f32.mrb[0].mxu0
    %524 = vmatprep.mubr.bf16.mxu0 0
    %525 = vmatmul.mubr.bf16.gmra.mrb[0].mxu0 %v359
    %v526 = vpop.f32.mrb[0].mxu0
    %v527 = vadd.f32 0.0, %v526
    %v528 = vpop.f32.mrb[0].mxu0
    %v529 = vpop.f32.mrb[0].mxu0
    %v530 = vadd.f32 0.0, %v529
    %v531 = vpop.f32.mrb[0].mxu0
    %532 = vmatprep.mubr.bf16.mxu0 0
    %533 = vmatmul.mubr.bf16.gmra.mrb[0].mxu0 %v360
    %v534 = vpop.f32.mrb[0].mxu0
    %v535 = vadd.f32 0.0, %v534
    %v536 = vpop.f32.mrb[0].mxu0
    %v537 = vpop.f32.mrb[0].mxu0
    %v538 = vadd.f32 0.0, %v537
    %v539 = vpop.f32.mrb[0].mxu0
    %540 = vmatprep.mubr.bf16.mxu0 0
    %541 = vmatmul.mubr.bf16.gmra.mrb[0].mxu0 %v361
    %v542 = vpop.f32.mrb[0].mxu0
    %v543 = vadd.f32 0.0, %v542
    %v544 = vpop.f32.mrb[0].mxu0
    %v545 = vpop.f32.mrb[0].mxu0
    %v546 = vadd.f32 0.0, %v545
    %v547 = vpop.f32.mrb[0].mxu0
    %548 = vmatprep.mubr.bf16.mxu0 0
    %549 = vmatmul.mubr.bf16.gmra.mrb[0].mxu0 %v362
    %v550 = vpop.f32.mrb[0].mxu0
    %v551 = vadd.f32 0.0, %v550
    %v552 = vpop.f32.mrb[0].mxu0
    %v553 = vpop.f32.mrb[0].mxu0
    %v554 = vadd.f32 0.0, %v553
    %v555 = vpop.f32.mrb[0].mxu0
    %556 = vmatprep.mubr.bf16.mxu0 0
    %557 = vmatmul.mubr.bf16.gmra.mrb[0].mxu0 %v363
    %v558 = vpop.f32.mrb[0].mxu0
    %v559 = vadd.f32 0.0, %v558
    %v560 = vpop.f32.mrb[0].mxu0
    %v561 = vpop.f32.mrb[0].mxu0
    %v562 = vadd.f32 0.0, %v561
    %v563 = vpop.f32.mrb[0].mxu0
    %564 = vmatprep.mubr.bf16.mxu0 0
    %565 = vmatmul.mubr.bf16.gmra.mrb[0].mxu0 %v364
    %v566 = vpop.f32.mrb[0].mxu0
    %v567 = vadd.f32 0.0, %v566
    %v568 = vpop.f32.mrb[0].mxu0
    %v569 = vpop.f32.mrb[0].mxu0
    %v570 = vadd.f32 0.0, %v569
    %v571 = vpop.f32.mrb[0].mxu0
    %572 = vmatprep.mubr.bf16.mxu0 0
    %573 = vmatmul.mubr.bf16.gmra.mrb[0].mxu0 %v365
    %v574 = vpop.f32.mrb[0].mxu0
    %v575 = vadd.f32 0.0, %v574
    %v576 = vpop.f32.mrb[0].mxu0
    %v577 = vpop.f32.mrb[0].mxu0
    %v578 = vadd.f32 0.0, %v577
    %v579 = vpop.f32.mrb[0].mxu0
    %580 = vmatprep.mubr.bf16.mxu0 0
    %581 = vmatmul.mubr.bf16.gmra.mrb[0].mxu0 %v366
    %v582 = vpop.f32.mrb[0].mxu0
    %v583 = vadd.f32 0.0, %v582
    %v584 = vpop.f32.mrb[0].mxu0
    %v585 = vpop.f32.mrb[0].mxu0
    %v586 = vadd.f32 0.0, %v585
    %v587 = vpop.f32.mrb[0].mxu0
    %588 = vmatprep.mubr.bf16.mxu0 0
    %589 = vmatmul.mubr.bf16.gmra.mrb[0].mxu0 %v367
    %v590 = vpop.f32.mrb[0].mxu0
    %v591 = vadd.f32 0.0, %v590
    %v592 = vpop.f32.mrb[0].mxu0
    %v593 = vpop.f32.mrb[0].mxu0
    %v594 = vadd.f32 0.0, %v593
    %v595 = vpop.f32.mrb[0].mxu0
    %596 = vmatprep.mubr.bf16.mxu0 0
    %597 = vmatmul.mubr.bf16.gmra.mrb[0].mxu0 %v368
    %v598 = vpop.f32.mrb[0].mxu0
    %v599 = vadd.f32 0.0, %v598
    %v600 = vpop.f32.mrb[0].mxu0
    %v601 = vpop.f32.mrb[0].mxu0
    %v602 = vadd.f32 0.0, %v601
    %v603 = vpop.f32.mrb[0].mxu0
    %604 = vmatprep.mubr.bf16.mxu0 0
    %605 = vmatmul.mubr.bf16.gmra.mrb[0].mxu0 %v369
    %v606 = vpop.f32.mrb[0].mxu0
    %v607 = vadd.f32 0.0, %v606
    %v608 = vpop.f32.mrb[0].mxu0
    %v609 = vpop.f32.mrb[0].mxu0
    %v610 = vadd.f32 0.0, %v609
    %v611 = vpop.f32.mrb[0].mxu0
    %612 = vmatprep.mubr.bf16.mxu0 0
    %613 = vmatmul.mubr.bf16.gmra.mrb[0].mxu0 %v370
    %v614 = vpop.f32.mrb[0].mxu0
    %v615 = vadd.f32 0.0, %v614
    %v616 = vpop.f32.mrb[0].mxu0
    %v617 = vpop.f32.mrb[0].mxu0
    %v618 = vadd.f32 0.0, %v617
    %v619 = vpop.f32.mrb[0].mxu0
    %620 = vmatprep.mubr.bf16.mxu0 0
    %621 = vmatmul.mubr.bf16.gmra.mrb[0].mxu0 %v371
    %v622 = vpop.f32.mrb[0].mxu0
    %v623 = vadd.f32 0.0, %v622
    %v624 = vpop.f32.mrb[0].mxu0
    %v625 = vpop.f32.mrb[0].mxu0
    %v626 = vadd.f32 0.0, %v625
    %v627 = vpop.f32.mrb[0].mxu0
    %628 = vmatprep.mubr.bf16.mxu0 0
    %629 = vmatmul.mubr.bf16.gmra.mrb[0].mxu0 %v372
    %v630 = vpop.f32.mrb[0].mxu0
    %v631 = vadd.f32 0.0, %v630
    %v632 = vpop.f32.mrb[0].mxu0
    %v633 = vpop.f32.mrb[0].mxu0
    %v634 = vadd.f32 0.0, %v633
    %v635 = vpop.f32.mrb[0].mxu0
    %636 = vmatprep.mubr.bf16.mxu0 0
    %637 = vmatmul.mubr.bf16.gmra.mrb[0].mxu0 %v373
    %v638 = vpop.f32.mrb[0].mxu0
    %v639 = vadd.f32 0.0, %v638
    %v640 = vpop.f32.mrb[0].mxu0
    %v641 = vpop.f32.mrb[0].mxu0
    %v642 = vadd.f32 0.0, %v641
    %v643 = vpop.f32.mrb[0].mxu0
    %644 = vmatprep.mubr.bf16.mxu0 0
    %645 = vmatmul.mubr.bf16.gmra.mrb[0].mxu0 %v374
    %v646 = vpop.f32.mrb[0].mxu0
    %v647 = vadd.f32 0.0, %v646
    %v648 = vpop.f32.mrb[0].mxu0
    %v649 = vpop.f32.mrb[0].mxu0
    %v650 = vadd.f32 0.0, %v649
    %v651 = vpop.f32.mrb[0].mxu0
    %652 = vmatprep.mubr.bf16.mxu0 0
    %653 = vmatmul.mubr.bf16.gmra.mrb[0].mxu0 %v375
    %v654 = vpop.f32.mrb[0].mxu0
    %v655 = vadd.f32 0.0, %v654
    %v656 = vpop.f32.mrb[0].mxu0
    %v657 = vpop.f32.mrb[0].mxu0
    %v658 = vadd.f32 0.0, %v657
    %v659 = vpop.f32.mrb[0].mxu0
    %660 = vmatprep.mubr.bf16.mxu0 0
    %661 = vmatmul.mubr.bf16.gmra.mrb[0].mxu0 %v376
    %v662 = vpop.f32.mrb[0].mxu0
    %v663 = vadd.f32 0.0, %v662
    %v664 = vpop.f32.mrb[0].mxu0
    %v665 = vpop.f32.mrb[0].mxu0
    %v666 = vadd.f32 0.0, %v665
    %v667 = vpop.f32.mrb[0].mxu0
    %668 = vmatprep.mubr.bf16.mxu0 0
    %669 = vmatmul.mubr.bf16.gmra.mrb[0].mxu0 %v377
    %v670 = vpop.f32.mrb[0].mxu0
    %v671 = vadd.f32 0.0, %v670
    %v672 = vpop.f32.mrb[0].mxu0
    %v673 = vpop.f32.mrb[0].mxu0
    %v674 = vadd.f32 0.0, %v673
    %v675 = vpop.f32.mrb[0].mxu0
    %676 = vmatprep.mubr.bf16.mxu0 0
    %677 = vmatmul.mubr.bf16.gmra.mrb[0].mxu0 %v378
    %v678 = vpop.f32.mrb[0].mxu0
    %v679 = vadd.f32 0.0, %v678
    %v680 = vpop.f32.mrb[0].mxu0
    %v681 = vpop.f32.mrb[0].mxu0
    %v682 = vadd.f32 0.0, %v681
    %v683 = vpop.f32.mrb[0].mxu0
    %684 = vmatprep.mubr.bf16.mxu0 0
    %685 = vmatmul.mubr.bf16.gmra.mrb[0].mxu0 %v379
    %v686 = vpop.f32.mrb[0].mxu0
    %v687 = vadd.f32 0.0, %v686
    %v688 = vpop.f32.mrb[0].mxu0
    %v689 = vpop.f32.mrb[0].mxu0
    %v690 = vadd.f32 0.0, %v689
    %v691 = vpop.f32.mrb[0].mxu0
    %692 = vmatprep.mubr.bf16.mxu0 0
    %693 = vmatmul.mubr.bf16.gmra.mrb[0].mxu0 %v380
    %v694 = vpop.f32.mrb[0].mxu0
    %v695 = vadd.f32 0.0, %v694
    %v696 = vpop.f32.mrb[0].mxu0
    %v697 = vpop.f32.mrb[0].mxu0
    %v698 = vadd.f32 0.0, %v697
    %v699 = vpop.f32.mrb[0].mxu0
    %700 = vmatprep.mubr.bf16.mxu0 0
    %701 = vmatmul.mubr.bf16.gmra.mrb[0].mxu0 %v381
    %v702 = vpop.f32.mrb[0].mxu0
    %v703 = vadd.f32 0.0, %v702
    %v704 = vpop.f32.mrb[0].mxu0
    %v705 = vpop.f32.mrb[0].mxu0
    %v706 = vadd.f32 0.0, %v705
    %v707 = vpop.f32.mrb[0].mxu0
    %708 = vmatprep.mubr.bf16.mxu0 0
    %709 = vmatmul.mubr.bf16.gmra.mrb[0].mxu0 %v382
    %v710 = vpop.f32.mrb[0].mxu0
    %v711 = vadd.f32 0.0, %v710
    %v712 = vpop.f32.mrb[0].mxu0
    %v713 = vpop.f32.mrb[0].mxu0
    %v714 = vadd.f32 0.0, %v713
    %v715 = vpop.f32.mrb[0].mxu0
    %716 = vmatprep.mubr.bf16.mxu0 0
    %717 = vmatmul.mubr.bf16.gmra.mrb[0].mxu0 %v383
    %v718 = vpop.f32.mrb[0].mxu0
    %v719 = vadd.f32 0.0, %v718
    %v720 = vpop.f32.mrb[0].mxu0
    %v721 = vpop.f32.mrb[0].mxu0
    %v722 = vadd.f32 0.0, %v721
    %v723 = vpop.f32.mrb[0].mxu0
    %724 = vmatprep.mubr.bf16.mxu0 0
    %725 = vmatmul.mubr.bf16.gmra.mrb[0].mxu0 %v384
    %v726 = vpop.f32.mrb[0].mxu0
    %v727 = vadd.f32 0.0, %v726
    %v728 = vpop.f32.mrb[0].mxu0
    %v729 = vpop.f32.mrb[0].mxu0
    %v730 = vadd.f32 0.0, %v729
    %v731 = vpop.f32.mrb[0].mxu0
    %732 = vmatprep.mubr.bf16.mxu0 0
    %733 = vmatmul.mubr.bf16.gmra.mrb[0].mxu0 %v385
    %v734 = vpop.f32.mrb[0].mxu0
    %v735 = vadd.f32 0.0, %v734
    %v736 = vpop.f32.mrb[0].mxu0
    %v737 = vpop.f32.mrb[0].mxu0
    %v738 = vadd.f32 0.0, %v737
    %v739 = vpop.f32.mrb[0].mxu0
    %740 = vmatprep.mubr.bf16.mxu0 0
    %741 = vmatmul.mubr.bf16.gmra.mrb[0].mxu0 %v386
    %v742 = vpop.f32.mrb[0].mxu0
    %v743 = vadd.f32 0.0, %v742
    %v744 = vpop.f32.mrb[0].mxu0
    %v745 = vpop.f32.mrb[0].mxu0
    %v746 = vadd.f32 0.0, %v745
    %v747 = vpop.f32.mrb[0].mxu0
    %748 = vmatprep.mubr.bf16.mxu0 0
    %749 = vmatmul.mubr.bf16.gmra.mrb[0].mxu0 %v387
    %v750 = vpop.f32.mrb[0].mxu0
    %v751 = vadd.f32 0.0, %v750
    %v752 = vpop.f32.mrb[0].mxu0
    %v753 = vpop.f32.mrb[0].mxu0
    %v754 = vadd.f32 0.0, %v753
    %v755 = vpop.f32.mrb[0].mxu0
    %756 = vdwg.mxu0
    %v757 = vadd.f32 %v84, %v503
    %v758 = vadd.f32 %v85, %v506
    %v759 = vadd.f32 %v86, %v511
    %v760 = vadd.f32 %v87, %v514
    %v761 = vadd.f32 %v88, %v519
    %v762 = vadd.f32 %v89, %v522
    %v763 = vadd.f32 %v90, %v527
    %v764 = vadd.f32 %v91, %v530
    %v765 = vadd.f32 %v92, %v535
    %v766 = vadd.f32 %v93, %v538
    %v767 = vadd.f32 %v94, %v543
    %v768 = vadd.f32 %v95, %v546
    %v769 = vadd.f32 %v96, %v551
    %v770 = vadd.f32 %v97, %v554
    %v771 = vadd.f32 %v98, %v559
    %v772 = vadd.f32 %v99, %v562
    %v773 = vadd.f32 %v100, %v567
    %v774 = vadd.f32 %v101, %v570
    %v775 = vadd.f32 %v102, %v575
    %v776 = vadd.f32 %v103, %v578
    %v777 = vadd.f32 %v104, %v583
    %v778 = vadd.f32 %v105, %v586
    %v779 = vadd.f32 %v106, %v591
    %v780 = vadd.f32 %v107, %v594
    %v781 = vadd.f32 %v108, %v599
    %v782 = vadd.f32 %v109, %v602
    %v783 = vadd.f32 %v110, %v607
    %v784 = vadd.f32 %v111, %v610
    %v785 = vadd.f32 %v112, %v615
    %v786 = vadd.f32 %v113, %v618
    %v787 = vadd.f32 %v114, %v623
    %v788 = vadd.f32 %v115, %v626
    %v789 = vadd.f32 %v116, %v631
    %v790 = vadd.f32 %v117, %v634
    %v791 = vadd.f32 %v118, %v639
    %v792 = vadd.f32 %v119, %v642
    %v793 = vadd.f32 %v120, %v647
    %v794 = vadd.f32 %v121, %v650
    %v795 = vadd.f32 %v122, %v655
    %v796 = vadd.f32 %v123, %v658
    %v797 = vadd.f32 %v124, %v663
    %v798 = vadd.f32 %v125, %v666
    %v799 = vadd.f32 %v126, %v671
    %v800 = vadd.f32 %v127, %v674
    %v801 = vadd.f32 %v128, %v679
    %v802 = vadd.f32 %v129, %v682
    %v803 = vadd.f32 %v130, %v687
    %v804 = vadd.f32 %v131, %v690
    %v805 = vadd.f32 %v132, %v695
    %v806 = vadd.f32 %v133, %v698
    %v807 = vadd.f32 %v134, %v703
    %v808 = vadd.f32 %v135, %v706
    %v809 = vadd.f32 %v136, %v711
    %v810 = vadd.f32 %v137, %v714
    %v811 = vadd.f32 %v138, %v719
    %v812 = vadd.f32 %v139, %v722
    %v813 = vadd.f32 %v140, %v727
    %v814 = vadd.f32 %v141, %v730
    %v815 = vadd.f32 %v142, %v735
    %v816 = vadd.f32 %v143, %v738
    %v817 = vadd.f32 %v144, %v743
    %v818 = vadd.f32 %v145, %v746
    %v819 = vadd.f32 %v146, %v751
    %v820 = vadd.f32 %v147, %v754
    %821 = vst [vmem:[#allocation2] sm:$0xff] %v757
    %822 = vst [vmem:[#allocation2 + $0x8] sm:$0xff] %v758
    %823 = vst [vmem:[#allocation2 + $0x10] sm:$0xff] %v759
    %824 = vst [vmem:[#allocation2 + $0x18] sm:$0xff] %v760
    %825 = vst [vmem:[#allocation2 + $0x20] sm:$0xff] %v761
    %826 = vst [vmem:[#allocation2 + $0x28] sm:$0xff] %v762
    %827 = vst [vmem:[#allocation2 + $0x30] sm:$0xff] %v763
    %828 = vst [vmem:[#allocation2 + $0x38] sm:$0xff] %v764
    %829 = vst [vmem:[#allocation2 + $0x40] sm:$0xff] %v765
    %830 = vst [vmem:[#allocation2 + $0x48] sm:$0xff] %v766
    %831 = vst [vmem:[#allocation2 + $0x50] sm:$0xff] %v767
    %832 = vst [vmem:[#allocation2 + $0x58] sm:$0xff] %v768
    %833 = vst [vmem:[#allocation2 + $0x60] sm:$0xff] %v769
    %834 = vst [vmem:[#allocation2 + $0x68] sm:$0xff] %v770
    %835 = vst [vmem:[#allocation2 + $0x70] sm:$0xff] %v771
    %836 = vst [vmem:[#allocation2 + $0x78] sm:$0xff] %v772
    %837 = vst [vmem:[#allocation2 + $0x80] sm:$0xff] %v773
    %838 = vst [vmem:[#allocation2 + $0x88] sm:$0xff] %v774
    %839 = vst [vmem:[#allocation2 + $0x90] sm:$0xff] %v775
    %840 = vst [vmem:[#allocation2 + $0x98] sm:$0xff] %v776
    %841 = vst [vmem:[#allocation2 + $0xa0] sm:$0xff] %v777
    %842 = vst [vmem:[#allocation2 + $0xa8] sm:$0xff] %v778
    %843 = vst [vmem:[#allocation2 + $0xb0] sm:$0xff] %v779
    %844 = vst [vmem:[#allocation2 + $0xb8] sm:$0xff] %v780
    %845 = vst [vmem:[#allocation2 + $0xc0] sm:$0xff] %v781
    %846 = vst [vmem:[#allocation2 + $0xc8] sm:$0xff] %v782
    %847 = vst [vmem:[#allocation2 + $0xd0] sm:$0xff] %v783
    %848 = vst [vmem:[#allocation2 + $0xd8] sm:$0xff] %v784
    %849 = vst [vmem:[#allocation2 + $0xe0] sm:$0xff] %v785
    %850 = vst [vmem:[#allocation2 + $0xe8] sm:$0xff] %v786
    %851 = vst [vmem:[#allocation2 + $0xf0] sm:$0xff] %v787
    %852 = vst [vmem:[#allocation2 + $0xf8] sm:$0xff] %v788
    %853 = vst [vmem:[#allocation2 + $0x100] sm:$0xff] %v789
    %854 = vst [vmem:[#allocation2 + $0x108] sm:$0xff] %v790
    %855 = vst [vmem:[#allocation2 + $0x110] sm:$0xff] %v791
    %856 = vst [vmem:[#allocation2 + $0x118] sm:$0xff] %v792
    %857 = vst [vmem:[#allocation2 + $0x120] sm:$0xff] %v793
    %858 = vst [vmem:[#allocation2 + $0x128] sm:$0xff] %v794
    %859 = vst [vmem:[#allocation2 + $0x130] sm:$0xff] %v795
    %860 = vst [vmem:[#allocation2 + $0x138] sm:$0xff] %v796
    %861 = vst [vmem:[#allocation2 + $0x140] sm:$0xff] %v797
    %862 = vst [vmem:[#allocation2 + $0x148] sm:$0xff] %v798
    %863 = vst [vmem:[#allocation2 + $0x150] sm:$0xff] %v799
    %864 = vst [vmem:[#allocation2 + $0x158] sm:$0xff] %v800
    %865 = vst [vmem:[#allocation2 + $0x160] sm:$0xff] %v801
    %866 = vst [vmem:[#allocation2 + $0x168] sm:$0xff] %v802
    %867 = vst [vmem:[#allocation2 + $0x170] sm:$0xff] %v803
    %868 = vst [vmem:[#allocation2 + $0x178] sm:$0xff] %v804
    %869 = vst [vmem:[#allocation2 + $0x180] sm:$0xff] %v805
    %870 = vst [vmem:[#allocation2 + $0x188] sm:$0xff] %v806
    %871 = vst [vmem:[#allocation2 + $0x190] sm:$0xff] %v807
    %872 = vst [vmem:[#allocation2 + $0x198] sm:$0xff] %v808
    %873 = vst [vmem:[#allocation2 + $0x1a0] sm:$0xff] %v809
    %874 = vst [vmem:[#allocation2 + $0x1a8] sm:$0xff] %v810
    %875 = vst [vmem:[#allocation2 + $0x1b0] sm:$0xff] %v811
    %876 = vst [vmem:[#allocation2 + $0x1b8] sm:$0xff] %v812
    %877 = vst [vmem:[#allocation2 + $0x1c0] sm:$0xff] %v813
    %878 = vst [vmem:[#allocation2 + $0x1c8] sm:$0xff] %v814
    %879 = vst [vmem:[#allocation2 + $0x1d0] sm:$0xff] %v815
    %880 = vst [vmem:[#allocation2 + $0x1d8] sm:$0xff] %v816
    %881 = vst [vmem:[#allocation2 + $0x1e0] sm:$0xff] %v817
    %882 = vst [vmem:[#allocation2 + $0x1e8] sm:$0xff] %v818
    %883 = vst [vmem:[#allocation2 + $0x1f0] sm:$0xff] %v819
    %884 = vst [vmem:[#allocation2 + $0x1f8] sm:$0xff] %v820
    // Predicated region
    $region18: #{self_attention_forward.5} parent=1 // pred_check
      %p885 = pneg %p16
    $region19: #{self_attention_forward.5} parent=1 // pred_check_branch
      %887 = sbr.rel (%p885) target = $region21
    $region20: #{self_attention_forward.5} parent=1 // pred_region
      %v888 = vld [vmem:[#allocation2] sm:$0xff]
      %v889 = vld [vmem:[#allocation2 + $0x8] sm:$0xff]
      %v890 = vld [vmem:[#allocation2 + $0x10] sm:$0xff]
      %v891 = vld [vmem:[#allocation2 + $0x18] sm:$0xff]
      %v892 = vld [vmem:[#allocation2 + $0x20] sm:$0xff]
      %v893 = vld [vmem:[#allocation2 + $0x28] sm:$0xff]
      %v894 = vld [vmem:[#allocation2 + $0x30] sm:$0xff]
      %v895 = vld [vmem:[#allocation2 + $0x38] sm:$0xff]
      %v896 = vld [vmem:[#allocation2 + $0x40] sm:$0xff]
      %v897 = vld [vmem:[#allocation2 + $0x48] sm:$0xff]
      %v898 = vld [vmem:[#allocation2 + $0x50] sm:$0xff]
      %v899 = vld [vmem:[#allocation2 + $0x58] sm:$0xff]
      %v900 = vld [vmem:[#allocation2 + $0x60] sm:$0xff]
      %v901 = vld [vmem:[#allocation2 + $0x68] sm:$0xff]
      %v902 = vld [vmem:[#allocation2 + $0x70] sm:$0xff]
      %v903 = vld [vmem:[#allocation2 + $0x78] sm:$0xff]
      %v904 = vld [vmem:[#allocation2 + $0x80] sm:$0xff]
      %v905 = vld [vmem:[#allocation2 + $0x88] sm:$0xff]
      %v906 = vld [vmem:[#allocation2 + $0x90] sm:$0xff]
      %v907 = vld [vmem:[#allocation2 + $0x98] sm:$0xff]
      %v908 = vld [vmem:[#allocation2 + $0xa0] sm:$0xff]
      %v909 = vld [vmem:[#allocation2 + $0xa8] sm:$0xff]
      %v910 = vld [vmem:[#allocation2 + $0xb0] sm:$0xff]
      %v911 = vld [vmem:[#allocation2 + $0xb8] sm:$0xff]
      %v912 = vld [vmem:[#allocation2 + $0xc0] sm:$0xff]
      %v913 = vld [vmem:[#allocation2 + $0xc8] sm:$0xff]
      %v914 = vld [vmem:[#allocation2 + $0xd0] sm:$0xff]
      %v915 = vld [vmem:[#allocation2 + $0xd8] sm:$0xff]
      %v916 = vld [vmem:[#allocation2 + $0xe0] sm:$0xff]
      %v917 = vld [vmem:[#allocation2 + $0xe8] sm:$0xff]
      %v918 = vld [vmem:[#allocation2 + $0xf0] sm:$0xff]
      %v919 = vld [vmem:[#allocation2 + $0xf8] sm:$0xff]
      %v920 = vld [vmem:[#allocation2 + $0x100] sm:$0xff]
      %v921 = vld [vmem:[#allocation2 + $0x108] sm:$0xff]
      %v922 = vld [vmem:[#allocation2 + $0x110] sm:$0xff]
      %v923 = vld [vmem:[#allocation2 + $0x118] sm:$0xff]
      %v924 = vld [vmem:[#allocation2 + $0x120] sm:$0xff]
      %v925 = vld [vmem:[#allocation2 + $0x128] sm:$0xff]
      %v926 = vld [vmem:[#allocation2 + $0x130] sm:$0xff]
      %v927 = vld [vmem:[#allocation2 + $0x138] sm:$0xff]
      %v928 = vld [vmem:[#allocation2 + $0x140] sm:$0xff]
      %v929 = vld [vmem:[#allocation2 + $0x148] sm:$0xff]
      %v930 = vld [vmem:[#allocation2 + $0x150] sm:$0xff]
      %v931 = vld [vmem:[#allocation2 + $0x158] sm:$0xff]
      %v932 = vld [vmem:[#allocation2 + $0x160] sm:$0xff]
      %v933 = vld [vmem:[#allocation2 + $0x168] sm:$0xff]
      %v934 = vld [vmem:[#allocation2 + $0x170] sm:$0xff]
      %v935 = vld [vmem:[#allocation2 + $0x178] sm:$0xff]
      %v936 = vld [vmem:[#allocation2 + $0x180] sm:$0xff]
      %v937 = vld [vmem:[#allocation2 + $0x188] sm:$0xff]
      %v938 = vld [vmem:[#allocation2 + $0x190] sm:$0xff]
      %v939 = vld [vmem:[#allocation2 + $0x198] sm:$0xff]
      %v940 = vld [vmem:[#allocation2 + $0x1a0] sm:$0xff]
      %v941 = vld [vmem:[#allocation2 + $0x1a8] sm:$0xff]
      %v942 = vld [vmem:[#allocation2 + $0x1b0] sm:$0xff]
      %v943 = vld [vmem:[#allocation2 + $0x1b8] sm:$0xff]
      %v944 = vld [vmem:[#allocation2 + $0x1c0] sm:$0xff]
      %v945 = vld [vmem:[#allocation2 + $0x1c8] sm:$0xff]
      %v946 = vld [vmem:[#allocation2 + $0x1d0] sm:$0xff]
      %v947 = vld [vmem:[#allocation2 + $0x1d8] sm:$0xff]
      %v948 = vld [vmem:[#allocation2 + $0x1e0] sm:$0xff]
      %v949 = vld [vmem:[#allocation2 + $0x1e8] sm:$0xff]
      %v950 = vld [vmem:[#allocation2 + $0x1f0] sm:$0xff]
      %v951 = vld [vmem:[#allocation2 + $0x1f8] sm:$0xff]
      %v952 = vld [vmem:[%s2] sm:$0x1]
      %v954 = vlaneseq
      %v955 = vshrl.u32 %v954, 7
      %v956 = vsub.s32 0, %v955
      %v957 = vrot.slane %v952, %v956
      %v959 = vadd.f32 %v888, %v957
      %v960 = vadd.f32 %v889, %v957
      %v961 = vadd.f32 %v890, %v957
      %v962 = vadd.f32 %v891, %v957
      %v963 = vadd.f32 %v892, %v957
      %v964 = vadd.f32 %v893, %v957
      %v965 = vadd.f32 %v894, %v957
      %v966 = vadd.f32 %v895, %v957
      %v967 = vadd.f32 %v896, %v957
      %v968 = vadd.f32 %v897, %v957
      %v969 = vadd.f32 %v898, %v957
      %v970 = vadd.f32 %v899, %v957
      %v971 = vadd.f32 %v900, %v957
      %v972 = vadd.f32 %v901, %v957
      %v973 = vadd.f32 %v902, %v957
      %v974 = vadd.f32 %v903, %v957
      %v975 = vadd.f32 %v904, %v957
      %v976 = vadd.f32 %v905, %v957
      %v977 = vadd.f32 %v906, %v957
      %v978 = vadd.f32 %v907, %v957
      %v979 = vadd.f32 %v908, %v957
      %v980 = vadd.f32 %v909, %v957
      %v981 = vadd.f32 %v910, %v957
      %v982 = vadd.f32 %v911, %v957
      %v983 = vadd.f32 %v912, %v957
      %v984 = vadd.f32 %v913, %v957
      %v985 = vadd.f32 %v914, %v957
      %v986 = vadd.f32 %v915, %v957
      %v987 = vadd.f32 %v916, %v957
      %v988 = vadd.f32 %v917, %v957
      %v989 = vadd.f32 %v918, %v957
      %v990 = vadd.f32 %v919, %v957
      %v991 = vadd.f32 %v920, %v957
      %v992 = vadd.f32 %v921, %v957
      %v993 = vadd.f32 %v922, %v957
      %v994 = vadd.f32 %v923, %v957
      %v995 = vadd.f32 %v924, %v957
      %v996 = vadd.f32 %v925, %v957
      %v997 = vadd.f32 %v926, %v957
      %v998 = vadd.f32 %v927, %v957
      %v999 = vadd.f32 %v928, %v957
      %v1000 = vadd.f32 %v929, %v957
      %v1001 = vadd.f32 %v930, %v957
      %v1002 = vadd.f32 %v931, %v957
      %v1003 = vadd.f32 %v932, %v957
      %v1004 = vadd.f32 %v933, %v957
      %v1005 = vadd.f32 %v934, %v957
      %v1006 = vadd.f32 %v935, %v957
      %v1007 = vadd.f32 %v936, %v957
      %v1008 = vadd.f32 %v937, %v957
      %v1009 = vadd.f32 %v938, %v957
      %v1010 = vadd.f32 %v939, %v957
      %v1011 = vadd.f32 %v940, %v957
      %v1012 = vadd.f32 %v941, %v957
      %v1013 = vadd.f32 %v942, %v957
      %v1014 = vadd.f32 %v943, %v957
      %v1015 = vadd.f32 %v944, %v957
      %v1016 = vadd.f32 %v945, %v957
      %v1017 = vadd.f32 %v946, %v957
      %v1018 = vadd.f32 %v947, %v957
      %v1019 = vadd.f32 %v948, %v957
      %v1020 = vadd.f32 %v949, %v957
      %v1021 = vadd.f32 %v950, %v957
      %v1022 = vadd.f32 %v951, %v957
      %1023 = vst [vmem:[#allocation3] sm:$0xff] %v959
      %1024 = vst [vmem:[#allocation3 + $0x8] sm:$0xff] %v960
      %1025 = vst [vmem:[#allocation3 + $0x10] sm:$0xff] %v961
      %1026 = vst [vmem:[#allocation3 + $0x18] sm:$0xff] %v962
      %1027 = vst [vmem:[#allocation3 + $0x20] sm:$0xff] %v963
      %1028 = vst [vmem:[#allocation3 + $0x28] sm:$0xff] %v964
      %1029 = vst [vmem:[#allocation3 + $0x30] sm:$0xff] %v965
      %1030 = vst [vmem:[#allocation3 + $0x38] sm:$0xff] %v966
      %1031 = vst [vmem:[#allocation3 + $0x40] sm:$0xff] %v967
      %1032 = vst [vmem:[#allocation3 + $0x48] sm:$0xff] %v968
      %1033 = vst [vmem:[#allocation3 + $0x50] sm:$0xff] %v969
      %1034 = vst [vmem:[#allocation3 + $0x58] sm:$0xff] %v970
      %1035 = vst [vmem:[#allocation3 + $0x60] sm:$0xff] %v971
      %1036 = vst [vmem:[#allocation3 + $0x68] sm:$0xff] %v972
      %1037 = vst [vmem:[#allocation3 + $0x70] sm:$0xff] %v973
      %1038 = vst [vmem:[#allocation3 + $0x78] sm:$0xff] %v974
      %1039 = vst [vmem:[#allocation3 + $0x80] sm:$0xff] %v975
      %1040 = vst [vmem:[#allocation3 + $0x88] sm:$0xff] %v976
      %1041 = vst [vmem:[#allocation3 + $0x90] sm:$0xff] %v977
      %1042 = vst [vmem:[#allocation3 + $0x98] sm:$0xff] %v978
      %1043 = vst [vmem:[#allocation3 + $0xa0] sm:$0xff] %v979
      %1044 = vst [vmem:[#allocation3 + $0xa8] sm:$0xff] %v980
      %1045 = vst [vmem:[#allocation3 + $0xb0] sm:$0xff] %v981
      %1046 = vst [vmem:[#allocation3 + $0xb8] sm:$0xff] %v982
      %1047 = vst [vmem:[#allocation3 + $0xc0] sm:$0xff] %v983
      %1048 = vst [vmem:[#allocation3 + $0xc8] sm:$0xff] %v984
      %1049 = vst [vmem:[#allocation3 + $0xd0] sm:$0xff] %v985
      %1050 = vst [vmem:[#allocation3 + $0xd8] sm:$0xff] %v986
      %1051 = vst [vmem:[#allocation3 + $0xe0] sm:$0xff] %v987
      %1052 = vst [vmem:[#allocation3 + $0xe8] sm:$0xff] %v988
      %1053 = vst [vmem:[#allocation3 + $0xf0] sm:$0xff] %v989
      %1054 = vst [vmem:[#allocation3 + $0xf8] sm:$0xff] %v990
      %1055 = vst [vmem:[#allocation3 + $0x100] sm:$0xff] %v991
      %1056 = vst [vmem:[#allocation3 + $0x108] sm:$0xff] %v992
      %1057 = vst [vmem:[#allocation3 + $0x110] sm:$0xff] %v993
      %1058 = vst [vmem:[#allocation3 + $0x118] sm:$0xff] %v994
      %1059 = vst [vmem:[#allocation3 + $0x120] sm:$0xff] %v995
      %1060 = vst [vmem:[#allocation3 + $0x128] sm:$0xff] %v996
      %1061 = vst [vmem:[#allocation3 + $0x130] sm:$0xff] %v997
      %1062 = vst [vmem:[#allocation3 + $0x138] sm:$0xff] %v998
      %1063 = vst [vmem:[#allocation3 + $0x140] sm:$0xff] %v999
      %1064 = vst [vmem:[#allocation3 + $0x148] sm:$0xff] %v1000
      %1065 = vst [vmem:[#allocation3 + $0x150] sm:$0xff] %v1001
      %1066 = vst [vmem:[#allocation3 + $0x158] sm:$0xff] %v1002
      %1067 = vst [vmem:[#allocation3 + $0x160] sm:$0xff] %v1003
      %1068 = vst [vmem:[#allocation3 + $0x168] sm:$0xff] %v1004
      %1069 = vst [vmem:[#allocation3 + $0x170] sm:$0xff] %v1005
      %1070 = vst [vmem:[#allocation3 + $0x178] sm:$0xff] %v1006
      %1071 = vst [vmem:[#allocation3 + $0x180] sm:$0xff] %v1007
      %1072 = vst [vmem:[#allocation3 + $0x188] sm:$0xff] %v1008
      %1073 = vst [vmem:[#allocation3 + $0x190] sm:$0xff] %v1009
      %1074 = vst [vmem:[#allocation3 + $0x198] sm:$0xff] %v1010
      %1075 = vst [vmem:[#allocation3 + $0x1a0] sm:$0xff] %v1011
      %1076 = vst [vmem:[#allocation3 + $0x1a8] sm:$0xff] %v1012
      %1077 = vst [vmem:[#allocation3 + $0x1b0] sm:$0xff] %v1013
      %1078 = vst [vmem:[#allocation3 + $0x1b8] sm:$0xff] %v1014
      %1079 = vst [vmem:[#allocation3 + $0x1c0] sm:$0xff] %v1015
      %1080 = vst [vmem:[#allocation3 + $0x1c8] sm:$0xff] %v1016
      %1081 = vst [vmem:[#allocation3 + $0x1d0] sm:$0xff] %v1017
      %1082 = vst [vmem:[#allocation3 + $0x1d8] sm:$0xff] %v1018
      %1083 = vst [vmem:[#allocation3 + $0x1e0] sm:$0xff] %v1019
      %1084 = vst [vmem:[#allocation3 + $0x1e8] sm:$0xff] %v1020
      %1085 = vst [vmem:[#allocation3 + $0x1f0] sm:$0xff] %v1021
      %1086 = vst [vmem:[#allocation3 + $0x1f8] sm:$0xff] %v1022
    $region21: #{self_attention_forward.5} parent=1 // pred_fallthru
      _
    // Predicated region
    $region22: #{self_attention_forward.5} parent=1 // pred_check
      _
    $region23: #{self_attention_forward.5} parent=1 // pred_check_branch
      %1088 = sbr.rel (0) target = $region25
    $region24: #{self_attention_forward.5} parent=1 // pred_region
      %s1090 = ssub.s32 8192, 8192
      %1091 = vsyncadd [#allocation4], %s1090
      %s1092 = sshll.u32 [#allocation3], 4
      %s1093 = int_to_ptr.vmem [resolvable:$true] %s1092
      %1098 = dma.vmem_to_hbm [thread:$0]  %s1093, 8192, %s3, [#allocation4], 128, 128, 8
    $region25: #{self_attention_forward.5} parent=1 // pred_fallthru
      _
    // Predicated region
    $region26: #{self_attention_forward.5} parent=1 // pred_check
      _
    $region27: #{self_attention_forward.5} parent=1 // pred_check_branch
      %1100 = sbr.rel (0) target = $region29
    $region28: #{self_attention_forward.5} parent=1 // pred_region
      %1101 = dma.done [#allocation4], 8192
    $region29: #{self_attention_forward.5} parent=1 // pred_fallthru
      _
    %1102 = vsyncpa [#allocation4], 1

// kernel: self_attention_forward.3
$region0: #{self_attention_forward.3}
  #allocation0 [shape = 'u32[]', space=smem, size = 0x4, offset = 0x4, fixed_abs, tag = 'smem constant byte address 0x4 - core index']
  #allocation1 [shape = 'u32[144,128]{1,0:T(1,128)}', space=vmem, size = 0x12000, scoped, tag = 'internal scratch']
  #allocation2 [shape = 'f32[512,384]{1,0:T(8,128)}', space=vmem, size = 0xc0000, scoped, tag = 'scratch operand']
  %s0 = inlined_call_operand.vmem [shape: bf16[512,128], index: 0, kind: input, shape index: {}]
  %s1 = inlined_call_operand.vmem [shape: bf16[128,384], index: 1, kind: input, shape index: {}]
  %s2 = inlined_call_operand.vmem [shape: f32[1,384], index: 2, kind: input, shape index: {}]
  %s3 = inlined_call_operand.vmem [shape: bf16[512,384], index: 3, kind: output, shape index: {}]
  %s4 = sld [smem:[#allocation0]]
  $region30: #{self_attention_forward.3} parent=0
    _
  %s6 = ssub.s32 1, %s4
  %s7 = scalar_select 0, %s6, %s4
  // Predicated region
  $region2: #{self_attention_forward.3} parent=0 // pred_check
    _
  $region3: #{self_attention_forward.3} parent=0 // pred_check_branch
    %9 = sbr.rel (0) target = $region5
  $region4: #{self_attention_forward.3} parent=0 // pred_region
    _
  $region5: #{self_attention_forward.3} parent=0 // pred_fallthru
    _
  // Predicated region
  $region6: #{self_attention_forward.3} parent=0 // pred_check
    _
  $region7: #{self_attention_forward.3} parent=0 // pred_check_branch
    %11 = sbr.rel (0) target = $region9
  $region8: #{self_attention_forward.3} parent=0 // pred_region
    _
  $region9: #{self_attention_forward.3} parent=0 // pred_fallthru
    _
  // Predicated region
  $region10: #{self_attention_forward.3} parent=0 // pred_check
    _
  $region11: #{self_attention_forward.3} parent=0 // pred_check_branch
    %13 = sbr.rel (0) target = $region13
  $region12: #{self_attention_forward.3} parent=0 // pred_region
    _
  $region13: #{self_attention_forward.3} parent=0 // pred_fallthru
    _
  %p15 = scmp.eq.s32.totalorder 0, 0
  // Predicated region
  $region14: #{self_attention_forward.3} parent=0 // pred_check
    %p16 = pneg %p15
  $region15: #{self_attention_forward.3} parent=0 // pred_check_branch
    %18 = sbr.rel (%p16) target = $region17
  $region16: #{self_attention_forward.3} parent=0 // pred_region
    %19 = vst [vmem:[#allocation2] sm:$0xff] 0.0
    %20 = vst [vmem:[#allocation2 + $0x8] sm:$0xff] 0.0
    %21 = vst [vmem:[#allocation2 + $0x10] sm:$0xff] 0.0
    %22 = vst [vmem:[#allocation2 + $0x18] sm:$0xff] 0.0
    %23 = vst [vmem:[#allocation2 + $0x20] sm:$0xff] 0.0
    %24 = vst [vmem:[#allocation2 + $0x28] sm:$0xff] 0.0
    %25 = vst [vmem:[#allocation2 + $0x30] sm:$0xff] 0.0
    %26 = vst [vmem:[#allocation2 + $0x38] sm:$0xff] 0.0
    %27 = vst [vmem:[#allocation2 + $0x40] sm:$0xff] 0.0
    %28 = vst [vmem:[#allocation2 + $0x48] sm:$0xff] 0.0
    %29 = vst [vmem:[#allocation2 + $0x50] sm:$0xff] 0.0
    %30 = vst [vmem:[#allocation2 + $0x58] sm:$0xff] 0.0
    %31 = vst [vmem:[#allocation2 + $0x60] sm:$0xff] 0.0
    %32 = vst [vmem:[#allocation2 + $0x68] sm:$0xff] 0.0
    %33 = vst [vmem:[#allocation2 + $0x70] sm:$0xff] 0.0
    %34 = vst [vmem:[#allocation2 + $0x78] sm:$0xff] 0.0
    %35 = vst [vmem:[#allocation2 + $0x80] sm:$0xff] 0.0
    %36 = vst [vmem:[#allocation2 + $0x88] sm:$0xff] 0.0
    %37 = vst [vmem:[#allocation2 + $0x90] sm:$0xff] 0.0
    %38 = vst [vmem:[#allocation2 + $0x98] sm:$0xff] 0.0
    %39 = vst [vmem:[#allocation2 + $0xa0] sm:$0xff] 0.0
    %40 = vst [vmem:[#allocation2 + $0xa8] sm:$0xff] 0.0
    %41 = vst [vmem:[#allocation2 + $0xb0] sm:$0xff] 0.0
    %42 = vst [vmem:[#allocation2 + $0xb8] sm:$0xff] 0.0
    %43 = vst [vmem:[#allocation2 + $0xc0] sm:$0xff] 0.0
    %44 = vst [vmem:[#allocation2 + $0xc8] sm:$0xff] 0.0
    %45 = vst [vmem:[#allocation2 + $0xd0] sm:$0xff] 0.0
    %46 = vst [vmem:[#allocation2 + $0xd8] sm:$0xff] 0.0
    %47 = vst [vmem:[#allocation2 + $0xe0] sm:$0xff] 0.0
    %48 = vst [vmem:[#allocation2 + $0xe8] sm:$0xff] 0.0
    %49 = vst [vmem:[#allocation2 + $0xf0] sm:$0xff] 0.0
    %50 = vst [vmem:[#allocation2 + $0xf8] sm:$0xff] 0.0
    %51 = vst [vmem:[#allocation2 + $0x100] sm:$0xff] 0.0
    %52 = vst [vmem:[#allocation2 + $0x108] sm:$0xff] 0.0
    %53 = vst [vmem:[#allocation2 + $0x110] sm:$0xff] 0.0
    %54 = vst [vmem:[#allocation2 + $0x118] sm:$0xff] 0.0
    %55 = vst [vmem:[#allocation2 + $0x120] sm:$0xff] 0.0
    %56 = vst [vmem:[#allocation2 + $0x128] sm:$0xff] 0.0
    %57 = vst [vmem:[#allocation2 + $0x130] sm:$0xff] 0.0
    %58 = vst [vmem:[#allocation2 + $0x138] sm:$0xff] 0.0
    %59 = vst [vmem:[#allocation2 + $0x140] sm:$0xff] 0.0
    %60 = vst [vmem:[#allocation2 + $0x148] sm:$0xff] 0.0
    %61 = vst [vmem:[#allocation2 + $0x150] sm:$0xff] 0.0
    %62 = vst [vmem:[#allocation2 + $0x158] sm:$0xff] 0.0
    %63 = vst [vmem:[#allocation2 + $0x160] sm:$0xff] 0.0
    %64 = vst [vmem:[#allocation2 + $0x168] sm:$0xff] 0.0
    %65 = vst [vmem:[#allocation2 + $0x170] sm:$0xff] 0.0
    %66 = vst [vmem:[#allocation2 + $0x178] sm:$0xff] 0.0
    %67 = vst [vmem:[#allocation2 + $0x180] sm:$0xff] 0.0
    %68 = vst [vmem:[#allocation2 + $0x188] sm:$0xff] 0.0
    %69 = vst [vmem:[#allocation2 + $0x190] sm:$0xff] 0.0
    %70 = vst [vmem:[#allocation2 + $0x198] sm:$0xff] 0.0
    %71 = vst [vmem:[#allocation2 + $0x1a0] sm:$0xff] 0.0
    %72 = vst [vmem:[#allocation2 + $0x1a8] sm:$0xff] 0.0
    %73 = vst [vmem:[#allocation2 + $0x1b0] sm:$0xff] 0.0
    %74 = vst [vmem:[#allocation2 + $0x1b8] sm:$0xff] 0.0
    %75 = vst [vmem:[#allocation2 + $0x1c0] sm:$0xff] 0.0
    %76 = vst [vmem:[#allocation2 + $0x1c8] sm:$0xff] 0.0
    %77 = vst [vmem:[#allocation2 + $0x1d0] sm:$0xff] 0.0
    %78 = vst [vmem:[#allocation2 + $0x1d8] sm:$0xff] 0.0
    %79 = vst [vmem:[#allocation2 + $0x1e0] sm:$0xff] 0.0
    %80 = vst [vmem:[#allocation2 + $0x1e8] sm:$0xff] 0.0
    %81 = vst [vmem:[#allocation2 + $0x1f0] sm:$0xff] 0.0
    %82 = vst [vmem:[#allocation2 + $0x1f8] sm:$0xff] 0.0
    %83 = vst [vmem:[#allocation2 + $0x200] sm:$0xff] 0.0
    %84 = vst [vmem:[#allocation2 + $0x208] sm:$0xff] 0.0
    %85 = vst [vmem:[#allocation2 + $0x210] sm:$0xff] 0.0
    %86 = vst [vmem:[#allocation2 + $0x218] sm:$0xff] 0.0
    %87 = vst [vmem:[#allocation2 + $0x220] sm:$0xff] 0.0
    %88 = vst [vmem:[#allocation2 + $0x228] sm:$0xff] 0.0
    %89 = vst [vmem:[#allocation2 + $0x230] sm:$0xff] 0.0
    %90 = vst [vmem:[#allocation2 + $0x238] sm:$0xff] 0.0
    %91 = vst [vmem:[#allocation2 + $0x240] sm:$0xff] 0.0
    %92 = vst [vmem:[#allocation2 + $0x248] sm:$0xff] 0.0
    %93 = vst [vmem:[#allocation2 + $0x250] sm:$0xff] 0.0
    %94 = vst [vmem:[#allocation2 + $0x258] sm:$0xff] 0.0
    %95 = vst [vmem:[#allocation2 + $0x260] sm:$0xff] 0.0
    %96 = vst [vmem:[#allocation2 + $0x268] sm:$0xff] 0.0
    %97 = vst [vmem:[#allocation2 + $0x270] sm:$0xff] 0.0
    %98 = vst [vmem:[#allocation2 + $0x278] sm:$0xff] 0.0
    %99 = vst [vmem:[#allocation2 + $0x280] sm:$0xff] 0.0
    %100 = vst [vmem:[#allocation2 + $0x288] sm:$0xff] 0.0
    %101 = vst [vmem:[#allocation2 + $0x290] sm:$0xff] 0.0
    %102 = vst [vmem:[#allocation2 + $0x298] sm:$0xff] 0.0
    %103 = vst [vmem:[#allocation2 + $0x2a0] sm:$0xff] 0.0
    %104 = vst [vmem:[#allocation2 + $0x2a8] sm:$0xff] 0.0
    %105 = vst [vmem:[#allocation2 + $0x2b0] sm:$0xff] 0.0
    %106 = vst [vmem:[#allocation2 + $0x2b8] sm:$0xff] 0.0
    %107 = vst [vmem:[#allocation2 + $0x2c0] sm:$0xff] 0.0
    %108 = vst [vmem:[#allocation2 + $0x2c8] sm:$0xff] 0.0
    %109 = vst [vmem:[#allocation2 + $0x2d0] sm:$0xff] 0.0
    %110 = vst [vmem:[#allocation2 + $0x2d8] sm:$0xff] 0.0
    %111 = vst [vmem:[#allocation2 + $0x2e0] sm:$0xff] 0.0
    %112 = vst [vmem:[#allocation2 + $0x2e8] sm:$0xff] 0.0
    %113 = vst [vmem:[#allocation2 + $0x2f0] sm:$0xff] 0.0
    %114 = vst [vmem:[#allocation2 + $0x2f8] sm:$0xff] 0.0
    %115 = vst [vmem:[#allocation2 + $0x300] sm:$0xff] 0.0
    %116 = vst [vmem:[#allocation2 + $0x308] sm:$0xff] 0.0
    %117 = vst [vmem:[#allocation2 + $0x310] sm:$0xff] 0.0
    %118 = vst [vmem:[#allocation2 + $0x318] sm:$0xff] 0.0
    %119 = vst [vmem:[#allocation2 + $0x320] sm:$0xff] 0.0
    %120 = vst [vmem:[#allocation2 + $0x328] sm:$0xff] 0.0
    %121 = vst [vmem:[#allocation2 + $0x330] sm:$0xff] 0.0
    %122 = vst [vmem:[#allocation2 + $0x338] sm:$0xff] 0.0
    %123 = vst [vmem:[#allocation2 + $0x340] sm:$0xff] 0.0
    %124 = vst [vmem:[#allocation2 + $0x348] sm:$0xff] 0.0
    %125 = vst [vmem:[#allocation2 + $0x350] sm:$0xff] 0.0
    %126 = vst [vmem:[#allocation2 + $0x358] sm:$0xff] 0.0
    %127 = vst [vmem:[#allocation2 + $0x360] sm:$0xff] 0.0
    %128 = vst [vmem:[#allocation2 + $0x368] sm:$0xff] 0.0
    %129 = vst [vmem:[#allocation2 + $0x370] sm:$0xff] 0.0
    %130 = vst [vmem:[#allocation2 + $0x378] sm:$0xff] 0.0
    %131 = vst [vmem:[#allocation2 + $0x380] sm:$0xff] 0.0
    %132 = vst [vmem:[#allocation2 + $0x388] sm:$0xff] 0.0
    %133 = vst [vmem:[#allocation2 + $0x390] sm:$0xff] 0.0
    %134 = vst [vmem:[#allocation2 + $0x398] sm:$0xff] 0.0
    %135 = vst [vmem:[#allocation2 + $0x3a0] sm:$0xff] 0.0
    %136 = vst [vmem:[#allocation2 + $0x3a8] sm:$0xff] 0.0
    %137 = vst [vmem:[#allocation2 + $0x3b0] sm:$0xff] 0.0
    %138 = vst [vmem:[#allocation2 + $0x3b8] sm:$0xff] 0.0
    %139 = vst [vmem:[#allocation2 + $0x3c0] sm:$0xff] 0.0
    %140 = vst [vmem:[#allocation2 + $0x3c8] sm:$0xff] 0.0
    %141 = vst [vmem:[#allocation2 + $0x3d0] sm:$0xff] 0.0
    %142 = vst [vmem:[#allocation2 + $0x3d8] sm:$0xff] 0.0
    %143 = vst [vmem:[#allocation2 + $0x3e0] sm:$0xff] 0.0
    %144 = vst [vmem:[#allocation2 + $0x3e8] sm:$0xff] 0.0
    %145 = vst [vmem:[#allocation2 + $0x3f0] sm:$0xff] 0.0
    %146 = vst [vmem:[#allocation2 + $0x3f8] sm:$0xff] 0.0
    %147 = vst [vmem:[#allocation2 + $0x400] sm:$0xff] 0.0
    %148 = vst [vmem:[#allocation2 + $0x408] sm:$0xff] 0.0
    %149 = vst [vmem:[#allocation2 + $0x410] sm:$0xff] 0.0
    %150 = vst [vmem:[#allocation2 + $0x418] sm:$0xff] 0.0
    %151 = vst [vmem:[#allocation2 + $0x420] sm:$0xff] 0.0
    %152 = vst [vmem:[#allocation2 + $0x428] sm:$0xff] 0.0
    %153 = vst [vmem:[#allocation2 + $0x430] sm:$0xff] 0.0
    %154 = vst [vmem:[#allocation2 + $0x438] sm:$0xff] 0.0
    %155 = vst [vmem:[#allocation2 + $0x440] sm:$0xff] 0.0
    %156 = vst [vmem:[#allocation2 + $0x448] sm:$0xff] 0.0
    %157 = vst [vmem:[#allocation2 + $0x450] sm:$0xff] 0.0
    %158 = vst [vmem:[#allocation2 + $0x458] sm:$0xff] 0.0
    %159 = vst [vmem:[#allocation2 + $0x460] sm:$0xff] 0.0
    %160 = vst [vmem:[#allocation2 + $0x468] sm:$0xff] 0.0
    %161 = vst [vmem:[#allocation2 + $0x470] sm:$0xff] 0.0
    %162 = vst [vmem:[#allocation2 + $0x478] sm:$0xff] 0.0
    %163 = vst [vmem:[#allocation2 + $0x480] sm:$0xff] 0.0
    %164 = vst [vmem:[#allocation2 + $0x488] sm:$0xff] 0.0
    %165 = vst [vmem:[#allocation2 + $0x490] sm:$0xff] 0.0
    %166 = vst [vmem:[#allocation2 + $0x498] sm:$0xff] 0.0
    %167 = vst [vmem:[#allocation2 + $0x4a0] sm:$0xff] 0.0
    %168 = vst [vmem:[#allocation2 + $0x4a8] sm:$0xff] 0.0
    %169 = vst [vmem:[#allocation2 + $0x4b0] sm:$0xff] 0.0
    %170 = vst [vmem:[#allocation2 + $0x4b8] sm:$0xff] 0.0
    %171 = vst [vmem:[#allocation2 + $0x4c0] sm:$0xff] 0.0
    %172 = vst [vmem:[#allocation2 + $0x4c8] sm:$0xff] 0.0
    %173 = vst [vmem:[#allocation2 + $0x4d0] sm:$0xff] 0.0
    %174 = vst [vmem:[#allocation2 + $0x4d8] sm:$0xff] 0.0
    %175 = vst [vmem:[#allocation2 + $0x4e0] sm:$0xff] 0.0
    %176 = vst [vmem:[#allocation2 + $0x4e8] sm:$0xff] 0.0
    %177 = vst [vmem:[#allocation2 + $0x4f0] sm:$0xff] 0.0
    %178 = vst [vmem:[#allocation2 + $0x4f8] sm:$0xff] 0.0
    %179 = vst [vmem:[#allocation2 + $0x500] sm:$0xff] 0.0
    %180 = vst [vmem:[#allocation2 + $0x508] sm:$0xff] 0.0
    %181 = vst [vmem:[#allocation2 + $0x510] sm:$0xff] 0.0
    %182 = vst [vmem:[#allocation2 + $0x518] sm:$0xff] 0.0
    %183 = vst [vmem:[#allocation2 + $0x520] sm:$0xff] 0.0
    %184 = vst [vmem:[#allocation2 + $0x528] sm:$0xff] 0.0
    %185 = vst [vmem:[#allocation2 + $0x530] sm:$0xff] 0.0
    %186 = vst [vmem:[#allocation2 + $0x538] sm:$0xff] 0.0
    %187 = vst [vmem:[#allocation2 + $0x540] sm:$0xff] 0.0
    %188 = vst [vmem:[#allocation2 + $0x548] sm:$0xff] 0.0
    %189 = vst [vmem:[#allocation2 + $0x550] sm:$0xff] 0.0
    %190 = vst [vmem:[#allocation2 + $0x558] sm:$0xff] 0.0
    %191 = vst [vmem:[#allocation2 + $0x560] sm:$0xff] 0.0
    %192 = vst [vmem:[#allocation2 + $0x568] sm:$0xff] 0.0
    %193 = vst [vmem:[#allocation2 + $0x570] sm:$0xff] 0.0
    %194 = vst [vmem:[#allocation2 + $0x578] sm:$0xff] 0.0
    %195 = vst [vmem:[#allocation2 + $0x580] sm:$0xff] 0.0
    %196 = vst [vmem:[#allocation2 + $0x588] sm:$0xff] 0.0
    %197 = vst [vmem:[#allocation2 + $0x590] sm:$0xff] 0.0
    %198 = vst [vmem:[#allocation2 + $0x598] sm:$0xff] 0.0
    %199 = vst [vmem:[#allocation2 + $0x5a0] sm:$0xff] 0.0
    %200 = vst [vmem:[#allocation2 + $0x5a8] sm:$0xff] 0.0
    %201 = vst [vmem:[#allocation2 + $0x5b0] sm:$0xff] 0.0
    %202 = vst [vmem:[#allocation2 + $0x5b8] sm:$0xff] 0.0
    %203 = vst [vmem:[#allocation2 + $0x5c0] sm:$0xff] 0.0
    %204 = vst [vmem:[#allocation2 + $0x5c8] sm:$0xff] 0.0
    %205 = vst [vmem:[#allocation2 + $0x5d0] sm:$0xff] 0.0
    %206 = vst [vmem:[#allocation2 + $0x5d8] sm:$0xff] 0.0
    %207 = vst [vmem:[#allocation2 + $0x5e0] sm:$0xff] 0.0
    %208 = vst [vmem:[#allocation2 + $0x5e8] sm:$0xff] 0.0
    %209 = vst [vmem:[#allocation2 + $0x5f0] sm:$0xff] 0.0
    %210 = vst [vmem:[#allocation2 + $0x5f8] sm:$0xff] 0.0
  $region17: #{self_attention_forward.3} parent=0 // pred_fallthru
    _
  %v211 = vld [vmem:[#allocation2] sm:$0xff]
  %v212 = vld [vmem:[#allocation2 + $0x8] sm:$0xff]
  %v213 = vld [vmem:[#allocation2 + $0x10] sm:$0xff]
  %v214 = vld [vmem:[#allocation2 + $0x18] sm:$0xff]
  %v215 = vld [vmem:[#allocation2 + $0x20] sm:$0xff]
  %v216 = vld [vmem:[#allocation2 + $0x28] sm:$0xff]
  %v217 = vld [vmem:[#allocation2 + $0x30] sm:$0xff]
  %v218 = vld [vmem:[#allocation2 + $0x38] sm:$0xff]
  %v219 = vld [vmem:[#allocation2 + $0x40] sm:$0xff]
  %v220 = vld [vmem:[#allocation2 + $0x48] sm:$0xff]
  %v221 = vld [vmem:[#allocation2 + $0x50] sm:$0xff]
  %v222 = vld [vmem:[#allocation2 + $0x58] sm:$0xff]
  %v223 = vld [vmem:[#allocation2 + $0x60] sm:$0xff]
  %v224 = vld [vmem:[#allocation2 + $0x68] sm:$0xff]
  %v225 = vld [vmem:[#allocation2 + $0x70] sm:$0xff]
  %v226 = vld [vmem:[#allocation2 + $0x78] sm:$0xff]
  %v227 = vld [vmem:[#allocation2 + $0x80] sm:$0xff]
  %v228 = vld [vmem:[#allocation2 + $0x88] sm:$0xff]
  %v229 = vld [vmem:[#allocation2 + $0x90] sm:$0xff]
  %v230 = vld [vmem:[#allocation2 + $0x98] sm:$0xff]
  %v231 = vld [vmem:[#allocation2 + $0xa0] sm:$0xff]
  %v232 = vld [vmem:[#allocation2 + $0xa8] sm:$0xff]
  %v233 = vld [vmem:[#allocation2 + $0xb0] sm:$0xff]
  %v234 = vld [vmem:[#allocation2 + $0xb8] sm:$0xff]
  %v235 = vld [vmem:[#allocation2 + $0xc0] sm:$0xff]
  %v236 = vld [vmem:[#allocation2 + $0xc8] sm:$0xff]
  %v237 = vld [vmem:[#allocation2 + $0xd0] sm:$0xff]
  %v238 = vld [vmem:[#allocation2 + $0xd8] sm:$0xff]
  %v239 = vld [vmem:[#allocation2 + $0xe0] sm:$0xff]
  %v240 = vld [vmem:[#allocation2 + $0xe8] sm:$0xff]
  %v241 = vld [vmem:[#allocation2 + $0xf0] sm:$0xff]
  %v242 = vld [vmem:[#allocation2 + $0xf8] sm:$0xff]
  %v243 = vld [vmem:[#allocation2 + $0x100] sm:$0xff]
  %v244 = vld [vmem:[#allocation2 + $0x108] sm:$0xff]
  %v245 = vld [vmem:[#allocation2 + $0x110] sm:$0xff]
  %v246 = vld [vmem:[#allocation2 + $0x118] sm:$0xff]
  %v247 = vld [vmem:[#allocation2 + $0x120] sm:$0xff]
  %v248 = vld [vmem:[#allocation2 + $0x128] sm:$0xff]
  %v249 = vld [vmem:[#allocation2 + $0x130] sm:$0xff]
  %v250 = vld [vmem:[#allocation2 + $0x138] sm:$0xff]
  %v251 = vld [vmem:[#allocation2 + $0x140] sm:$0xff]
  %v252 = vld [vmem:[#allocation2 + $0x148] sm:$0xff]
  %v253 = vld [vmem:[#allocation2 + $0x150] sm:$0xff]
  %v254 = vld [vmem:[#allocation2 + $0x158] sm:$0xff]
  %v255 = vld [vmem:[#allocation2 + $0x160] sm:$0xff]
  %v256 = vld [vmem:[#allocation2 + $0x168] sm:$0xff]
  %v257 = vld [vmem:[#allocation2 + $0x170] sm:$0xff]
  %v258 = vld [vmem:[#allocation2 + $0x178] sm:$0xff]
  %v259 = vld [vmem:[#allocation2 + $0x180] sm:$0xff]
  %v260 = vld [vmem:[#allocation2 + $0x188] sm:$0xff]
  %v261 = vld [vmem:[#allocation2 + $0x190] sm:$0xff]
  %v262 = vld [vmem:[#allocation2 + $0x198] sm:$0xff]
  %v263 = vld [vmem:[#allocation2 + $0x1a0] sm:$0xff]
  %v264 = vld [vmem:[#allocation2 + $0x1a8] sm:$0xff]
  %v265 = vld [vmem:[#allocation2 + $0x1b0] sm:$0xff]
  %v266 = vld [vmem:[#allocation2 + $0x1b8] sm:$0xff]
  %v267 = vld [vmem:[#allocation2 + $0x1c0] sm:$0xff]
  %v268 = vld [vmem:[#allocation2 + $0x1c8] sm:$0xff]
  %v269 = vld [vmem:[#allocation2 + $0x1d0] sm:$0xff]
  %v270 = vld [vmem:[#allocation2 + $0x1d8] sm:$0xff]
  %v271 = vld [vmem:[#allocation2 + $0x1e0] sm:$0xff]
  %v272 = vld [vmem:[#allocation2 + $0x1e8] sm:$0xff]
  %v273 = vld [vmem:[#allocation2 + $0x1f0] sm:$0xff]
  %v274 = vld [vmem:[#allocation2 + $0x1f8] sm:$0xff]
  %v275 = vld [vmem:[#allocation2 + $0x200] sm:$0xff]
  %v276 = vld [vmem:[#allocation2 + $0x208] sm:$0xff]
  %v277 = vld [vmem:[#allocation2 + $0x210] sm:$0xff]
  %v278 = vld [vmem:[#allocation2 + $0x218] sm:$0xff]
  %v279 = vld [vmem:[#allocation2 + $0x220] sm:$0xff]
  %v280 = vld [vmem:[#allocation2 + $0x228] sm:$0xff]
  %v281 = vld [vmem:[#allocation2 + $0x230] sm:$0xff]
  %v282 = vld [vmem:[#allocation2 + $0x238] sm:$0xff]
  %v283 = vld [vmem:[#allocation2 + $0x240] sm:$0xff]
  %v284 = vld [vmem:[#allocation2 + $0x248] sm:$0xff]
  %v285 = vld [vmem:[#allocation2 + $0x250] sm:$0xff]
  %v286 = vld [vmem:[#allocation2 + $0x258] sm:$0xff]
  %v287 = vld [vmem:[#allocation2 + $0x260] sm:$0xff]
  %v288 = vld [vmem:[#allocation2 + $0x268] sm:$0xff]
  %v289 = vld [vmem:[#allocation2 + $0x270] sm:$0xff]
  %v290 = vld [vmem:[#allocation2 + $0x278] sm:$0xff]
  %v291 = vld [vmem:[#allocation2 + $0x280] sm:$0xff]
  %v292 = vld [vmem:[#allocation2 + $0x288] sm:$0xff]
  %v293 = vld [vmem:[#allocation2 + $0x290] sm:$0xff]
  %v294 = vld [vmem:[#allocation2 + $0x298] sm:$0xff]
  %v295 = vld [vmem:[#allocation2 + $0x2a0] sm:$0xff]
  %v296 = vld [vmem:[#allocation2 + $0x2a8] sm:$0xff]
  %v297 = vld [vmem:[#allocation2 + $0x2b0] sm:$0xff]
  %v298 = vld [vmem:[#allocation2 + $0x2b8] sm:$0xff]
  %v299 = vld [vmem:[#allocation2 + $0x2c0] sm:$0xff]
  %v300 = vld [vmem:[#allocation2 + $0x2c8] sm:$0xff]
  %v301 = vld [vmem:[#allocation2 + $0x2d0] sm:$0xff]
  %v302 = vld [vmem:[#allocation2 + $0x2d8] sm:$0xff]
  %v303 = vld [vmem:[#allocation2 + $0x2e0] sm:$0xff]
  %v304 = vld [vmem:[#allocation2 + $0x2e8] sm:$0xff]
  %v305 = vld [vmem:[#allocation2 + $0x2f0] sm:$0xff]
  %v306 = vld [vmem:[#allocation2 + $0x2f8] sm:$0xff]
  %v307 = vld [vmem:[#allocation2 + $0x300] sm:$0xff]
  %v308 = vld [vmem:[#allocation2 + $0x308] sm:$0xff]
  %v309 = vld [vmem:[#allocation2 + $0x310] sm:$0xff]
  %v310 = vld [vmem:[#allocation2 + $0x318] sm:$0xff]
  %v311 = vld [vmem:[#allocation2 + $0x320] sm:$0xff]
  %v312 = vld [vmem:[#allocation2 + $0x328] sm:$0xff]
  %v313 = vld [vmem:[#allocation2 + $0x330] sm:$0xff]
  %v314 = vld [vmem:[#allocation2 + $0x338] sm:$0xff]
  %v315 = vld [vmem:[#allocation2 + $0x340] sm:$0xff]
  %v316 = vld [vmem:[#allocation2 + $0x348] sm:$0xff]
  %v317 = vld [vmem:[#allocation2 + $0x350] sm:$0xff]
  %v318 = vld [vmem:[#allocation2 + $0x358] sm:$0xff]
  %v319 = vld [vmem:[#allocation2 + $0x360] sm:$0xff]
  %v320 = vld [vmem:[#allocation2 + $0x368] sm:$0xff]
  %v321 = vld [vmem:[#allocation2 + $0x370] sm:$0xff]
  %v322 = vld [vmem:[#allocation2 + $0x378] sm:$0xff]
  %v323 = vld [vmem:[#allocation2 + $0x380] sm:$0xff]
  %v324 = vld [vmem:[#allocation2 + $0x388] sm:$0xff]
  %v325 = vld [vmem:[#allocation2 + $0x390] sm:$0xff]
  %v326 = vld [vmem:[#allocation2 + $0x398] sm:$0xff]
  %v327 = vld [vmem:[#allocation2 + $0x3a0] sm:$0xff]
  %v328 = vld [vmem:[#allocation2 + $0x3a8] sm:$0xff]
  %v329 = vld [vmem:[#allocation2 + $0x3b0] sm:$0xff]
  %v330 = vld [vmem:[#allocation2 + $0x3b8] sm:$0xff]
  %v331 = vld [vmem:[#allocation2 + $0x3c0] sm:$0xff]
  %v332 = vld [vmem:[#allocation2 + $0x3c8] sm:$0xff]
  %v333 = vld [vmem:[#allocation2 + $0x3d0] sm:$0xff]
  %v334 = vld [vmem:[#allocation2 + $0x3d8] sm:$0xff]
  %v335 = vld [vmem:[#allocation2 + $0x3e0] sm:$0xff]
  %v336 = vld [vmem:[#allocation2 + $0x3e8] sm:$0xff]
  %v337 = vld [vmem:[#allocation2 + $0x3f0] sm:$0xff]
  %v338 = vld [vmem:[#allocation2 + $0x3f8] sm:$0xff]
  %v339 = vld [vmem:[#allocation2 + $0x400] sm:$0xff]
  %v340 = vld [vmem:[#allocation2 + $0x408] sm:$0xff]
  %v341 = vld [vmem:[#allocation2 + $0x410] sm:$0xff]
  %v342 = vld [vmem:[#allocation2 + $0x418] sm:$0xff]
  %v343 = vld [vmem:[#allocation2 + $0x420] sm:$0xff]
  %v344 = vld [vmem:[#allocation2 + $0x428] sm:$0xff]
  %v345 = vld [vmem:[#allocation2 + $0x430] sm:$0xff]
  %v346 = vld [vmem:[#allocation2 + $0x438] sm:$0xff]
  %v347 = vld [vmem:[#allocation2 + $0x440] sm:$0xff]
  %v348 = vld [vmem:[#allocation2 + $0x448] sm:$0xff]
  %v349 = vld [vmem:[#allocation2 + $0x450] sm:$0xff]
  %v350 = vld [vmem:[#allocation2 + $0x458] sm:$0xff]
  %v351 = vld [vmem:[#allocation2 + $0x460] sm:$0xff]
  %v352 = vld [vmem:[#allocation2 + $0x468] sm:$0xff]
  %v353 = vld [vmem:[#allocation2 + $0x470] sm:$0xff]
  %v354 = vld [vmem:[#allocation2 + $0x478] sm:$0xff]
  %v355 = vld [vmem:[#allocation2 + $0x480] sm:$0xff]
  %v356 = vld [vmem:[#allocation2 + $0x488] sm:$0xff]
  %v357 = vld [vmem:[#allocation2 + $0x490] sm:$0xff]
  %v358 = vld [vmem:[#allocation2 + $0x498] sm:$0xff]
  %v359 = vld [vmem:[#allocation2 + $0x4a0] sm:$0xff]
  %v360 = vld [vmem:[#allocation2 + $0x4a8] sm:$0xff]
  %v361 = vld [vmem:[#allocation2 + $0x4b0] sm:$0xff]
  %v362 = vld [vmem:[#allocation2 + $0x4b8] sm:$0xff]
  %v363 = vld [vmem:[#allocation2 + $0x4c0] sm:$0xff]
  %v364 = vld [vmem:[#allocation2 + $0x4c8] sm:$0xff]
  %v365 = vld [vmem:[#allocation2 + $0x4d0] sm:$0xff]
  %v366 = vld [vmem:[#allocation2 + $0x4d8] sm:$0xff]
  %v367 = vld [vmem:[#allocation2 + $0x4e0] sm:$0xff]
  %v368 = vld [vmem:[#allocation2 + $0x4e8] sm:$0xff]
  %v369 = vld [vmem:[#allocation2 + $0x4f0] sm:$0xff]
  %v370 = vld [vmem:[#allocation2 + $0x4f8] sm:$0xff]
  %v371 = vld [vmem:[#allocation2 + $0x500] sm:$0xff]
  %v372 = vld [vmem:[#allocation2 + $0x508] sm:$0xff]
  %v373 = vld [vmem:[#allocation2 + $0x510] sm:$0xff]
  %v374 = vld [vmem:[#allocation2 + $0x518] sm:$0xff]
  %v375 = vld [vmem:[#allocation2 + $0x520] sm:$0xff]
  %v376 = vld [vmem:[#allocation2 + $0x528] sm:$0xff]
  %v377 = vld [vmem:[#allocation2 + $0x530] sm:$0xff]
  %v378 = vld [vmem:[#allocation2 + $0x538] sm:$0xff]
  %v379 = vld [vmem:[#allocation2 + $0x540] sm:$0xff]
  %v380 = vld [vmem:[#allocation2 + $0x548] sm:$0xff]
  %v381 = vld [vmem:[#allocation2 + $0x550] sm:$0xff]
  %v382 = vld [vmem:[#allocation2 + $0x558] sm:$0xff]
  %v383 = vld [vmem:[#allocation2 + $0x560] sm:$0xff]
  %v384 = vld [vmem:[#allocation2 + $0x568] sm:$0xff]
  %v385 = vld [vmem:[#allocation2 + $0x570] sm:$0xff]
  %v386 = vld [vmem:[#allocation2 + $0x578] sm:$0xff]
  %v387 = vld [vmem:[#allocation2 + $0x580] sm:$0xff]
  %v388 = vld [vmem:[#allocation2 + $0x588] sm:$0xff]
  %v389 = vld [vmem:[#allocation2 + $0x590] sm:$0xff]
  %v390 = vld [vmem:[#allocation2 + $0x598] sm:$0xff]
  %v391 = vld [vmem:[#allocation2 + $0x5a0] sm:$0xff]
  %v392 = vld [vmem:[#allocation2 + $0x5a8] sm:$0xff]
  %v393 = vld [vmem:[#allocation2 + $0x5b0] sm:$0xff]
  %v394 = vld [vmem:[#allocation2 + $0x5b8] sm:$0xff]
  %v395 = vld [vmem:[#allocation2 + $0x5c0] sm:$0xff]
  %v396 = vld [vmem:[#allocation2 + $0x5c8] sm:$0xff]
  %v397 = vld [vmem:[#allocation2 + $0x5d0] sm:$0xff]
  %v398 = vld [vmem:[#allocation2 + $0x5d8] sm:$0xff]
  %v399 = vld [vmem:[#allocation2 + $0x5e0] sm:$0xff]
  %v400 = vld [vmem:[#allocation2 + $0x5e8] sm:$0xff]
  %v401 = vld [vmem:[#allocation2 + $0x5f0] sm:$0xff]
  %v402 = vld [vmem:[#allocation2 + $0x5f8] sm:$0xff]
  %v403 = vld [vmem:[%s0] sm:$0xf]
  %v404 = vld [vmem:[%s0 + $0x4] sm:$0xf]
  %v405 = vld [vmem:[%s0 + $0x8] sm:$0xf]
  %v406 = vld [vmem:[%s0 + $0xc] sm:$0xf]
  %v407 = vld [vmem:[%s0 + $0x10] sm:$0xf]
  %v408 = vld [vmem:[%s0 + $0x14] sm:$0xf]
  %v409 = vld [vmem:[%s0 + $0x18] sm:$0xf]
  %v410 = vld [vmem:[%s0 + $0x1c] sm:$0xf]
  %v411 = vld [vmem:[%s0 + $0x20] sm:$0xf]
  %v412 = vld [vmem:[%s0 + $0x24] sm:$0xf]
  %v413 = vld [vmem:[%s0 + $0x28] sm:$0xf]
  %v414 = vld [vmem:[%s0 + $0x2c] sm:$0xf]
  %v415 = vld [vmem:[%s0 + $0x30] sm:$0xf]
  %v416 = vld [vmem:[%s0 + $0x34] sm:$0xf]
  %v417 = vld [vmem:[%s0 + $0x38] sm:$0xf]
  %v418 = vld [vmem:[%s0 + $0x3c] sm:$0xf]
  %v419 = vld [vmem:[%s0 + $0x40] sm:$0xf]
  %v420 = vld [vmem:[%s0 + $0x44] sm:$0xf]
  %v421 = vld [vmem:[%s0 + $0x48] sm:$0xf]
  %v422 = vld [vmem:[%s0 + $0x4c] sm:$0xf]
  %v423 = vld [vmem:[%s0 + $0x50] sm:$0xf]
  %v424 = vld [vmem:[%s0 + $0x54] sm:$0xf]
  %v425 = vld [vmem:[%s0 + $0x58] sm:$0xf]
  %v426 = vld [vmem:[%s0 + $0x5c] sm:$0xf]
  %v427 = vld [vmem:[%s0 + $0x60] sm:$0xf]
  %v428 = vld [vmem:[%s0 + $0x64] sm:$0xf]
  %v429 = vld [vmem:[%s0 + $0x68] sm:$0xf]
  %v430 = vld [vmem:[%s0 + $0x6c] sm:$0xf]
  %v431 = vld [vmem:[%s0 + $0x70] sm:$0xf]
  %v432 = vld [vmem:[%s0 + $0x74] sm:$0xf]
  %v433 = vld [vmem:[%s0 + $0x78] sm:$0xf]
  %v434 = vld [vmem:[%s0 + $0x7c] sm:$0xf]
  %v435 = vld [vmem:[%s0 + $0x80] sm:$0xf]
  %v436 = vld [vmem:[%s0 + $0x84] sm:$0xf]
  %v437 = vld [vmem:[%s0 + $0x88] sm:$0xf]
  %v438 = vld [vmem:[%s0 + $0x8c] sm:$0xf]
  %v439 = vld [vmem:[%s0 + $0x90] sm:$0xf]
  %v440 = vld [vmem:[%s0 + $0x94] sm:$0xf]
  %v441 = vld [vmem:[%s0 + $0x98] sm:$0xf]
  %v442 = vld [vmem:[%s0 + $0x9c] sm:$0xf]
  %v443 = vld [vmem:[%s0 + $0xa0] sm:$0xf]
  %v444 = vld [vmem:[%s0 + $0xa4] sm:$0xf]
  %v445 = vld [vmem:[%s0 + $0xa8] sm:$0xf]
  %v446 = vld [vmem:[%s0 + $0xac] sm:$0xf]
  %v447 = vld [vmem:[%s0 + $0xb0] sm:$0xf]
  %v448 = vld [vmem:[%s0 + $0xb4] sm:$0xf]
  %v449 = vld [vmem:[%s0 + $0xb8] sm:$0xf]
  %v450 = vld [vmem:[%s0 + $0xbc] sm:$0xf]
  %v451 = vld [vmem:[%s0 + $0xc0] sm:$0xf]
  %v452 = vld [vmem:[%s0 + $0xc4] sm:$0xf]
  %v453 = vld [vmem:[%s0 + $0xc8] sm:$0xf]
  %v454 = vld [vmem:[%s0 + $0xcc] sm:$0xf]
  %v455 = vld [vmem:[%s0 + $0xd0] sm:$0xf]
  %v456 = vld [vmem:[%s0 + $0xd4] sm:$0xf]
  %v457 = vld [vmem:[%s0 + $0xd8] sm:$0xf]
  %v458 = vld [vmem:[%s0 + $0xdc] sm:$0xf]
  %v459 = vld [vmem:[%s0 + $0xe0] sm:$0xf]
  %v460 = vld [vmem:[%s0 + $0xe4] sm:$0xf]
  %v461 = vld [vmem:[%s0 + $0xe8] sm:$0xf]
  %v462 = vld [vmem:[%s0 + $0xec] sm:$0xf]
  %v463 = vld [vmem:[%s0 + $0xf0] sm:$0xf]
  %v464 = vld [vmem:[%s0 + $0xf4] sm:$0xf]
  %v465 = vld [vmem:[%s0 + $0xf8] sm:$0xf]
  %v466 = vld [vmem:[%s0 + $0xfc] sm:$0xf]
  %v467 = vld [vmem:[%s1] sm:$0xff]
  %v468 = vld [vmem:[%s1 + $0x8] sm:$0xf]
  %v469 = vld [vmem:[%s1 + $0xc] sm:$0xff]
  %v470 = vld [vmem:[%s1 + $0x14] sm:$0xf]
  %v471 = vld [vmem:[%s1 + $0x18] sm:$0xff]
  %v472 = vld [vmem:[%s1 + $0x20] sm:$0xf]
  %v473 = vld [vmem:[%s1 + $0x24] sm:$0xff]
  %v474 = vld [vmem:[%s1 + $0x2c] sm:$0xf]
  %v475 = vld [vmem:[%s1 + $0x30] sm:$0xff]
  %v476 = vld [vmem:[%s1 + $0x38] sm:$0xf]
  %v477 = vld [vmem:[%s1 + $0x3c] sm:$0xff]
  %v478 = vld [vmem:[%s1 + $0x44] sm:$0xf]
  %v479 = vld [vmem:[%s1 + $0x48] sm:$0xff]
  %v480 = vld [vmem:[%s1 + $0x50] sm:$0xf]
  %v481 = vld [vmem:[%s1 + $0x54] sm:$0xff]
  %v482 = vld [vmem:[%s1 + $0x5c] sm:$0xf]
  %v483 = vld [vmem:[%s1 + $0x60] sm:$0xff]
  %v484 = vld [vmem:[%s1 + $0x68] sm:$0xf]
  %v485 = vld [vmem:[%s1 + $0x6c] sm:$0xff]
  %v486 = vld [vmem:[%s1 + $0x74] sm:$0xf]
  %v487 = vld [vmem:[%s1 + $0x78] sm:$0xff]
  %v488 = vld [vmem:[%s1 + $0x80] sm:$0xf]
  %v489 = vld [vmem:[%s1 + $0x84] sm:$0xff]
  %v490 = vld [vmem:[%s1 + $0x8c] sm:$0xf]
  %v491 = vld [vmem:[%s1 + $0x90] sm:$0xff]
  %v492 = vld [vmem:[%s1 + $0x98] sm:$0xf]
  %v493 = vld [vmem:[%s1 + $0x9c] sm:$0xff]
  %v494 = vld [vmem:[%s1 + $0xa4] sm:$0xf]
  %v495 = vld [vmem:[%s1 + $0xa8] sm:$0xff]
  %v496 = vld [vmem:[%s1 + $0xb0] sm:$0xf]
  %v497 = vld [vmem:[%s1 + $0xb4] sm:$0xff]
  %v498 = vld [vmem:[%s1 + $0xbc] sm:$0xf]
  %v563 = vunpack.c.l.b16 %v403
  %v564 = vunpack.c.l.b16 %v404
  %v565 = vunpack.c.l.b16 %v405
  %v566 = vunpack.c.l.b16 %v406
  %v567 = vunpack.c.l.b16 %v407
  %v568 = vunpack.c.l.b16 %v408
  %v569 = vunpack.c.l.b16 %v409
  %v570 = vunpack.c.l.b16 %v410
  %v571 = vunpack.c.l.b16 %v411
  %v572 = vunpack.c.l.b16 %v412
  %v573 = vunpack.c.l.b16 %v413
  %v574 = vunpack.c.l.b16 %v414
  %v575 = vunpack.c.l.b16 %v415
  %v576 = vunpack.c.l.b16 %v416
  %v577 = vunpack.c.l.b16 %v417
  %v578 = vunpack.c.l.b16 %v418
  %v579 = vunpack.c.l.b16 %v419
  %v580 = vunpack.c.l.b16 %v420
  %v581 = vunpack.c.l.b16 %v421
  %v582 = vunpack.c.l.b16 %v422
  %v583 = vunpack.c.l.b16 %v423
  %v584 = vunpack.c.l.b16 %v424
  %v585 = vunpack.c.l.b16 %v425
  %v586 = vunpack.c.l.b16 %v426
  %v587 = vunpack.c.l.b16 %v427
  %v588 = vunpack.c.l.b16 %v428
  %v589 = vunpack.c.l.b16 %v429
  %v590 = vunpack.c.l.b16 %v430
  %v591 = vunpack.c.l.b16 %v431
  %v592 = vunpack.c.l.b16 %v432
  %v593 = vunpack.c.l.b16 %v433
  %v594 = vunpack.c.l.b16 %v434
  %v595 = vunpack.c.l.b16 %v435
  %v596 = vunpack.c.l.b16 %v436
  %v597 = vunpack.c.l.b16 %v437
  %v598 = vunpack.c.l.b16 %v438
  %v599 = vunpack.c.l.b16 %v439
  %v600 = vunpack.c.l.b16 %v440
  %v601 = vunpack.c.l.b16 %v441
  %v602 = vunpack.c.l.b16 %v442
  %v603 = vunpack.c.l.b16 %v443
  %v604 = vunpack.c.l.b16 %v444
  %v605 = vunpack.c.l.b16 %v445
  %v606 = vunpack.c.l.b16 %v446
  %v607 = vunpack.c.l.b16 %v447
  %v608 = vunpack.c.l.b16 %v448
  %v609 = vunpack.c.l.b16 %v449
  %v610 = vunpack.c.l.b16 %v450
  %v611 = vunpack.c.l.b16 %v451
  %v612 = vunpack.c.l.b16 %v452
  %v613 = vunpack.c.l.b16 %v453
  %v614 = vunpack.c.l.b16 %v454
  %v615 = vunpack.c.l.b16 %v455
  %v616 = vunpack.c.l.b16 %v456
  %v617 = vunpack.c.l.b16 %v457
  %v618 = vunpack.c.l.b16 %v458
  %v619 = vunpack.c.l.b16 %v459
  %v620 = vunpack.c.l.b16 %v460
  %v621 = vunpack.c.l.b16 %v461
  %v622 = vunpack.c.l.b16 %v462
  %v623 = vunpack.c.l.b16 %v463
  %v624 = vunpack.c.l.b16 %v464
  %v625 = vunpack.c.l.b16 %v465
  %v626 = vunpack.c.l.b16 %v466
  %v627 = vpack.c.b16 %v564, %v563
  %v628 = vpack.c.b16 %v566, %v565
  %v629 = vpack.c.b16 %v568, %v567
  %v630 = vpack.c.b16 %v570, %v569
  %v631 = vpack.c.b16 %v572, %v571
  %v632 = vpack.c.b16 %v574, %v573
  %v633 = vpack.c.b16 %v576, %v575
  %v634 = vpack.c.b16 %v578, %v577
  %v635 = vpack.c.b16 %v580, %v579
  %v636 = vpack.c.b16 %v582, %v581
  %v637 = vpack.c.b16 %v584, %v583
  %v638 = vpack.c.b16 %v586, %v585
  %v639 = vpack.c.b16 %v588, %v587
  %v640 = vpack.c.b16 %v590, %v589
  %v641 = vpack.c.b16 %v592, %v591
  %v642 = vpack.c.b16 %v594, %v593
  %v643 = vpack.c.b16 %v596, %v595
  %v644 = vpack.c.b16 %v598, %v597
  %v645 = vpack.c.b16 %v600, %v599
  %v646 = vpack.c.b16 %v602, %v601
  %v647 = vpack.c.b16 %v604, %v603
  %v648 = vpack.c.b16 %v606, %v605
  %v649 = vpack.c.b16 %v608, %v607
  %v650 = vpack.c.b16 %v610, %v609
  %v651 = vpack.c.b16 %v612, %v611
  %v652 = vpack.c.b16 %v614, %v613
  %v653 = vpack.c.b16 %v616, %v615
  %v654 = vpack.c.b16 %v618, %v617
  %v655 = vpack.c.b16 %v620, %v619
  %v656 = vpack.c.b16 %v622, %v621
  %v657 = vpack.c.b16 %v624, %v623
  %v658 = vpack.c.b16 %v626, %v625
  %v723 = vunpack.c.l.b16 %v467
  %v724 = vunpack.c.h.b16 %v467
  %v725 = vunpack.c.l.b16 %v468
  %v726 = vunpack.c.l.b16 %v469
  %v727 = vunpack.c.h.b16 %v469
  %v728 = vunpack.c.l.b16 %v470
  %v729 = vunpack.c.l.b16 %v471
  %v730 = vunpack.c.h.b16 %v471
  %v731 = vunpack.c.l.b16 %v472
  %v732 = vunpack.c.l.b16 %v473
  %v733 = vunpack.c.h.b16 %v473
  %v734 = vunpack.c.l.b16 %v474
  %v735 = vunpack.c.l.b16 %v475
  %v736 = vunpack.c.h.b16 %v475
  %v737 = vunpack.c.l.b16 %v476
  %v738 = vunpack.c.l.b16 %v477
  %v739 = vunpack.c.h.b16 %v477
  %v740 = vunpack.c.l.b16 %v478
  %v741 = vunpack.c.l.b16 %v479
  %v742 = vunpack.c.h.b16 %v479
  %v743 = vunpack.c.l.b16 %v480
  %v744 = vunpack.c.l.b16 %v481
  %v745 = vunpack.c.h.b16 %v481
  %v746 = vunpack.c.l.b16 %v482
  %v747 = vunpack.c.l.b16 %v483
  %v748 = vunpack.c.h.b16 %v483
  %v749 = vunpack.c.l.b16 %v484
  %v750 = vunpack.c.l.b16 %v485
  %v751 = vunpack.c.h.b16 %v485
  %v752 = vunpack.c.l.b16 %v486
  %v753 = vunpack.c.l.b16 %v487
  %v754 = vunpack.c.h.b16 %v487
  %v755 = vunpack.c.l.b16 %v488
  %v756 = vunpack.c.l.b16 %v489
  %v757 = vunpack.c.h.b16 %v489
  %v758 = vunpack.c.l.b16 %v490
  %v759 = vunpack.c.l.b16 %v491
  %v760 = vunpack.c.h.b16 %v491
  %v761 = vunpack.c.l.b16 %v492
  %v762 = vunpack.c.l.b16 %v493
  %v763 = vunpack.c.h.b16 %v493
  %v764 = vunpack.c.l.b16 %v494
  %v765 = vunpack.c.l.b16 %v495
  %v766 = vunpack.c.h.b16 %v495
  %v767 = vunpack.c.l.b16 %v496
  %v768 = vunpack.c.l.b16 %v497
  %v769 = vunpack.c.h.b16 %v497
  %v770 = vunpack.c.l.b16 %v498
  %v771 = vpack.c.b16 %v726, %v723
  %v772 = vpack.c.b16 %v727, %v724
  %v773 = vpack.c.b16 %v728, %v725
  %v774 = vpack.c.b16 %v732, %v729
  %v775 = vpack.c.b16 %v733, %v730
  %v776 = vpack.c.b16 %v734, %v731
  %v777 = vpack.c.b16 %v738, %v735
  %v778 = vpack.c.b16 %v739, %v736
  %v779 = vpack.c.b16 %v740, %v737
  %v780 = vpack.c.b16 %v744, %v741
  %v781 = vpack.c.b16 %v745, %v742
  %v782 = vpack.c.b16 %v746, %v743
  %v783 = vpack.c.b16 %v750, %v747
  %v784 = vpack.c.b16 %v751, %v748
  %v785 = vpack.c.b16 %v752, %v749
  %v786 = vpack.c.b16 %v756, %v753
  %v787 = vpack.c.b16 %v757, %v754
  %v788 = vpack.c.b16 %v758, %v755
  %v789 = vpack.c.b16 %v762, %v759
  %v790 = vpack.c.b16 %v763, %v760
  %v791 = vpack.c.b16 %v764, %v761
  %v792 = vpack.c.b16 %v768, %v765
  %v793 = vpack.c.b16 %v769, %v766
  %v794 = vpack.c.b16 %v770, %v767
  %819 = vmatprep.subr.bf16.mxu0 %v772
  %820 = vmatpush1.bf16.msra.mxu0 %v771
  %821 = vmatprep.subr.bf16.mxu0 %v775
  %822 = vmatpush1.bf16.msra.mxu0 %v774
  %823 = vmatprep.subr.bf16.mxu0 %v778
  %824 = vmatpush1.bf16.msra.mxu0 %v777
  %825 = vmatprep.subr.bf16.mxu0 %v781
  %826 = vmatpush1.bf16.msra.mxu0 %v780
  %827 = vmatprep.subr.bf16.mxu0 %v784
  %828 = vmatpush1.bf16.msra.mxu0 %v783
  %829 = vmatprep.subr.bf16.mxu0 %v787
  %830 = vmatpush1.bf16.msra.mxu0 %v786
  %831 = vmatprep.subr.bf16.mxu0 %v790
  %832 = vmatpush1.bf16.msra.mxu0 %v789
  %833 = vmatprep.subr.bf16.mxu0 %v793
  %834 = vmatpush1.bf16.msra.mxu0 %v792
  %835 = vmatprep.subr.bf16.mxu0 0
  %836 = vmatpush1.bf16.msra.mxu0 0
  %837 = vmatprep.subr.bf16.mxu0 0
  %838 = vmatpush1.bf16.msra.mxu0 0
  %839 = vmatprep.subr.bf16.mxu0 0
  %840 = vmatpush1.bf16.msra.mxu0 0
  %841 = vmatprep.subr.bf16.mxu0 0
  %842 = vmatpush1.bf16.msra.mxu0 0
  %843 = vmatprep.subr.bf16.mxu0 0
  %844 = vmatpush1.bf16.msra.mxu0 0
  %845 = vmatprep.subr.bf16.mxu0 0
  %846 = vmatpush1.bf16.msra.mxu0 0
  %847 = vmatprep.subr.bf16.mxu0 0
  %848 = vmatpush1.bf16.msra.mxu0 0
  %849 = vmatprep.subr.bf16.mxu0 0
  %850 = vmatpush1.bf16.msra.mxu0 0
  %851 = vmatprep.mubr.bf16.mxu0 0
  %852 = vmatmul.mubr.bf16.gmra.mrb[0].mxu0 %v627
  %v853 = vpop.f32.mrb[0].mxu0
  %v854 = vadd.f32 0.0, %v853
  %v855 = vpop.f32.mrb[0].mxu0
  %v856 = vadd.f32 0.0, %v855
  %v857 = vpop.f32.mrb[0].mxu0
  %v858 = vadd.f32 0.0, %v857
  %v859 = vpop.f32.mrb[0].mxu0
  %v860 = vadd.f32 0.0, %v859
  %861 = vmatprep.mubr.bf16.mxu0 0
  %862 = vmatmul.mubr.bf16.gmra.mrb[0].mxu0 %v628
  %v863 = vpop.f32.mrb[0].mxu0
  %v864 = vadd.f32 0.0, %v863
  %v865 = vpop.f32.mrb[0].mxu0
  %v866 = vadd.f32 0.0, %v865
  %v867 = vpop.f32.mrb[0].mxu0
  %v868 = vadd.f32 0.0, %v867
  %v869 = vpop.f32.mrb[0].mxu0
  %v870 = vadd.f32 0.0, %v869
  %871 = vmatprep.mubr.bf16.mxu0 0
  %872 = vmatmul.mubr.bf16.gmra.mrb[0].mxu0 %v629
  %v873 = vpop.f32.mrb[0].mxu0
  %v874 = vadd.f32 0.0, %v873
  %v875 = vpop.f32.mrb[0].mxu0
  %v876 = vadd.f32 0.0, %v875
  %v877 = vpop.f32.mrb[0].mxu0
  %v878 = vadd.f32 0.0, %v877
  %v879 = vpop.f32.mrb[0].mxu0
  %v880 = vadd.f32 0.0, %v879
  %881 = vmatprep.mubr.bf16.mxu0 0
  %882 = vmatmul.mubr.bf16.gmra.mrb[0].mxu0 %v630
  %v883 = vpop.f32.mrb[0].mxu0
  %v884 = vadd.f32 0.0, %v883
  %v885 = vpop.f32.mrb[0].mxu0
  %v886 = vadd.f32 0.0, %v885
  %v887 = vpop.f32.mrb[0].mxu0
  %v888 = vadd.f32 0.0, %v887
  %v889 = vpop.f32.mrb[0].mxu0
  %v890 = vadd.f32 0.0, %v889
  %891 = vmatprep.mubr.bf16.mxu0 0
  %892 = vmatmul.mubr.bf16.gmra.mrb[0].mxu0 %v631
  %v893 = vpop.f32.mrb[0].mxu0
  %v894 = vadd.f32 0.0, %v893
  %v895 = vpop.f32.mrb[0].mxu0
  %v896 = vadd.f32 0.0, %v895
  %v897 = vpop.f32.mrb[0].mxu0
  %v898 = vadd.f32 0.0, %v897
  %v899 = vpop.f32.mrb[0].mxu0
  %v900 = vadd.f32 0.0, %v899
  %901 = vmatprep.mubr.bf16.mxu0 0
  %902 = vmatmul.mubr.bf16.gmra.mrb[0].mxu0 %v632
  %v903 = vpop.f32.mrb[0].mxu0
  %v904 = vadd.f32 0.0, %v903
  %v905 = vpop.f32.mrb[0].mxu0
  %v906 = vadd.f32 0.0, %v905
  %v907 = vpop.f32.mrb[0].mxu0
  %v908 = vadd.f32 0.0, %v907
  %v909 = vpop.f32.mrb[0].mxu0
  %v910 = vadd.f32 0.0, %v909
  %911 = vmatprep.mubr.bf16.mxu0 0
  %912 = vmatmul.mubr.bf16.gmra.mrb[0].mxu0 %v633
  %v913 = vpop.f32.mrb[0].mxu0
  %v914 = vadd.f32 0.0, %v913
  %v915 = vpop.f32.mrb[0].mxu0
  %v916 = vadd.f32 0.0, %v915
  %v917 = vpop.f32.mrb[0].mxu0
  %v918 = vadd.f32 0.0, %v917
  %v919 = vpop.f32.mrb[0].mxu0
  %v920 = vadd.f32 0.0, %v919
  %921 = vmatprep.mubr.bf16.mxu0 0
  %922 = vmatmul.mubr.bf16.gmra.mrb[0].mxu0 %v634
  %v923 = vpop.f32.mrb[0].mxu0
  %v924 = vadd.f32 0.0, %v923
  %v925 = vpop.f32.mrb[0].mxu0
  %v926 = vadd.f32 0.0, %v925
  %v927 = vpop.f32.mrb[0].mxu0
  %v928 = vadd.f32 0.0, %v927
  %v929 = vpop.f32.mrb[0].mxu0
  %v930 = vadd.f32 0.0, %v929
  %931 = vmatprep.mubr.bf16.mxu0 0
  %932 = vmatmul.mubr.bf16.gmra.mrb[0].mxu0 %v635
  %v933 = vpop.f32.mrb[0].mxu0
  %v934 = vadd.f32 0.0, %v933
  %v935 = vpop.f32.mrb[0].mxu0
  %v936 = vadd.f32 0.0, %v935
  %v937 = vpop.f32.mrb[0].mxu0
  %v938 = vadd.f32 0.0, %v937
  %v939 = vpop.f32.mrb[0].mxu0
  %v940 = vadd.f32 0.0, %v939
  %941 = vmatprep.mubr.bf16.mxu0 0
  %942 = vmatmul.mubr.bf16.gmra.mrb[0].mxu0 %v636
  %v943 = vpop.f32.mrb[0].mxu0
  %v944 = vadd.f32 0.0, %v943
  %v945 = vpop.f32.mrb[0].mxu0
  %v946 = vadd.f32 0.0, %v945
  %v947 = vpop.f32.mrb[0].mxu0
  %v948 = vadd.f32 0.0, %v947
  %v949 = vpop.f32.mrb[0].mxu0
  %v950 = vadd.f32 0.0, %v949
  %951 = vmatprep.mubr.bf16.mxu0 0
  %952 = vmatmul.mubr.bf16.gmra.mrb[0].mxu0 %v637
  %v953 = vpop.f32.mrb[0].mxu0
  %v954 = vadd.f32 0.0, %v953
  %v955 = vpop.f32.mrb[0].mxu0
  %v956 = vadd.f32 0.0, %v955
  %v957 = vpop.f32.mrb[0].mxu0
  %v958 = vadd.f32 0.0, %v957
  %v959 = vpop.f32.mrb[0].mxu0
  %v960 = vadd.f32 0.0, %v959
  %961 = vmatprep.mubr.bf16.mxu0 0
  %962 = vmatmul.mubr.bf16.gmra.mrb[0].mxu0 %v638
  %v963 = vpop.f32.mrb[0].mxu0
  %v964 = vadd.f32 0.0, %v963
  %v965 = vpop.f32.mrb[0].mxu0
  %v966 = vadd.f32 0.0, %v965
  %v967 = vpop.f32.mrb[0].mxu0
  %v968 = vadd.f32 0.0, %v967
  %v969 = vpop.f32.mrb[0].mxu0
  %v970 = vadd.f32 0.0, %v969
  %971 = vmatprep.mubr.bf16.mxu0 0
  %972 = vmatmul.mubr.bf16.gmra.mrb[0].mxu0 %v639
  %v973 = vpop.f32.mrb[0].mxu0
  %v974 = vadd.f32 0.0, %v973
  %v975 = vpop.f32.mrb[0].mxu0
  %v976 = vadd.f32 0.0, %v975
  %v977 = vpop.f32.mrb[0].mxu0
  %v978 = vadd.f32 0.0, %v977
  %v979 = vpop.f32.mrb[0].mxu0
  %v980 = vadd.f32 0.0, %v979
  %981 = vmatprep.mubr.bf16.mxu0 0
  %982 = vmatmul.mubr.bf16.gmra.mrb[0].mxu0 %v640
  %v983 = vpop.f32.mrb[0].mxu0
  %v984 = vadd.f32 0.0, %v983
  %v985 = vpop.f32.mrb[0].mxu0
  %v986 = vadd.f32 0.0, %v985
  %v987 = vpop.f32.mrb[0].mxu0
  %v988 = vadd.f32 0.0, %v987
  %v989 = vpop.f32.mrb[0].mxu0
  %v990 = vadd.f32 0.0, %v989
  %991 = vmatprep.mubr.bf16.mxu0 0
  %992 = vmatmul.mubr.bf16.gmra.mrb[0].mxu0 %v641
  %v993 = vpop.f32.mrb[0].mxu0
  %v994 = vadd.f32 0.0, %v993
  %v995 = vpop.f32.mrb[0].mxu0
  %v996 = vadd.f32 0.0, %v995
  %v997 = vpop.f32.mrb[0].mxu0
  %v998 = vadd.f32 0.0, %v997
  %v999 = vpop.f32.mrb[0].mxu0
  %v1000 = vadd.f32 0.0, %v999
  %1001 = vmatprep.mubr.bf16.mxu0 0
  %1002 = vmatmul.mubr.bf16.gmra.mrb[0].mxu0 %v642
  %v1003 = vpop.f32.mrb[0].mxu0
  %v1004 = vadd.f32 0.0, %v1003
  %v1005 = vpop.f32.mrb[0].mxu0
  %v1006 = vadd.f32 0.0, %v1005
  %v1007 = vpop.f32.mrb[0].mxu0
  %v1008 = vadd.f32 0.0, %v1007
  %v1009 = vpop.f32.mrb[0].mxu0
  %v1010 = vadd.f32 0.0, %v1009
  %1011 = vmatprep.mubr.bf16.mxu0 0
  %1012 = vmatmul.mubr.bf16.gmra.mrb[0].mxu0 %v643
  %v1013 = vpop.f32.mrb[0].mxu0
  %v1014 = vadd.f32 0.0, %v1013
  %v1015 = vpop.f32.mrb[0].mxu0
  %v1016 = vadd.f32 0.0, %v1015
  %v1017 = vpop.f32.mrb[0].mxu0
  %v1018 = vadd.f32 0.0, %v1017
  %v1019 = vpop.f32.mrb[0].mxu0
  %v1020 = vadd.f32 0.0, %v1019
  %1021 = vmatprep.mubr.bf16.mxu0 0
  %1022 = vmatmul.mubr.bf16.gmra.mrb[0].mxu0 %v644
  %v1023 = vpop.f32.mrb[0].mxu0
  %v1024 = vadd.f32 0.0, %v1023
  %v1025 = vpop.f32.mrb[0].mxu0
  %v1026 = vadd.f32 0.0, %v1025
  %v1027 = vpop.f32.mrb[0].mxu0
  %v1028 = vadd.f32 0.0, %v1027
  %v1029 = vpop.f32.mrb[0].mxu0
  %v1030 = vadd.f32 0.0, %v1029
  %1031 = vmatprep.mubr.bf16.mxu0 0
  %1032 = vmatmul.mubr.bf16.gmra.mrb[0].mxu0 %v645
  %v1033 = vpop.f32.mrb[0].mxu0
  %v1034 = vadd.f32 0.0, %v1033
  %v1035 = vpop.f32.mrb[0].mxu0
  %v1036 = vadd.f32 0.0, %v1035
  %v1037 = vpop.f32.mrb[0].mxu0
  %v1038 = vadd.f32 0.0, %v1037
  %v1039 = vpop.f32.mrb[0].mxu0
  %v1040 = vadd.f32 0.0, %v1039
  %1041 = vmatprep.mubr.bf16.mxu0 0
  %1042 = vmatmul.mubr.bf16.gmra.mrb[0].mxu0 %v646
  %v1043 = vpop.f32.mrb[0].mxu0
  %v1044 = vadd.f32 0.0, %v1043
  %v1045 = vpop.f32.mrb[0].mxu0
  %v1046 = vadd.f32 0.0, %v1045
  %v1047 = vpop.f32.mrb[0].mxu0
  %v1048 = vadd.f32 0.0, %v1047
  %v1049 = vpop.f32.mrb[0].mxu0
  %v1050 = vadd.f32 0.0, %v1049
  %1051 = vmatprep.mubr.bf16.mxu0 0
  %1052 = vmatmul.mubr.bf16.gmra.mrb[0].mxu0 %v647
  %v1053 = vpop.f32.mrb[0].mxu0
  %v1054 = vadd.f32 0.0, %v1053
  %v1055 = vpop.f32.mrb[0].mxu0
  %v1056 = vadd.f32 0.0, %v1055
  %v1057 = vpop.f32.mrb[0].mxu0
  %v1058 = vadd.f32 0.0, %v1057
  %v1059 = vpop.f32.mrb[0].mxu0
  %v1060 = vadd.f32 0.0, %v1059
  %1061 = vmatprep.mubr.bf16.mxu0 0
  %1062 = vmatmul.mubr.bf16.gmra.mrb[0].mxu0 %v648
  %v1063 = vpop.f32.mrb[0].mxu0
  %v1064 = vadd.f32 0.0, %v1063
  %v1065 = vpop.f32.mrb[0].mxu0
  %v1066 = vadd.f32 0.0, %v1065
  %v1067 = vpop.f32.mrb[0].mxu0
  %v1068 = vadd.f32 0.0, %v1067
  %v1069 = vpop.f32.mrb[0].mxu0
  %v1070 = vadd.f32 0.0, %v1069
  %1071 = vmatprep.mubr.bf16.mxu0 0
  %1072 = vmatmul.mubr.bf16.gmra.mrb[0].mxu0 %v649
  %v1073 = vpop.f32.mrb[0].mxu0
  %v1074 = vadd.f32 0.0, %v1073
  %v1075 = vpop.f32.mrb[0].mxu0
  %v1076 = vadd.f32 0.0, %v1075
  %v1077 = vpop.f32.mrb[0].mxu0
  %v1078 = vadd.f32 0.0, %v1077
  %v1079 = vpop.f32.mrb[0].mxu0
  %v1080 = vadd.f32 0.0, %v1079
  %1081 = vmatprep.mubr.bf16.mxu0 0
  %1082 = vmatmul.mubr.bf16.gmra.mrb[0].mxu0 %v650
  %v1083 = vpop.f32.mrb[0].mxu0
  %v1084 = vadd.f32 0.0, %v1083
  %v1085 = vpop.f32.mrb[0].mxu0
  %v1086 = vadd.f32 0.0, %v1085
  %v1087 = vpop.f32.mrb[0].mxu0
  %v1088 = vadd.f32 0.0, %v1087
  %v1089 = vpop.f32.mrb[0].mxu0
  %v1090 = vadd.f32 0.0, %v1089
  %1091 = vmatprep.mubr.bf16.mxu0 0
  %1092 = vmatmul.mubr.bf16.gmra.mrb[0].mxu0 %v651
  %v1093 = vpop.f32.mrb[0].mxu0
  %v1094 = vadd.f32 0.0, %v1093
  %v1095 = vpop.f32.mrb[0].mxu0
  %v1096 = vadd.f32 0.0, %v1095
  %v1097 = vpop.f32.mrb[0].mxu0
  %v1098 = vadd.f32 0.0, %v1097
  %v1099 = vpop.f32.mrb[0].mxu0
  %v1100 = vadd.f32 0.0, %v1099
  %1101 = vmatprep.mubr.bf16.mxu0 0
  %1102 = vmatmul.mubr.bf16.gmra.mrb[0].mxu0 %v652
  %v1103 = vpop.f32.mrb[0].mxu0
  %v1104 = vadd.f32 0.0, %v1103
  %v1105 = vpop.f32.mrb[0].mxu0
  %v1106 = vadd.f32 0.0, %v1105
  %v1107 = vpop.f32.mrb[0].mxu0
  %v1108 = vadd.f32 0.0, %v1107
  %v1109 = vpop.f32.mrb[0].mxu0
  %v1110 = vadd.f32 0.0, %v1109
  %1111 = vmatprep.mubr.bf16.mxu0 0
  %1112 = vmatmul.mubr.bf16.gmra.mrb[0].mxu0 %v653
  %v1113 = vpop.f32.mrb[0].mxu0
  %v1114 = vadd.f32 0.0, %v1113
  %v1115 = vpop.f32.mrb[0].mxu0
  %v1116 = vadd.f32 0.0, %v1115
  %v1117 = vpop.f32.mrb[0].mxu0
  %v1118 = vadd.f32 0.0, %v1117
  %v1119 = vpop.f32.mrb[0].mxu0
  %v1120 = vadd.f32 0.0, %v1119
  %1121 = vmatprep.mubr.bf16.mxu0 0
  %1122 = vmatmul.mubr.bf16.gmra.mrb[0].mxu0 %v654
  %v1123 = vpop.f32.mrb[0].mxu0
  %v1124 = vadd.f32 0.0, %v1123
  %v1125 = vpop.f32.mrb[0].mxu0
  %v1126 = vadd.f32 0.0, %v1125
  %v1127 = vpop.f32.mrb[0].mxu0
  %v1128 = vadd.f32 0.0, %v1127
  %v1129 = vpop.f32.mrb[0].mxu0
  %v1130 = vadd.f32 0.0, %v1129
  %1131 = vmatprep.mubr.bf16.mxu0 0
  %1132 = vmatmul.mubr.bf16.gmra.mrb[0].mxu0 %v655
  %v1133 = vpop.f32.mrb[0].mxu0
  %v1134 = vadd.f32 0.0, %v1133
  %v1135 = vpop.f32.mrb[0].mxu0
  %v1136 = vadd.f32 0.0, %v1135
  %v1137 = vpop.f32.mrb[0].mxu0
  %v1138 = vadd.f32 0.0, %v1137
  %v1139 = vpop.f32.mrb[0].mxu0
  %v1140 = vadd.f32 0.0, %v1139
  %1141 = vmatprep.mubr.bf16.mxu0 0
  %1142 = vmatmul.mubr.bf16.gmra.mrb[0].mxu0 %v656
  %v1143 = vpop.f32.mrb[0].mxu0
  %v1144 = vadd.f32 0.0, %v1143
  %v1145 = vpop.f32.mrb[0].mxu0
  %v1146 = vadd.f32 0.0, %v1145
  %v1147 = vpop.f32.mrb[0].mxu0
  %v1148 = vadd.f32 0.0, %v1147
  %v1149 = vpop.f32.mrb[0].mxu0
  %v1150 = vadd.f32 0.0, %v1149
  %1151 = vmatprep.mubr.bf16.mxu0 0
  %1152 = vmatmul.mubr.bf16.gmra.mrb[0].mxu0 %v657
  %v1153 = vpop.f32.mrb[0].mxu0
  %v1154 = vadd.f32 0.0, %v1153
  %v1155 = vpop.f32.mrb[0].mxu0
  %v1156 = vadd.f32 0.0, %v1155
  %v1157 = vpop.f32.mrb[0].mxu0
  %v1158 = vadd.f32 0.0, %v1157
  %v1159 = vpop.f32.mrb[0].mxu0
  %v1160 = vadd.f32 0.0, %v1159
  %1161 = vmatprep.mubr.bf16.mxu0 0
  %1162 = vmatmul.mubr.bf16.gmra.mrb[0].mxu0 %v658
  %v1163 = vpop.f32.mrb[0].mxu0
  %v1164 = vadd.f32 0.0, %v1163
  %v1165 = vpop.f32.mrb[0].mxu0
  %v1166 = vadd.f32 0.0, %v1165
  %v1167 = vpop.f32.mrb[0].mxu0
  %v1168 = vadd.f32 0.0, %v1167
  %v1169 = vpop.f32.mrb[0].mxu0
  %v1170 = vadd.f32 0.0, %v1169
  %1171 = vdwg.mxu0
  %1172 = vmatprep.subr.bf16.mxu0 0
  %1173 = vmatpush1.bf16.msra.mxu0 %v773
  %1174 = vmatprep.subr.bf16.mxu0 0
  %1175 = vmatpush1.bf16.msra.mxu0 %v776
  %1176 = vmatprep.subr.bf16.mxu0 0
  %1177 = vmatpush1.bf16.msra.mxu0 %v779
  %1178 = vmatprep.subr.bf16.mxu0 0
  %1179 = vmatpush1.bf16.msra.mxu0 %v782
  %1180 = vmatprep.subr.bf16.mxu0 0
  %1181 = vmatpush1.bf16.msra.mxu0 %v785
  %1182 = vmatprep.subr.bf16.mxu0 0
  %1183 = vmatpush1.bf16.msra.mxu0 %v788
  %1184 = vmatprep.subr.bf16.mxu0 0
  %1185 = vmatpush1.bf16.msra.mxu0 %v791
  %1186 = vmatprep.subr.bf16.mxu0 0
  %1187 = vmatpush1.bf16.msra.mxu0 %v794
  %1188 = vmatprep.subr.bf16.mxu0 0
  %1189 = vmatpush1.bf16.msra.mxu0 0
  %1190 = vmatprep.subr.bf16.mxu0 0
  %1191 = vmatpush1.bf16.msra.mxu0 0
  %1192 = vmatprep.subr.bf16.mxu0 0
  %1193 = vmatpush1.bf16.msra.mxu0 0
  %1194 = vmatprep.subr.bf16.mxu0 0
  %1195 = vmatpush1.bf16.msra.mxu0 0
  %1196 = vmatprep.subr.bf16.mxu0 0
  %1197 = vmatpush1.bf16.msra.mxu0 0
  %1198 = vmatprep.subr.bf16.mxu0 0
  %1199 = vmatpush1.bf16.msra.mxu0 0
  %1200 = vmatprep.subr.bf16.mxu0 0
  %1201 = vmatpush1.bf16.msra.mxu0 0
  %1202 = vmatprep.subr.bf16.mxu0 0
  %1203 = vmatpush1.bf16.msra.mxu0 0
  %1204 = vmatprep.mubr.bf16.mxu0 0
  %1205 = vmatmul.mubr.bf16.gmra.mrb[0].mxu0 %v627
  %v1206 = vpop.f32.mrb[0].mxu0
  %v1207 = vadd.f32 0.0, %v1206
  %v1208 = vpop.f32.mrb[0].mxu0
  %v1209 = vpop.f32.mrb[0].mxu0
  %v1210 = vadd.f32 0.0, %v1209
  %v1211 = vpop.f32.mrb[0].mxu0
  %1212 = vmatprep.mubr.bf16.mxu0 0
  %1213 = vmatmul.mubr.bf16.gmra.mrb[0].mxu0 %v628
  %v1214 = vpop.f32.mrb[0].mxu0
  %v1215 = vadd.f32 0.0, %v1214
  %v1216 = vpop.f32.mrb[0].mxu0
  %v1217 = vpop.f32.mrb[0].mxu0
  %v1218 = vadd.f32 0.0, %v1217
  %v1219 = vpop.f32.mrb[0].mxu0
  %1220 = vmatprep.mubr.bf16.mxu0 0
  %1221 = vmatmul.mubr.bf16.gmra.mrb[0].mxu0 %v629
  %v1222 = vpop.f32.mrb[0].mxu0
  %v1223 = vadd.f32 0.0, %v1222
  %v1224 = vpop.f32.mrb[0].mxu0
  %v1225 = vpop.f32.mrb[0].mxu0
  %v1226 = vadd.f32 0.0, %v1225
  %v1227 = vpop.f32.mrb[0].mxu0
  %1228 = vmatprep.mubr.bf16.mxu0 0
  %1229 = vmatmul.mubr.bf16.gmra.mrb[0].mxu0 %v630
  %v1230 = vpop.f32.mrb[0].mxu0
  %v1231 = vadd.f32 0.0, %v1230
  %v1232 = vpop.f32.mrb[0].mxu0
  %v1233 = vpop.f32.mrb[0].mxu0
  %v1234 = vadd.f32 0.0, %v1233
  %v1235 = vpop.f32.mrb[0].mxu0
  %1236 = vmatprep.mubr.bf16.mxu0 0
  %1237 = vmatmul.mubr.bf16.gmra.mrb[0].mxu0 %v631
  %v1238 = vpop.f32.mrb[0].mxu0
  %v1239 = vadd.f32 0.0, %v1238
  %v1240 = vpop.f32.mrb[0].mxu0
  %v1241 = vpop.f32.mrb[0].mxu0
  %v1242 = vadd.f32 0.0, %v1241
  %v1243 = vpop.f32.mrb[0].mxu0
  %1244 = vmatprep.mubr.bf16.mxu0 0
  %1245 = vmatmul.mubr.bf16.gmra.mrb[0].mxu0 %v632
  %v1246 = vpop.f32.mrb[0].mxu0
  %v1247 = vadd.f32 0.0, %v1246
  %v1248 = vpop.f32.mrb[0].mxu0
  %v1249 = vpop.f32.mrb[0].mxu0
  %v1250 = vadd.f32 0.0, %v1249
  %v1251 = vpop.f32.mrb[0].mxu0
  %1252 = vmatprep.mubr.bf16.mxu0 0
  %1253 = vmatmul.mubr.bf16.gmra.mrb[0].mxu0 %v633
  %v1254 = vpop.f32.mrb[0].mxu0
  %v1255 = vadd.f32 0.0, %v1254
  %v1256 = vpop.f32.mrb[0].mxu0
  %v1257 = vpop.f32.mrb[0].mxu0
  %v1258 = vadd.f32 0.0, %v1257
  %v1259 = vpop.f32.mrb[0].mxu0
  %1260 = vmatprep.mubr.bf16.mxu0 0
  %1261 = vmatmul.mubr.bf16.gmra.mrb[0].mxu0 %v634
  %v1262 = vpop.f32.mrb[0].mxu0
  %v1263 = vadd.f32 0.0, %v1262
  %v1264 = vpop.f32.mrb[0].mxu0
  %v1265 = vpop.f32.mrb[0].mxu0
  %v1266 = vadd.f32 0.0, %v1265
  %v1267 = vpop.f32.mrb[0].mxu0
  %1268 = vmatprep.mubr.bf16.mxu0 0
  %1269 = vmatmul.mubr.bf16.gmra.mrb[0].mxu0 %v635
  %v1270 = vpop.f32.mrb[0].mxu0
  %v1271 = vadd.f32 0.0, %v1270
  %v1272 = vpop.f32.mrb[0].mxu0
  %v1273 = vpop.f32.mrb[0].mxu0
  %v1274 = vadd.f32 0.0, %v1273
  %v1275 = vpop.f32.mrb[0].mxu0
  %1276 = vmatprep.mubr.bf16.mxu0 0
  %1277 = vmatmul.mubr.bf16.gmra.mrb[0].mxu0 %v636
  %v1278 = vpop.f32.mrb[0].mxu0
  %v1279 = vadd.f32 0.0, %v1278
  %v1280 = vpop.f32.mrb[0].mxu0
  %v1281 = vpop.f32.mrb[0].mxu0
  %v1282 = vadd.f32 0.0, %v1281
  %v1283 = vpop.f32.mrb[0].mxu0
  %1284 = vmatprep.mubr.bf16.mxu0 0
  %1285 = vmatmul.mubr.bf16.gmra.mrb[0].mxu0 %v637
  %v1286 = vpop.f32.mrb[0].mxu0
  %v1287 = vadd.f32 0.0, %v1286
  %v1288 = vpop.f32.mrb[0].mxu0
  %v1289 = vpop.f32.mrb[0].mxu0
  %v1290 = vadd.f32 0.0, %v1289
  %v1291 = vpop.f32.mrb[0].mxu0
  %1292 = vmatprep.mubr.bf16.mxu0 0
  %1293 = vmatmul.mubr.bf16.gmra.mrb[0].mxu0 %v638
  %v1294 = vpop.f32.mrb[0].mxu0
  %v1295 = vadd.f32 0.0, %v1294
  %v1296 = vpop.f32.mrb[0].mxu0
  %v1297 = vpop.f32.mrb[0].mxu0
  %v1298 = vadd.f32 0.0, %v1297
  %v1299 = vpop.f32.mrb[0].mxu0
  %1300 = vmatprep.mubr.bf16.mxu0 0
  %1301 = vmatmul.mubr.bf16.gmra.mrb[0].mxu0 %v639
  %v1302 = vpop.f32.mrb[0].mxu0
  %v1303 = vadd.f32 0.0, %v1302
  %v1304 = vpop.f32.mrb[0].mxu0
  %v1305 = vpop.f32.mrb[0].mxu0
  %v1306 = vadd.f32 0.0, %v1305
  %v1307 = vpop.f32.mrb[0].mxu0
  %1308 = vmatprep.mubr.bf16.mxu0 0
  %1309 = vmatmul.mubr.bf16.gmra.mrb[0].mxu0 %v640
  %v1310 = vpop.f32.mrb[0].mxu0
  %v1311 = vadd.f32 0.0, %v1310
  %v1312 = vpop.f32.mrb[0].mxu0
  %v1313 = vpop.f32.mrb[0].mxu0
  %v1314 = vadd.f32 0.0, %v1313
  %v1315 = vpop.f32.mrb[0].mxu0
  %1316 = vmatprep.mubr.bf16.mxu0 0
  %1317 = vmatmul.mubr.bf16.gmra.mrb[0].mxu0 %v641
  %v1318 = vpop.f32.mrb[0].mxu0
  %v1319 = vadd.f32 0.0, %v1318
  %v1320 = vpop.f32.mrb[0].mxu0
  %v1321 = vpop.f32.mrb[0].mxu0
  %v1322 = vadd.f32 0.0, %v1321
  %v1323 = vpop.f32.mrb[0].mxu0
  %1324 = vmatprep.mubr.bf16.mxu0 0
  %1325 = vmatmul.mubr.bf16.gmra.mrb[0].mxu0 %v642
  %v1326 = vpop.f32.mrb[0].mxu0
  %v1327 = vadd.f32 0.0, %v1326
  %v1328 = vpop.f32.mrb[0].mxu0
  %v1329 = vpop.f32.mrb[0].mxu0
  %v1330 = vadd.f32 0.0, %v1329
  %v1331 = vpop.f32.mrb[0].mxu0
  %1332 = vmatprep.mubr.bf16.mxu0 0
  %1333 = vmatmul.mubr.bf16.gmra.mrb[0].mxu0 %v643
  %v1334 = vpop.f32.mrb[0].mxu0
  %v1335 = vadd.f32 0.0, %v1334
  %v1336 = vpop.f32.mrb[0].mxu0
  %v1337 = vpop.f32.mrb[0].mxu0
  %v1338 = vadd.f32 0.0, %v1337
  %v1339 = vpop.f32.mrb[0].mxu0
  %1340 = vmatprep.mubr.bf16.mxu0 0
  %1341 = vmatmul.mubr.bf16.gmra.mrb[0].mxu0 %v644
  %v1342 = vpop.f32.mrb[0].mxu0
  %v1343 = vadd.f32 0.0, %v1342
  %v1344 = vpop.f32.mrb[0].mxu0
  %v1345 = vpop.f32.mrb[0].mxu0
  %v1346 = vadd.f32 0.0, %v1345
  %v1347 = vpop.f32.mrb[0].mxu0
  %1348 = vmatprep.mubr.bf16.mxu0 0
  %1349 = vmatmul.mubr.bf16.gmra.mrb[0].mxu0 %v645
  %v1350 = vpop.f32.mrb[0].mxu0
  %v1351 = vadd.f32 0.0, %v1350
  %v1352 = vpop.f32.mrb[0].mxu0
  %v1353 = vpop.f32.mrb[0].mxu0
  %v1354 = vadd.f32 0.0, %v1353
  %v1355 = vpop.f32.mrb[0].mxu0
  %1356 = vmatprep.mubr.bf16.mxu0 0
  %1357 = vmatmul.mubr.bf16.gmra.mrb[0].mxu0 %v646
  %v1358 = vpop.f32.mrb[0].mxu0
  %v1359 = vadd.f32 0.0, %v1358
  %v1360 = vpop.f32.mrb[0].mxu0
  %v1361 = vpop.f32.mrb[0].mxu0
  %v1362 = vadd.f32 0.0, %v1361
  %v1363 = vpop.f32.mrb[0].mxu0
  %1364 = vmatprep.mubr.bf16.mxu0 0
  %1365 = vmatmul.mubr.bf16.gmra.mrb[0].mxu0 %v647
  %v1366 = vpop.f32.mrb[0].mxu0
  %v1367 = vadd.f32 0.0, %v1366
  %v1368 = vpop.f32.mrb[0].mxu0
  %v1369 = vpop.f32.mrb[0].mxu0
  %v1370 = vadd.f32 0.0, %v1369
  %v1371 = vpop.f32.mrb[0].mxu0
  %1372 = vmatprep.mubr.bf16.mxu0 0
  %1373 = vmatmul.mubr.bf16.gmra.mrb[0].mxu0 %v648
  %v1374 = vpop.f32.mrb[0].mxu0
  %v1375 = vadd.f32 0.0, %v1374
  %v1376 = vpop.f32.mrb[0].mxu0
  %v1377 = vpop.f32.mrb[0].mxu0
  %v1378 = vadd.f32 0.0, %v1377
  %v1379 = vpop.f32.mrb[0].mxu0
  %1380 = vmatprep.mubr.bf16.mxu0 0
  %1381 = vmatmul.mubr.bf16.gmra.mrb[0].mxu0 %v649
  %v1382 = vpop.f32.mrb[0].mxu0
  %v1383 = vadd.f32 0.0, %v1382
  %v1384 = vpop.f32.mrb[0].mxu0
  %v1385 = vpop.f32.mrb[0].mxu0
  %v1386 = vadd.f32 0.0, %v1385
  %v1387 = vpop.f32.mrb[0].mxu0
  %1388 = vmatprep.mubr.bf16.mxu0 0
  %1389 = vmatmul.mubr.bf16.gmra.mrb[0].mxu0 %v650
  %v1390 = vpop.f32.mrb[0].mxu0
  %v1391 = vadd.f32 0.0, %v1390
  %v1392 = vpop.f32.mrb[0].mxu0
  %v1393 = vpop.f32.mrb[0].mxu0
  %v1394 = vadd.f32 0.0, %v1393
  %v1395 = vpop.f32.mrb[0].mxu0
  %1396 = vmatprep.mubr.bf16.mxu0 0
  %1397 = vmatmul.mubr.bf16.gmra.mrb[0].mxu0 %v651
  %v1398 = vpop.f32.mrb[0].mxu0
  %v1399 = vadd.f32 0.0, %v1398
  %v1400 = vpop.f32.mrb[0].mxu0
  %v1401 = vpop.f32.mrb[0].mxu0
  %v1402 = vadd.f32 0.0, %v1401
  %v1403 = vpop.f32.mrb[0].mxu0
  %1404 = vmatprep.mubr.bf16.mxu0 0
  %1405 = vmatmul.mubr.bf16.gmra.mrb[0].mxu0 %v652
  %v1406 = vpop.f32.mrb[0].mxu0
  %v1407 = vadd.f32 0.0, %v1406
  %v1408 = vpop.f32.mrb[0].mxu0
  %v1409 = vpop.f32.mrb[0].mxu0
  %v1410 = vadd.f32 0.0, %v1409
  %v1411 = vpop.f32.mrb[0].mxu0
  %1412 = vmatprep.mubr.bf16.mxu0 0
  %1413 = vmatmul.mubr.bf16.gmra.mrb[0].mxu0 %v653
  %v1414 = vpop.f32.mrb[0].mxu0
  %v1415 = vadd.f32 0.0, %v1414
  %v1416 = vpop.f32.mrb[0].mxu0
  %v1417 = vpop.f32.mrb[0].mxu0
  %v1418 = vadd.f32 0.0, %v1417
  %v1419 = vpop.f32.mrb[0].mxu0
  %1420 = vmatprep.mubr.bf16.mxu0 0
  %1421 = vmatmul.mubr.bf16.gmra.mrb[0].mxu0 %v654
  %v1422 = vpop.f32.mrb[0].mxu0
  %v1423 = vadd.f32 0.0, %v1422
  %v1424 = vpop.f32.mrb[0].mxu0
  %v1425 = vpop.f32.mrb[0].mxu0
  %v1426 = vadd.f32 0.0, %v1425
  %v1427 = vpop.f32.mrb[0].mxu0
  %1428 = vmatprep.mubr.bf16.mxu0 0
  %1429 = vmatmul.mubr.bf16.gmra.mrb[0].mxu0 %v655
  %v1430 = vpop.f32.mrb[0].mxu0
  %v1431 = vadd.f32 0.0, %v1430
  %v1432 = vpop.f32.mrb[0].mxu0
  %v1433 = vpop.f32.mrb[0].mxu0
  %v1434 = vadd.f32 0.0, %v1433
  %v1435 = vpop.f32.mrb[0].mxu0
  %1436 = vmatprep.mubr.bf16.mxu0 0
  %1437 = vmatmul.mubr.bf16.gmra.mrb[0].mxu0 %v656
  %v1438 = vpop.f32.mrb[0].mxu0
  %v1439 = vadd.f32 0.0, %v1438
  %v1440 = vpop.f32.mrb[0].mxu0
  %v1441 = vpop.f32.mrb[0].mxu0
  %v1442 = vadd.f32 0.0, %v1441
  %v1443 = vpop.f32.mrb[0].mxu0
  %1444 = vmatprep.mubr.bf16.mxu0 0
  %1445 = vmatmul.mubr.bf16.gmra.mrb[0].mxu0 %v657
  %v1446 = vpop.f32.mrb[0].mxu0
  %v1447 = vadd.f32 0.0, %v1446
  %v1448 = vpop.f32.mrb[0].mxu0
  %v1449 = vpop.f32.mrb[0].mxu0
  %v1450 = vadd.f32 0.0, %v1449
  %v1451 = vpop.f32.mrb[0].mxu0
  %1452 = vmatprep.mubr.bf16.mxu0 0
  %1453 = vmatmul.mubr.bf16.gmra.mrb[0].mxu0 %v658
  %v1454 = vpop.f32.mrb[0].mxu0
  %v1455 = vadd.f32 0.0, %v1454
  %v1456 = vpop.f32.mrb[0].mxu0
  %v1457 = vpop.f32.mrb[0].mxu0
  %v1458 = vadd.f32 0.0, %v1457
  %v1459 = vpop.f32.mrb[0].mxu0
  %1460 = vdwg.mxu0
  %v1461 = vadd.f32 %v211, %v854
  %v1462 = vadd.f32 %v212, %v856
  %v1463 = vadd.f32 %v213, %v1207
  %v1464 = vadd.f32 %v214, %v858
  %v1465 = vadd.f32 %v215, %v860
  %v1466 = vadd.f32 %v216, %v1210
  %v1467 = vadd.f32 %v217, %v864
  %v1468 = vadd.f32 %v218, %v866
  %v1469 = vadd.f32 %v219, %v1215
  %v1470 = vadd.f32 %v220, %v868
  %v1471 = vadd.f32 %v221, %v870
  %v1472 = vadd.f32 %v222, %v1218
  %v1473 = vadd.f32 %v223, %v874
  %v1474 = vadd.f32 %v224, %v876
  %v1475 = vadd.f32 %v225, %v1223
  %v1476 = vadd.f32 %v226, %v878
  %v1477 = vadd.f32 %v227, %v880
  %v1478 = vadd.f32 %v228, %v1226
  %v1479 = vadd.f32 %v229, %v884
  %v1480 = vadd.f32 %v230, %v886
  %v1481 = vadd.f32 %v231, %v1231
  %v1482 = vadd.f32 %v232, %v888
  %v1483 = vadd.f32 %v233, %v890
  %v1484 = vadd.f32 %v234, %v1234
  %v1485 = vadd.f32 %v235, %v894
  %v1486 = vadd.f32 %v236, %v896
  %v1487 = vadd.f32 %v237, %v1239
  %v1488 = vadd.f32 %v238, %v898
  %v1489 = vadd.f32 %v239, %v900
  %v1490 = vadd.f32 %v240, %v1242
  %v1491 = vadd.f32 %v241, %v904
  %v1492 = vadd.f32 %v242, %v906
  %v1493 = vadd.f32 %v243, %v1247
  %v1494 = vadd.f32 %v244, %v908
  %v1495 = vadd.f32 %v245, %v910
  %v1496 = vadd.f32 %v246, %v1250
  %v1497 = vadd.f32 %v247, %v914
  %v1498 = vadd.f32 %v248, %v916
  %v1499 = vadd.f32 %v249, %v1255
  %v1500 = vadd.f32 %v250, %v918
  %v1501 = vadd.f32 %v251, %v920
  %v1502 = vadd.f32 %v252, %v1258
  %v1503 = vadd.f32 %v253, %v924
  %v1504 = vadd.f32 %v254, %v926
  %v1505 = vadd.f32 %v255, %v1263
  %v1506 = vadd.f32 %v256, %v928
  %v1507 = vadd.f32 %v257, %v930
  %v1508 = vadd.f32 %v258, %v1266
  %v1509 = vadd.f32 %v259, %v934
  %v1510 = vadd.f32 %v260, %v936
  %v1511 = vadd.f32 %v261, %v1271
  %v1512 = vadd.f32 %v262, %v938
  %v1513 = vadd.f32 %v263, %v940
  %v1514 = vadd.f32 %v264, %v1274
  %v1515 = vadd.f32 %v265, %v944
  %v1516 = vadd.f32 %v266, %v946
  %v1517 = vadd.f32 %v267, %v1279
  %v1518 = vadd.f32 %v268, %v948
  %v1519 = vadd.f32 %v269, %v950
  %v1520 = vadd.f32 %v270, %v1282
  %v1521 = vadd.f32 %v271, %v954
  %v1522 = vadd.f32 %v272, %v956
  %v1523 = vadd.f32 %v273, %v1287
  %v1524 = vadd.f32 %v274, %v958
  %v1525 = vadd.f32 %v275, %v960
  %v1526 = vadd.f32 %v276, %v1290
  %v1527 = vadd.f32 %v277, %v964
  %v1528 = vadd.f32 %v278, %v966
  %v1529 = vadd.f32 %v279, %v1295
  %v1530 = vadd.f32 %v280, %v968
  %v1531 = vadd.f32 %v281, %v970
  %v1532 = vadd.f32 %v282, %v1298
  %v1533 = vadd.f32 %v283, %v974
  %v1534 = vadd.f32 %v284, %v976
  %v1535 = vadd.f32 %v285, %v1303
  %v1536 = vadd.f32 %v286, %v978
  %v1537 = vadd.f32 %v287, %v980
  %v1538 = vadd.f32 %v288, %v1306
  %v1539 = vadd.f32 %v289, %v984
  %v1540 = vadd.f32 %v290, %v986
  %v1541 = vadd.f32 %v291, %v1311
  %v1542 = vadd.f32 %v292, %v988
  %v1543 = vadd.f32 %v293, %v990
  %v1544 = vadd.f32 %v294, %v1314
  %v1545 = vadd.f32 %v295, %v994
  %v1546 = vadd.f32 %v296, %v996
  %v1547 = vadd.f32 %v297, %v1319
  %v1548 = vadd.f32 %v298, %v998
  %v1549 = vadd.f32 %v299, %v1000
  %v1550 = vadd.f32 %v300, %v1322
  %v1551 = vadd.f32 %v301, %v1004
  %v1552 = vadd.f32 %v302, %v1006
  %v1553 = vadd.f32 %v303, %v1327
  %v1554 = vadd.f32 %v304, %v1008
  %v1555 = vadd.f32 %v305, %v1010
  %v1556 = vadd.f32 %v306, %v1330
  %v1557 = vadd.f32 %v307, %v1014
  %v1558 = vadd.f32 %v308, %v1016
  %v1559 = vadd.f32 %v309, %v1335
  %v1560 = vadd.f32 %v310, %v1018
  %v1561 = vadd.f32 %v311, %v1020
  %v1562 = vadd.f32 %v312, %v1338
  %v1563 = vadd.f32 %v313, %v1024
  %v1564 = vadd.f32 %v314, %v1026
  %v1565 = vadd.f32 %v315, %v1343
  %v1566 = vadd.f32 %v316, %v1028
  %v1567 = vadd.f32 %v317, %v1030
  %v1568 = vadd.f32 %v318, %v1346
  %v1569 = vadd.f32 %v319, %v1034
  %v1570 = vadd.f32 %v320, %v1036
  %v1571 = vadd.f32 %v321, %v1351
  %v1572 = vadd.f32 %v322, %v1038
  %v1573 = vadd.f32 %v323, %v1040
  %v1574 = vadd.f32 %v324, %v1354
  %v1575 = vadd.f32 %v325, %v1044
  %v1576 = vadd.f32 %v326, %v1046
  %v1577 = vadd.f32 %v327, %v1359
  %v1578 = vadd.f32 %v328, %v1048
  %v1579 = vadd.f32 %v329, %v1050
  %v1580 = vadd.f32 %v330, %v1362
  %v1581 = vadd.f32 %v331, %v1054
  %v1582 = vadd.f32 %v332, %v1056
  %v1583 = vadd.f32 %v333, %v1367
  %v1584 = vadd.f32 %v334, %v1058
  %v1585 = vadd.f32 %v335, %v1060
  %v1586 = vadd.f32 %v336, %v1370
  %v1587 = vadd.f32 %v337, %v1064
  %v1588 = vadd.f32 %v338, %v1066
  %v1589 = vadd.f32 %v339, %v1375
  %v1590 = vadd.f32 %v340, %v1068
  %v1591 = vadd.f32 %v341, %v1070
  %v1592 = vadd.f32 %v342, %v1378
  %v1593 = vadd.f32 %v343, %v1074
  %v1594 = vadd.f32 %v344, %v1076
  %v1595 = vadd.f32 %v345, %v1383
  %v1596 = vadd.f32 %v346, %v1078
  %v1597 = vadd.f32 %v347, %v1080
  %v1598 = vadd.f32 %v348, %v1386
  %v1599 = vadd.f32 %v349, %v1084
  %v1600 = vadd.f32 %v350, %v1086
  %v1601 = vadd.f32 %v351, %v1391
  %v1602 = vadd.f32 %v352, %v1088
  %v1603 = vadd.f32 %v353, %v1090
  %v1604 = vadd.f32 %v354, %v1394
  %v1605 = vadd.f32 %v355, %v1094
  %v1606 = vadd.f32 %v356, %v1096
  %v1607 = vadd.f32 %v357, %v1399
  %v1608 = vadd.f32 %v358, %v1098
  %v1609 = vadd.f32 %v359, %v1100
  %v1610 = vadd.f32 %v360, %v1402
  %v1611 = vadd.f32 %v361, %v1104
  %v1612 = vadd.f32 %v362, %v1106
  %v1613 = vadd.f32 %v363, %v1407
  %v1614 = vadd.f32 %v364, %v1108
  %v1615 = vadd.f32 %v365, %v1110
  %v1616 = vadd.f32 %v366, %v1410
  %v1617 = vadd.f32 %v367, %v1114
  %v1618 = vadd.f32 %v368, %v1116
  %v1619 = vadd.f32 %v369, %v1415
  %v1620 = vadd.f32 %v370, %v1118
  %v1621 = vadd.f32 %v371, %v1120
  %v1622 = vadd.f32 %v372, %v1418
  %v1623 = vadd.f32 %v373, %v1124
  %v1624 = vadd.f32 %v374, %v1126
  %v1625 = vadd.f32 %v375, %v1423
  %v1626 = vadd.f32 %v376, %v1128
  %v1627 = vadd.f32 %v377, %v1130
  %v1628 = vadd.f32 %v378, %v1426
  %v1629 = vadd.f32 %v379, %v1134
  %v1630 = vadd.f32 %v380, %v1136
  %v1631 = vadd.f32 %v381, %v1431
  %v1632 = vadd.f32 %v382, %v1138
  %v1633 = vadd.f32 %v383, %v1140
  %v1634 = vadd.f32 %v384, %v1434
  %v1635 = vadd.f32 %v385, %v1144
  %v1636 = vadd.f32 %v386, %v1146
  %v1637 = vadd.f32 %v387, %v1439
  %v1638 = vadd.f32 %v388, %v1148
  %v1639 = vadd.f32 %v389, %v1150
  %v1640 = vadd.f32 %v390, %v1442
  %v1641 = vadd.f32 %v391, %v1154
  %v1642 = vadd.f32 %v392, %v1156
  %v1643 = vadd.f32 %v393, %v1447
  %v1644 = vadd.f32 %v394, %v1158
  %v1645 = vadd.f32 %v395, %v1160
  %v1646 = vadd.f32 %v396, %v1450
  %v1647 = vadd.f32 %v397, %v1164
  %v1648 = vadd.f32 %v398, %v1166
  %v1649 = vadd.f32 %v399, %v1455
  %v1650 = vadd.f32 %v400, %v1168
  %v1651 = vadd.f32 %v401, %v1170
  %v1652 = vadd.f32 %v402, %v1458
  %1653 = vst [vmem:[#allocation2] sm:$0xff] %v1461
  %1654 = vst [vmem:[#allocation2 + $0x8] sm:$0xff] %v1462
  %1655 = vst [vmem:[#allocation2 + $0x10] sm:$0xff] %v1463
  %1656 = vst [vmem:[#allocation2 + $0x18] sm:$0xff] %v1464
  %1657 = vst [vmem:[#allocation2 + $0x20] sm:$0xff] %v1465
  %1658 = vst [vmem:[#allocation2 + $0x28] sm:$0xff] %v1466
  %1659 = vst [vmem:[#allocation2 + $0x30] sm:$0xff] %v1467
  %1660 = vst [vmem:[#allocation2 + $0x38] sm:$0xff] %v1468
  %1661 = vst [vmem:[#allocation2 + $0x40] sm:$0xff] %v1469
  %1662 = vst [vmem:[#allocation2 + $0x48] sm:$0xff] %v1470
  %1663 = vst [vmem:[#allocation2 + $0x50] sm:$0xff] %v1471
  %1664 = vst [vmem:[#allocation2 + $0x58] sm:$0xff] %v1472
  %1665 = vst [vmem:[#allocation2 + $0x60] sm:$0xff] %v1473
  %1666 = vst [vmem:[#allocation2 + $0x68] sm:$0xff] %v1474
  %1667 = vst [vmem:[#allocation2 + $0x70] sm:$0xff] %v1475
  %1668 = vst [vmem:[#allocation2 + $0x78] sm:$0xff] %v1476
  %1669 = vst [vmem:[#allocation2 + $0x80] sm:$0xff] %v1477
  %1670 = vst [vmem:[#allocation2 + $0x88] sm:$0xff] %v1478
  %1671 = vst [vmem:[#allocation2 + $0x90] sm:$0xff] %v1479
  %1672 = vst [vmem:[#allocation2 + $0x98] sm:$0xff] %v1480
  %1673 = vst [vmem:[#allocation2 + $0xa0] sm:$0xff] %v1481
  %1674 = vst [vmem:[#allocation2 + $0xa8] sm:$0xff] %v1482
  %1675 = vst [vmem:[#allocation2 + $0xb0] sm:$0xff] %v1483
  %1676 = vst [vmem:[#allocation2 + $0xb8] sm:$0xff] %v1484
  %1677 = vst [vmem:[#allocation2 + $0xc0] sm:$0xff] %v1485
  %1678 = vst [vmem:[#allocation2 + $0xc8] sm:$0xff] %v1486
  %1679 = vst [vmem:[#allocation2 + $0xd0] sm:$0xff] %v1487
  %1680 = vst [vmem:[#allocation2 + $0xd8] sm:$0xff] %v1488
  %1681 = vst [vmem:[#allocation2 + $0xe0] sm:$0xff] %v1489
  %1682 = vst [vmem:[#allocation2 + $0xe8] sm:$0xff] %v1490
  %1683 = vst [vmem:[#allocation2 + $0xf0] sm:$0xff] %v1491
  %1684 = vst [vmem:[#allocation2 + $0xf8] sm:$0xff] %v1492
  %1685 = vst [vmem:[#allocation2 + $0x100] sm:$0xff] %v1493
  %1686 = vst [vmem:[#allocation2 + $0x108] sm:$0xff] %v1494
  %1687 = vst [vmem:[#allocation2 + $0x110] sm:$0xff] %v1495
  %1688 = vst [vmem:[#allocation2 + $0x118] sm:$0xff] %v1496
  %1689 = vst [vmem:[#allocation2 + $0x120] sm:$0xff] %v1497
  %1690 = vst [vmem:[#allocation2 + $0x128] sm:$0xff] %v1498
  %1691 = vst [vmem:[#allocation2 + $0x130] sm:$0xff] %v1499
  %1692 = vst [vmem:[#allocation2 + $0x138] sm:$0xff] %v1500
  %1693 = vst [vmem:[#allocation2 + $0x140] sm:$0xff] %v1501
  %1694 = vst [vmem:[#allocation2 + $0x148] sm:$0xff] %v1502
  %1695 = vst [vmem:[#allocation2 + $0x150] sm:$0xff] %v1503
  %1696 = vst [vmem:[#allocation2 + $0x158] sm:$0xff] %v1504
  %1697 = vst [vmem:[#allocation2 + $0x160] sm:$0xff] %v1505
  %1698 = vst [vmem:[#allocation2 + $0x168] sm:$0xff] %v1506
  %1699 = vst [vmem:[#allocation2 + $0x170] sm:$0xff] %v1507
  %1700 = vst [vmem:[#allocation2 + $0x178] sm:$0xff] %v1508
  %1701 = vst [vmem:[#allocation2 + $0x180] sm:$0xff] %v1509
  %1702 = vst [vmem:[#allocation2 + $0x188] sm:$0xff] %v1510
  %1703 = vst [vmem:[#allocation2 + $0x190] sm:$0xff] %v1511
  %1704 = vst [vmem:[#allocation2 + $0x198] sm:$0xff] %v1512
  %1705 = vst [vmem:[#allocation2 + $0x1a0] sm:$0xff] %v1513
  %1706 = vst [vmem:[#allocation2 + $0x1a8] sm:$0xff] %v1514
  %1707 = vst [vmem:[#allocation2 + $0x1b0] sm:$0xff] %v1515
  %1708 = vst [vmem:[#allocation2 + $0x1b8] sm:$0xff] %v1516
  %1709 = vst [vmem:[#allocation2 + $0x1c0] sm:$0xff] %v1517
  %1710 = vst [vmem:[#allocation2 + $0x1c8] sm:$0xff] %v1518
  %1711 = vst [vmem:[#allocation2 + $0x1d0] sm:$0xff] %v1519
  %1712 = vst [vmem:[#allocation2 + $0x1d8] sm:$0xff] %v1520
  %1713 = vst [vmem:[#allocation2 + $0x1e0] sm:$0xff] %v1521
  %1714 = vst [vmem:[#allocation2 + $0x1e8] sm:$0xff] %v1522
  %1715 = vst [vmem:[#allocation2 + $0x1f0] sm:$0xff] %v1523
  %1716 = vst [vmem:[#allocation2 + $0x1f8] sm:$0xff] %v1524
  %1717 = vst [vmem:[#allocation2 + $0x200] sm:$0xff] %v1525
  %1718 = vst [vmem:[#allocation2 + $0x208] sm:$0xff] %v1526
  %1719 = vst [vmem:[#allocation2 + $0x210] sm:$0xff] %v1527
  %1720 = vst [vmem:[#allocation2 + $0x218] sm:$0xff] %v1528
  %1721 = vst [vmem:[#allocation2 + $0x220] sm:$0xff] %v1529
  %1722 = vst [vmem:[#allocation2 + $0x228] sm:$0xff] %v1530
  %1723 = vst [vmem:[#allocation2 + $0x230] sm:$0xff] %v1531
  %1724 = vst [vmem:[#allocation2 + $0x238] sm:$0xff] %v1532
  %1725 = vst [vmem:[#allocation2 + $0x240] sm:$0xff] %v1533
  %1726 = vst [vmem:[#allocation2 + $0x248] sm:$0xff] %v1534
  %1727 = vst [vmem:[#allocation2 + $0x250] sm:$0xff] %v1535
  %1728 = vst [vmem:[#allocation2 + $0x258] sm:$0xff] %v1536
  %1729 = vst [vmem:[#allocation2 + $0x260] sm:$0xff] %v1537
  %1730 = vst [vmem:[#allocation2 + $0x268] sm:$0xff] %v1538
  %1731 = vst [vmem:[#allocation2 + $0x270] sm:$0xff] %v1539
  %1732 = vst [vmem:[#allocation2 + $0x278] sm:$0xff] %v1540
  %1733 = vst [vmem:[#allocation2 + $0x280] sm:$0xff] %v1541
  %1734 = vst [vmem:[#allocation2 + $0x288] sm:$0xff] %v1542
  %1735 = vst [vmem:[#allocation2 + $0x290] sm:$0xff] %v1543
  %1736 = vst [vmem:[#allocation2 + $0x298] sm:$0xff] %v1544
  %1737 = vst [vmem:[#allocation2 + $0x2a0] sm:$0xff] %v1545
  %1738 = vst [vmem:[#allocation2 + $0x2a8] sm:$0xff] %v1546
  %1739 = vst [vmem:[#allocation2 + $0x2b0] sm:$0xff] %v1547
  %1740 = vst [vmem:[#allocation2 + $0x2b8] sm:$0xff] %v1548
  %1741 = vst [vmem:[#allocation2 + $0x2c0] sm:$0xff] %v1549
  %1742 = vst [vmem:[#allocation2 + $0x2c8] sm:$0xff] %v1550
  %1743 = vst [vmem:[#allocation2 + $0x2d0] sm:$0xff] %v1551
  %1744 = vst [vmem:[#allocation2 + $0x2d8] sm:$0xff] %v1552
  %1745 = vst [vmem:[#allocation2 + $0x2e0] sm:$0xff] %v1553
  %1746 = vst [vmem:[#allocation2 + $0x2e8] sm:$0xff] %v1554
  %1747 = vst [vmem:[#allocation2 + $0x2f0] sm:$0xff] %v1555
  %1748 = vst [vmem:[#allocation2 + $0x2f8] sm:$0xff] %v1556
  %1749 = vst [vmem:[#allocation2 + $0x300] sm:$0xff] %v1557
  %1750 = vst [vmem:[#allocation2 + $0x308] sm:$0xff] %v1558
  %1751 = vst [vmem:[#allocation2 + $0x310] sm:$0xff] %v1559
  %1752 = vst [vmem:[#allocation2 + $0x318] sm:$0xff] %v1560
  %1753 = vst [vmem:[#allocation2 + $0x320] sm:$0xff] %v1561
  %1754 = vst [vmem:[#allocation2 + $0x328] sm:$0xff] %v1562
  %1755 = vst [vmem:[#allocation2 + $0x330] sm:$0xff] %v1563
  %1756 = vst [vmem:[#allocation2 + $0x338] sm:$0xff] %v1564
  %1757 = vst [vmem:[#allocation2 + $0x340] sm:$0xff] %v1565
  %1758 = vst [vmem:[#allocation2 + $0x348] sm:$0xff] %v1566
  %1759 = vst [vmem:[#allocation2 + $0x350] sm:$0xff] %v1567
  %1760 = vst [vmem:[#allocation2 + $0x358] sm:$0xff] %v1568
  %1761 = vst [vmem:[#allocation2 + $0x360] sm:$0xff] %v1569
  %1762 = vst [vmem:[#allocation2 + $0x368] sm:$0xff] %v1570
  %1763 = vst [vmem:[#allocation2 + $0x370] sm:$0xff] %v1571
  %1764 = vst [vmem:[#allocation2 + $0x378] sm:$0xff] %v1572
  %1765 = vst [vmem:[#allocation2 + $0x380] sm:$0xff] %v1573
  %1766 = vst [vmem:[#allocation2 + $0x388] sm:$0xff] %v1574
  %1767 = vst [vmem:[#allocation2 + $0x390] sm:$0xff] %v1575
  %1768 = vst [vmem:[#allocation2 + $0x398] sm:$0xff] %v1576
  %1769 = vst [vmem:[#allocation2 + $0x3a0] sm:$0xff] %v1577
  %1770 = vst [vmem:[#allocation2 + $0x3a8] sm:$0xff] %v1578
  %1771 = vst [vmem:[#allocation2 + $0x3b0] sm:$0xff] %v1579
  %1772 = vst [vmem:[#allocation2 + $0x3b8] sm:$0xff] %v1580
  %1773 = vst [vmem:[#allocation2 + $0x3c0] sm:$0xff] %v1581
  %1774 = vst [vmem:[#allocation2 + $0x3c8] sm:$0xff] %v1582
  %1775 = vst [vmem:[#allocation2 + $0x3d0] sm:$0xff] %v1583
  %1776 = vst [vmem:[#allocation2 + $0x3d8] sm:$0xff] %v1584
  %1777 = vst [vmem:[#allocation2 + $0x3e0] sm:$0xff] %v1585
  %1778 = vst [vmem:[#allocation2 + $0x3e8] sm:$0xff] %v1586
  %1779 = vst [vmem:[#allocation2 + $0x3f0] sm:$0xff] %v1587
  %1780 = vst [vmem:[#allocation2 + $0x3f8] sm:$0xff] %v1588
  %1781 = vst [vmem:[#allocation2 + $0x400] sm:$0xff] %v1589
  %1782 = vst [vmem:[#allocation2 + $0x408] sm:$0xff] %v1590
  %1783 = vst [vmem:[#allocation2 + $0x410] sm:$0xff] %v1591
  %1784 = vst [vmem:[#allocation2 + $0x418] sm:$0xff] %v1592
  %1785 = vst [vmem:[#allocation2 + $0x420] sm:$0xff] %v1593
  %1786 = vst [vmem:[#allocation2 + $0x428] sm:$0xff] %v1594
  %1787 = vst [vmem:[#allocation2 + $0x430] sm:$0xff] %v1595
  %1788 = vst [vmem:[#allocation2 + $0x438] sm:$0xff] %v1596
  %1789 = vst [vmem:[#allocation2 + $0x440] sm:$0xff] %v1597
  %1790 = vst [vmem:[#allocation2 + $0x448] sm:$0xff] %v1598
  %1791 = vst [vmem:[#allocation2 + $0x450] sm:$0xff] %v1599
  %1792 = vst [vmem:[#allocation2 + $0x458] sm:$0xff] %v1600
  %1793 = vst [vmem:[#allocation2 + $0x460] sm:$0xff] %v1601
  %1794 = vst [vmem:[#allocation2 + $0x468] sm:$0xff] %v1602
  %1795 = vst [vmem:[#allocation2 + $0x470] sm:$0xff] %v1603
  %1796 = vst [vmem:[#allocation2 + $0x478] sm:$0xff] %v1604
  %1797 = vst [vmem:[#allocation2 + $0x480] sm:$0xff] %v1605
  %1798 = vst [vmem:[#allocation2 + $0x488] sm:$0xff] %v1606
  %1799 = vst [vmem:[#allocation2 + $0x490] sm:$0xff] %v1607
  %1800 = vst [vmem:[#allocation2 + $0x498] sm:$0xff] %v1608
  %1801 = vst [vmem:[#allocation2 + $0x4a0] sm:$0xff] %v1609
  %1802 = vst [vmem:[#allocation2 + $0x4a8] sm:$0xff] %v1610
  %1803 = vst [vmem:[#allocation2 + $0x4b0] sm:$0xff] %v1611
  %1804 = vst [vmem:[#allocation2 + $0x4b8] sm:$0xff] %v1612
  %1805 = vst [vmem:[#allocation2 + $0x4c0] sm:$0xff] %v1613
  %1806 = vst [vmem:[#allocation2 + $0x4c8] sm:$0xff] %v1614
  %1807 = vst [vmem:[#allocation2 + $0x4d0] sm:$0xff] %v1615
  %1808 = vst [vmem:[#allocation2 + $0x4d8] sm:$0xff] %v1616
  %1809 = vst [vmem:[#allocation2 + $0x4e0] sm:$0xff] %v1617
  %1810 = vst [vmem:[#allocation2 + $0x4e8] sm:$0xff] %v1618
  %1811 = vst [vmem:[#allocation2 + $0x4f0] sm:$0xff] %v1619
  %1812 = vst [vmem:[#allocation2 + $0x4f8] sm:$0xff] %v1620
  %1813 = vst [vmem:[#allocation2 + $0x500] sm:$0xff] %v1621
  %1814 = vst [vmem:[#allocation2 + $0x508] sm:$0xff] %v1622
  %1815 = vst [vmem:[#allocation2 + $0x510] sm:$0xff] %v1623
  %1816 = vst [vmem:[#allocation2 + $0x518] sm:$0xff] %v1624
  %1817 = vst [vmem:[#allocation2 + $0x520] sm:$0xff] %v1625
  %1818 = vst [vmem:[#allocation2 + $0x528] sm:$0xff] %v1626
  %1819 = vst [vmem:[#allocation2 + $0x530] sm:$0xff] %v1627
  %1820 = vst [vmem:[#allocation2 + $0x538] sm:$0xff] %v1628
  %1821 = vst [vmem:[#allocation2 + $0x540] sm:$0xff] %v1629
  %1822 = vst [vmem:[#allocation2 + $0x548] sm:$0xff] %v1630
  %1823 = vst [vmem:[#allocation2 + $0x550] sm:$0xff] %v1631
  %1824 = vst [vmem:[#allocation2 + $0x558] sm:$0xff] %v1632
  %1825 = vst [vmem:[#allocation2 + $0x560] sm:$0xff] %v1633
  %1826 = vst [vmem:[#allocation2 + $0x568] sm:$0xff] %v1634
  %1827 = vst [vmem:[#allocation2 + $0x570] sm:$0xff] %v1635
  %1828 = vst [vmem:[#allocation2 + $0x578] sm:$0xff] %v1636
  %1829 = vst [vmem:[#allocation2 + $0x580] sm:$0xff] %v1637
  %1830 = vst [vmem:[#allocation2 + $0x588] sm:$0xff] %v1638
  %1831 = vst [vmem:[#allocation2 + $0x590] sm:$0xff] %v1639
  %1832 = vst [vmem:[#allocation2 + $0x598] sm:$0xff] %v1640
  %1833 = vst [vmem:[#allocation2 + $0x5a0] sm:$0xff] %v1641
  %1834 = vst [vmem:[#allocation2 + $0x5a8] sm:$0xff] %v1642
  %1835 = vst [vmem:[#allocation2 + $0x5b0] sm:$0xff] %v1643
  %1836 = vst [vmem:[#allocation2 + $0x5b8] sm:$0xff] %v1644
  %1837 = vst [vmem:[#allocation2 + $0x5c0] sm:$0xff] %v1645
  %1838 = vst [vmem:[#allocation2 + $0x5c8] sm:$0xff] %v1646
  %1839 = vst [vmem:[#allocation2 + $0x5d0] sm:$0xff] %v1647
  %1840 = vst [vmem:[#allocation2 + $0x5d8] sm:$0xff] %v1648
  %1841 = vst [vmem:[#allocation2 + $0x5e0] sm:$0xff] %v1649
  %1842 = vst [vmem:[#allocation2 + $0x5e8] sm:$0xff] %v1650
  %1843 = vst [vmem:[#allocation2 + $0x5f0] sm:$0xff] %v1651
  %1844 = vst [vmem:[#allocation2 + $0x5f8] sm:$0xff] %v1652
  // Predicated region
  $region18: #{self_attention_forward.3} parent=0 // pred_check
    %p1845 = pneg %p15
  $region19: #{self_attention_forward.3} parent=0 // pred_check_branch
    %1847 = sbr.rel (%p1845) target = $region21
  $region20: #{self_attention_forward.3} parent=0 // pred_region
    %v1848 = vld [vmem:[#allocation2] sm:$0xff]
    %v1849 = vld [vmem:[#allocation2 + $0x8] sm:$0xff]
    %v1850 = vld [vmem:[#allocation2 + $0x10] sm:$0xff]
    %v1851 = vld [vmem:[#allocation2 + $0x18] sm:$0xff]
    %v1852 = vld [vmem:[#allocation2 + $0x20] sm:$0xff]
    %v1853 = vld [vmem:[#allocation2 + $0x28] sm:$0xff]
    %v1854 = vld [vmem:[#allocation2 + $0x30] sm:$0xff]
    %v1855 = vld [vmem:[#allocation2 + $0x38] sm:$0xff]
    %v1856 = vld [vmem:[#allocation2 + $0x40] sm:$0xff]
    %v1857 = vld [vmem:[#allocation2 + $0x48] sm:$0xff]
    %v1858 = vld [vmem:[#allocation2 + $0x50] sm:$0xff]
    %v1859 = vld [vmem:[#allocation2 + $0x58] sm:$0xff]
    %v1860 = vld [vmem:[#allocation2 + $0x60] sm:$0xff]
    %v1861 = vld [vmem:[#allocation2 + $0x68] sm:$0xff]
    %v1862 = vld [vmem:[#allocation2 + $0x70] sm:$0xff]
    %v1863 = vld [vmem:[#allocation2 + $0x78] sm:$0xff]
    %v1864 = vld [vmem:[#allocation2 + $0x80] sm:$0xff]
    %v1865 = vld [vmem:[#allocation2 + $0x88] sm:$0xff]
    %v1866 = vld [vmem:[#allocation2 + $0x90] sm:$0xff]
    %v1867 = vld [vmem:[#allocation2 + $0x98] sm:$0xff]
    %v1868 = vld [vmem:[#allocation2 + $0xa0] sm:$0xff]
    %v1869 = vld [vmem:[#allocation2 + $0xa8] sm:$0xff]
    %v1870 = vld [vmem:[#allocation2 + $0xb0] sm:$0xff]
    %v1871 = vld [vmem:[#allocation2 + $0xb8] sm:$0xff]
    %v1872 = vld [vmem:[#allocation2 + $0xc0] sm:$0xff]
    %v1873 = vld [vmem:[#allocation2 + $0xc8] sm:$0xff]
    %v1874 = vld [vmem:[#allocation2 + $0xd0] sm:$0xff]
    %v1875 = vld [vmem:[#allocation2 + $0xd8] sm:$0xff]
    %v1876 = vld [vmem:[#allocation2 + $0xe0] sm:$0xff]
    %v1877 = vld [vmem:[#allocation2 + $0xe8] sm:$0xff]
    %v1878 = vld [vmem:[#allocation2 + $0xf0] sm:$0xff]
    %v1879 = vld [vmem:[#allocation2 + $0xf8] sm:$0xff]
    %v1880 = vld [vmem:[#allocation2 + $0x100] sm:$0xff]
    %v1881 = vld [vmem:[#allocation2 + $0x108] sm:$0xff]
    %v1882 = vld [vmem:[#allocation2 + $0x110] sm:$0xff]
    %v1883 = vld [vmem:[#allocation2 + $0x118] sm:$0xff]
    %v1884 = vld [vmem:[#allocation2 + $0x120] sm:$0xff]
    %v1885 = vld [vmem:[#allocation2 + $0x128] sm:$0xff]
    %v1886 = vld [vmem:[#allocation2 + $0x130] sm:$0xff]
    %v1887 = vld [vmem:[#allocation2 + $0x138] sm:$0xff]
    %v1888 = vld [vmem:[#allocation2 + $0x140] sm:$0xff]
    %v1889 = vld [vmem:[#allocation2 + $0x148] sm:$0xff]
    %v1890 = vld [vmem:[#allocation2 + $0x150] sm:$0xff]
    %v1891 = vld [vmem:[#allocation2 + $0x158] sm:$0xff]
    %v1892 = vld [vmem:[#allocation2 + $0x160] sm:$0xff]
    %v1893 = vld [vmem:[#allocation2 + $0x168] sm:$0xff]
    %v1894 = vld [vmem:[#allocation2 + $0x170] sm:$0xff]
    %v1895 = vld [vmem:[#allocation2 + $0x178] sm:$0xff]
    %v1896 = vld [vmem:[#allocation2 + $0x180] sm:$0xff]
    %v1897 = vld [vmem:[#allocation2 + $0x188] sm:$0xff]
    %v1898 = vld [vmem:[#allocation2 + $0x190] sm:$0xff]
    %v1899 = vld [vmem:[#allocation2 + $0x198] sm:$0xff]
    %v1900 = vld [vmem:[#allocation2 + $0x1a0] sm:$0xff]
    %v1901 = vld [vmem:[#allocation2 + $0x1a8] sm:$0xff]
    %v1902 = vld [vmem:[#allocation2 + $0x1b0] sm:$0xff]
    %v1903 = vld [vmem:[#allocation2 + $0x1b8] sm:$0xff]
    %v1904 = vld [vmem:[#allocation2 + $0x1c0] sm:$0xff]
    %v1905 = vld [vmem:[#allocation2 + $0x1c8] sm:$0xff]
    %v1906 = vld [vmem:[#allocation2 + $0x1d0] sm:$0xff]
    %v1907 = vld [vmem:[#allocation2 + $0x1d8] sm:$0xff]
    %v1908 = vld [vmem:[#allocation2 + $0x1e0] sm:$0xff]
    %v1909 = vld [vmem:[#allocation2 + $0x1e8] sm:$0xff]
    %v1910 = vld [vmem:[#allocation2 + $0x1f0] sm:$0xff]
    %v1911 = vld [vmem:[#allocation2 + $0x1f8] sm:$0xff]
    %v1912 = vld [vmem:[#allocation2 + $0x200] sm:$0xff]
    %v1913 = vld [vmem:[#allocation2 + $0x208] sm:$0xff]
    %v1914 = vld [vmem:[#allocation2 + $0x210] sm:$0xff]
    %v1915 = vld [vmem:[#allocation2 + $0x218] sm:$0xff]
    %v1916 = vld [vmem:[#allocation2 + $0x220] sm:$0xff]
    %v1917 = vld [vmem:[#allocation2 + $0x228] sm:$0xff]
    %v1918 = vld [vmem:[#allocation2 + $0x230] sm:$0xff]
    %v1919 = vld [vmem:[#allocation2 + $0x238] sm:$0xff]
    %v1920 = vld [vmem:[#allocation2 + $0x240] sm:$0xff]
    %v1921 = vld [vmem:[#allocation2 + $0x248] sm:$0xff]
    %v1922 = vld [vmem:[#allocation2 + $0x250] sm:$0xff]
    %v1923 = vld [vmem:[#allocation2 + $0x258] sm:$0xff]
    %v1924 = vld [vmem:[#allocation2 + $0x260] sm:$0xff]
    %v1925 = vld [vmem:[#allocation2 + $0x268] sm:$0xff]
    %v1926 = vld [vmem:[#allocation2 + $0x270] sm:$0xff]
    %v1927 = vld [vmem:[#allocation2 + $0x278] sm:$0xff]
    %v1928 = vld [vmem:[#allocation2 + $0x280] sm:$0xff]
    %v1929 = vld [vmem:[#allocation2 + $0x288] sm:$0xff]
    %v1930 = vld [vmem:[#allocation2 + $0x290] sm:$0xff]
    %v1931 = vld [vmem:[#allocation2 + $0x298] sm:$0xff]
    %v1932 = vld [vmem:[#allocation2 + $0x2a0] sm:$0xff]
    %v1933 = vld [vmem:[#allocation2 + $0x2a8] sm:$0xff]
    %v1934 = vld [vmem:[#allocation2 + $0x2b0] sm:$0xff]
    %v1935 = vld [vmem:[#allocation2 + $0x2b8] sm:$0xff]
    %v1936 = vld [vmem:[#allocation2 + $0x2c0] sm:$0xff]
    %v1937 = vld [vmem:[#allocation2 + $0x2c8] sm:$0xff]
    %v1938 = vld [vmem:[#allocation2 + $0x2d0] sm:$0xff]
    %v1939 = vld [vmem:[#allocation2 + $0x2d8] sm:$0xff]
    %v1940 = vld [vmem:[#allocation2 + $0x2e0] sm:$0xff]
    %v1941 = vld [vmem:[#allocation2 + $0x2e8] sm:$0xff]
    %v1942 = vld [vmem:[#allocation2 + $0x2f0] sm:$0xff]
    %v1943 = vld [vmem:[#allocation2 + $0x2f8] sm:$0xff]
    %v1944 = vld [vmem:[#allocation2 + $0x300] sm:$0xff]
    %v1945 = vld [vmem:[#allocation2 + $0x308] sm:$0xff]
    %v1946 = vld [vmem:[#allocation2 + $0x310] sm:$0xff]
    %v1947 = vld [vmem:[#allocation2 + $0x318] sm:$0xff]
    %v1948 = vld [vmem:[#allocation2 + $0x320] sm:$0xff]
    %v1949 = vld [vmem:[#allocation2 + $0x328] sm:$0xff]
    %v1950 = vld [vmem:[#allocation2 + $0x330] sm:$0xff]
    %v1951 = vld [vmem:[#allocation2 + $0x338] sm:$0xff]
    %v1952 = vld [vmem:[#allocation2 + $0x340] sm:$0xff]
    %v1953 = vld [vmem:[#allocation2 + $0x348] sm:$0xff]
    %v1954 = vld [vmem:[#allocation2 + $0x350] sm:$0xff]
    %v1955 = vld [vmem:[#allocation2 + $0x358] sm:$0xff]
    %v1956 = vld [vmem:[#allocation2 + $0x360] sm:$0xff]
    %v1957 = vld [vmem:[#allocation2 + $0x368] sm:$0xff]
    %v1958 = vld [vmem:[#allocation2 + $0x370] sm:$0xff]
    %v1959 = vld [vmem:[#allocation2 + $0x378] sm:$0xff]
    %v1960 = vld [vmem:[#allocation2 + $0x380] sm:$0xff]
    %v1961 = vld [vmem:[#allocation2 + $0x388] sm:$0xff]
    %v1962 = vld [vmem:[#allocation2 + $0x390] sm:$0xff]
    %v1963 = vld [vmem:[#allocation2 + $0x398] sm:$0xff]
    %v1964 = vld [vmem:[#allocation2 + $0x3a0] sm:$0xff]
    %v1965 = vld [vmem:[#allocation2 + $0x3a8] sm:$0xff]
    %v1966 = vld [vmem:[#allocation2 + $0x3b0] sm:$0xff]
    %v1967 = vld [vmem:[#allocation2 + $0x3b8] sm:$0xff]
    %v1968 = vld [vmem:[#allocation2 + $0x3c0] sm:$0xff]
    %v1969 = vld [vmem:[#allocation2 + $0x3c8] sm:$0xff]
    %v1970 = vld [vmem:[#allocation2 + $0x3d0] sm:$0xff]
    %v1971 = vld [vmem:[#allocation2 + $0x3d8] sm:$0xff]
    %v1972 = vld [vmem:[#allocation2 + $0x3e0] sm:$0xff]
    %v1973 = vld [vmem:[#allocation2 + $0x3e8] sm:$0xff]
    %v1974 = vld [vmem:[#allocation2 + $0x3f0] sm:$0xff]
    %v1975 = vld [vmem:[#allocation2 + $0x3f8] sm:$0xff]
    %v1976 = vld [vmem:[#allocation2 + $0x400] sm:$0xff]
    %v1977 = vld [vmem:[#allocation2 + $0x408] sm:$0xff]
    %v1978 = vld [vmem:[#allocation2 + $0x410] sm:$0xff]
    %v1979 = vld [vmem:[#allocation2 + $0x418] sm:$0xff]
    %v1980 = vld [vmem:[#allocation2 + $0x420] sm:$0xff]
    %v1981 = vld [vmem:[#allocation2 + $0x428] sm:$0xff]
    %v1982 = vld [vmem:[#allocation2 + $0x430] sm:$0xff]
    %v1983 = vld [vmem:[#allocation2 + $0x438] sm:$0xff]
    %v1984 = vld [vmem:[#allocation2 + $0x440] sm:$0xff]
    %v1985 = vld [vmem:[#allocation2 + $0x448] sm:$0xff]
    %v1986 = vld [vmem:[#allocation2 + $0x450] sm:$0xff]
    %v1987 = vld [vmem:[#allocation2 + $0x458] sm:$0xff]
    %v1988 = vld [vmem:[#allocation2 + $0x460] sm:$0xff]
    %v1989 = vld [vmem:[#allocation2 + $0x468] sm:$0xff]
    %v1990 = vld [vmem:[#allocation2 + $0x470] sm:$0xff]
    %v1991 = vld [vmem:[#allocation2 + $0x478] sm:$0xff]
    %v1992 = vld [vmem:[#allocation2 + $0x480] sm:$0xff]
    %v1993 = vld [vmem:[#allocation2 + $0x488] sm:$0xff]
    %v1994 = vld [vmem:[#allocation2 + $0x490] sm:$0xff]
    %v1995 = vld [vmem:[#allocation2 + $0x498] sm:$0xff]
    %v1996 = vld [vmem:[#allocation2 + $0x4a0] sm:$0xff]
    %v1997 = vld [vmem:[#allocation2 + $0x4a8] sm:$0xff]
    %v1998 = vld [vmem:[#allocation2 + $0x4b0] sm:$0xff]
    %v1999 = vld [vmem:[#allocation2 + $0x4b8] sm:$0xff]
    %v2000 = vld [vmem:[#allocation2 + $0x4c0] sm:$0xff]
    %v2001 = vld [vmem:[#allocation2 + $0x4c8] sm:$0xff]
    %v2002 = vld [vmem:[#allocation2 + $0x4d0] sm:$0xff]
    %v2003 = vld [vmem:[#allocation2 + $0x4d8] sm:$0xff]
    %v2004 = vld [vmem:[#allocation2 + $0x4e0] sm:$0xff]
    %v2005 = vld [vmem:[#allocation2 + $0x4e8] sm:$0xff]
    %v2006 = vld [vmem:[#allocation2 + $0x4f0] sm:$0xff]
    %v2007 = vld [vmem:[#allocation2 + $0x4f8] sm:$0xff]
    %v2008 = vld [vmem:[#allocation2 + $0x500] sm:$0xff]
    %v2009 = vld [vmem:[#allocation2 + $0x508] sm:$0xff]
    %v2010 = vld [vmem:[#allocation2 + $0x510] sm:$0xff]
    %v2011 = vld [vmem:[#allocation2 + $0x518] sm:$0xff]
    %v2012 = vld [vmem:[#allocation2 + $0x520] sm:$0xff]
    %v2013 = vld [vmem:[#allocation2 + $0x528] sm:$0xff]
    %v2014 = vld [vmem:[#allocation2 + $0x530] sm:$0xff]
    %v2015 = vld [vmem:[#allocation2 + $0x538] sm:$0xff]
    %v2016 = vld [vmem:[#allocation2 + $0x540] sm:$0xff]
    %v2017 = vld [vmem:[#allocation2 + $0x548] sm:$0xff]
    %v2018 = vld [vmem:[#allocation2 + $0x550] sm:$0xff]
    %v2019 = vld [vmem:[#allocation2 + $0x558] sm:$0xff]
    %v2020 = vld [vmem:[#allocation2 + $0x560] sm:$0xff]
    %v2021 = vld [vmem:[#allocation2 + $0x568] sm:$0xff]
    %v2022 = vld [vmem:[#allocation2 + $0x570] sm:$0xff]
    %v2023 = vld [vmem:[#allocation2 + $0x578] sm:$0xff]
    %v2024 = vld [vmem:[#allocation2 + $0x580] sm:$0xff]
    %v2025 = vld [vmem:[#allocation2 + $0x588] sm:$0xff]
    %v2026 = vld [vmem:[#allocation2 + $0x590] sm:$0xff]
    %v2027 = vld [vmem:[#allocation2 + $0x598] sm:$0xff]
    %v2028 = vld [vmem:[#allocation2 + $0x5a0] sm:$0xff]
    %v2029 = vld [vmem:[#allocation2 + $0x5a8] sm:$0xff]
    %v2030 = vld [vmem:[#allocation2 + $0x5b0] sm:$0xff]
    %v2031 = vld [vmem:[#allocation2 + $0x5b8] sm:$0xff]
    %v2032 = vld [vmem:[#allocation2 + $0x5c0] sm:$0xff]
    %v2033 = vld [vmem:[#allocation2 + $0x5c8] sm:$0xff]
    %v2034 = vld [vmem:[#allocation2 + $0x5d0] sm:$0xff]
    %v2035 = vld [vmem:[#allocation2 + $0x5d8] sm:$0xff]
    %v2036 = vld [vmem:[#allocation2 + $0x5e0] sm:$0xff]
    %v2037 = vld [vmem:[#allocation2 + $0x5e8] sm:$0xff]
    %v2038 = vld [vmem:[#allocation2 + $0x5f0] sm:$0xff]
    %v2039 = vld [vmem:[#allocation2 + $0x5f8] sm:$0xff]
    %v2040 = vld [vmem:[%s2] sm:$0x7]
    %v2042 = vlaneseq
    %v2043 = vshrl.u32 %v2042, 7
    %v2044 = vsub.s32 0, %v2043
    %v2045 = vrot.slane %v2040, %v2044
    %v2046 = vlaneseq
    %v2047 = vshrl.u32 %v2046, 7
    %v2048 = vsub.s32 1, %v2047
    %v2049 = vrot.slane %v2040, %v2048
    %v2050 = vlaneseq
    %v2051 = vshrl.u32 %v2050, 7
    %v2052 = vsub.s32 2, %v2051
    %v2053 = vrot.slane %v2040, %v2052
    %v2057 = vadd.f32 %v1848, %v2045
    %v2058 = vadd.f32 %v1849, %v2049
    %v2059 = vadd.f32 %v1850, %v2053
    %v2060 = vadd.f32 %v1851, %v2045
    %v2061 = vadd.f32 %v1852, %v2049
    %v2062 = vadd.f32 %v1853, %v2053
    %v2063 = vadd.f32 %v1854, %v2045
    %v2064 = vadd.f32 %v1855, %v2049
    %v2065 = vadd.f32 %v1856, %v2053
    %v2066 = vadd.f32 %v1857, %v2045
    %v2067 = vadd.f32 %v1858, %v2049
    %v2068 = vadd.f32 %v1859, %v2053
    %v2069 = vadd.f32 %v1860, %v2045
    %v2070 = vadd.f32 %v1861, %v2049
    %v2071 = vadd.f32 %v1862, %v2053
    %v2072 = vadd.f32 %v1863, %v2045
    %v2073 = vadd.f32 %v1864, %v2049
    %v2074 = vadd.f32 %v1865, %v2053
    %v2075 = vadd.f32 %v1866, %v2045
    %v2076 = vadd.f32 %v1867, %v2049
    %v2077 = vadd.f32 %v1868, %v2053
    %v2078 = vadd.f32 %v1869, %v2045
    %v2079 = vadd.f32 %v1870, %v2049
    %v2080 = vadd.f32 %v1871, %v2053
    %v2081 = vadd.f32 %v1872, %v2045
    %v2082 = vadd.f32 %v1873, %v2049
    %v2083 = vadd.f32 %v1874, %v2053
    %v2084 = vadd.f32 %v1875, %v2045
    %v2085 = vadd.f32 %v1876, %v2049
    %v2086 = vadd.f32 %v1877, %v2053
    %v2087 = vadd.f32 %v1878, %v2045
    %v2088 = vadd.f32 %v1879, %v2049
    %v2089 = vadd.f32 %v1880, %v2053
    %v2090 = vadd.f32 %v1881, %v2045
    %v2091 = vadd.f32 %v1882, %v2049
    %v2092 = vadd.f32 %v1883, %v2053
    %v2093 = vadd.f32 %v1884, %v2045
    %v2094 = vadd.f32 %v1885, %v2049
    %v2095 = vadd.f32 %v1886, %v2053
    %v2096 = vadd.f32 %v1887, %v2045
    %v2097 = vadd.f32 %v1888, %v2049
    %v2098 = vadd.f32 %v1889, %v2053
    %v2099 = vadd.f32 %v1890, %v2045
    %v2100 = vadd.f32 %v1891, %v2049
    %v2101 = vadd.f32 %v1892, %v2053
    %v2102 = vadd.f32 %v1893, %v2045
    %v2103 = vadd.f32 %v1894, %v2049
    %v2104 = vadd.f32 %v1895, %v2053
    %v2105 = vadd.f32 %v1896, %v2045
    %v2106 = vadd.f32 %v1897, %v2049
    %v2107 = vadd.f32 %v1898, %v2053
    %v2108 = vadd.f32 %v1899, %v2045
    %v2109 = vadd.f32 %v1900, %v2049
    %v2110 = vadd.f32 %v1901, %v2053
    %v2111 = vadd.f32 %v1902, %v2045
    %v2112 = vadd.f32 %v1903, %v2049
    %v2113 = vadd.f32 %v1904, %v2053
    %v2114 = vadd.f32 %v1905, %v2045
    %v2115 = vadd.f32 %v1906, %v2049
    %v2116 = vadd.f32 %v1907, %v2053
    %v2117 = vadd.f32 %v1908, %v2045
    %v2118 = vadd.f32 %v1909, %v2049
    %v2119 = vadd.f32 %v1910, %v2053
    %v2120 = vadd.f32 %v1911, %v2045
    %v2121 = vadd.f32 %v1912, %v2049
    %v2122 = vadd.f32 %v1913, %v2053
    %v2123 = vadd.f32 %v1914, %v2045
    %v2124 = vadd.f32 %v1915, %v2049
    %v2125 = vadd.f32 %v1916, %v2053
    %v2126 = vadd.f32 %v1917, %v2045
    %v2127 = vadd.f32 %v1918, %v2049
    %v2128 = vadd.f32 %v1919, %v2053
    %v2129 = vadd.f32 %v1920, %v2045
    %v2130 = vadd.f32 %v1921, %v2049
    %v2131 = vadd.f32 %v1922, %v2053
    %v2132 = vadd.f32 %v1923, %v2045
    %v2133 = vadd.f32 %v1924, %v2049
    %v2134 = vadd.f32 %v1925, %v2053
    %v2135 = vadd.f32 %v1926, %v2045
    %v2136 = vadd.f32 %v1927, %v2049
    %v2137 = vadd.f32 %v1928, %v2053
    %v2138 = vadd.f32 %v1929, %v2045
    %v2139 = vadd.f32 %v1930, %v2049
    %v2140 = vadd.f32 %v1931, %v2053
    %v2141 = vadd.f32 %v1932, %v2045
    %v2142 = vadd.f32 %v1933, %v2049
    %v2143 = vadd.f32 %v1934, %v2053
    %v2144 = vadd.f32 %v1935, %v2045
    %v2145 = vadd.f32 %v1936, %v2049
    %v2146 = vadd.f32 %v1937, %v2053
    %v2147 = vadd.f32 %v1938, %v2045
    %v2148 = vadd.f32 %v1939, %v2049
    %v2149 = vadd.f32 %v1940, %v2053
    %v2150 = vadd.f32 %v1941, %v2045
    %v2151 = vadd.f32 %v1942, %v2049
    %v2152 = vadd.f32 %v1943, %v2053
    %v2153 = vadd.f32 %v1944, %v2045
    %v2154 = vadd.f32 %v1945, %v2049
    %v2155 = vadd.f32 %v1946, %v2053
    %v2156 = vadd.f32 %v1947, %v2045
    %v2157 = vadd.f32 %v1948, %v2049
    %v2158 = vadd.f32 %v1949, %v2053
    %v2159 = vadd.f32 %v1950, %v2045
    %v2160 = vadd.f32 %v1951, %v2049
    %v2161 = vadd.f32 %v1952, %v2053
    %v2162 = vadd.f32 %v1953, %v2045
    %v2163 = vadd.f32 %v1954, %v2049
    %v2164 = vadd.f32 %v1955, %v2053
    %v2165 = vadd.f32 %v1956, %v2045
    %v2166 = vadd.f32 %v1957, %v2049
    %v2167 = vadd.f32 %v1958, %v2053
    %v2168 = vadd.f32 %v1959, %v2045
    %v2169 = vadd.f32 %v1960, %v2049
    %v2170 = vadd.f32 %v1961, %v2053
    %v2171 = vadd.f32 %v1962, %v2045
    %v2172 = vadd.f32 %v1963, %v2049
    %v2173 = vadd.f32 %v1964, %v2053
    %v2174 = vadd.f32 %v1965, %v2045
    %v2175 = vadd.f32 %v1966, %v2049
    %v2176 = vadd.f32 %v1967, %v2053
    %v2177 = vadd.f32 %v1968, %v2045
    %v2178 = vadd.f32 %v1969, %v2049
    %v2179 = vadd.f32 %v1970, %v2053
    %v2180 = vadd.f32 %v1971, %v2045
    %v2181 = vadd.f32 %v1972, %v2049
    %v2182 = vadd.f32 %v1973, %v2053
    %v2183 = vadd.f32 %v1974, %v2045
    %v2184 = vadd.f32 %v1975, %v2049
    %v2185 = vadd.f32 %v1976, %v2053
    %v2186 = vadd.f32 %v1977, %v2045
    %v2187 = vadd.f32 %v1978, %v2049
    %v2188 = vadd.f32 %v1979, %v2053
    %v2189 = vadd.f32 %v1980, %v2045
    %v2190 = vadd.f32 %v1981, %v2049
    %v2191 = vadd.f32 %v1982, %v2053
    %v2192 = vadd.f32 %v1983, %v2045
    %v2193 = vadd.f32 %v1984, %v2049
    %v2194 = vadd.f32 %v1985, %v2053
    %v2195 = vadd.f32 %v1986, %v2045
    %v2196 = vadd.f32 %v1987, %v2049
    %v2197 = vadd.f32 %v1988, %v2053
    %v2198 = vadd.f32 %v1989, %v2045
    %v2199 = vadd.f32 %v1990, %v2049
    %v2200 = vadd.f32 %v1991, %v2053
    %v2201 = vadd.f32 %v1992, %v2045
    %v2202 = vadd.f32 %v1993, %v2049
    %v2203 = vadd.f32 %v1994, %v2053
    %v2204 = vadd.f32 %v1995, %v2045
    %v2205 = vadd.f32 %v1996, %v2049
    %v2206 = vadd.f32 %v1997, %v2053
    %v2207 = vadd.f32 %v1998, %v2045
    %v2208 = vadd.f32 %v1999, %v2049
    %v2209 = vadd.f32 %v2000, %v2053
    %v2210 = vadd.f32 %v2001, %v2045
    %v2211 = vadd.f32 %v2002, %v2049
    %v2212 = vadd.f32 %v2003, %v2053
    %v2213 = vadd.f32 %v2004, %v2045
    %v2214 = vadd.f32 %v2005, %v2049
    %v2215 = vadd.f32 %v2006, %v2053
    %v2216 = vadd.f32 %v2007, %v2045
    %v2217 = vadd.f32 %v2008, %v2049
    %v2218 = vadd.f32 %v2009, %v2053
    %v2219 = vadd.f32 %v2010, %v2045
    %v2220 = vadd.f32 %v2011, %v2049
    %v2221 = vadd.f32 %v2012, %v2053
    %v2222 = vadd.f32 %v2013, %v2045
    %v2223 = vadd.f32 %v2014, %v2049
    %v2224 = vadd.f32 %v2015, %v2053
    %v2225 = vadd.f32 %v2016, %v2045
    %v2226 = vadd.f32 %v2017, %v2049
    %v2227 = vadd.f32 %v2018, %v2053
    %v2228 = vadd.f32 %v2019, %v2045
    %v2229 = vadd.f32 %v2020, %v2049
    %v2230 = vadd.f32 %v2021, %v2053
    %v2231 = vadd.f32 %v2022, %v2045
    %v2232 = vadd.f32 %v2023, %v2049
    %v2233 = vadd.f32 %v2024, %v2053
    %v2234 = vadd.f32 %v2025, %v2045
    %v2235 = vadd.f32 %v2026, %v2049
    %v2236 = vadd.f32 %v2027, %v2053
    %v2237 = vadd.f32 %v2028, %v2045
    %v2238 = vadd.f32 %v2029, %v2049
    %v2239 = vadd.f32 %v2030, %v2053
    %v2240 = vadd.f32 %v2031, %v2045
    %v2241 = vadd.f32 %v2032, %v2049
    %v2242 = vadd.f32 %v2033, %v2053
    %v2243 = vadd.f32 %v2034, %v2045
    %v2244 = vadd.f32 %v2035, %v2049
    %v2245 = vadd.f32 %v2036, %v2053
    %v2246 = vadd.f32 %v2037, %v2045
    %v2247 = vadd.f32 %v2038, %v2049
    %v2248 = vadd.f32 %v2039, %v2053
    %v2249 = vpack.c.bf16 %v2060, %v2057
    %v2250 = vpack.c.bf16 %v2061, %v2058
    %v2251 = vpack.c.bf16 %v2062, %v2059
    %v2252 = vpack.c.bf16 %v2066, %v2063
    %v2253 = vpack.c.bf16 %v2067, %v2064
    %v2254 = vpack.c.bf16 %v2068, %v2065
    %v2255 = vpack.c.bf16 %v2072, %v2069
    %v2256 = vpack.c.bf16 %v2073, %v2070
    %v2257 = vpack.c.bf16 %v2074, %v2071
    %v2258 = vpack.c.bf16 %v2078, %v2075
    %v2259 = vpack.c.bf16 %v2079, %v2076
    %v2260 = vpack.c.bf16 %v2080, %v2077
    %v2261 = vpack.c.bf16 %v2084, %v2081
    %v2262 = vpack.c.bf16 %v2085, %v2082
    %v2263 = vpack.c.bf16 %v2086, %v2083
    %v2264 = vpack.c.bf16 %v2090, %v2087
    %v2265 = vpack.c.bf16 %v2091, %v2088
    %v2266 = vpack.c.bf16 %v2092, %v2089
    %v2267 = vpack.c.bf16 %v2096, %v2093
    %v2268 = vpack.c.bf16 %v2097, %v2094
    %v2269 = vpack.c.bf16 %v2098, %v2095
    %v2270 = vpack.c.bf16 %v2102, %v2099
    %v2271 = vpack.c.bf16 %v2103, %v2100
    %v2272 = vpack.c.bf16 %v2104, %v2101
    %v2273 = vpack.c.bf16 %v2108, %v2105
    %v2274 = vpack.c.bf16 %v2109, %v2106
    %v2275 = vpack.c.bf16 %v2110, %v2107
    %v2276 = vpack.c.bf16 %v2114, %v2111
    %v2277 = vpack.c.bf16 %v2115, %v2112
    %v2278 = vpack.c.bf16 %v2116, %v2113
    %v2279 = vpack.c.bf16 %v2120, %v2117
    %v2280 = vpack.c.bf16 %v2121, %v2118
    %v2281 = vpack.c.bf16 %v2122, %v2119
    %v2282 = vpack.c.bf16 %v2126, %v2123
    %v2283 = vpack.c.bf16 %v2127, %v2124
    %v2284 = vpack.c.bf16 %v2128, %v2125
    %v2285 = vpack.c.bf16 %v2132, %v2129
    %v2286 = vpack.c.bf16 %v2133, %v2130
    %v2287 = vpack.c.bf16 %v2134, %v2131
    %v2288 = vpack.c.bf16 %v2138, %v2135
    %v2289 = vpack.c.bf16 %v2139, %v2136
    %v2290 = vpack.c.bf16 %v2140, %v2137
    %v2291 = vpack.c.bf16 %v2144, %v2141
    %v2292 = vpack.c.bf16 %v2145, %v2142
    %v2293 = vpack.c.bf16 %v2146, %v2143
    %v2294 = vpack.c.bf16 %v2150, %v2147
    %v2295 = vpack.c.bf16 %v2151, %v2148
    %v2296 = vpack.c.bf16 %v2152, %v2149
    %v2297 = vpack.c.bf16 %v2156, %v2153
    %v2298 = vpack.c.bf16 %v2157, %v2154
    %v2299 = vpack.c.bf16 %v2158, %v2155
    %v2300 = vpack.c.bf16 %v2162, %v2159
    %v2301 = vpack.c.bf16 %v2163, %v2160
    %v2302 = vpack.c.bf16 %v2164, %v2161
    %v2303 = vpack.c.bf16 %v2168, %v2165
    %v2304 = vpack.c.bf16 %v2169, %v2166
    %v2305 = vpack.c.bf16 %v2170, %v2167
    %v2306 = vpack.c.bf16 %v2174, %v2171
    %v2307 = vpack.c.bf16 %v2175, %v2172
    %v2308 = vpack.c.bf16 %v2176, %v2173
    %v2309 = vpack.c.bf16 %v2180, %v2177
    %v2310 = vpack.c.bf16 %v2181, %v2178
    %v2311 = vpack.c.bf16 %v2182, %v2179
    %v2312 = vpack.c.bf16 %v2186, %v2183
    %v2313 = vpack.c.bf16 %v2187, %v2184
    %v2314 = vpack.c.bf16 %v2188, %v2185
    %v2315 = vpack.c.bf16 %v2192, %v2189
    %v2316 = vpack.c.bf16 %v2193, %v2190
    %v2317 = vpack.c.bf16 %v2194, %v2191
    %v2318 = vpack.c.bf16 %v2198, %v2195
    %v2319 = vpack.c.bf16 %v2199, %v2196
    %v2320 = vpack.c.bf16 %v2200, %v2197
    %v2321 = vpack.c.bf16 %v2204, %v2201
    %v2322 = vpack.c.bf16 %v2205, %v2202
    %v2323 = vpack.c.bf16 %v2206, %v2203
    %v2324 = vpack.c.bf16 %v2210, %v2207
    %v2325 = vpack.c.bf16 %v2211, %v2208
    %v2326 = vpack.c.bf16 %v2212, %v2209
    %v2327 = vpack.c.bf16 %v2216, %v2213
    %v2328 = vpack.c.bf16 %v2217, %v2214
    %v2329 = vpack.c.bf16 %v2218, %v2215
    %v2330 = vpack.c.bf16 %v2222, %v2219
    %v2331 = vpack.c.bf16 %v2223, %v2220
    %v2332 = vpack.c.bf16 %v2224, %v2221
    %v2333 = vpack.c.bf16 %v2228, %v2225
    %v2334 = vpack.c.bf16 %v2229, %v2226
    %v2335 = vpack.c.bf16 %v2230, %v2227
    %v2336 = vpack.c.bf16 %v2234, %v2231
    %v2337 = vpack.c.bf16 %v2235, %v2232
    %v2338 = vpack.c.bf16 %v2236, %v2233
    %v2339 = vpack.c.bf16 %v2240, %v2237
    %v2340 = vpack.c.bf16 %v2241, %v2238
    %v2341 = vpack.c.bf16 %v2242, %v2239
    %v2342 = vpack.c.bf16 %v2246, %v2243
    %v2343 = vpack.c.bf16 %v2247, %v2244
    %v2344 = vpack.c.bf16 %v2248, %v2245
    %v2441 = vunpack.c.l.b16 %v2249
    %v2442 = vunpack.c.l.b16 %v2250
    %v2443 = vunpack.c.l.b16 %v2251
    %v2444 = vunpack.c.h.b16 %v2249
    %v2445 = vunpack.c.h.b16 %v2250
    %v2446 = vunpack.c.h.b16 %v2251
    %v2447 = vunpack.c.l.b16 %v2252
    %v2448 = vunpack.c.l.b16 %v2253
    %v2449 = vunpack.c.l.b16 %v2254
    %v2450 = vunpack.c.h.b16 %v2252
    %v2451 = vunpack.c.h.b16 %v2253
    %v2452 = vunpack.c.h.b16 %v2254
    %v2453 = vunpack.c.l.b16 %v2255
    %v2454 = vunpack.c.l.b16 %v2256
    %v2455 = vunpack.c.l.b16 %v2257
    %v2456 = vunpack.c.h.b16 %v2255
    %v2457 = vunpack.c.h.b16 %v2256
    %v2458 = vunpack.c.h.b16 %v2257
    %v2459 = vunpack.c.l.b16 %v2258
    %v2460 = vunpack.c.l.b16 %v2259
    %v2461 = vunpack.c.l.b16 %v2260
    %v2462 = vunpack.c.h.b16 %v2258
    %v2463 = vunpack.c.h.b16 %v2259
    %v2464 = vunpack.c.h.b16 %v2260
    %v2465 = vunpack.c.l.b16 %v2261
    %v2466 = vunpack.c.l.b16 %v2262
    %v2467 = vunpack.c.l.b16 %v2263
    %v2468 = vunpack.c.h.b16 %v2261
    %v2469 = vunpack.c.h.b16 %v2262
    %v2470 = vunpack.c.h.b16 %v2263
    %v2471 = vunpack.c.l.b16 %v2264
    %v2472 = vunpack.c.l.b16 %v2265
    %v2473 = vunpack.c.l.b16 %v2266
    %v2474 = vunpack.c.h.b16 %v2264
    %v2475 = vunpack.c.h.b16 %v2265
    %v2476 = vunpack.c.h.b16 %v2266
    %v2477 = vunpack.c.l.b16 %v2267
    %v2478 = vunpack.c.l.b16 %v2268
    %v2479 = vunpack.c.l.b16 %v2269
    %v2480 = vunpack.c.h.b16 %v2267
    %v2481 = vunpack.c.h.b16 %v2268
    %v2482 = vunpack.c.h.b16 %v2269
    %v2483 = vunpack.c.l.b16 %v2270
    %v2484 = vunpack.c.l.b16 %v2271
    %v2485 = vunpack.c.l.b16 %v2272
    %v2486 = vunpack.c.h.b16 %v2270
    %v2487 = vunpack.c.h.b16 %v2271
    %v2488 = vunpack.c.h.b16 %v2272
    %v2489 = vunpack.c.l.b16 %v2273
    %v2490 = vunpack.c.l.b16 %v2274
    %v2491 = vunpack.c.l.b16 %v2275
    %v2492 = vunpack.c.h.b16 %v2273
    %v2493 = vunpack.c.h.b16 %v2274
    %v2494 = vunpack.c.h.b16 %v2275
    %v2495 = vunpack.c.l.b16 %v2276
    %v2496 = vunpack.c.l.b16 %v2277
    %v2497 = vunpack.c.l.b16 %v2278
    %v2498 = vunpack.c.h.b16 %v2276
    %v2499 = vunpack.c.h.b16 %v2277
    %v2500 = vunpack.c.h.b16 %v2278
    %v2501 = vunpack.c.l.b16 %v2279
    %v2502 = vunpack.c.l.b16 %v2280
    %v2503 = vunpack.c.l.b16 %v2281
    %v2504 = vunpack.c.h.b16 %v2279
    %v2505 = vunpack.c.h.b16 %v2280
    %v2506 = vunpack.c.h.b16 %v2281
    %v2507 = vunpack.c.l.b16 %v2282
    %v2508 = vunpack.c.l.b16 %v2283
    %v2509 = vunpack.c.l.b16 %v2284
    %v2510 = vunpack.c.h.b16 %v2282
    %v2511 = vunpack.c.h.b16 %v2283
    %v2512 = vunpack.c.h.b16 %v2284
    %v2513 = vunpack.c.l.b16 %v2285
    %v2514 = vunpack.c.l.b16 %v2286
    %v2515 = vunpack.c.l.b16 %v2287
    %v2516 = vunpack.c.h.b16 %v2285
    %v2517 = vunpack.c.h.b16 %v2286
    %v2518 = vunpack.c.h.b16 %v2287
    %v2519 = vunpack.c.l.b16 %v2288
    %v2520 = vunpack.c.l.b16 %v2289
    %v2521 = vunpack.c.l.b16 %v2290
    %v2522 = vunpack.c.h.b16 %v2288
    %v2523 = vunpack.c.h.b16 %v2289
    %v2524 = vunpack.c.h.b16 %v2290
    %v2525 = vunpack.c.l.b16 %v2291
    %v2526 = vunpack.c.l.b16 %v2292
    %v2527 = vunpack.c.l.b16 %v2293
    %v2528 = vunpack.c.h.b16 %v2291
    %v2529 = vunpack.c.h.b16 %v2292
    %v2530 = vunpack.c.h.b16 %v2293
    %v2531 = vunpack.c.l.b16 %v2294
    %v2532 = vunpack.c.l.b16 %v2295
    %v2533 = vunpack.c.l.b16 %v2296
    %v2534 = vunpack.c.h.b16 %v2294
    %v2535 = vunpack.c.h.b16 %v2295
    %v2536 = vunpack.c.h.b16 %v2296
    %v2537 = vunpack.c.l.b16 %v2297
    %v2538 = vunpack.c.l.b16 %v2298
    %v2539 = vunpack.c.l.b16 %v2299
    %v2540 = vunpack.c.h.b16 %v2297
    %v2541 = vunpack.c.h.b16 %v2298
    %v2542 = vunpack.c.h.b16 %v2299
    %v2543 = vunpack.c.l.b16 %v2300
    %v2544 = vunpack.c.l.b16 %v2301
    %v2545 = vunpack.c.l.b16 %v2302
    %v2546 = vunpack.c.h.b16 %v2300
    %v2547 = vunpack.c.h.b16 %v2301
    %v2548 = vunpack.c.h.b16 %v2302
    %v2549 = vunpack.c.l.b16 %v2303
    %v2550 = vunpack.c.l.b16 %v2304
    %v2551 = vunpack.c.l.b16 %v2305
    %v2552 = vunpack.c.h.b16 %v2303
    %v2553 = vunpack.c.h.b16 %v2304
    %v2554 = vunpack.c.h.b16 %v2305
    %v2555 = vunpack.c.l.b16 %v2306
    %v2556 = vunpack.c.l.b16 %v2307
    %v2557 = vunpack.c.l.b16 %v2308
    %v2558 = vunpack.c.h.b16 %v2306
    %v2559 = vunpack.c.h.b16 %v2307
    %v2560 = vunpack.c.h.b16 %v2308
    %v2561 = vunpack.c.l.b16 %v2309
    %v2562 = vunpack.c.l.b16 %v2310
    %v2563 = vunpack.c.l.b16 %v2311
    %v2564 = vunpack.c.h.b16 %v2309
    %v2565 = vunpack.c.h.b16 %v2310
    %v2566 = vunpack.c.h.b16 %v2311
    %v2567 = vunpack.c.l.b16 %v2312
    %v2568 = vunpack.c.l.b16 %v2313
    %v2569 = vunpack.c.l.b16 %v2314
    %v2570 = vunpack.c.h.b16 %v2312
    %v2571 = vunpack.c.h.b16 %v2313
    %v2572 = vunpack.c.h.b16 %v2314
    %v2573 = vunpack.c.l.b16 %v2315
    %v2574 = vunpack.c.l.b16 %v2316
    %v2575 = vunpack.c.l.b16 %v2317
    %v2576 = vunpack.c.h.b16 %v2315
    %v2577 = vunpack.c.h.b16 %v2316
    %v2578 = vunpack.c.h.b16 %v2317
    %v2579 = vunpack.c.l.b16 %v2318
    %v2580 = vunpack.c.l.b16 %v2319
    %v2581 = vunpack.c.l.b16 %v2320
    %v2582 = vunpack.c.h.b16 %v2318
    %v2583 = vunpack.c.h.b16 %v2319
    %v2584 = vunpack.c.h.b16 %v2320
    %v2585 = vunpack.c.l.b16 %v2321
    %v2586 = vunpack.c.l.b16 %v2322
    %v2587 = vunpack.c.l.b16 %v2323
    %v2588 = vunpack.c.h.b16 %v2321
    %v2589 = vunpack.c.h.b16 %v2322
    %v2590 = vunpack.c.h.b16 %v2323
    %v2591 = vunpack.c.l.b16 %v2324
    %v2592 = vunpack.c.l.b16 %v2325
    %v2593 = vunpack.c.l.b16 %v2326
    %v2594 = vunpack.c.h.b16 %v2324
    %v2595 = vunpack.c.h.b16 %v2325
    %v2596 = vunpack.c.h.b16 %v2326
    %v2597 = vunpack.c.l.b16 %v2327
    %v2598 = vunpack.c.l.b16 %v2328
    %v2599 = vunpack.c.l.b16 %v2329
    %v2600 = vunpack.c.h.b16 %v2327
    %v2601 = vunpack.c.h.b16 %v2328
    %v2602 = vunpack.c.h.b16 %v2329
    %v2603 = vunpack.c.l.b16 %v2330
    %v2604 = vunpack.c.l.b16 %v2331
    %v2605 = vunpack.c.l.b16 %v2332
    %v2606 = vunpack.c.h.b16 %v2330
    %v2607 = vunpack.c.h.b16 %v2331
    %v2608 = vunpack.c.h.b16 %v2332
    %v2609 = vunpack.c.l.b16 %v2333
    %v2610 = vunpack.c.l.b16 %v2334
    %v2611 = vunpack.c.l.b16 %v2335
    %v2612 = vunpack.c.h.b16 %v2333
    %v2613 = vunpack.c.h.b16 %v2334
    %v2614 = vunpack.c.h.b16 %v2335
    %v2615 = vunpack.c.l.b16 %v2336
    %v2616 = vunpack.c.l.b16 %v2337
    %v2617 = vunpack.c.l.b16 %v2338
    %v2618 = vunpack.c.h.b16 %v2336
    %v2619 = vunpack.c.h.b16 %v2337
    %v2620 = vunpack.c.h.b16 %v2338
    %v2621 = vunpack.c.l.b16 %v2339
    %v2622 = vunpack.c.l.b16 %v2340
    %v2623 = vunpack.c.l.b16 %v2341
    %v2624 = vunpack.c.h.b16 %v2339
    %v2625 = vunpack.c.h.b16 %v2340
    %v2626 = vunpack.c.h.b16 %v2341
    %v2627 = vunpack.c.l.b16 %v2342
    %v2628 = vunpack.c.l.b16 %v2343
    %v2629 = vunpack.c.l.b16 %v2344
    %v2630 = vunpack.c.h.b16 %v2342
    %v2631 = vunpack.c.h.b16 %v2343
    %v2632 = vunpack.c.h.b16 %v2344
    %v2633 = vpack.c.b16 %v2442, %v2441
    %v2634 = vpack.c.b16 %v2443, %v2443
    %v2635 = vpack.c.b16 %v2445, %v2444
    %v2636 = vpack.c.b16 %v2446, %v2446
    %v2637 = vpack.c.b16 %v2448, %v2447
    %v2638 = vpack.c.b16 %v2449, %v2449
    %v2639 = vpack.c.b16 %v2451, %v2450
    %v2640 = vpack.c.b16 %v2452, %v2452
    %v2641 = vpack.c.b16 %v2454, %v2453
    %v2642 = vpack.c.b16 %v2455, %v2455
    %v2643 = vpack.c.b16 %v2457, %v2456
    %v2644 = vpack.c.b16 %v2458, %v2458
    %v2645 = vpack.c.b16 %v2460, %v2459
    %v2646 = vpack.c.b16 %v2461, %v2461
    %v2647 = vpack.c.b16 %v2463, %v2462
    %v2648 = vpack.c.b16 %v2464, %v2464
    %v2649 = vpack.c.b16 %v2466, %v2465
    %v2650 = vpack.c.b16 %v2467, %v2467
    %v2651 = vpack.c.b16 %v2469, %v2468
    %v2652 = vpack.c.b16 %v2470, %v2470
    %v2653 = vpack.c.b16 %v2472, %v2471
    %v2654 = vpack.c.b16 %v2473, %v2473
    %v2655 = vpack.c.b16 %v2475, %v2474
    %v2656 = vpack.c.b16 %v2476, %v2476
    %v2657 = vpack.c.b16 %v2478, %v2477
    %v2658 = vpack.c.b16 %v2479, %v2479
    %v2659 = vpack.c.b16 %v2481, %v2480
    %v2660 = vpack.c.b16 %v2482, %v2482
    %v2661 = vpack.c.b16 %v2484, %v2483
    %v2662 = vpack.c.b16 %v2485, %v2485
    %v2663 = vpack.c.b16 %v2487, %v2486
    %v2664 = vpack.c.b16 %v2488, %v2488
    %v2665 = vpack.c.b16 %v2490, %v2489
    %v2666 = vpack.c.b16 %v2491, %v2491
    %v2667 = vpack.c.b16 %v2493, %v2492
    %v2668 = vpack.c.b16 %v2494, %v2494
    %v2669 = vpack.c.b16 %v2496, %v2495
    %v2670 = vpack.c.b16 %v2497, %v2497
    %v2671 = vpack.c.b16 %v2499, %v2498
    %v2672 = vpack.c.b16 %v2500, %v2500
    %v2673 = vpack.c.b16 %v2502, %v2501
    %v2674 = vpack.c.b16 %v2503, %v2503
    %v2675 = vpack.c.b16 %v2505, %v2504
    %v2676 = vpack.c.b16 %v2506, %v2506
    %v2677 = vpack.c.b16 %v2508, %v2507
    %v2678 = vpack.c.b16 %v2509, %v2509
    %v2679 = vpack.c.b16 %v2511, %v2510
    %v2680 = vpack.c.b16 %v2512, %v2512
    %v2681 = vpack.c.b16 %v2514, %v2513
    %v2682 = vpack.c.b16 %v2515, %v2515
    %v2683 = vpack.c.b16 %v2517, %v2516
    %v2684 = vpack.c.b16 %v2518, %v2518
    %v2685 = vpack.c.b16 %v2520, %v2519
    %v2686 = vpack.c.b16 %v2521, %v2521
    %v2687 = vpack.c.b16 %v2523, %v2522
    %v2688 = vpack.c.b16 %v2524, %v2524
    %v2689 = vpack.c.b16 %v2526, %v2525
    %v2690 = vpack.c.b16 %v2527, %v2527
    %v2691 = vpack.c.b16 %v2529, %v2528
    %v2692 = vpack.c.b16 %v2530, %v2530
    %v2693 = vpack.c.b16 %v2532, %v2531
    %v2694 = vpack.c.b16 %v2533, %v2533
    %v2695 = vpack.c.b16 %v2535, %v2534
    %v2696 = vpack.c.b16 %v2536, %v2536
    %v2697 = vpack.c.b16 %v2538, %v2537
    %v2698 = vpack.c.b16 %v2539, %v2539
    %v2699 = vpack.c.b16 %v2541, %v2540
    %v2700 = vpack.c.b16 %v2542, %v2542
    %v2701 = vpack.c.b16 %v2544, %v2543
    %v2702 = vpack.c.b16 %v2545, %v2545
    %v2703 = vpack.c.b16 %v2547, %v2546
    %v2704 = vpack.c.b16 %v2548, %v2548
    %v2705 = vpack.c.b16 %v2550, %v2549
    %v2706 = vpack.c.b16 %v2551, %v2551
    %v2707 = vpack.c.b16 %v2553, %v2552
    %v2708 = vpack.c.b16 %v2554, %v2554
    %v2709 = vpack.c.b16 %v2556, %v2555
    %v2710 = vpack.c.b16 %v2557, %v2557
    %v2711 = vpack.c.b16 %v2559, %v2558
    %v2712 = vpack.c.b16 %v2560, %v2560
    %v2713 = vpack.c.b16 %v2562, %v2561
    %v2714 = vpack.c.b16 %v2563, %v2563
    %v2715 = vpack.c.b16 %v2565, %v2564
    %v2716 = vpack.c.b16 %v2566, %v2566
    %v2717 = vpack.c.b16 %v2568, %v2567
    %v2718 = vpack.c.b16 %v2569, %v2569
    %v2719 = vpack.c.b16 %v2571, %v2570
    %v2720 = vpack.c.b16 %v2572, %v2572
    %v2721 = vpack.c.b16 %v2574, %v2573
    %v2722 = vpack.c.b16 %v2575, %v2575
    %v2723 = vpack.c.b16 %v2577, %v2576
    %v2724 = vpack.c.b16 %v2578, %v2578
    %v2725 = vpack.c.b16 %v2580, %v2579
    %v2726 = vpack.c.b16 %v2581, %v2581
    %v2727 = vpack.c.b16 %v2583, %v2582
    %v2728 = vpack.c.b16 %v2584, %v2584
    %v2729 = vpack.c.b16 %v2586, %v2585
    %v2730 = vpack.c.b16 %v2587, %v2587
    %v2731 = vpack.c.b16 %v2589, %v2588
    %v2732 = vpack.c.b16 %v2590, %v2590
    %v2733 = vpack.c.b16 %v2592, %v2591
    %v2734 = vpack.c.b16 %v2593, %v2593
    %v2735 = vpack.c.b16 %v2595, %v2594
    %v2736 = vpack.c.b16 %v2596, %v2596
    %v2737 = vpack.c.b16 %v2598, %v2597
    %v2738 = vpack.c.b16 %v2599, %v2599
    %v2739 = vpack.c.b16 %v2601, %v2600
    %v2740 = vpack.c.b16 %v2602, %v2602
    %v2741 = vpack.c.b16 %v2604, %v2603
    %v2742 = vpack.c.b16 %v2605, %v2605
    %v2743 = vpack.c.b16 %v2607, %v2606
    %v2744 = vpack.c.b16 %v2608, %v2608
    %v2745 = vpack.c.b16 %v2610, %v2609
    %v2746 = vpack.c.b16 %v2611, %v2611
    %v2747 = vpack.c.b16 %v2613, %v2612
    %v2748 = vpack.c.b16 %v2614, %v2614
    %v2749 = vpack.c.b16 %v2616, %v2615
    %v2750 = vpack.c.b16 %v2617, %v2617
    %v2751 = vpack.c.b16 %v2619, %v2618
    %v2752 = vpack.c.b16 %v2620, %v2620
    %v2753 = vpack.c.b16 %v2622, %v2621
    %v2754 = vpack.c.b16 %v2623, %v2623
    %v2755 = vpack.c.b16 %v2625, %v2624
    %v2756 = vpack.c.b16 %v2626, %v2626
    %v2757 = vpack.c.b16 %v2628, %v2627
    %v2758 = vpack.c.b16 %v2629, %v2629
    %v2759 = vpack.c.b16 %v2631, %v2630
    %v2760 = vpack.c.b16 %v2632, %v2632
    %2889 = vst [vmem:[%s3] sm:$0xff] %v2633
    %2890 = vst [vmem:[%s3 + $0x8] sm:$0xf] %v2634
    %2891 = vst [vmem:[%s3 + $0xc] sm:$0xff] %v2635
    %2892 = vst [vmem:[%s3 + $0x14] sm:$0xf] %v2636
    %2893 = vst [vmem:[%s3 + $0x18] sm:$0xff] %v2637
    %2894 = vst [vmem:[%s3 + $0x20] sm:$0xf] %v2638
    %2895 = vst [vmem:[%s3 + $0x24] sm:$0xff] %v2639
    %2896 = vst [vmem:[%s3 + $0x2c] sm:$0xf] %v2640
    %2897 = vst [vmem:[%s3 + $0x30] sm:$0xff] %v2641
    %2898 = vst [vmem:[%s3 + $0x38] sm:$0xf] %v2642
    %2899 = vst [vmem:[%s3 + $0x3c] sm:$0xff] %v2643
    %2900 = vst [vmem:[%s3 + $0x44] sm:$0xf] %v2644
    %2901 = vst [vmem:[%s3 + $0x48] sm:$0xff] %v2645
    %2902 = vst [vmem:[%s3 + $0x50] sm:$0xf] %v2646
    %2903 = vst [vmem:[%s3 + $0x54] sm:$0xff] %v2647
    %2904 = vst [vmem:[%s3 + $0x5c] sm:$0xf] %v2648
    %2905 = vst [vmem:[%s3 + $0x60] sm:$0xff] %v2649
    %2906 = vst [vmem:[%s3 + $0x68] sm:$0xf] %v2650
    %2907 = vst [vmem:[%s3 + $0x6c] sm:$0xff] %v2651
    %2908 = vst [vmem:[%s3 + $0x74] sm:$0xf] %v2652
    %2909 = vst [vmem:[%s3 + $0x78] sm:$0xff] %v2653
    %2910 = vst [vmem:[%s3 + $0x80] sm:$0xf] %v2654
    %2911 = vst [vmem:[%s3 + $0x84] sm:$0xff] %v2655
    %2912 = vst [vmem:[%s3 + $0x8c] sm:$0xf] %v2656
    %2913 = vst [vmem:[%s3 + $0x90] sm:$0xff] %v2657
    %2914 = vst [vmem:[%s3 + $0x98] sm:$0xf] %v2658
    %2915 = vst [vmem:[%s3 + $0x9c] sm:$0xff] %v2659
    %2916 = vst [vmem:[%s3 + $0xa4] sm:$0xf] %v2660
    %2917 = vst [vmem:[%s3 + $0xa8] sm:$0xff] %v2661
    %2918 = vst [vmem:[%s3 + $0xb0] sm:$0xf] %v2662
    %2919 = vst [vmem:[%s3 + $0xb4] sm:$0xff] %v2663
    %2920 = vst [vmem:[%s3 + $0xbc] sm:$0xf] %v2664
    %2921 = vst [vmem:[%s3 + $0xc0] sm:$0xff] %v2665
    %2922 = vst [vmem:[%s3 + $0xc8] sm:$0xf] %v2666
    %2923 = vst [vmem:[%s3 + $0xcc] sm:$0xff] %v2667
    %2924 = vst [vmem:[%s3 + $0xd4] sm:$0xf] %v2668
    %2925 = vst [vmem:[%s3 + $0xd8] sm:$0xff] %v2669
    %2926 = vst [vmem:[%s3 + $0xe0] sm:$0xf] %v2670
    %2927 = vst [vmem:[%s3 + $0xe4] sm:$0xff] %v2671
    %2928 = vst [vmem:[%s3 + $0xec] sm:$0xf] %v2672
    %2929 = vst [vmem:[%s3 + $0xf0] sm:$0xff] %v2673
    %2930 = vst [vmem:[%s3 + $0xf8] sm:$0xf] %v2674
    %2931 = vst [vmem:[%s3 + $0xfc] sm:$0xff] %v2675
    %2932 = vst [vmem:[%s3 + $0x104] sm:$0xf] %v2676
    %2933 = vst [vmem:[%s3 + $0x108] sm:$0xff] %v2677
    %2934 = vst [vmem:[%s3 + $0x110] sm:$0xf] %v2678
    %2935 = vst [vmem:[%s3 + $0x114] sm:$0xff] %v2679
    %2936 = vst [vmem:[%s3 + $0x11c] sm:$0xf] %v2680
    %2937 = vst [vmem:[%s3 + $0x120] sm:$0xff] %v2681
    %2938 = vst [vmem:[%s3 + $0x128] sm:$0xf] %v2682
    %2939 = vst [vmem:[%s3 + $0x12c] sm:$0xff] %v2683
    %2940 = vst [vmem:[%s3 + $0x134] sm:$0xf] %v2684
    %2941 = vst [vmem:[%s3 + $0x138] sm:$0xff] %v2685
    %2942 = vst [vmem:[%s3 + $0x140] sm:$0xf] %v2686
    %2943 = vst [vmem:[%s3 + $0x144] sm:$0xff] %v2687
    %2944 = vst [vmem:[%s3 + $0x14c] sm:$0xf] %v2688
    %2945 = vst [vmem:[%s3 + $0x150] sm:$0xff] %v2689
    %2946 = vst [vmem:[%s3 + $0x158] sm:$0xf] %v2690
    %2947 = vst [vmem:[%s3 + $0x15c] sm:$0xff] %v2691
    %2948 = vst [vmem:[%s3 + $0x164] sm:$0xf] %v2692
    %2949 = vst [vmem:[%s3 + $0x168] sm:$0xff] %v2693
    %2950 = vst [vmem:[%s3 + $0x170] sm:$0xf] %v2694
    %2951 = vst [vmem:[%s3 + $0x174] sm:$0xff] %v2695
    %2952 = vst [vmem:[%s3 + $0x17c] sm:$0xf] %v2696
    %2953 = vst [vmem:[%s3 + $0x180] sm:$0xff] %v2697
    %2954 = vst [vmem:[%s3 + $0x188] sm:$0xf] %v2698
    %2955 = vst [vmem:[%s3 + $0x18c] sm:$0xff] %v2699
    %2956 = vst [vmem:[%s3 + $0x194] sm:$0xf] %v2700
    %2957 = vst [vmem:[%s3 + $0x198] sm:$0xff] %v2701
    %2958 = vst [vmem:[%s3 + $0x1a0] sm:$0xf] %v2702
    %2959 = vst [vmem:[%s3 + $0x1a4] sm:$0xff] %v2703
    %2960 = vst [vmem:[%s3 + $0x1ac] sm:$0xf] %v2704
    %2961 = vst [vmem:[%s3 + $0x1b0] sm:$0xff] %v2705
    %2962 = vst [vmem:[%s3 + $0x1b8] sm:$0xf] %v2706
    %2963 = vst [vmem:[%s3 + $0x1bc] sm:$0xff] %v2707
    %2964 = vst [vmem:[%s3 + $0x1c4] sm:$0xf] %v2708
    %2965 = vst [vmem:[%s3 + $0x1c8] sm:$0xff] %v2709
    %2966 = vst [vmem:[%s3 + $0x1d0] sm:$0xf] %v2710
    %2967 = vst [vmem:[%s3 + $0x1d4] sm:$0xff] %v2711
    %2968 = vst [vmem:[%s3 + $0x1dc] sm:$0xf] %v2712
    %2969 = vst [vmem:[%s3 + $0x1e0] sm:$0xff] %v2713
    %2970 = vst [vmem:[%s3 + $0x1e8] sm:$0xf] %v2714
    %2971 = vst [vmem:[%s3 + $0x1ec] sm:$0xff] %v2715
    %2972 = vst [vmem:[%s3 + $0x1f4] sm:$0xf] %v2716
    %2973 = vst [vmem:[%s3 + $0x1f8] sm:$0xff] %v2717
    %2974 = vst [vmem:[%s3 + $0x200] sm:$0xf] %v2718
    %2975 = vst [vmem:[%s3 + $0x204] sm:$0xff] %v2719
    %2976 = vst [vmem:[%s3 + $0x20c] sm:$0xf] %v2720
    %2977 = vst [vmem:[%s3 + $0x210] sm:$0xff] %v2721
    %2978 = vst [vmem:[%s3 + $0x218] sm:$0xf] %v2722
    %2979 = vst [vmem:[%s3 + $0x21c] sm:$0xff] %v2723
    %2980 = vst [vmem:[%s3 + $0x224] sm:$0xf] %v2724
    %2981 = vst [vmem:[%s3 + $0x228] sm:$0xff] %v2725
    %2982 = vst [vmem:[%s3 + $0x230] sm:$0xf] %v2726
    %2983 = vst [vmem:[%s3 + $0x234] sm:$0xff] %v2727
    %2984 = vst [vmem:[%s3 + $0x23c] sm:$0xf] %v2728
    %2985 = vst [vmem:[%s3 + $0x240] sm:$0xff] %v2729
    %2986 = vst [vmem:[%s3 + $0x248] sm:$0xf] %v2730
    %2987 = vst [vmem:[%s3 + $0x24c] sm:$0xff] %v2731
    %2988 = vst [vmem:[%s3 + $0x254] sm:$0xf] %v2732
    %2989 = vst [vmem:[%s3 + $0x258] sm:$0xff] %v2733
    %2990 = vst [vmem:[%s3 + $0x260] sm:$0xf] %v2734
    %2991 = vst [vmem:[%s3 + $0x264] sm:$0xff] %v2735
    %2992 = vst [vmem:[%s3 + $0x26c] sm:$0xf] %v2736
    %2993 = vst [vmem:[%s3 + $0x270] sm:$0xff] %v2737
    %2994 = vst [vmem:[%s3 + $0x278] sm:$0xf] %v2738
    %2995 = vst [vmem:[%s3 + $0x27c] sm:$0xff] %v2739
    %2996 = vst [vmem:[%s3 + $0x284] sm:$0xf] %v2740
    %2997 = vst [vmem:[%s3 + $0x288] sm:$0xff] %v2741
    %2998 = vst [vmem:[%s3 + $0x290] sm:$0xf] %v2742
    %2999 = vst [vmem:[%s3 + $0x294] sm:$0xff] %v2743
    %3000 = vst [vmem:[%s3 + $0x29c] sm:$0xf] %v2744
    %3001 = vst [vmem:[%s3 + $0x2a0] sm:$0xff] %v2745
    %3002 = vst [vmem:[%s3 + $0x2a8] sm:$0xf] %v2746
    %3003 = vst [vmem:[%s3 + $0x2ac] sm:$0xff] %v2747
    %3004 = vst [vmem:[%s3 + $0x2b4] sm:$0xf] %v2748
    %3005 = vst [vmem:[%s3 + $0x2b8] sm:$0xff] %v2749
    %3006 = vst [vmem:[%s3 + $0x2c0] sm:$0xf] %v2750
    %3007 = vst [vmem:[%s3 + $0x2c4] sm:$0xff] %v2751
    %3008 = vst [vmem:[%s3 + $0x2cc] sm:$0xf] %v2752
    %3009 = vst [vmem:[%s3 + $0x2d0] sm:$0xff] %v2753
    %3010 = vst [vmem:[%s3 + $0x2d8] sm:$0xf] %v2754
    %3011 = vst [vmem:[%s3 + $0x2dc] sm:$0xff] %v2755
    %3012 = vst [vmem:[%s3 + $0x2e4] sm:$0xf] %v2756
    %3013 = vst [vmem:[%s3 + $0x2e8] sm:$0xff] %v2757
    %3014 = vst [vmem:[%s3 + $0x2f0] sm:$0xf] %v2758
    %3015 = vst [vmem:[%s3 + $0x2f4] sm:$0xff] %v2759
    %3016 = vst [vmem:[%s3 + $0x2fc] sm:$0xf] %v2760
  $region21: #{self_attention_forward.3} parent=0 // pred_fallthru
    _
  // Predicated region
  $region22: #{self_attention_forward.3} parent=0 // pred_check
    _
  $region23: #{self_attention_forward.3} parent=0 // pred_check_branch
    %3018 = sbr.rel (0) target = $region25
  $region24: #{self_attention_forward.3} parent=0 // pred_region
    _
  $region25: #{self_attention_forward.3} parent=0 // pred_fallthru
    _
  // Predicated region
  $region26: #{self_attention_forward.3} parent=0 // pred_check
    _
  $region27: #{self_attention_forward.3} parent=0 // pred_check_branch
    %3020 = sbr.rel (0) target = $region29
  $region28: #{self_attention_forward.3} parent=0 // pred_region
    _
  $region29: #{self_attention_forward.3} parent=0 // pred_fallthru
    _

// kernel: self_attention_forward.4
$region0: #{self_attention_forward.4}
  #allocation0 [shape = 'u32[]', space=smem, size = 0x4, offset = 0x4, fixed_abs, tag = 'smem constant byte address 0x4 - core index']
  #allocation1 [shape = 'u32[144,128]{1,0:T(1,128)}', space=vmem, size = 0x12000, scoped, tag = 'internal scratch']
  #allocation2 [shape = 'f32[4,128,1]{2,1,0:T(8,128)}', space=vmem, size = 0x40000, scoped, tag = 'scratch operand']
  #allocation3 [shape = 'f32[4,128,1]{2,1,0:T(8,128)}', space=vmem, size = 0x40000, scoped, tag = 'scratch operand']
  #allocation4 [shape = 'f32[4,128,32]{2,1,0:T(8,128)}', space=vmem, size = 0x40000, scoped, tag = 'scratch operand']
  %s0 = inlined_call_operand.vmem [shape: bf16[2,256,384], index: 0, kind: input, shape index: {}, may-alias: {0,1,2}]
  %s1 = inlined_call_operand.vmem [shape: bf16[2,256,384], index: 1, kind: input, shape index: {}, may-alias: {0,1,2}]
  %s2 = inlined_call_operand.vmem [shape: bf16[2,256,384], index: 2, kind: input, shape index: {}, may-alias: {0,1,2}]
  %s3 = inlined_call_operand.vmem [shape: bf16[2,256,128], index: 3, kind: output, shape index: {}]
  %s4 = sld [smem:[#allocation0]]
  $region180: #{self_attention_forward.4} parent=0
    _
  %s6 = ssub.s32 1, %s4
  %s7 = scalar_select 0, %s6, %s4
  $region1: #{self_attention_forward.4} parent=0
    #allocation5 [shape = 'u8[65536]{0}', space=vmem, size = 0x10000, scoped, tag = 'input window, operand 0']
    #allocation6 [shape = 'u8[65536]{0}', space=vmem, size = 0x10000, scoped, tag = 'input window, operand 1']
    #allocation7 [shape = 'u8[65536]{0}', space=vmem, size = 0x10000, scoped, tag = 'input window, operand 2']
    loop: start=0, step=1, limit=10
    $region2: #{self_attention_forward.4} parent=1 // loop_pre_header
      _
    $region3: #{self_attention_forward.4} parent=1 // loop_header
      %s9 = sphi 0, %s13
      %p10 = scmp.ge.s32.totalorder %s9, 10
      %s16 = sphi 0, %s35
      %s17 = sphi 0, %s31
      %s18 = sphi 0, %s27
      %s19 = sphi 0, %s16
      %s20 = sphi 0, %s17
      %s21 = sphi 0, %s18
      %s22 = sphi 0, %s19
      %s23 = sphi 0, %s20
      %s24 = sphi 0, %s21
      %s40 = sphi 0, %s42
      %s43 = sphi 0, %s40
      %s44 = sphi 0, %s43
      %s60 = sphi 0, %s44
      %s72 = sphi 0, %s74
      %s75 = sphi 0, %s72
      %s76 = sphi 0, %s75
      %s92 = sphi 0, %s76
      %s104 = sphi 0, %s106
      %s107 = sphi 0, %s104
      %s108 = sphi 0, %s107
      %s124 = sphi 0, %s108
      %s132 = sphi 0, %s134
      %s135 = sphi 0, %s132
      %s136 = sphi 0, %s135
      %s152 = sphi 0, %s136
    $region4: #{self_attention_forward.4} parent=1 // loop_header_branch
      %12 = sbr.rel (%p10) target = $region8
    $region5: #{self_attention_forward.4} parent=1 // loop_body
      %s14 = ssub.s32 %s9, 1
      %s15 = ssub.s32 %s9, 2
      %s25 = sadd.s32 1, %s18
      %p26 = scmp.ge.s32.totalorder %s25, 2
      %s27 = scalar_select %p26, 0, %s25
      %s28 = sadd.s32 1, %s17
      %s29 = scalar_select %p26, %s28, %s17
      %p30 = scmp.ge.s32.totalorder %s29, 2
      %s31 = scalar_select %p30, 0, %s29
      %s32 = sadd.s32 1, %s16
      %s33 = scalar_select %p30, %s32, %s16
      %p34 = scmp.ge.s32.totalorder %s33, 2
      %s35 = scalar_select %p34, 0, %s33
      %s36 = ssub.s32 %s16, %s35
      %s37 = ssub.s32 %s17, %s31
      %s38 = sor.u32 %s36, %s37
      %p39 = scmp.eq.s32.totalorder %s38, 0
      %s41 = sadd.s32 %s40, 1
      %s42 = scalar_select %p39, %s40, %s41
      %p45 = pneg %p39
      %p46 = scmp.eq.s32.totalorder %s9, 7
      %p47 = por %p45, %p46
      %p48 = scmp.ne.s32.totalorder %s40, %s43
      %p49 = scmp.eq.s32.totalorder %s9, 0
      %p50 = por %p48, %p49
      %p51 = scmp.ne.s32.totalorder %s40, %s43
      %p52 = scmp.eq.s32.totalorder %s14, 7
      %p53 = por %p51, %p52
      %p54 = scmp.ne.s32.totalorder %s43, %s44
      %p55 = scmp.eq.s32.totalorder %s14, 0
      %p56 = por %p54, %p55
      %p57 = scmp.ne.s32.totalorder %s43, %s44
      %p58 = scmp.eq.s32.totalorder %s15, 7
      %p59 = por %p57, %p58
      %p61 = scmp.ne.s32.totalorder %s44, %s60
      %p62 = scmp.eq.s32.totalorder %s15, 0
      %p63 = por %p61, %p62
      %p64 = scmp.lt.s32.totalorder %s18, %s17
      %s65 = scalar_select %p64, %s18, %s17
      %p66 = scmp.lt.s32.totalorder %s27, %s31
      %s67 = scalar_select %p66, %s27, %s31
      %s68 = ssub.s32 %s16, %s35
      %s69 = ssub.s32 %s65, %s67
      %s70 = sor.u32 %s68, %s69
      %p71 = scmp.eq.s32.totalorder %s70, 0
      %s73 = sadd.s32 %s72, 1
      %s74 = scalar_select %p71, %s72, %s73
      %p77 = pneg %p71
      %p78 = scmp.eq.s32.totalorder %s9, 7
      %p79 = por %p77, %p78
      %p80 = scmp.ne.s32.totalorder %s72, %s75
      %p81 = scmp.eq.s32.totalorder %s9, 0
      %p82 = por %p80, %p81
      %p83 = scmp.ne.s32.totalorder %s72, %s75
      %p84 = scmp.eq.s32.totalorder %s14, 7
      %p85 = por %p83, %p84
      %p86 = scmp.ne.s32.totalorder %s75, %s76
      %p87 = scmp.eq.s32.totalorder %s14, 0
      %p88 = por %p86, %p87
      %p89 = scmp.ne.s32.totalorder %s75, %s76
      %p90 = scmp.eq.s32.totalorder %s15, 7
      %p91 = por %p89, %p90
      %p93 = scmp.ne.s32.totalorder %s76, %s92
      %p94 = scmp.eq.s32.totalorder %s15, 0
      %p95 = por %p93, %p94
      %p96 = scmp.lt.s32.totalorder %s18, %s17
      %s97 = scalar_select %p96, %s18, %s17
      %p98 = scmp.lt.s32.totalorder %s27, %s31
      %s99 = scalar_select %p98, %s27, %s31
      %s100 = ssub.s32 %s16, %s35
      %s101 = ssub.s32 %s97, %s99
      %s102 = sor.u32 %s100, %s101
      %p103 = scmp.eq.s32.totalorder %s102, 0
      %s105 = sadd.s32 %s104, 1
      %s106 = scalar_select %p103, %s104, %s105
      %p109 = pneg %p103
      %p110 = scmp.eq.s32.totalorder %s9, 7
      %p111 = por %p109, %p110
      %p112 = scmp.ne.s32.totalorder %s104, %s107
      %p113 = scmp.eq.s32.totalorder %s9, 0
      %p114 = por %p112, %p113
      %p115 = scmp.ne.s32.totalorder %s104, %s107
      %p116 = scmp.eq.s32.totalorder %s14, 7
      %p117 = por %p115, %p116
      %p118 = scmp.ne.s32.totalorder %s107, %s108
      %p119 = scmp.eq.s32.totalorder %s14, 0
      %p120 = por %p118, %p119
      %p121 = scmp.ne.s32.totalorder %s107, %s108
      %p122 = scmp.eq.s32.totalorder %s15, 7
      %p123 = por %p121, %p122
      %p125 = scmp.ne.s32.totalorder %s108, %s124
      %p126 = scmp.eq.s32.totalorder %s15, 0
      %p127 = por %p125, %p126
      %s128 = ssub.s32 %s16, %s35
      %s129 = ssub.s32 %s17, %s31
      %s130 = sor.u32 %s128, %s129
      %p131 = scmp.eq.s32.totalorder %s130, 0
      %s133 = sadd.s32 %s132, 1
      %s134 = scalar_select %p131, %s132, %s133
      %p137 = pneg %p131
      %p138 = scmp.eq.s32.totalorder %s9, 7
      %p139 = por %p137, %p138
      %p140 = scmp.ne.s32.totalorder %s132, %s135
      %p141 = scmp.eq.s32.totalorder %s9, 0
      %p142 = por %p140, %p141
      %p143 = scmp.ne.s32.totalorder %s132, %s135
      %p144 = scmp.eq.s32.totalorder %s14, 7
      %p145 = por %p143, %p144
      %p146 = scmp.ne.s32.totalorder %s135, %s136
      %p147 = scmp.eq.s32.totalorder %s14, 0
      %p148 = por %p146, %p147
      %p149 = scmp.ne.s32.totalorder %s135, %s136
      %p150 = scmp.eq.s32.totalorder %s15, 7
      %p151 = por %p149, %p150
      %p153 = scmp.ne.s32.totalorder %s136, %s152
      %p154 = scmp.eq.s32.totalorder %s15, 0
      %p155 = por %p153, %p154
      %p156 = scmp.le.s32.totalorder 1, %s9
      %p157 = scmp.lt.s32.totalorder %s9, 9
      %p158 = pnand %p156, %p157
      %p159 = pneg %p158
      // Predicated region
      $region9: #{self_attention_forward.4} parent=5 // pred_check
        _
      $region10: #{self_attention_forward.4} parent=5 // pred_check_branch
        %161 = sbr.rel (%p158) target = $region12
      $region11: #{self_attention_forward.4} parent=5 // pred_region
        %s162 = ssub.s32 %s9, 1
      $region12: #{self_attention_forward.4} parent=5 // pred_fallthru
        _
      %p163 = scmp.lt.s32.totalorder %s9, 8
      // Predicated region
      $region13: #{self_attention_forward.4} parent=5 // pred_check
        %p164 = pneg %p163
      $region14: #{self_attention_forward.4} parent=5 // pred_check_branch
        %166 = sbr.rel (%p164) target = $region16
      $region15: #{self_attention_forward.4} parent=5 // pred_region
        // Predicated region
        $region17: #{self_attention_forward.4} parent=15 // pred_check
          %p167 = pneg %p50
        $region18: #{self_attention_forward.4} parent=15 // pred_check_branch
          %169 = sbr.rel (%p167) target = $region20
        $region19: #{self_attention_forward.4} parent=15 // pred_region
          %s170 = sand.u32 %s40, 1
          %s171 = sand.u32 %s40, 1
          %s172 = smul.addr %s171, 64
          %s173 = scalar_lea.vmem [#allocation5], %s172
          %s174 = smul.u32 16, %s17
          %s175 = smul.addr %s174, 3
          %s176 = smul.addr %s16, 96
          %s177 = sadd.s32 %s175, %s176
          %s178 = smul.addr %s177, 4
          %s179 = scalar_lea.vmem %s0, %s178
          // Predicated region
          $region21: #{self_attention_forward.4} parent=19 // pred_check
            _
          $region22: #{self_attention_forward.4} parent=19 // pred_check_branch
            %181 = sbr.rel (0) target = $region24
          $region23: #{self_attention_forward.4} parent=19 // pred_region
            // Predicated region
            $region25: #{self_attention_forward.4} parent=23 // pred_check
              _
            $region26: #{self_attention_forward.4} parent=23 // pred_check_branch
              %183 = sbr.rel target = $region28
            $region27: #{self_attention_forward.4} parent=23 // pred_region
              // Predicated region
              $region40: #{self_attention_forward.4} parent=27 // pred_check
                _
              $region41: #{self_attention_forward.4} parent=27 // pred_check_branch
                %228 = sbr.rel (0) target = $region43
              $region42: #{self_attention_forward.4} parent=27 // pred_region
                loop: start=0, step=1, limit=1
                $region44: #{self_attention_forward.4} parent=42 // loop_pre_header
                  _
                $region45: #{self_attention_forward.4} parent=42 // loop_header
                  %s230 = sphi 0, %s234
                  %p231 = scmp.ge.s32.totalorder %s230, 1
                  %s235 = sphi %s179, %s179
                  %s236 = sphi %s173, %s173
                $region46: #{self_attention_forward.4} parent=42 // loop_header_branch
                  %233 = sbr.rel (%p231) target = $region50
                $region47: #{self_attention_forward.4} parent=42 // loop_body
                  _
                $region48: #{self_attention_forward.4} parent=42 // loop_footer
                  %s234 = sadd.s32 1, %s230
                $region49: #{self_attention_forward.4} parent=42 // loop_footer_branch
                  %229 = sbr.rel target = $region45
                $region50: #{self_attention_forward.4} parent=42 // loop_exit
                  _
                loop: start=0, step=1, limit=1
                $region51: #{self_attention_forward.4} parent=42 // loop_pre_header
                  _
                $region52: #{self_attention_forward.4} parent=42 // loop_header
                  %s239 = sphi 0, %s243
                  %p240 = scmp.ge.s32.totalorder %s239, 1
                  %s244 = sphi %s179, %s179
                  %s245 = sphi %s173, %s173
                $region53: #{self_attention_forward.4} parent=42 // loop_header_branch
                  %242 = sbr.rel (%p240) target = $region57
                $region54: #{self_attention_forward.4} parent=42 // loop_body
                  %v246 = vld [vmem:[%s244] sm:$0xf]
                  %247 = vst [vmem:[%s245] sm:$0xf] %v246
                  %v248 = vld [vmem:[%s244 + $0xc] sm:$0xf]
                  %249 = vst [vmem:[%s245 + $0x4] sm:$0xf] %v248
                  %v250 = vld [vmem:[%s244 + $0x18] sm:$0xf]
                  %251 = vst [vmem:[%s245 + $0x8] sm:$0xf] %v250
                  %v252 = vld [vmem:[%s244 + $0x24] sm:$0xf]
                  %253 = vst [vmem:[%s245 + $0xc] sm:$0xf] %v252
                  %v254 = vld [vmem:[%s244 + $0x30] sm:$0xf]
                  %255 = vst [vmem:[%s245 + $0x10] sm:$0xf] %v254
                  %v256 = vld [vmem:[%s244 + $0x3c] sm:$0xf]
                  %257 = vst [vmem:[%s245 + $0x14] sm:$0xf] %v256
                  %v258 = vld [vmem:[%s244 + $0x48] sm:$0xf]
                  %259 = vst [vmem:[%s245 + $0x18] sm:$0xf] %v258
                  %v260 = vld [vmem:[%s244 + $0x54] sm:$0xf]
                  %261 = vst [vmem:[%s245 + $0x1c] sm:$0xf] %v260
                  %v262 = vld [vmem:[%s244 + $0x60] sm:$0xf]
                  %263 = vst [vmem:[%s245 + $0x20] sm:$0xf] %v262
                  %v264 = vld [vmem:[%s244 + $0x6c] sm:$0xf]
                  %265 = vst [vmem:[%s245 + $0x24] sm:$0xf] %v264
                  %v266 = vld [vmem:[%s244 + $0x78] sm:$0xf]
                  %267 = vst [vmem:[%s245 + $0x28] sm:$0xf] %v266
                  %v268 = vld [vmem:[%s244 + $0x84] sm:$0xf]
                  %269 = vst [vmem:[%s245 + $0x2c] sm:$0xf] %v268
                  %v270 = vld [vmem:[%s244 + $0x90] sm:$0xf]
                  %271 = vst [vmem:[%s245 + $0x30] sm:$0xf] %v270
                  %v272 = vld [vmem:[%s244 + $0x9c] sm:$0xf]
                  %273 = vst [vmem:[%s245 + $0x34] sm:$0xf] %v272
                  %v274 = vld [vmem:[%s244 + $0xa8] sm:$0xf]
                  %275 = vst [vmem:[%s245 + $0x38] sm:$0xf] %v274
                  %v276 = vld [vmem:[%s244 + $0xb4] sm:$0xf]
                  %277 = vst [vmem:[%s245 + $0x3c] sm:$0xf] %v276
                $region55: #{self_attention_forward.4} parent=42 // loop_footer
                  %s243 = sadd.s32 1, %s239
                $region56: #{self_attention_forward.4} parent=42 // loop_footer_branch
                  %238 = sbr.rel target = $region52
                $region57: #{self_attention_forward.4} parent=42 // loop_exit
                  _
              $region43: #{self_attention_forward.4} parent=27 // pred_fallthru
                _
            $region28: #{self_attention_forward.4} parent=23 // pred_fallthru
              _
            // Predicated region
            $region29: #{self_attention_forward.4} parent=23 // pred_check
              _
            $region30: #{self_attention_forward.4} parent=23 // pred_check_branch
              %185 = sbr.rel (0) target = $region32
            $region31: #{self_attention_forward.4} parent=23 // pred_region
              loop: start=0, step=1, limit=1
              $region33: #{self_attention_forward.4} parent=31 // loop_pre_header
                _
              $region34: #{self_attention_forward.4} parent=31 // loop_header
                %s188 = sphi 0, %s192
                %p189 = scmp.ge.s32.totalorder %s188, 1
                %s193 = sphi %s179, %s179
                %s194 = sphi %s173, %s173
              $region35: #{self_attention_forward.4} parent=31 // loop_header_branch
                %191 = sbr.rel (%p189) target = $region39
              $region36: #{self_attention_forward.4} parent=31 // loop_body
                %v195 = vld [vmem:[%s193] sm:$0xf]
                %196 = vst [vmem:[%s194] sm:$0xf] %v195
                %v197 = vld [vmem:[%s193 + $0xc] sm:$0xf]
                %198 = vst [vmem:[%s194 + $0x4] sm:$0xf] %v197
                %v199 = vld [vmem:[%s193 + $0x18] sm:$0xf]
                %200 = vst [vmem:[%s194 + $0x8] sm:$0xf] %v199
                %v201 = vld [vmem:[%s193 + $0x24] sm:$0xf]
                %202 = vst [vmem:[%s194 + $0xc] sm:$0xf] %v201
                %v203 = vld [vmem:[%s193 + $0x30] sm:$0xf]
                %204 = vst [vmem:[%s194 + $0x10] sm:$0xf] %v203
                %v205 = vld [vmem:[%s193 + $0x3c] sm:$0xf]
                %206 = vst [vmem:[%s194 + $0x14] sm:$0xf] %v205
                %v207 = vld [vmem:[%s193 + $0x48] sm:$0xf]
                %208 = vst [vmem:[%s194 + $0x18] sm:$0xf] %v207
                %v209 = vld [vmem:[%s193 + $0x54] sm:$0xf]
                %210 = vst [vmem:[%s194 + $0x1c] sm:$0xf] %v209
                %v211 = vld [vmem:[%s193 + $0x60] sm:$0xf]
                %212 = vst [vmem:[%s194 + $0x20] sm:$0xf] %v211
                %v213 = vld [vmem:[%s193 + $0x6c] sm:$0xf]
                %214 = vst [vmem:[%s194 + $0x24] sm:$0xf] %v213
                %v215 = vld [vmem:[%s193 + $0x78] sm:$0xf]
                %216 = vst [vmem:[%s194 + $0x28] sm:$0xf] %v215
                %v217 = vld [vmem:[%s193 + $0x84] sm:$0xf]
                %218 = vst [vmem:[%s194 + $0x2c] sm:$0xf] %v217
                %v219 = vld [vmem:[%s193 + $0x90] sm:$0xf]
                %220 = vst [vmem:[%s194 + $0x30] sm:$0xf] %v219
                %v221 = vld [vmem:[%s193 + $0x9c] sm:$0xf]
                %222 = vst [vmem:[%s194 + $0x34] sm:$0xf] %v221
                %v223 = vld [vmem:[%s193 + $0xa8] sm:$0xf]
                %224 = vst [vmem:[%s194 + $0x38] sm:$0xf] %v223
                %v225 = vld [vmem:[%s193 + $0xb4] sm:$0xf]
                %226 = vst [vmem:[%s194 + $0x3c] sm:$0xf] %v225
              $region37: #{self_attention_forward.4} parent=31 // loop_footer
                %s192 = sadd.s32 1, %s188
              $region38: #{self_attention_forward.4} parent=31 // loop_footer_branch
                %187 = sbr.rel target = $region34
              $region39: #{self_attention_forward.4} parent=31 // loop_exit
                _
            $region32: #{self_attention_forward.4} parent=23 // pred_fallthru
              _
          $region24: #{self_attention_forward.4} parent=19 // pred_fallthru
            _
          %278 = vnop
        $region20: #{self_attention_forward.4} parent=15 // pred_fallthru
          _
        // Predicated region
        $region58: #{self_attention_forward.4} parent=15 // pred_check
          %p279 = pneg %p82
        $region59: #{self_attention_forward.4} parent=15 // pred_check_branch
          %281 = sbr.rel (%p279) target = $region61
        $region60: #{self_attention_forward.4} parent=15 // pred_region
          %s282 = sand.u32 %s72, 1
          %s283 = sand.u32 %s72, 1
          %s284 = smul.addr %s283, 64
          %s285 = scalar_lea.vmem [#allocation6], %s284
          %p286 = scmp.lt.s32.totalorder %s18, %s17
          %s287 = scalar_select %p286, %s18, %s17
          %s288 = smul.u32 16, %s287
          %s289 = smul.addr %s288, 3
          %s290 = sadd.s32 1, %s289
          %s291 = smul.addr %s16, 96
          %s292 = sadd.s32 %s290, %s291
          %s293 = smul.addr %s292, 4
          %s294 = scalar_lea.vmem %s1, %s293
          // Predicated region
          $region62: #{self_attention_forward.4} parent=60 // pred_check
            _
          $region63: #{self_attention_forward.4} parent=60 // pred_check_branch
            %296 = sbr.rel (0) target = $region65
          $region64: #{self_attention_forward.4} parent=60 // pred_region
            // Predicated region
            $region66: #{self_attention_forward.4} parent=64 // pred_check
              _
            $region67: #{self_attention_forward.4} parent=64 // pred_check_branch
              %298 = sbr.rel target = $region69
            $region68: #{self_attention_forward.4} parent=64 // pred_region
              // Predicated region
              $region81: #{self_attention_forward.4} parent=68 // pred_check
                _
              $region82: #{self_attention_forward.4} parent=68 // pred_check_branch
                %343 = sbr.rel (0) target = $region84
              $region83: #{self_attention_forward.4} parent=68 // pred_region
                loop: start=0, step=1, limit=1
                $region85: #{self_attention_forward.4} parent=83 // loop_pre_header
                  _
                $region86: #{self_attention_forward.4} parent=83 // loop_header
                  %s345 = sphi 0, %s349
                  %p346 = scmp.ge.s32.totalorder %s345, 1
                  %s350 = sphi %s294, %s294
                  %s351 = sphi %s285, %s285
                $region87: #{self_attention_forward.4} parent=83 // loop_header_branch
                  %348 = sbr.rel (%p346) target = $region91
                $region88: #{self_attention_forward.4} parent=83 // loop_body
                  _
                $region89: #{self_attention_forward.4} parent=83 // loop_footer
                  %s349 = sadd.s32 1, %s345
                $region90: #{self_attention_forward.4} parent=83 // loop_footer_branch
                  %344 = sbr.rel target = $region86
                $region91: #{self_attention_forward.4} parent=83 // loop_exit
                  _
                loop: start=0, step=1, limit=1
                $region92: #{self_attention_forward.4} parent=83 // loop_pre_header
                  _
                $region93: #{self_attention_forward.4} parent=83 // loop_header
                  %s354 = sphi 0, %s358
                  %p355 = scmp.ge.s32.totalorder %s354, 1
                  %s359 = sphi %s294, %s294
                  %s360 = sphi %s285, %s285
                $region94: #{self_attention_forward.4} parent=83 // loop_header_branch
                  %357 = sbr.rel (%p355) target = $region98
                $region95: #{self_attention_forward.4} parent=83 // loop_body
                  %v361 = vld [vmem:[%s359] sm:$0xf]
                  %362 = vst [vmem:[%s360] sm:$0xf] %v361
                  %v363 = vld [vmem:[%s359 + $0xc] sm:$0xf]
                  %364 = vst [vmem:[%s360 + $0x4] sm:$0xf] %v363
                  %v365 = vld [vmem:[%s359 + $0x18] sm:$0xf]
                  %366 = vst [vmem:[%s360 + $0x8] sm:$0xf] %v365
                  %v367 = vld [vmem:[%s359 + $0x24] sm:$0xf]
                  %368 = vst [vmem:[%s360 + $0xc] sm:$0xf] %v367
                  %v369 = vld [vmem:[%s359 + $0x30] sm:$0xf]
                  %370 = vst [vmem:[%s360 + $0x10] sm:$0xf] %v369
                  %v371 = vld [vmem:[%s359 + $0x3c] sm:$0xf]
                  %372 = vst [vmem:[%s360 + $0x14] sm:$0xf] %v371
                  %v373 = vld [vmem:[%s359 + $0x48] sm:$0xf]
                  %374 = vst [vmem:[%s360 + $0x18] sm:$0xf] %v373
                  %v375 = vld [vmem:[%s359 + $0x54] sm:$0xf]
                  %376 = vst [vmem:[%s360 + $0x1c] sm:$0xf] %v375
                  %v377 = vld [vmem:[%s359 + $0x60] sm:$0xf]
                  %378 = vst [vmem:[%s360 + $0x20] sm:$0xf] %v377
                  %v379 = vld [vmem:[%s359 + $0x6c] sm:$0xf]
                  %380 = vst [vmem:[%s360 + $0x24] sm:$0xf] %v379
                  %v381 = vld [vmem:[%s359 + $0x78] sm:$0xf]
                  %382 = vst [vmem:[%s360 + $0x28] sm:$0xf] %v381
                  %v383 = vld [vmem:[%s359 + $0x84] sm:$0xf]
                  %384 = vst [vmem:[%s360 + $0x2c] sm:$0xf] %v383
                  %v385 = vld [vmem:[%s359 + $0x90] sm:$0xf]
                  %386 = vst [vmem:[%s360 + $0x30] sm:$0xf] %v385
                  %v387 = vld [vmem:[%s359 + $0x9c] sm:$0xf]
                  %388 = vst [vmem:[%s360 + $0x34] sm:$0xf] %v387
                  %v389 = vld [vmem:[%s359 + $0xa8] sm:$0xf]
                  %390 = vst [vmem:[%s360 + $0x38] sm:$0xf] %v389
                  %v391 = vld [vmem:[%s359 + $0xb4] sm:$0xf]
                  %392 = vst [vmem:[%s360 + $0x3c] sm:$0xf] %v391
                $region96: #{self_attention_forward.4} parent=83 // loop_footer
                  %s358 = sadd.s32 1, %s354
                $region97: #{self_attention_forward.4} parent=83 // loop_footer_branch
                  %353 = sbr.rel target = $region93
                $region98: #{self_attention_forward.4} parent=83 // loop_exit
                  _
              $region84: #{self_attention_forward.4} parent=68 // pred_fallthru
                _
            $region69: #{self_attention_forward.4} parent=64 // pred_fallthru
              _
            // Predicated region
            $region70: #{self_attention_forward.4} parent=64 // pred_check
              _
            $region71: #{self_attention_forward.4} parent=64 // pred_check_branch
              %300 = sbr.rel (0) target = $region73
            $region72: #{self_attention_forward.4} parent=64 // pred_region
              loop: start=0, step=1, limit=1
              $region74: #{self_attention_forward.4} parent=72 // loop_pre_header
                _
              $region75: #{self_attention_forward.4} parent=72 // loop_header
                %s303 = sphi 0, %s307
                %p304 = scmp.ge.s32.totalorder %s303, 1
                %s308 = sphi %s294, %s294
                %s309 = sphi %s285, %s285
              $region76: #{self_attention_forward.4} parent=72 // loop_header_branch
                %306 = sbr.rel (%p304) target = $region80
              $region77: #{self_attention_forward.4} parent=72 // loop_body
                %v310 = vld [vmem:[%s308] sm:$0xf]
                %311 = vst [vmem:[%s309] sm:$0xf] %v310
                %v312 = vld [vmem:[%s308 + $0xc] sm:$0xf]
                %313 = vst [vmem:[%s309 + $0x4] sm:$0xf] %v312
                %v314 = vld [vmem:[%s308 + $0x18] sm:$0xf]
                %315 = vst [vmem:[%s309 + $0x8] sm:$0xf] %v314
                %v316 = vld [vmem:[%s308 + $0x24] sm:$0xf]
                %317 = vst [vmem:[%s309 + $0xc] sm:$0xf] %v316
                %v318 = vld [vmem:[%s308 + $0x30] sm:$0xf]
                %319 = vst [vmem:[%s309 + $0x10] sm:$0xf] %v318
                %v320 = vld [vmem:[%s308 + $0x3c] sm:$0xf]
                %321 = vst [vmem:[%s309 + $0x14] sm:$0xf] %v320
                %v322 = vld [vmem:[%s308 + $0x48] sm:$0xf]
                %323 = vst [vmem:[%s309 + $0x18] sm:$0xf] %v322
                %v324 = vld [vmem:[%s308 + $0x54] sm:$0xf]
                %325 = vst [vmem:[%s309 + $0x1c] sm:$0xf] %v324
                %v326 = vld [vmem:[%s308 + $0x60] sm:$0xf]
                %327 = vst [vmem:[%s309 + $0x20] sm:$0xf] %v326
                %v328 = vld [vmem:[%s308 + $0x6c] sm:$0xf]
                %329 = vst [vmem:[%s309 + $0x24] sm:$0xf] %v328
                %v330 = vld [vmem:[%s308 + $0x78] sm:$0xf]
                %331 = vst [vmem:[%s309 + $0x28] sm:$0xf] %v330
                %v332 = vld [vmem:[%s308 + $0x84] sm:$0xf]
                %333 = vst [vmem:[%s309 + $0x2c] sm:$0xf] %v332
                %v334 = vld [vmem:[%s308 + $0x90] sm:$0xf]
                %335 = vst [vmem:[%s309 + $0x30] sm:$0xf] %v334
                %v336 = vld [vmem:[%s308 + $0x9c] sm:$0xf]
                %337 = vst [vmem:[%s309 + $0x34] sm:$0xf] %v336
                %v338 = vld [vmem:[%s308 + $0xa8] sm:$0xf]
                %339 = vst [vmem:[%s309 + $0x38] sm:$0xf] %v338
                %v340 = vld [vmem:[%s308 + $0xb4] sm:$0xf]
                %341 = vst [vmem:[%s309 + $0x3c] sm:$0xf] %v340
              $region78: #{self_attention_forward.4} parent=72 // loop_footer
                %s307 = sadd.s32 1, %s303
              $region79: #{self_attention_forward.4} parent=72 // loop_footer_branch
                %302 = sbr.rel target = $region75
              $region80: #{self_attention_forward.4} parent=72 // loop_exit
                _
            $region73: #{self_attention_forward.4} parent=64 // pred_fallthru
              _
          $region65: #{self_attention_forward.4} parent=60 // pred_fallthru
            _
          %393 = vnop
        $region61: #{self_attention_forward.4} parent=15 // pred_fallthru
          _
        // Predicated region
        $region99: #{self_attention_forward.4} parent=15 // pred_check
          %p394 = pneg %p114
        $region100: #{self_attention_forward.4} parent=15 // pred_check_branch
          %396 = sbr.rel (%p394) target = $region102
        $region101: #{self_attention_forward.4} parent=15 // pred_region
          %s397 = sand.u32 %s104, 1
          %s398 = sand.u32 %s104, 1
          %s399 = smul.addr %s398, 64
          %s400 = scalar_lea.vmem [#allocation7], %s399
          %p401 = scmp.lt.s32.totalorder %s18, %s17
          %s402 = scalar_select %p401, %s18, %s17
          %s403 = smul.u32 16, %s402
          %s404 = smul.addr %s403, 3
          %s405 = sadd.s32 2, %s404
          %s406 = smul.addr %s16, 96
          %s407 = sadd.s32 %s405, %s406
          %s408 = smul.addr %s407, 4
          %s409 = scalar_lea.vmem %s2, %s408
          // Predicated region
          $region103: #{self_attention_forward.4} parent=101 // pred_check
            _
          $region104: #{self_attention_forward.4} parent=101 // pred_check_branch
            %411 = sbr.rel (0) target = $region106
          $region105: #{self_attention_forward.4} parent=101 // pred_region
            // Predicated region
            $region107: #{self_attention_forward.4} parent=105 // pred_check
              _
            $region108: #{self_attention_forward.4} parent=105 // pred_check_branch
              %413 = sbr.rel target = $region110
            $region109: #{self_attention_forward.4} parent=105 // pred_region
              // Predicated region
              $region122: #{self_attention_forward.4} parent=109 // pred_check
                _
              $region123: #{self_attention_forward.4} parent=109 // pred_check_branch
                %458 = sbr.rel (0) target = $region125
              $region124: #{self_attention_forward.4} parent=109 // pred_region
                loop: start=0, step=1, limit=1
                $region126: #{self_attention_forward.4} parent=124 // loop_pre_header
                  _
                $region127: #{self_attention_forward.4} parent=124 // loop_header
                  %s460 = sphi 0, %s464
                  %p461 = scmp.ge.s32.totalorder %s460, 1
                  %s465 = sphi %s409, %s409
                  %s466 = sphi %s400, %s400
                $region128: #{self_attention_forward.4} parent=124 // loop_header_branch
                  %463 = sbr.rel (%p461) target = $region132
                $region129: #{self_attention_forward.4} parent=124 // loop_body
                  _
                $region130: #{self_attention_forward.4} parent=124 // loop_footer
                  %s464 = sadd.s32 1, %s460
                $region131: #{self_attention_forward.4} parent=124 // loop_footer_branch
                  %459 = sbr.rel target = $region127
                $region132: #{self_attention_forward.4} parent=124 // loop_exit
                  _
                loop: start=0, step=1, limit=1
                $region133: #{self_attention_forward.4} parent=124 // loop_pre_header
                  _
                $region134: #{self_attention_forward.4} parent=124 // loop_header
                  %s469 = sphi 0, %s473
                  %p470 = scmp.ge.s32.totalorder %s469, 1
                  %s474 = sphi %s409, %s409
                  %s475 = sphi %s400, %s400
                $region135: #{self_attention_forward.4} parent=124 // loop_header_branch
                  %472 = sbr.rel (%p470) target = $region139
                $region136: #{self_attention_forward.4} parent=124 // loop_body
                  %v476 = vld [vmem:[%s474] sm:$0xf]
                  %477 = vst [vmem:[%s475] sm:$0xf] %v476
                  %v478 = vld [vmem:[%s474 + $0xc] sm:$0xf]
                  %479 = vst [vmem:[%s475 + $0x4] sm:$0xf] %v478
                  %v480 = vld [vmem:[%s474 + $0x18] sm:$0xf]
                  %481 = vst [vmem:[%s475 + $0x8] sm:$0xf] %v480
                  %v482 = vld [vmem:[%s474 + $0x24] sm:$0xf]
                  %483 = vst [vmem:[%s475 + $0xc] sm:$0xf] %v482
                  %v484 = vld [vmem:[%s474 + $0x30] sm:$0xf]
                  %485 = vst [vmem:[%s475 + $0x10] sm:$0xf] %v484
                  %v486 = vld [vmem:[%s474 + $0x3c] sm:$0xf]
                  %487 = vst [vmem:[%s475 + $0x14] sm:$0xf] %v486
                  %v488 = vld [vmem:[%s474 + $0x48] sm:$0xf]
                  %489 = vst [vmem:[%s475 + $0x18] sm:$0xf] %v488
                  %v490 = vld [vmem:[%s474 + $0x54] sm:$0xf]
                  %491 = vst [vmem:[%s475 + $0x1c] sm:$0xf] %v490
                  %v492 = vld [vmem:[%s474 + $0x60] sm:$0xf]
                  %493 = vst [vmem:[%s475 + $0x20] sm:$0xf] %v492
                  %v494 = vld [vmem:[%s474 + $0x6c] sm:$0xf]
                  %495 = vst [vmem:[%s475 + $0x24] sm:$0xf] %v494
                  %v496 = vld [vmem:[%s474 + $0x78] sm:$0xf]
                  %497 = vst [vmem:[%s475 + $0x28] sm:$0xf] %v496
                  %v498 = vld [vmem:[%s474 + $0x84] sm:$0xf]
                  %499 = vst [vmem:[%s475 + $0x2c] sm:$0xf] %v498
                  %v500 = vld [vmem:[%s474 + $0x90] sm:$0xf]
                  %501 = vst [vmem:[%s475 + $0x30] sm:$0xf] %v500
                  %v502 = vld [vmem:[%s474 + $0x9c] sm:$0xf]
                  %503 = vst [vmem:[%s475 + $0x34] sm:$0xf] %v502
                  %v504 = vld [vmem:[%s474 + $0xa8] sm:$0xf]
                  %505 = vst [vmem:[%s475 + $0x38] sm:$0xf] %v504
                  %v506 = vld [vmem:[%s474 + $0xb4] sm:$0xf]
                  %507 = vst [vmem:[%s475 + $0x3c] sm:$0xf] %v506
                $region137: #{self_attention_forward.4} parent=124 // loop_footer
                  %s473 = sadd.s32 1, %s469
                $region138: #{self_attention_forward.4} parent=124 // loop_footer_branch
                  %468 = sbr.rel target = $region134
                $region139: #{self_attention_forward.4} parent=124 // loop_exit
                  _
              $region125: #{self_attention_forward.4} parent=109 // pred_fallthru
                _
            $region110: #{self_attention_forward.4} parent=105 // pred_fallthru
              _
            // Predicated region
            $region111: #{self_attention_forward.4} parent=105 // pred_check
              _
            $region112: #{self_attention_forward.4} parent=105 // pred_check_branch
              %415 = sbr.rel (0) target = $region114
            $region113: #{self_attention_forward.4} parent=105 // pred_region
              loop: start=0, step=1, limit=1
              $region115: #{self_attention_forward.4} parent=113 // loop_pre_header
                _
              $region116: #{self_attention_forward.4} parent=113 // loop_header
                %s418 = sphi 0, %s422
                %p419 = scmp.ge.s32.totalorder %s418, 1
                %s423 = sphi %s409, %s409
                %s424 = sphi %s400, %s400
              $region117: #{self_attention_forward.4} parent=113 // loop_header_branch
                %421 = sbr.rel (%p419) target = $region121
              $region118: #{self_attention_forward.4} parent=113 // loop_body
                %v425 = vld [vmem:[%s423] sm:$0xf]
                %426 = vst [vmem:[%s424] sm:$0xf] %v425
                %v427 = vld [vmem:[%s423 + $0xc] sm:$0xf]
                %428 = vst [vmem:[%s424 + $0x4] sm:$0xf] %v427
                %v429 = vld [vmem:[%s423 + $0x18] sm:$0xf]
                %430 = vst [vmem:[%s424 + $0x8] sm:$0xf] %v429
                %v431 = vld [vmem:[%s423 + $0x24] sm:$0xf]
                %432 = vst [vmem:[%s424 + $0xc] sm:$0xf] %v431
                %v433 = vld [vmem:[%s423 + $0x30] sm:$0xf]
                %434 = vst [vmem:[%s424 + $0x10] sm:$0xf] %v433
                %v435 = vld [vmem:[%s423 + $0x3c] sm:$0xf]
                %436 = vst [vmem:[%s424 + $0x14] sm:$0xf] %v435
                %v437 = vld [vmem:[%s423 + $0x48] sm:$0xf]
                %438 = vst [vmem:[%s424 + $0x18] sm:$0xf] %v437
                %v439 = vld [vmem:[%s423 + $0x54] sm:$0xf]
                %440 = vst [vmem:[%s424 + $0x1c] sm:$0xf] %v439
                %v441 = vld [vmem:[%s423 + $0x60] sm:$0xf]
                %442 = vst [vmem:[%s424 + $0x20] sm:$0xf] %v441
                %v443 = vld [vmem:[%s423 + $0x6c] sm:$0xf]
                %444 = vst [vmem:[%s424 + $0x24] sm:$0xf] %v443
                %v445 = vld [vmem:[%s423 + $0x78] sm:$0xf]
                %446 = vst [vmem:[%s424 + $0x28] sm:$0xf] %v445
                %v447 = vld [vmem:[%s423 + $0x84] sm:$0xf]
                %448 = vst [vmem:[%s424 + $0x2c] sm:$0xf] %v447
                %v449 = vld [vmem:[%s423 + $0x90] sm:$0xf]
                %450 = vst [vmem:[%s424 + $0x30] sm:$0xf] %v449
                %v451 = vld [vmem:[%s423 + $0x9c] sm:$0xf]
                %452 = vst [vmem:[%s424 + $0x34] sm:$0xf] %v451
                %v453 = vld [vmem:[%s423 + $0xa8] sm:$0xf]
                %454 = vst [vmem:[%s424 + $0x38] sm:$0xf] %v453
                %v455 = vld [vmem:[%s423 + $0xb4] sm:$0xf]
                %456 = vst [vmem:[%s424 + $0x3c] sm:$0xf] %v455
              $region119: #{self_attention_forward.4} parent=113 // loop_footer
                %s422 = sadd.s32 1, %s418
              $region120: #{self_attention_forward.4} parent=113 // loop_footer_branch
                %417 = sbr.rel target = $region116
              $region121: #{self_attention_forward.4} parent=113 // loop_exit
                _
            $region114: #{self_attention_forward.4} parent=105 // pred_fallthru
              _
          $region106: #{self_attention_forward.4} parent=101 // pred_fallthru
            _
          %508 = vnop
        $region102: #{self_attention_forward.4} parent=15 // pred_fallthru
          _
      $region16: #{self_attention_forward.4} parent=5 // pred_fallthru
        _
      %p509 = scmp.le.s32.totalorder 1, %s9
      %p510 = scmp.lt.s32.totalorder %s9, 9
      %p511 = pnand %p509, %p510
      %p512 = pneg %p511
      // Predicated region
      $region140: #{self_attention_forward.4} parent=5 // pred_check
        _
      $region141: #{self_attention_forward.4} parent=5 // pred_check_branch
        %514 = sbr.rel (%p511) target = $region143
      $region142: #{self_attention_forward.4} parent=5 // pred_region
        %s515 = ssub.s32 %s9, 1
        %s516 = sand.u32 %s43, 1
        %s517 = sand.u32 %s43, 1
        %s518 = smul.addr %s517, 64
        %s519 = scalar_lea.vmem [#allocation5], %s518
        // Predicated region
        $region144: #{self_attention_forward.4} parent=142 // pred_check
          %p520 = pneg %p56
        $region145: #{self_attention_forward.4} parent=142 // pred_check_branch
          %522 = sbr.rel (%p520) target = $region147
        $region146: #{self_attention_forward.4} parent=142 // pred_region
          _
        $region147: #{self_attention_forward.4} parent=142 // pred_fallthru
          _
        %s523 = sand.u32 %s75, 1
        %s524 = sand.u32 %s75, 1
        %s525 = smul.addr %s524, 64
        %s526 = scalar_lea.vmem [#allocation6], %s525
        // Predicated region
        $region148: #{self_attention_forward.4} parent=142 // pred_check
          %p527 = pneg %p88
        $region149: #{self_attention_forward.4} parent=142 // pred_check_branch
          %529 = sbr.rel (%p527) target = $region151
        $region150: #{self_attention_forward.4} parent=142 // pred_region
          _
        $region151: #{self_attention_forward.4} parent=142 // pred_fallthru
          _
        %s530 = sand.u32 %s107, 1
        %s531 = sand.u32 %s107, 1
        %s532 = smul.addr %s531, 64
        %s533 = scalar_lea.vmem [#allocation7], %s532
        // Predicated region
        $region152: #{self_attention_forward.4} parent=142 // pred_check
          %p534 = pneg %p120
        $region153: #{self_attention_forward.4} parent=142 // pred_check_branch
          %536 = sbr.rel (%p534) target = $region155
        $region154: #{self_attention_forward.4} parent=142 // pred_region
          _
        $region155: #{self_attention_forward.4} parent=142 // pred_fallthru
          _
        %s537 = sand.u32 %s43, 1
        %s538 = sand.u32 %s43, 1
        %s539 = smul.addr %s538, 64
        %s540 = scalar_lea.vmem [#allocation5], %s539
        %p541 = pneg %p56
        %p542 = pneg %p53
        %s543 = sand.u32 %s75, 1
        %s544 = sand.u32 %s75, 1
        %s545 = smul.addr %s544, 64
        %s546 = scalar_lea.vmem [#allocation6], %s545
        %p547 = pneg %p88
        %p548 = pneg %p85
        %s549 = sand.u32 %s107, 1
        %s550 = sand.u32 %s107, 1
        %s551 = smul.addr %s550, 64
        %s552 = scalar_lea.vmem [#allocation7], %s551
        %p553 = pneg %p120
        %p554 = pneg %p117
        %p555 = pneg %p148
        %p556 = pneg %p145
        %s557 = smul.u32 16, %s20
        %p558 = scmp.lt.s32.totalorder %s19, 1
        %s559 = scalar_select %p558, %s19, 1
        %p560 = scmp.lt.s32.totalorder %s557, 31
        %s561 = scalar_select %p560, %s557, 31
        %s562 = smul.addr %s559, 32
        %s563 = sadd.s32 %s561, %s562
        %s564 = smul.addr %s563, 4
        %s565 = scalar_lea.vmem %s3, %s564
        %s566 = smul.u32 16, %s20
        %p567 = scmp.lt.s32.totalorder %s21, %s20
        %s568 = scalar_select %p567, %s21, %s20
        %s569 = smul.u32 16, %s568
        %p570 = scmp.lt.s32.totalorder %s21, %s20
        %s571 = scalar_select %p570, %s21, %s20
        %s572 = smul.u32 16, %s571
        %s573 = smul.u32 16, %s20
        %p574 = scmp.lt.s32.totalorder %s19, 1
        %s575 = scalar_select %p574, %s19, 1
        %p576 = scmp.lt.s32.totalorder %s573, 31
        %s577 = scalar_select %p576, %s573, 31
        %s578 = smul.addr %s575, 32
        %s579 = sadd.s32 %s577, %s578
        %s580 = smul.addr %s579, 4
        %s581 = scalar_lea.vmem %s3, %s580
        %s582 = smul.u32 16, %s20
        %p584 = scmp.eq.s32.totalorder %s21, 0
        // Predicated region
        $region156: #{self_attention_forward.4} parent=142 // pred_check
          %p585 = pneg %p584
        $region157: #{self_attention_forward.4} parent=142 // pred_check_branch
          %587 = sbr.rel (%p585) target = $region159
        $region158: #{self_attention_forward.4} parent=142 // pred_region
          %vm588 = vcmask 7168
          %589 = vst.msk [vmem:[#allocation2] sm:$0xff] %vm588, -inf
          %590 = vst.msk [vmem:[#allocation2 + $0x8] sm:$0xff] %vm588, -inf
          %591 = vst.msk [vmem:[#allocation2 + $0x10] sm:$0xff] %vm588, -inf
          %592 = vst.msk [vmem:[#allocation2 + $0x18] sm:$0xff] %vm588, -inf
          %593 = vst.msk [vmem:[#allocation2 + $0x20] sm:$0xff] %vm588, -inf
          %594 = vst.msk [vmem:[#allocation2 + $0x28] sm:$0xff] %vm588, -inf
          %595 = vst.msk [vmem:[#allocation2 + $0x30] sm:$0xff] %vm588, -inf
          %596 = vst.msk [vmem:[#allocation2 + $0x38] sm:$0xff] %vm588, -inf
          %597 = vst.msk [vmem:[#allocation2 + $0x40] sm:$0xff] %vm588, -inf
          %598 = vst.msk [vmem:[#allocation2 + $0x48] sm:$0xff] %vm588, -inf
          %599 = vst.msk [vmem:[#allocation2 + $0x50] sm:$0xff] %vm588, -inf
          %600 = vst.msk [vmem:[#allocation2 + $0x58] sm:$0xff] %vm588, -inf
          %601 = vst.msk [vmem:[#allocation2 + $0x60] sm:$0xff] %vm588, -inf
          %602 = vst.msk [vmem:[#allocation2 + $0x68] sm:$0xff] %vm588, -inf
          %603 = vst.msk [vmem:[#allocation2 + $0x70] sm:$0xff] %vm588, -inf
          %604 = vst.msk [vmem:[#allocation2 + $0x78] sm:$0xff] %vm588, -inf
          %605 = vst.msk [vmem:[#allocation2 + $0x80] sm:$0xff] %vm588, -inf
          %606 = vst.msk [vmem:[#allocation2 + $0x88] sm:$0xff] %vm588, -inf
          %607 = vst.msk [vmem:[#allocation2 + $0x90] sm:$0xff] %vm588, -inf
          %608 = vst.msk [vmem:[#allocation2 + $0x98] sm:$0xff] %vm588, -inf
          %609 = vst.msk [vmem:[#allocation2 + $0xa0] sm:$0xff] %vm588, -inf
          %610 = vst.msk [vmem:[#allocation2 + $0xa8] sm:$0xff] %vm588, -inf
          %611 = vst.msk [vmem:[#allocation2 + $0xb0] sm:$0xff] %vm588, -inf
          %612 = vst.msk [vmem:[#allocation2 + $0xb8] sm:$0xff] %vm588, -inf
          %613 = vst.msk [vmem:[#allocation2 + $0xc0] sm:$0xff] %vm588, -inf
          %614 = vst.msk [vmem:[#allocation2 + $0xc8] sm:$0xff] %vm588, -inf
          %615 = vst.msk [vmem:[#allocation2 + $0xd0] sm:$0xff] %vm588, -inf
          %616 = vst.msk [vmem:[#allocation2 + $0xd8] sm:$0xff] %vm588, -inf
          %617 = vst.msk [vmem:[#allocation2 + $0xe0] sm:$0xff] %vm588, -inf
          %618 = vst.msk [vmem:[#allocation2 + $0xe8] sm:$0xff] %vm588, -inf
          %619 = vst.msk [vmem:[#allocation2 + $0xf0] sm:$0xff] %vm588, -inf
          %620 = vst.msk [vmem:[#allocation2 + $0xf8] sm:$0xff] %vm588, -inf
          %621 = vst.msk [vmem:[#allocation2 + $0x100] sm:$0xff] %vm588, -inf
          %622 = vst.msk [vmem:[#allocation2 + $0x108] sm:$0xff] %vm588, -inf
          %623 = vst.msk [vmem:[#allocation2 + $0x110] sm:$0xff] %vm588, -inf
          %624 = vst.msk [vmem:[#allocation2 + $0x118] sm:$0xff] %vm588, -inf
          %625 = vst.msk [vmem:[#allocation2 + $0x120] sm:$0xff] %vm588, -inf
          %626 = vst.msk [vmem:[#allocation2 + $0x128] sm:$0xff] %vm588, -inf
          %627 = vst.msk [vmem:[#allocation2 + $0x130] sm:$0xff] %vm588, -inf
          %628 = vst.msk [vmem:[#allocation2 + $0x138] sm:$0xff] %vm588, -inf
          %629 = vst.msk [vmem:[#allocation2 + $0x140] sm:$0xff] %vm588, -inf
          %630 = vst.msk [vmem:[#allocation2 + $0x148] sm:$0xff] %vm588, -inf
          %631 = vst.msk [vmem:[#allocation2 + $0x150] sm:$0xff] %vm588, -inf
          %632 = vst.msk [vmem:[#allocation2 + $0x158] sm:$0xff] %vm588, -inf
          %633 = vst.msk [vmem:[#allocation2 + $0x160] sm:$0xff] %vm588, -inf
          %634 = vst.msk [vmem:[#allocation2 + $0x168] sm:$0xff] %vm588, -inf
          %635 = vst.msk [vmem:[#allocation2 + $0x170] sm:$0xff] %vm588, -inf
          %636 = vst.msk [vmem:[#allocation2 + $0x178] sm:$0xff] %vm588, -inf
          %637 = vst.msk [vmem:[#allocation2 + $0x180] sm:$0xff] %vm588, -inf
          %638 = vst.msk [vmem:[#allocation2 + $0x188] sm:$0xff] %vm588, -inf
          %639 = vst.msk [vmem:[#allocation2 + $0x190] sm:$0xff] %vm588, -inf
          %640 = vst.msk [vmem:[#allocation2 + $0x198] sm:$0xff] %vm588, -inf
          %641 = vst.msk [vmem:[#allocation2 + $0x1a0] sm:$0xff] %vm588, -inf
          %642 = vst.msk [vmem:[#allocation2 + $0x1a8] sm:$0xff] %vm588, -inf
          %643 = vst.msk [vmem:[#allocation2 + $0x1b0] sm:$0xff] %vm588, -inf
          %644 = vst.msk [vmem:[#allocation2 + $0x1b8] sm:$0xff] %vm588, -inf
          %645 = vst.msk [vmem:[#allocation2 + $0x1c0] sm:$0xff] %vm588, -inf
          %646 = vst.msk [vmem:[#allocation2 + $0x1c8] sm:$0xff] %vm588, -inf
          %647 = vst.msk [vmem:[#allocation2 + $0x1d0] sm:$0xff] %vm588, -inf
          %648 = vst.msk [vmem:[#allocation2 + $0x1d8] sm:$0xff] %vm588, -inf
          %649 = vst.msk [vmem:[#allocation2 + $0x1e0] sm:$0xff] %vm588, -inf
          %650 = vst.msk [vmem:[#allocation2 + $0x1e8] sm:$0xff] %vm588, -inf
          %651 = vst.msk [vmem:[#allocation2 + $0x1f0] sm:$0xff] %vm588, -inf
          %652 = vst.msk [vmem:[#allocation2 + $0x1f8] sm:$0xff] %vm588, -inf
          %653 = vst.msk [vmem:[#allocation3] sm:$0xff] %vm588, 0.0
          %654 = vst.msk [vmem:[#allocation3 + $0x8] sm:$0xff] %vm588, 0.0
          %655 = vst.msk [vmem:[#allocation3 + $0x10] sm:$0xff] %vm588, 0.0
          %656 = vst.msk [vmem:[#allocation3 + $0x18] sm:$0xff] %vm588, 0.0
          %657 = vst.msk [vmem:[#allocation3 + $0x20] sm:$0xff] %vm588, 0.0
          %658 = vst.msk [vmem:[#allocation3 + $0x28] sm:$0xff] %vm588, 0.0
          %659 = vst.msk [vmem:[#allocation3 + $0x30] sm:$0xff] %vm588, 0.0
          %660 = vst.msk [vmem:[#allocation3 + $0x38] sm:$0xff] %vm588, 0.0
          %661 = vst.msk [vmem:[#allocation3 + $0x40] sm:$0xff] %vm588, 0.0
          %662 = vst.msk [vmem:[#allocation3 + $0x48] sm:$0xff] %vm588, 0.0
          %663 = vst.msk [vmem:[#allocation3 + $0x50] sm:$0xff] %vm588, 0.0
          %664 = vst.msk [vmem:[#allocation3 + $0x58] sm:$0xff] %vm588, 0.0
          %665 = vst.msk [vmem:[#allocation3 + $0x60] sm:$0xff] %vm588, 0.0
          %666 = vst.msk [vmem:[#allocation3 + $0x68] sm:$0xff] %vm588, 0.0
          %667 = vst.msk [vmem:[#allocation3 + $0x70] sm:$0xff] %vm588, 0.0
          %668 = vst.msk [vmem:[#allocation3 + $0x78] sm:$0xff] %vm588, 0.0
          %669 = vst.msk [vmem:[#allocation3 + $0x80] sm:$0xff] %vm588, 0.0
          %670 = vst.msk [vmem:[#allocation3 + $0x88] sm:$0xff] %vm588, 0.0
          %671 = vst.msk [vmem:[#allocation3 + $0x90] sm:$0xff] %vm588, 0.0
          %672 = vst.msk [vmem:[#allocation3 + $0x98] sm:$0xff] %vm588, 0.0
          %673 = vst.msk [vmem:[#allocation3 + $0xa0] sm:$0xff] %vm588, 0.0
          %674 = vst.msk [vmem:[#allocation3 + $0xa8] sm:$0xff] %vm588, 0.0
          %675 = vst.msk [vmem:[#allocation3 + $0xb0] sm:$0xff] %vm588, 0.0
          %676 = vst.msk [vmem:[#allocation3 + $0xb8] sm:$0xff] %vm588, 0.0
          %677 = vst.msk [vmem:[#allocation3 + $0xc0] sm:$0xff] %vm588, 0.0
          %678 = vst.msk [vmem:[#allocation3 + $0xc8] sm:$0xff] %vm588, 0.0
          %679 = vst.msk [vmem:[#allocation3 + $0xd0] sm:$0xff] %vm588, 0.0
          %680 = vst.msk [vmem:[#allocation3 + $0xd8] sm:$0xff] %vm588, 0.0
          %681 = vst.msk [vmem:[#allocation3 + $0xe0] sm:$0xff] %vm588, 0.0
          %682 = vst.msk [vmem:[#allocation3 + $0xe8] sm:$0xff] %vm588, 0.0
          %683 = vst.msk [vmem:[#allocation3 + $0xf0] sm:$0xff] %vm588, 0.0
          %684 = vst.msk [vmem:[#allocation3 + $0xf8] sm:$0xff] %vm588, 0.0
          %685 = vst.msk [vmem:[#allocation3 + $0x100] sm:$0xff] %vm588, 0.0
          %686 = vst.msk [vmem:[#allocation3 + $0x108] sm:$0xff] %vm588, 0.0
          %687 = vst.msk [vmem:[#allocation3 + $0x110] sm:$0xff] %vm588, 0.0
          %688 = vst.msk [vmem:[#allocation3 + $0x118] sm:$0xff] %vm588, 0.0
          %689 = vst.msk [vmem:[#allocation3 + $0x120] sm:$0xff] %vm588, 0.0
          %690 = vst.msk [vmem:[#allocation3 + $0x128] sm:$0xff] %vm588, 0.0
          %691 = vst.msk [vmem:[#allocation3 + $0x130] sm:$0xff] %vm588, 0.0
          %692 = vst.msk [vmem:[#allocation3 + $0x138] sm:$0xff] %vm588, 0.0
          %693 = vst.msk [vmem:[#allocation3 + $0x140] sm:$0xff] %vm588, 0.0
          %694 = vst.msk [vmem:[#allocation3 + $0x148] sm:$0xff] %vm588, 0.0
          %695 = vst.msk [vmem:[#allocation3 + $0x150] sm:$0xff] %vm588, 0.0
          %696 = vst.msk [vmem:[#allocation3 + $0x158] sm:$0xff] %vm588, 0.0
          %697 = vst.msk [vmem:[#allocation3 + $0x160] sm:$0xff] %vm588, 0.0
          %698 = vst.msk [vmem:[#allocation3 + $0x168] sm:$0xff] %vm588, 0.0
          %699 = vst.msk [vmem:[#allocation3 + $0x170] sm:$0xff] %vm588, 0.0
          %700 = vst.msk [vmem:[#allocation3 + $0x178] sm:$0xff] %vm588, 0.0
          %701 = vst.msk [vmem:[#allocation3 + $0x180] sm:$0xff] %vm588, 0.0
          %702 = vst.msk [vmem:[#allocation3 + $0x188] sm:$0xff] %vm588, 0.0
          %703 = vst.msk [vmem:[#allocation3 + $0x190] sm:$0xff] %vm588, 0.0
          %704 = vst.msk [vmem:[#allocation3 + $0x198] sm:$0xff] %vm588, 0.0
          %705 = vst.msk [vmem:[#allocation3 + $0x1a0] sm:$0xff] %vm588, 0.0
          %706 = vst.msk [vmem:[#allocation3 + $0x1a8] sm:$0xff] %vm588, 0.0
          %707 = vst.msk [vmem:[#allocation3 + $0x1b0] sm:$0xff] %vm588, 0.0
          %708 = vst.msk [vmem:[#allocation3 + $0x1b8] sm:$0xff] %vm588, 0.0
          %709 = vst.msk [vmem:[#allocation3 + $0x1c0] sm:$0xff] %vm588, 0.0
          %710 = vst.msk [vmem:[#allocation3 + $0x1c8] sm:$0xff] %vm588, 0.0
          %711 = vst.msk [vmem:[#allocation3 + $0x1d0] sm:$0xff] %vm588, 0.0
          %712 = vst.msk [vmem:[#allocation3 + $0x1d8] sm:$0xff] %vm588, 0.0
          %713 = vst.msk [vmem:[#allocation3 + $0x1e0] sm:$0xff] %vm588, 0.0
          %714 = vst.msk [vmem:[#allocation3 + $0x1e8] sm:$0xff] %vm588, 0.0
          %715 = vst.msk [vmem:[#allocation3 + $0x1f0] sm:$0xff] %vm588, 0.0
          %716 = vst.msk [vmem:[#allocation3 + $0x1f8] sm:$0xff] %vm588, 0.0
          %vm717 = vcmask 261120
          %718 = vst.msk [vmem:[#allocation4] sm:$0xff] %vm717, 0.0
          %719 = vst.msk [vmem:[#allocation4 + $0x8] sm:$0xff] %vm717, 0.0
          %720 = vst.msk [vmem:[#allocation4 + $0x10] sm:$0xff] %vm717, 0.0
          %721 = vst.msk [vmem:[#allocation4 + $0x18] sm:$0xff] %vm717, 0.0
          %722 = vst.msk [vmem:[#allocation4 + $0x20] sm:$0xff] %vm717, 0.0
          %723 = vst.msk [vmem:[#allocation4 + $0x28] sm:$0xff] %vm717, 0.0
          %724 = vst.msk [vmem:[#allocation4 + $0x30] sm:$0xff] %vm717, 0.0
          %725 = vst.msk [vmem:[#allocation4 + $0x38] sm:$0xff] %vm717, 0.0
          %726 = vst.msk [vmem:[#allocation4 + $0x40] sm:$0xff] %vm717, 0.0
          %727 = vst.msk [vmem:[#allocation4 + $0x48] sm:$0xff] %vm717, 0.0
          %728 = vst.msk [vmem:[#allocation4 + $0x50] sm:$0xff] %vm717, 0.0
          %729 = vst.msk [vmem:[#allocation4 + $0x58] sm:$0xff] %vm717, 0.0
          %730 = vst.msk [vmem:[#allocation4 + $0x60] sm:$0xff] %vm717, 0.0
          %731 = vst.msk [vmem:[#allocation4 + $0x68] sm:$0xff] %vm717, 0.0
          %732 = vst.msk [vmem:[#allocation4 + $0x70] sm:$0xff] %vm717, 0.0
          %733 = vst.msk [vmem:[#allocation4 + $0x78] sm:$0xff] %vm717, 0.0
          %734 = vst.msk [vmem:[#allocation4 + $0x80] sm:$0xff] %vm717, 0.0
          %735 = vst.msk [vmem:[#allocation4 + $0x88] sm:$0xff] %vm717, 0.0
          %736 = vst.msk [vmem:[#allocation4 + $0x90] sm:$0xff] %vm717, 0.0
          %737 = vst.msk [vmem:[#allocation4 + $0x98] sm:$0xff] %vm717, 0.0
          %738 = vst.msk [vmem:[#allocation4 + $0xa0] sm:$0xff] %vm717, 0.0
          %739 = vst.msk [vmem:[#allocation4 + $0xa8] sm:$0xff] %vm717, 0.0
          %740 = vst.msk [vmem:[#allocation4 + $0xb0] sm:$0xff] %vm717, 0.0
          %741 = vst.msk [vmem:[#allocation4 + $0xb8] sm:$0xff] %vm717, 0.0
          %742 = vst.msk [vmem:[#allocation4 + $0xc0] sm:$0xff] %vm717, 0.0
          %743 = vst.msk [vmem:[#allocation4 + $0xc8] sm:$0xff] %vm717, 0.0
          %744 = vst.msk [vmem:[#allocation4 + $0xd0] sm:$0xff] %vm717, 0.0
          %745 = vst.msk [vmem:[#allocation4 + $0xd8] sm:$0xff] %vm717, 0.0
          %746 = vst.msk [vmem:[#allocation4 + $0xe0] sm:$0xff] %vm717, 0.0
          %747 = vst.msk [vmem:[#allocation4 + $0xe8] sm:$0xff] %vm717, 0.0
          %748 = vst.msk [vmem:[#allocation4 + $0xf0] sm:$0xff] %vm717, 0.0
          %749 = vst.msk [vmem:[#allocation4 + $0xf8] sm:$0xff] %vm717, 0.0
          %750 = vst.msk [vmem:[#allocation4 + $0x100] sm:$0xff] %vm717, 0.0
          %751 = vst.msk [vmem:[#allocation4 + $0x108] sm:$0xff] %vm717, 0.0
          %752 = vst.msk [vmem:[#allocation4 + $0x110] sm:$0xff] %vm717, 0.0
          %753 = vst.msk [vmem:[#allocation4 + $0x118] sm:$0xff] %vm717, 0.0
          %754 = vst.msk [vmem:[#allocation4 + $0x120] sm:$0xff] %vm717, 0.0
          %755 = vst.msk [vmem:[#allocation4 + $0x128] sm:$0xff] %vm717, 0.0
          %756 = vst.msk [vmem:[#allocation4 + $0x130] sm:$0xff] %vm717, 0.0
          %757 = vst.msk [vmem:[#allocation4 + $0x138] sm:$0xff] %vm717, 0.0
          %758 = vst.msk [vmem:[#allocation4 + $0x140] sm:$0xff] %vm717, 0.0
          %759 = vst.msk [vmem:[#allocation4 + $0x148] sm:$0xff] %vm717, 0.0
          %760 = vst.msk [vmem:[#allocation4 + $0x150] sm:$0xff] %vm717, 0.0
          %761 = vst.msk [vmem:[#allocation4 + $0x158] sm:$0xff] %vm717, 0.0
          %762 = vst.msk [vmem:[#allocation4 + $0x160] sm:$0xff] %vm717, 0.0
          %763 = vst.msk [vmem:[#allocation4 + $0x168] sm:$0xff] %vm717, 0.0
          %764 = vst.msk [vmem:[#allocation4 + $0x170] sm:$0xff] %vm717, 0.0
          %765 = vst.msk [vmem:[#allocation4 + $0x178] sm:$0xff] %vm717, 0.0
          %766 = vst.msk [vmem:[#allocation4 + $0x180] sm:$0xff] %vm717, 0.0
          %767 = vst.msk [vmem:[#allocation4 + $0x188] sm:$0xff] %vm717, 0.0
          %768 = vst.msk [vmem:[#allocation4 + $0x190] sm:$0xff] %vm717, 0.0
          %769 = vst.msk [vmem:[#allocation4 + $0x198] sm:$0xff] %vm717, 0.0
          %770 = vst.msk [vmem:[#allocation4 + $0x1a0] sm:$0xff] %vm717, 0.0
          %771 = vst.msk [vmem:[#allocation4 + $0x1a8] sm:$0xff] %vm717, 0.0
          %772 = vst.msk [vmem:[#allocation4 + $0x1b0] sm:$0xff] %vm717, 0.0
          %773 = vst.msk [vmem:[#allocation4 + $0x1b8] sm:$0xff] %vm717, 0.0
          %774 = vst.msk [vmem:[#allocation4 + $0x1c0] sm:$0xff] %vm717, 0.0
          %775 = vst.msk [vmem:[#allocation4 + $0x1c8] sm:$0xff] %vm717, 0.0
          %776 = vst.msk [vmem:[#allocation4 + $0x1d0] sm:$0xff] %vm717, 0.0
          %777 = vst.msk [vmem:[#allocation4 + $0x1d8] sm:$0xff] %vm717, 0.0
          %778 = vst.msk [vmem:[#allocation4 + $0x1e0] sm:$0xff] %vm717, 0.0
          %779 = vst.msk [vmem:[#allocation4 + $0x1e8] sm:$0xff] %vm717, 0.0
          %780 = vst.msk [vmem:[#allocation4 + $0x1f0] sm:$0xff] %vm717, 0.0
          %781 = vst.msk [vmem:[#allocation4 + $0x1f8] sm:$0xff] %vm717, 0.0
        $region159: #{self_attention_forward.4} parent=142 // pred_fallthru
          _
        %p782 = scmp.le.s32.totalorder %s21, %s20
        // Predicated region
        $region160: #{self_attention_forward.4} parent=142 // pred_check
          %p783 = pneg %p782
        $region161: #{self_attention_forward.4} parent=142 // pred_check_branch
          %785 = sbr.rel (%p783) target = $region163
        $region162: #{self_attention_forward.4} parent=142 // pred_region
          %v786 = vld [vmem:[%s519] sm:$0xf]
          %v787 = vld [vmem:[%s519 + $0x4] sm:$0xf]
          %v788 = vld [vmem:[%s519 + $0x8] sm:$0xf]
          %v789 = vld [vmem:[%s519 + $0xc] sm:$0xf]
          %v790 = vld [vmem:[%s519 + $0x10] sm:$0xf]
          %v791 = vld [vmem:[%s519 + $0x14] sm:$0xf]
          %v792 = vld [vmem:[%s519 + $0x18] sm:$0xf]
          %v793 = vld [vmem:[%s519 + $0x1c] sm:$0xf]
          %v794 = vld [vmem:[%s519 + $0x20] sm:$0xf]
          %v795 = vld [vmem:[%s519 + $0x24] sm:$0xf]
          %v796 = vld [vmem:[%s519 + $0x28] sm:$0xf]
          %v797 = vld [vmem:[%s519 + $0x2c] sm:$0xf]
          %v798 = vld [vmem:[%s519 + $0x30] sm:$0xf]
          %v799 = vld [vmem:[%s519 + $0x34] sm:$0xf]
          %v800 = vld [vmem:[%s519 + $0x38] sm:$0xf]
          %v801 = vld [vmem:[%s519 + $0x3c] sm:$0xf]
          %v802 = vld [vmem:[%s526] sm:$0xf]
          %v803 = vld [vmem:[%s526 + $0x4] sm:$0xf]
          %v804 = vld [vmem:[%s526 + $0x8] sm:$0xf]
          %v805 = vld [vmem:[%s526 + $0xc] sm:$0xf]
          %v806 = vld [vmem:[%s526 + $0x10] sm:$0xf]
          %v807 = vld [vmem:[%s526 + $0x14] sm:$0xf]
          %v808 = vld [vmem:[%s526 + $0x18] sm:$0xf]
          %v809 = vld [vmem:[%s526 + $0x1c] sm:$0xf]
          %v810 = vld [vmem:[%s526 + $0x20] sm:$0xf]
          %v811 = vld [vmem:[%s526 + $0x24] sm:$0xf]
          %v812 = vld [vmem:[%s526 + $0x28] sm:$0xf]
          %v813 = vld [vmem:[%s526 + $0x2c] sm:$0xf]
          %v814 = vld [vmem:[%s526 + $0x30] sm:$0xf]
          %v815 = vld [vmem:[%s526 + $0x34] sm:$0xf]
          %v816 = vld [vmem:[%s526 + $0x38] sm:$0xf]
          %v817 = vld [vmem:[%s526 + $0x3c] sm:$0xf]
          %v818 = vld [vmem:[%s533] sm:$0xf]
          %v819 = vld [vmem:[%s533 + $0x4] sm:$0xf]
          %v820 = vld [vmem:[%s533 + $0x8] sm:$0xf]
          %v821 = vld [vmem:[%s533 + $0xc] sm:$0xf]
          %v822 = vld [vmem:[%s533 + $0x10] sm:$0xf]
          %v823 = vld [vmem:[%s533 + $0x14] sm:$0xf]
          %v824 = vld [vmem:[%s533 + $0x18] sm:$0xf]
          %v825 = vld [vmem:[%s533 + $0x1c] sm:$0xf]
          %v826 = vld [vmem:[%s533 + $0x20] sm:$0xf]
          %v827 = vld [vmem:[%s533 + $0x24] sm:$0xf]
          %v828 = vld [vmem:[%s533 + $0x28] sm:$0xf]
          %v829 = vld [vmem:[%s533 + $0x2c] sm:$0xf]
          %v830 = vld [vmem:[%s533 + $0x30] sm:$0xf]
          %v831 = vld [vmem:[%s533 + $0x34] sm:$0xf]
          %v832 = vld [vmem:[%s533 + $0x38] sm:$0xf]
          %v833 = vld [vmem:[%s533 + $0x3c] sm:$0xf]
          %v834 = vlaneseq
          %v835 = vshrl.u32 %v834, 7
          %v836 = vadd.s32 %v835, 8
          %v837 = vadd.s32 %v835, 16
          %v838 = vadd.s32 %v835, 24
          %v839 = vadd.s32 %v835, 32
          %v840 = vadd.s32 %v835, 40
          %v841 = vadd.s32 %v835, 48
          %v842 = vadd.s32 %v835, 56
          %v843 = vadd.s32 %v835, 64
          %v844 = vadd.s32 %v835, 72
          %v845 = vadd.s32 %v835, 80
          %v846 = vadd.s32 %v835, 88
          %v847 = vadd.s32 %v835, 96
          %v848 = vadd.s32 %v835, 104
          %v849 = vadd.s32 %v835, 112
          %v850 = vadd.s32 %v835, 120
          %v851 = vlaneseq
          %v852 = vand.u32 %v851, 127
          %s853 = ssub.s32 %s20, %s21
          %s854 = smul.u32 %s853, 128
          %v855 = vstv %s854
          %v856 = vadd.s32 %v835, %v855
          %v857 = vadd.s32 %v836, %v855
          %v858 = vadd.s32 %v837, %v855
          %v859 = vadd.s32 %v838, %v855
          %v860 = vadd.s32 %v839, %v855
          %v861 = vadd.s32 %v840, %v855
          %v862 = vadd.s32 %v841, %v855
          %v863 = vadd.s32 %v842, %v855
          %v864 = vadd.s32 %v843, %v855
          %v865 = vadd.s32 %v844, %v855
          %v866 = vadd.s32 %v845, %v855
          %v867 = vadd.s32 %v846, %v855
          %v868 = vadd.s32 %v847, %v855
          %v869 = vadd.s32 %v848, %v855
          %v870 = vadd.s32 %v849, %v855
          %v871 = vadd.s32 %v850, %v855
          %vm872 = vcmp.le.s32.totalorder %v852, %v856
          %vm873 = vcmp.le.s32.totalorder %v852, %v857
          %vm874 = vcmp.le.s32.totalorder %v852, %v858
          %vm875 = vcmp.le.s32.totalorder %v852, %v859
          %vm876 = vcmp.le.s32.totalorder %v852, %v860
          %vm877 = vcmp.le.s32.totalorder %v852, %v861
          %vm878 = vcmp.le.s32.totalorder %v852, %v862
          %vm879 = vcmp.le.s32.totalorder %v852, %v863
          %vm880 = vcmp.le.s32.totalorder %v852, %v864
          %vm881 = vcmp.le.s32.totalorder %v852, %v865
          %vm882 = vcmp.le.s32.totalorder %v852, %v866
          %vm883 = vcmp.le.s32.totalorder %v852, %v867
          %vm884 = vcmp.le.s32.totalorder %v852, %v868
          %vm885 = vcmp.le.s32.totalorder %v852, %v869
          %vm886 = vcmp.le.s32.totalorder %v852, %v870
          %vm887 = vcmp.le.s32.totalorder %v852, %v871
          %v904 = vunpack.c.l.b16 %v786
          %v905 = vunpack.c.l.b16 %v787
          %v906 = vunpack.c.l.b16 %v788
          %v907 = vunpack.c.l.b16 %v789
          %v908 = vunpack.c.l.b16 %v790
          %v909 = vunpack.c.l.b16 %v791
          %v910 = vunpack.c.l.b16 %v792
          %v911 = vunpack.c.l.b16 %v793
          %v912 = vunpack.c.l.b16 %v794
          %v913 = vunpack.c.l.b16 %v795
          %v914 = vunpack.c.l.b16 %v796
          %v915 = vunpack.c.l.b16 %v797
          %v916 = vunpack.c.l.b16 %v798
          %v917 = vunpack.c.l.b16 %v799
          %v918 = vunpack.c.l.b16 %v800
          %v919 = vunpack.c.l.b16 %v801
          %v920 = vpack.c.b16 %v905, %v904
          %v921 = vpack.c.b16 %v907, %v906
          %v922 = vpack.c.b16 %v909, %v908
          %v923 = vpack.c.b16 %v911, %v910
          %v924 = vpack.c.b16 %v913, %v912
          %v925 = vpack.c.b16 %v915, %v914
          %v926 = vpack.c.b16 %v917, %v916
          %v927 = vpack.c.b16 %v919, %v918
          %v944 = vunpack.c.l.b16 %v802
          %v945 = vunpack.c.l.b16 %v803
          %v946 = vunpack.c.l.b16 %v804
          %v947 = vunpack.c.l.b16 %v805
          %v948 = vunpack.c.l.b16 %v806
          %v949 = vunpack.c.l.b16 %v807
          %v950 = vunpack.c.l.b16 %v808
          %v951 = vunpack.c.l.b16 %v809
          %v952 = vunpack.c.l.b16 %v810
          %v953 = vunpack.c.l.b16 %v811
          %v954 = vunpack.c.l.b16 %v812
          %v955 = vunpack.c.l.b16 %v813
          %v956 = vunpack.c.l.b16 %v814
          %v957 = vunpack.c.l.b16 %v815
          %v958 = vunpack.c.l.b16 %v816
          %v959 = vunpack.c.l.b16 %v817
          %v960 = vpack.c.b16 %v945, %v944
          %v961 = vpack.c.b16 %v947, %v946
          %v962 = vpack.c.b16 %v949, %v948
          %v963 = vpack.c.b16 %v951, %v950
          %v964 = vpack.c.b16 %v953, %v952
          %v965 = vpack.c.b16 %v955, %v954
          %v966 = vpack.c.b16 %v957, %v956
          %v967 = vpack.c.b16 %v959, %v958
          %vm968 = vcmask 261120
          %v970 = vsel %vm968, %v920, 0
          %v973 = vsel %vm968, %v921, 0
          %v976 = vsel %vm968, %v922, 0
          %v979 = vsel %vm968, %v923, 0
          %v982 = vsel %vm968, %v924, 0
          %v985 = vsel %vm968, %v925, 0
          %v988 = vsel %vm968, %v926, 0
          %v991 = vsel %vm968, %v927, 0
          %v994 = vsel %vm968, %v960, 0
          %v997 = vsel %vm968, %v961, 0
          %v1000 = vsel %vm968, %v962, 0
          %v1003 = vsel %vm968, %v963, 0
          %v1006 = vsel %vm968, %v964, 0
          %v1009 = vsel %vm968, %v965, 0
          %v1012 = vsel %vm968, %v966, 0
          %v1015 = vsel %vm968, %v967, 0
          %1017 = vmatprep.subr.bf16.mxu0 0
          %1018 = vmatpush1.bf16.xpose.msra.mxu0 %v994
          %1019 = vmatprep.subr.bf16.mxu0 0
          %1020 = vmatpush1.bf16.xpose.msra.mxu0 %v997
          %1021 = vmatprep.subr.bf16.mxu0 0
          %1022 = vmatpush1.bf16.xpose.msra.mxu0 %v1000
          %1023 = vmatprep.subr.bf16.mxu0 0
          %1024 = vmatpush1.bf16.xpose.msra.mxu0 %v1003
          %1025 = vmatprep.subr.bf16.mxu0 0
          %1026 = vmatpush1.bf16.xpose.msra.mxu0 %v1006
          %1027 = vmatprep.subr.bf16.mxu0 0
          %1028 = vmatpush1.bf16.xpose.msra.mxu0 %v1009
          %1029 = vmatprep.subr.bf16.mxu0 0
          %1030 = vmatpush1.bf16.xpose.msra.mxu0 %v1012
          %1031 = vmatprep.subr.bf16.mxu0 0
          %1032 = vmatpush1.bf16.xpose.msra.mxu0 %v1015
          %1033 = vmatprep.subr.bf16.mxu0 0
          %1034 = vmatpush1.bf16.xpose.msra.mxu0 0
          %1035 = vmatprep.subr.bf16.mxu0 0
          %1036 = vmatpush1.bf16.xpose.msra.mxu0 0
          %1037 = vmatprep.subr.bf16.mxu0 0
          %1038 = vmatpush1.bf16.xpose.msra.mxu0 0
          %1039 = vmatprep.subr.bf16.mxu0 0
          %1040 = vmatpush1.bf16.xpose.msra.mxu0 0
          %1041 = vmatprep.subr.bf16.mxu0 0
          %1042 = vmatpush1.bf16.xpose.msra.mxu0 0
          %1043 = vmatprep.subr.bf16.mxu0 0
          %1044 = vmatpush1.bf16.xpose.msra.mxu0 0
          %1045 = vmatprep.subr.bf16.mxu0 0
          %1046 = vmatpush1.bf16.xpose.msra.mxu0 0
          %1047 = vmatprep.subr.bf16.mxu0 0
          %1048 = vmatpush1.bf16.xpose.msra.mxu0 0
          %1049 = vmatprep.mubr.bf16.mxu0 0
          %1050 = vmatmul.mubr.bf16.gmra.mrb[0].mxu0 %v970
          %v1051 = vpop.f32.mrb[0].mxu0
          %v1052 = vadd.f32 0.0, %v1051
          %v1053 = vpop.f32.mrb[0].mxu0
          %v1054 = vpop.f32.mrb[0].mxu0
          %v1055 = vadd.f32 0.0, %v1054
          %v1056 = vpop.f32.mrb[0].mxu0
          %1057 = vmatprep.mubr.bf16.mxu0 0
          %1058 = vmatmul.mubr.bf16.gmra.mrb[0].mxu0 %v973
          %v1059 = vpop.f32.mrb[0].mxu0
          %v1060 = vadd.f32 0.0, %v1059
          %v1061 = vpop.f32.mrb[0].mxu0
          %v1062 = vpop.f32.mrb[0].mxu0
          %v1063 = vadd.f32 0.0, %v1062
          %v1064 = vpop.f32.mrb[0].mxu0
          %1065 = vmatprep.mubr.bf16.mxu0 0
          %1066 = vmatmul.mubr.bf16.gmra.mrb[0].mxu0 %v976
          %v1067 = vpop.f32.mrb[0].mxu0
          %v1068 = vadd.f32 0.0, %v1067
          %v1069 = vpop.f32.mrb[0].mxu0
          %v1070 = vpop.f32.mrb[0].mxu0
          %v1071 = vadd.f32 0.0, %v1070
          %v1072 = vpop.f32.mrb[0].mxu0
          %1073 = vmatprep.mubr.bf16.mxu0 0
          %1074 = vmatmul.mubr.bf16.gmra.mrb[0].mxu0 %v979
          %v1075 = vpop.f32.mrb[0].mxu0
          %v1076 = vadd.f32 0.0, %v1075
          %v1077 = vpop.f32.mrb[0].mxu0
          %v1078 = vpop.f32.mrb[0].mxu0
          %v1079 = vadd.f32 0.0, %v1078
          %v1080 = vpop.f32.mrb[0].mxu0
          %1081 = vmatprep.mubr.bf16.mxu0 0
          %1082 = vmatmul.mubr.bf16.gmra.mrb[0].mxu0 %v982
          %v1083 = vpop.f32.mrb[0].mxu0
          %v1084 = vadd.f32 0.0, %v1083
          %v1085 = vpop.f32.mrb[0].mxu0
          %v1086 = vpop.f32.mrb[0].mxu0
          %v1087 = vadd.f32 0.0, %v1086
          %v1088 = vpop.f32.mrb[0].mxu0
          %1089 = vmatprep.mubr.bf16.mxu0 0
          %1090 = vmatmul.mubr.bf16.gmra.mrb[0].mxu0 %v985
          %v1091 = vpop.f32.mrb[0].mxu0
          %v1092 = vadd.f32 0.0, %v1091
          %v1093 = vpop.f32.mrb[0].mxu0
          %v1094 = vpop.f32.mrb[0].mxu0
          %v1095 = vadd.f32 0.0, %v1094
          %v1096 = vpop.f32.mrb[0].mxu0
          %1097 = vmatprep.mubr.bf16.mxu0 0
          %1098 = vmatmul.mubr.bf16.gmra.mrb[0].mxu0 %v988
          %v1099 = vpop.f32.mrb[0].mxu0
          %v1100 = vadd.f32 0.0, %v1099
          %v1101 = vpop.f32.mrb[0].mxu0
          %v1102 = vpop.f32.mrb[0].mxu0
          %v1103 = vadd.f32 0.0, %v1102
          %v1104 = vpop.f32.mrb[0].mxu0
          %1105 = vmatprep.mubr.bf16.mxu0 0
          %1106 = vmatmul.mubr.bf16.gmra.mrb[0].mxu0 %v991
          %v1107 = vpop.f32.mrb[0].mxu0
          %v1108 = vadd.f32 0.0, %v1107
          %v1109 = vpop.f32.mrb[0].mxu0
          %v1110 = vpop.f32.mrb[0].mxu0
          %v1111 = vadd.f32 0.0, %v1110
          %v1112 = vpop.f32.mrb[0].mxu0
          %1113 = vdwg.mxu0
          %v1114 = vmul.f32 %v1052, 0.17677669
          %v1115 = vmul.f32 %v1055, 0.17677669
          %v1116 = vmul.f32 %v1060, 0.17677669
          %v1117 = vmul.f32 %v1063, 0.17677669
          %v1118 = vmul.f32 %v1068, 0.17677669
          %v1119 = vmul.f32 %v1071, 0.17677669
          %v1120 = vmul.f32 %v1076, 0.17677669
          %v1121 = vmul.f32 %v1079, 0.17677669
          %v1122 = vmul.f32 %v1084, 0.17677669
          %v1123 = vmul.f32 %v1087, 0.17677669
          %v1124 = vmul.f32 %v1092, 0.17677669
          %v1125 = vmul.f32 %v1095, 0.17677669
          %v1126 = vmul.f32 %v1100, 0.17677669
          %v1127 = vmul.f32 %v1103, 0.17677669
          %v1128 = vmul.f32 %v1108, 0.17677669
          %v1129 = vmul.f32 %v1111, 0.17677669
          %v1130 = vsel %vm872, %v1114, -3.4028235e+38
          %v1131 = vsel %vm873, %v1115, -3.4028235e+38
          %v1132 = vsel %vm874, %v1116, -3.4028235e+38
          %v1133 = vsel %vm875, %v1117, -3.4028235e+38
          %v1134 = vsel %vm876, %v1118, -3.4028235e+38
          %v1135 = vsel %vm877, %v1119, -3.4028235e+38
          %v1136 = vsel %vm878, %v1120, -3.4028235e+38
          %v1137 = vsel %vm879, %v1121, -3.4028235e+38
          %v1138 = vsel %vm880, %v1122, -3.4028235e+38
          %v1139 = vsel %vm881, %v1123, -3.4028235e+38
          %v1140 = vsel %vm882, %v1124, -3.4028235e+38
          %v1141 = vsel %vm883, %v1125, -3.4028235e+38
          %v1142 = vsel %vm884, %v1126, -3.4028235e+38
          %v1143 = vsel %vm885, %v1127, -3.4028235e+38
          %v1144 = vsel %vm886, %v1128, -3.4028235e+38
          %v1145 = vsel %vm887, %v1129, -3.4028235e+38
          %v1146 = vld [vmem:[#allocation2] sm:$0xff]
          %v1147 = vld [vmem:[#allocation2 + $0x8] sm:$0xff]
          %v1148 = vld [vmem:[#allocation2 + $0x10] sm:$0xff]
          %v1149 = vld [vmem:[#allocation2 + $0x18] sm:$0xff]
          %v1150 = vld [vmem:[#allocation2 + $0x20] sm:$0xff]
          %v1151 = vld [vmem:[#allocation2 + $0x28] sm:$0xff]
          %v1152 = vld [vmem:[#allocation2 + $0x30] sm:$0xff]
          %v1153 = vld [vmem:[#allocation2 + $0x38] sm:$0xff]
          %v1154 = vld [vmem:[#allocation2 + $0x40] sm:$0xff]
          %v1155 = vld [vmem:[#allocation2 + $0x48] sm:$0xff]
          %v1156 = vld [vmem:[#allocation2 + $0x50] sm:$0xff]
          %v1157 = vld [vmem:[#allocation2 + $0x58] sm:$0xff]
          %v1158 = vld [vmem:[#allocation2 + $0x60] sm:$0xff]
          %v1159 = vld [vmem:[#allocation2 + $0x68] sm:$0xff]
          %v1160 = vld [vmem:[#allocation2 + $0x70] sm:$0xff]
          %v1161 = vld [vmem:[#allocation2 + $0x78] sm:$0xff]
          %1162 = vmax.xlane.f32.xlu0 %v1130
          %v1163 = vpop.xlane.xlu0 %1162
          %1164 = vmax.xlane.f32.xlu0 %v1131
          %v1165 = vpop.xlane.xlu0 %1164
          %1166 = vmax.xlane.f32.xlu0 %v1132
          %v1167 = vpop.xlane.xlu0 %1166
          %1168 = vmax.xlane.f32.xlu0 %v1133
          %v1169 = vpop.xlane.xlu0 %1168
          %1170 = vmax.xlane.f32.xlu0 %v1134
          %v1171 = vpop.xlane.xlu0 %1170
          %1172 = vmax.xlane.f32.xlu0 %v1135
          %v1173 = vpop.xlane.xlu0 %1172
          %1174 = vmax.xlane.f32.xlu0 %v1136
          %v1175 = vpop.xlane.xlu0 %1174
          %1176 = vmax.xlane.f32.xlu0 %v1137
          %v1177 = vpop.xlane.xlu0 %1176
          %1178 = vmax.xlane.f32.xlu0 %v1138
          %v1179 = vpop.xlane.xlu0 %1178
          %1180 = vmax.xlane.f32.xlu0 %v1139
          %v1181 = vpop.xlane.xlu0 %1180
          %1182 = vmax.xlane.f32.xlu0 %v1140
          %v1183 = vpop.xlane.xlu0 %1182
          %1184 = vmax.xlane.f32.xlu0 %v1141
          %v1185 = vpop.xlane.xlu0 %1184
          %1186 = vmax.xlane.f32.xlu0 %v1142
          %v1187 = vpop.xlane.xlu0 %1186
          %1188 = vmax.xlane.f32.xlu0 %v1143
          %v1189 = vpop.xlane.xlu0 %1188
          %1190 = vmax.xlane.f32.xlu0 %v1144
          %v1191 = vpop.xlane.xlu0 %1190
          %1192 = vmax.xlane.f32.xlu0 %v1145
          %v1193 = vpop.xlane.xlu0 %1192
          %v1194 = vmax.f32 %v1146, %v1163
          %v1195 = vmax.f32 %v1147, %v1165
          %v1196 = vmax.f32 %v1148, %v1167
          %v1197 = vmax.f32 %v1149, %v1169
          %v1198 = vmax.f32 %v1150, %v1171
          %v1199 = vmax.f32 %v1151, %v1173
          %v1200 = vmax.f32 %v1152, %v1175
          %v1201 = vmax.f32 %v1153, %v1177
          %v1202 = vmax.f32 %v1154, %v1179
          %v1203 = vmax.f32 %v1155, %v1181
          %v1204 = vmax.f32 %v1156, %v1183
          %v1205 = vmax.f32 %v1157, %v1185
          %v1206 = vmax.f32 %v1158, %v1187
          %v1207 = vmax.f32 %v1159, %v1189
          %v1208 = vmax.f32 %v1160, %v1191
          %v1209 = vmax.f32 %v1161, %v1193
          %v1210 = vsub.f32 %v1146, %v1194
          %v1211 = vsub.f32 %v1147, %v1195
          %v1212 = vsub.f32 %v1148, %v1196
          %v1213 = vsub.f32 %v1149, %v1197
          %v1214 = vsub.f32 %v1150, %v1198
          %v1215 = vsub.f32 %v1151, %v1199
          %v1216 = vsub.f32 %v1152, %v1200
          %v1217 = vsub.f32 %v1153, %v1201
          %v1218 = vsub.f32 %v1154, %v1202
          %v1219 = vsub.f32 %v1155, %v1203
          %v1220 = vsub.f32 %v1156, %v1204
          %v1221 = vsub.f32 %v1157, %v1205
          %v1222 = vsub.f32 %v1158, %v1206
          %v1223 = vsub.f32 %v1159, %v1207
          %v1224 = vsub.f32 %v1160, %v1208
          %v1225 = vsub.f32 %v1161, %v1209
          %v1226 = vmul.f32 %v1210, 1.442695
          %v1227 = vpow.pop %v1226
          %v1228 = vmul.f32 %v1211, 1.442695
          %v1229 = vpow.pop %v1228
          %v1230 = vmul.f32 %v1212, 1.442695
          %v1231 = vpow.pop %v1230
          %v1232 = vmul.f32 %v1213, 1.442695
          %v1233 = vpow.pop %v1232
          %v1234 = vmul.f32 %v1214, 1.442695
          %v1235 = vpow.pop %v1234
          %v1236 = vmul.f32 %v1215, 1.442695
          %v1237 = vpow.pop %v1236
          %v1238 = vmul.f32 %v1216, 1.442695
          %v1239 = vpow.pop %v1238
          %v1240 = vmul.f32 %v1217, 1.442695
          %v1241 = vpow.pop %v1240
          %v1242 = vmul.f32 %v1218, 1.442695
          %v1243 = vpow.pop %v1242
          %v1244 = vmul.f32 %v1219, 1.442695
          %v1245 = vpow.pop %v1244
          %v1246 = vmul.f32 %v1220, 1.442695
          %v1247 = vpow.pop %v1246
          %v1248 = vmul.f32 %v1221, 1.442695
          %v1249 = vpow.pop %v1248
          %v1250 = vmul.f32 %v1222, 1.442695
          %v1251 = vpow.pop %v1250
          %v1252 = vmul.f32 %v1223, 1.442695
          %v1253 = vpow.pop %v1252
          %v1254 = vmul.f32 %v1224, 1.442695
          %v1255 = vpow.pop %v1254
          %v1256 = vmul.f32 %v1225, 1.442695
          %v1257 = vpow.pop %v1256
          %1259 = vset.pattern.permute.xlu0 0
          %1260 = vperm.xlu0 %1259, %v1194
          %v1261 = vpop.permute.xlu0 %1260
          %1264 = vset.pattern.permute.xlu0 0
          %1265 = vperm.xlu0 %1264, %v1195
          %v1266 = vpop.permute.xlu0 %1265
          %1269 = vset.pattern.permute.xlu0 0
          %1270 = vperm.xlu0 %1269, %v1196
          %v1271 = vpop.permute.xlu0 %1270
          %1274 = vset.pattern.permute.xlu0 0
          %1275 = vperm.xlu0 %1274, %v1197
          %v1276 = vpop.permute.xlu0 %1275
          %1279 = vset.pattern.permute.xlu0 0
          %1280 = vperm.xlu0 %1279, %v1198
          %v1281 = vpop.permute.xlu0 %1280
          %1284 = vset.pattern.permute.xlu0 0
          %1285 = vperm.xlu0 %1284, %v1199
          %v1286 = vpop.permute.xlu0 %1285
          %1289 = vset.pattern.permute.xlu0 0
          %1290 = vperm.xlu0 %1289, %v1200
          %v1291 = vpop.permute.xlu0 %1290
          %1294 = vset.pattern.permute.xlu0 0
          %1295 = vperm.xlu0 %1294, %v1201
          %v1296 = vpop.permute.xlu0 %1295
          %1299 = vset.pattern.permute.xlu0 0
          %1300 = vperm.xlu0 %1299, %v1202
          %v1301 = vpop.permute.xlu0 %1300
          %1304 = vset.pattern.permute.xlu0 0
          %1305 = vperm.xlu0 %1304, %v1203
          %v1306 = vpop.permute.xlu0 %1305
          %1309 = vset.pattern.permute.xlu0 0
          %1310 = vperm.xlu0 %1309, %v1204
          %v1311 = vpop.permute.xlu0 %1310
          %1314 = vset.pattern.permute.xlu0 0
          %1315 = vperm.xlu0 %1314, %v1205
          %v1316 = vpop.permute.xlu0 %1315
          %1319 = vset.pattern.permute.xlu0 0
          %1320 = vperm.xlu0 %1319, %v1206
          %v1321 = vpop.permute.xlu0 %1320
          %1324 = vset.pattern.permute.xlu0 0
          %1325 = vperm.xlu0 %1324, %v1207
          %v1326 = vpop.permute.xlu0 %1325
          %1329 = vset.pattern.permute.xlu0 0
          %1330 = vperm.xlu0 %1329, %v1208
          %v1331 = vpop.permute.xlu0 %1330
          %1334 = vset.pattern.permute.xlu0 0
          %1335 = vperm.xlu0 %1334, %v1209
          %v1336 = vpop.permute.xlu0 %1335
          %v1338 = vsub.f32 %v1130, %v1261
          %v1339 = vsub.f32 %v1131, %v1266
          %v1340 = vsub.f32 %v1132, %v1271
          %v1341 = vsub.f32 %v1133, %v1276
          %v1342 = vsub.f32 %v1134, %v1281
          %v1343 = vsub.f32 %v1135, %v1286
          %v1344 = vsub.f32 %v1136, %v1291
          %v1345 = vsub.f32 %v1137, %v1296
          %v1346 = vsub.f32 %v1138, %v1301
          %v1347 = vsub.f32 %v1139, %v1306
          %v1348 = vsub.f32 %v1140, %v1311
          %v1349 = vsub.f32 %v1141, %v1316
          %v1350 = vsub.f32 %v1142, %v1321
          %v1351 = vsub.f32 %v1143, %v1326
          %v1352 = vsub.f32 %v1144, %v1331
          %v1353 = vsub.f32 %v1145, %v1336
          %v1354 = vmul.f32 %v1338, 1.442695
          %v1355 = vpow.pop %v1354
          %v1356 = vmul.f32 %v1339, 1.442695
          %v1357 = vpow.pop %v1356
          %v1358 = vmul.f32 %v1340, 1.442695
          %v1359 = vpow.pop %v1358
          %v1360 = vmul.f32 %v1341, 1.442695
          %v1361 = vpow.pop %v1360
          %v1362 = vmul.f32 %v1342, 1.442695
          %v1363 = vpow.pop %v1362
          %v1364 = vmul.f32 %v1343, 1.442695
          %v1365 = vpow.pop %v1364
          %v1366 = vmul.f32 %v1344, 1.442695
          %v1367 = vpow.pop %v1366
          %v1368 = vmul.f32 %v1345, 1.442695
          %v1369 = vpow.pop %v1368
          %v1370 = vmul.f32 %v1346, 1.442695
          %v1371 = vpow.pop %v1370
          %v1372 = vmul.f32 %v1347, 1.442695
          %v1373 = vpow.pop %v1372
          %v1374 = vmul.f32 %v1348, 1.442695
          %v1375 = vpow.pop %v1374
          %v1376 = vmul.f32 %v1349, 1.442695
          %v1377 = vpow.pop %v1376
          %v1378 = vmul.f32 %v1350, 1.442695
          %v1379 = vpow.pop %v1378
          %v1380 = vmul.f32 %v1351, 1.442695
          %v1381 = vpow.pop %v1380
          %v1382 = vmul.f32 %v1352, 1.442695
          %v1383 = vpow.pop %v1382
          %v1384 = vmul.f32 %v1353, 1.442695
          %v1385 = vpow.pop %v1384
          %v1386 = vld [vmem:[#allocation3] sm:$0xff]
          %v1387 = vld [vmem:[#allocation3 + $0x8] sm:$0xff]
          %v1388 = vld [vmem:[#allocation3 + $0x10] sm:$0xff]
          %v1389 = vld [vmem:[#allocation3 + $0x18] sm:$0xff]
          %v1390 = vld [vmem:[#allocation3 + $0x20] sm:$0xff]
          %v1391 = vld [vmem:[#allocation3 + $0x28] sm:$0xff]
          %v1392 = vld [vmem:[#allocation3 + $0x30] sm:$0xff]
          %v1393 = vld [vmem:[#allocation3 + $0x38] sm:$0xff]
          %v1394 = vld [vmem:[#allocation3 + $0x40] sm:$0xff]
          %v1395 = vld [vmem:[#allocation3 + $0x48] sm:$0xff]
          %v1396 = vld [vmem:[#allocation3 + $0x50] sm:$0xff]
          %v1397 = vld [vmem:[#allocation3 + $0x58] sm:$0xff]
          %v1398 = vld [vmem:[#allocation3 + $0x60] sm:$0xff]
          %v1399 = vld [vmem:[#allocation3 + $0x68] sm:$0xff]
          %v1400 = vld [vmem:[#allocation3 + $0x70] sm:$0xff]
          %v1401 = vld [vmem:[#allocation3 + $0x78] sm:$0xff]
          %v1402 = vmul.f32 %v1227, %v1386
          %v1403 = vmul.f32 %v1229, %v1387
          %v1404 = vmul.f32 %v1231, %v1388
          %v1405 = vmul.f32 %v1233, %v1389
          %v1406 = vmul.f32 %v1235, %v1390
          %v1407 = vmul.f32 %v1237, %v1391
          %v1408 = vmul.f32 %v1239, %v1392
          %v1409 = vmul.f32 %v1241, %v1393
          %v1410 = vmul.f32 %v1243, %v1394
          %v1411 = vmul.f32 %v1245, %v1395
          %v1412 = vmul.f32 %v1247, %v1396
          %v1413 = vmul.f32 %v1249, %v1397
          %v1414 = vmul.f32 %v1251, %v1398
          %v1415 = vmul.f32 %v1253, %v1399
          %v1416 = vmul.f32 %v1255, %v1400
          %v1417 = vmul.f32 %v1257, %v1401
          %1418 = vadd.xlane.f32.xlu0 %v1355
          %v1419 = vpop.xlane.xlu0 %1418
          %1420 = vadd.xlane.f32.xlu0 %v1357
          %v1421 = vpop.xlane.xlu0 %1420
          %1422 = vadd.xlane.f32.xlu0 %v1359
          %v1423 = vpop.xlane.xlu0 %1422
          %1424 = vadd.xlane.f32.xlu0 %v1361
          %v1425 = vpop.xlane.xlu0 %1424
          %1426 = vadd.xlane.f32.xlu0 %v1363
          %v1427 = vpop.xlane.xlu0 %1426
          %1428 = vadd.xlane.f32.xlu0 %v1365
          %v1429 = vpop.xlane.xlu0 %1428
          %1430 = vadd.xlane.f32.xlu0 %v1367
          %v1431 = vpop.xlane.xlu0 %1430
          %1432 = vadd.xlane.f32.xlu0 %v1369
          %v1433 = vpop.xlane.xlu0 %1432
          %1434 = vadd.xlane.f32.xlu0 %v1371
          %v1435 = vpop.xlane.xlu0 %1434
          %1436 = vadd.xlane.f32.xlu0 %v1373
          %v1437 = vpop.xlane.xlu0 %1436
          %1438 = vadd.xlane.f32.xlu0 %v1375
          %v1439 = vpop.xlane.xlu0 %1438
          %1440 = vadd.xlane.f32.xlu0 %v1377
          %v1441 = vpop.xlane.xlu0 %1440
          %1442 = vadd.xlane.f32.xlu0 %v1379
          %v1443 = vpop.xlane.xlu0 %1442
          %1444 = vadd.xlane.f32.xlu0 %v1381
          %v1445 = vpop.xlane.xlu0 %1444
          %1446 = vadd.xlane.f32.xlu0 %v1383
          %v1447 = vpop.xlane.xlu0 %1446
          %1448 = vadd.xlane.f32.xlu0 %v1385
          %v1449 = vpop.xlane.xlu0 %1448
          %v1450 = vadd.f32 %v1402, %v1419
          %v1451 = vadd.f32 %v1403, %v1421
          %v1452 = vadd.f32 %v1404, %v1423
          %v1453 = vadd.f32 %v1405, %v1425
          %v1454 = vadd.f32 %v1406, %v1427
          %v1455 = vadd.f32 %v1407, %v1429
          %v1456 = vadd.f32 %v1408, %v1431
          %v1457 = vadd.f32 %v1409, %v1433
          %v1458 = vadd.f32 %v1410, %v1435
          %v1459 = vadd.f32 %v1411, %v1437
          %v1460 = vadd.f32 %v1412, %v1439
          %v1461 = vadd.f32 %v1413, %v1441
          %v1462 = vadd.f32 %v1414, %v1443
          %v1463 = vadd.f32 %v1415, %v1445
          %v1464 = vadd.f32 %v1416, %v1447
          %v1465 = vadd.f32 %v1417, %v1449
          %vm1466 = vcmask 7168
          %1467 = vst.msk [vmem:[#allocation3] sm:$0xff] %vm1466, %v1450
          %1468 = vst.msk [vmem:[#allocation3 + $0x8] sm:$0xff] %vm1466, %v1451
          %1469 = vst.msk [vmem:[#allocation3 + $0x10] sm:$0xff] %vm1466, %v1452
          %1470 = vst.msk [vmem:[#allocation3 + $0x18] sm:$0xff] %vm1466, %v1453
          %1471 = vst.msk [vmem:[#allocation3 + $0x20] sm:$0xff] %vm1466, %v1454
          %1472 = vst.msk [vmem:[#allocation3 + $0x28] sm:$0xff] %vm1466, %v1455
          %1473 = vst.msk [vmem:[#allocation3 + $0x30] sm:$0xff] %vm1466, %v1456
          %1474 = vst.msk [vmem:[#allocation3 + $0x38] sm:$0xff] %vm1466, %v1457
          %1475 = vst.msk [vmem:[#allocation3 + $0x40] sm:$0xff] %vm1466, %v1458
          %1476 = vst.msk [vmem:[#allocation3 + $0x48] sm:$0xff] %vm1466, %v1459
          %1477 = vst.msk [vmem:[#allocation3 + $0x50] sm:$0xff] %vm1466, %v1460
          %1478 = vst.msk [vmem:[#allocation3 + $0x58] sm:$0xff] %vm1466, %v1461
          %1479 = vst.msk [vmem:[#allocation3 + $0x60] sm:$0xff] %vm1466, %v1462
          %1480 = vst.msk [vmem:[#allocation3 + $0x68] sm:$0xff] %vm1466, %v1463
          %1481 = vst.msk [vmem:[#allocation3 + $0x70] sm:$0xff] %vm1466, %v1464
          %1482 = vst.msk [vmem:[#allocation3 + $0x78] sm:$0xff] %vm1466, %v1465
          %v1483 = vld [vmem:[#allocation4] sm:$0xff]
          %v1484 = vld [vmem:[#allocation4 + $0x8] sm:$0xff]
          %v1485 = vld [vmem:[#allocation4 + $0x10] sm:$0xff]
          %v1486 = vld [vmem:[#allocation4 + $0x18] sm:$0xff]
          %v1487 = vld [vmem:[#allocation4 + $0x20] sm:$0xff]
          %v1488 = vld [vmem:[#allocation4 + $0x28] sm:$0xff]
          %v1489 = vld [vmem:[#allocation4 + $0x30] sm:$0xff]
          %v1490 = vld [vmem:[#allocation4 + $0x38] sm:$0xff]
          %v1491 = vld [vmem:[#allocation4 + $0x40] sm:$0xff]
          %v1492 = vld [vmem:[#allocation4 + $0x48] sm:$0xff]
          %v1493 = vld [vmem:[#allocation4 + $0x50] sm:$0xff]
          %v1494 = vld [vmem:[#allocation4 + $0x58] sm:$0xff]
          %v1495 = vld [vmem:[#allocation4 + $0x60] sm:$0xff]
          %v1496 = vld [vmem:[#allocation4 + $0x68] sm:$0xff]
          %v1497 = vld [vmem:[#allocation4 + $0x70] sm:$0xff]
          %v1498 = vld [vmem:[#allocation4 + $0x78] sm:$0xff]
          %1500 = vset.pattern.permute.xlu0 0
          %1501 = vperm.xlu0 %1500, %v1227
          %v1502 = vpop.permute.xlu0 %1501
          %1505 = vset.pattern.permute.xlu0 0
          %1506 = vperm.xlu0 %1505, %v1229
          %v1507 = vpop.permute.xlu0 %1506
          %1510 = vset.pattern.permute.xlu0 0
          %1511 = vperm.xlu0 %1510, %v1231
          %v1512 = vpop.permute.xlu0 %1511
          %1515 = vset.pattern.permute.xlu0 0
          %1516 = vperm.xlu0 %1515, %v1233
          %v1517 = vpop.permute.xlu0 %1516
          %1520 = vset.pattern.permute.xlu0 0
          %1521 = vperm.xlu0 %1520, %v1235
          %v1522 = vpop.permute.xlu0 %1521
          %1525 = vset.pattern.permute.xlu0 0
          %1526 = vperm.xlu0 %1525, %v1237
          %v1527 = vpop.permute.xlu0 %1526
          %1530 = vset.pattern.permute.xlu0 0
          %1531 = vperm.xlu0 %1530, %v1239
          %v1532 = vpop.permute.xlu0 %1531
          %1535 = vset.pattern.permute.xlu0 0
          %1536 = vperm.xlu0 %1535, %v1241
          %v1537 = vpop.permute.xlu0 %1536
          %1540 = vset.pattern.permute.xlu0 0
          %1541 = vperm.xlu0 %1540, %v1243
          %v1542 = vpop.permute.xlu0 %1541
          %1545 = vset.pattern.permute.xlu0 0
          %1546 = vperm.xlu0 %1545, %v1245
          %v1547 = vpop.permute.xlu0 %1546
          %1550 = vset.pattern.permute.xlu0 0
          %1551 = vperm.xlu0 %1550, %v1247
          %v1552 = vpop.permute.xlu0 %1551
          %1555 = vset.pattern.permute.xlu0 0
          %1556 = vperm.xlu0 %1555, %v1249
          %v1557 = vpop.permute.xlu0 %1556
          %1560 = vset.pattern.permute.xlu0 0
          %1561 = vperm.xlu0 %1560, %v1251
          %v1562 = vpop.permute.xlu0 %1561
          %1565 = vset.pattern.permute.xlu0 0
          %1566 = vperm.xlu0 %1565, %v1253
          %v1567 = vpop.permute.xlu0 %1566
          %1570 = vset.pattern.permute.xlu0 0
          %1571 = vperm.xlu0 %1570, %v1255
          %v1572 = vpop.permute.xlu0 %1571
          %1575 = vset.pattern.permute.xlu0 0
          %1576 = vperm.xlu0 %1575, %v1257
          %v1577 = vpop.permute.xlu0 %1576
          %v1579 = vmul.f32 %v1502, %v1483
          %v1580 = vmul.f32 %v1507, %v1484
          %v1581 = vmul.f32 %v1512, %v1485
          %v1582 = vmul.f32 %v1517, %v1486
          %v1583 = vmul.f32 %v1522, %v1487
          %v1584 = vmul.f32 %v1527, %v1488
          %v1585 = vmul.f32 %v1532, %v1489
          %v1586 = vmul.f32 %v1537, %v1490
          %v1587 = vmul.f32 %v1542, %v1491
          %v1588 = vmul.f32 %v1547, %v1492
          %v1589 = vmul.f32 %v1552, %v1493
          %v1590 = vmul.f32 %v1557, %v1494
          %v1591 = vmul.f32 %v1562, %v1495
          %v1592 = vmul.f32 %v1567, %v1496
          %v1593 = vmul.f32 %v1572, %v1497
          %v1594 = vmul.f32 %v1577, %v1498
          %v1595 = vpack.c.bf16 %v1357, %v1355
          %v1596 = vpack.c.bf16 %v1361, %v1359
          %v1597 = vpack.c.bf16 %v1365, %v1363
          %v1598 = vpack.c.bf16 %v1369, %v1367
          %v1599 = vpack.c.bf16 %v1373, %v1371
          %v1600 = vpack.c.bf16 %v1377, %v1375
          %v1601 = vpack.c.bf16 %v1381, %v1379
          %v1602 = vpack.c.bf16 %v1385, %v1383
          %v1619 = vunpack.c.l.b16 %v818
          %v1620 = vunpack.c.l.b16 %v819
          %v1621 = vunpack.c.l.b16 %v820
          %v1622 = vunpack.c.l.b16 %v821
          %v1623 = vunpack.c.l.b16 %v822
          %v1624 = vunpack.c.l.b16 %v823
          %v1625 = vunpack.c.l.b16 %v824
          %v1626 = vunpack.c.l.b16 %v825
          %v1627 = vunpack.c.l.b16 %v826
          %v1628 = vunpack.c.l.b16 %v827
          %v1629 = vunpack.c.l.b16 %v828
          %v1630 = vunpack.c.l.b16 %v829
          %v1631 = vunpack.c.l.b16 %v830
          %v1632 = vunpack.c.l.b16 %v831
          %v1633 = vunpack.c.l.b16 %v832
          %v1634 = vunpack.c.l.b16 %v833
          %v1635 = vpack.c.b16 %v1620, %v1619
          %v1636 = vpack.c.b16 %v1622, %v1621
          %v1637 = vpack.c.b16 %v1624, %v1623
          %v1638 = vpack.c.b16 %v1626, %v1625
          %v1639 = vpack.c.b16 %v1628, %v1627
          %v1640 = vpack.c.b16 %v1630, %v1629
          %v1641 = vpack.c.b16 %v1632, %v1631
          %v1642 = vpack.c.b16 %v1634, %v1633
          %1651 = vmatprep.subr.bf16.mxu0 0
          %1652 = vmatpush1.bf16.msra.mxu0 %v1635
          %1653 = vmatprep.subr.bf16.mxu0 0
          %1654 = vmatpush1.bf16.msra.mxu0 %v1636
          %1655 = vmatprep.subr.bf16.mxu0 0
          %1656 = vmatpush1.bf16.msra.mxu0 %v1637
          %1657 = vmatprep.subr.bf16.mxu0 0
          %1658 = vmatpush1.bf16.msra.mxu0 %v1638
          %1659 = vmatprep.subr.bf16.mxu0 0
          %1660 = vmatpush1.bf16.msra.mxu0 %v1639
          %1661 = vmatprep.subr.bf16.mxu0 0
          %1662 = vmatpush1.bf16.msra.mxu0 %v1640
          %1663 = vmatprep.subr.bf16.mxu0 0
          %1664 = vmatpush1.bf16.msra.mxu0 %v1641
          %1665 = vmatprep.subr.bf16.mxu0 0
          %1666 = vmatpush1.bf16.msra.mxu0 %v1642
          %1667 = vmatprep.subr.bf16.mxu0 0
          %1668 = vmatpush1.bf16.msra.mxu0 0
          %1669 = vmatprep.subr.bf16.mxu0 0
          %1670 = vmatpush1.bf16.msra.mxu0 0
          %1671 = vmatprep.subr.bf16.mxu0 0
          %1672 = vmatpush1.bf16.msra.mxu0 0
          %1673 = vmatprep.subr.bf16.mxu0 0
          %1674 = vmatpush1.bf16.msra.mxu0 0
          %1675 = vmatprep.subr.bf16.mxu0 0
          %1676 = vmatpush1.bf16.msra.mxu0 0
          %1677 = vmatprep.subr.bf16.mxu0 0
          %1678 = vmatpush1.bf16.msra.mxu0 0
          %1679 = vmatprep.subr.bf16.mxu0 0
          %1680 = vmatpush1.bf16.msra.mxu0 0
          %1681 = vmatprep.subr.bf16.mxu0 0
          %1682 = vmatpush1.bf16.msra.mxu0 0
          %1683 = vmatprep.mubr.bf16.mxu0 0
          %1684 = vmatmul.mubr.bf16.gmra.mrb[0].mxu0 %v1595
          %v1685 = vpop.f32.mrb[0].mxu0
          %v1686 = vadd.f32 0.0, %v1685
          %v1687 = vpop.f32.mrb[0].mxu0
          %v1688 = vpop.f32.mrb[0].mxu0
          %v1689 = vadd.f32 0.0, %v1688
          %v1690 = vpop.f32.mrb[0].mxu0
          %1691 = vmatprep.mubr.bf16.mxu0 0
          %1692 = vmatmul.mubr.bf16.gmra.mrb[0].mxu0 %v1596
          %v1693 = vpop.f32.mrb[0].mxu0
          %v1694 = vadd.f32 0.0, %v1693
          %v1695 = vpop.f32.mrb[0].mxu0
          %v1696 = vpop.f32.mrb[0].mxu0
          %v1697 = vadd.f32 0.0, %v1696
          %v1698 = vpop.f32.mrb[0].mxu0
          %1699 = vmatprep.mubr.bf16.mxu0 0
          %1700 = vmatmul.mubr.bf16.gmra.mrb[0].mxu0 %v1597
          %v1701 = vpop.f32.mrb[0].mxu0
          %v1702 = vadd.f32 0.0, %v1701
          %v1703 = vpop.f32.mrb[0].mxu0
          %v1704 = vpop.f32.mrb[0].mxu0
          %v1705 = vadd.f32 0.0, %v1704
          %v1706 = vpop.f32.mrb[0].mxu0
          %1707 = vmatprep.mubr.bf16.mxu0 0
          %1708 = vmatmul.mubr.bf16.gmra.mrb[0].mxu0 %v1598
          %v1709 = vpop.f32.mrb[0].mxu0
          %v1710 = vadd.f32 0.0, %v1709
          %v1711 = vpop.f32.mrb[0].mxu0
          %v1712 = vpop.f32.mrb[0].mxu0
          %v1713 = vadd.f32 0.0, %v1712
          %v1714 = vpop.f32.mrb[0].mxu0
          %1715 = vmatprep.mubr.bf16.mxu0 0
          %1716 = vmatmul.mubr.bf16.gmra.mrb[0].mxu0 %v1599
          %v1717 = vpop.f32.mrb[0].mxu0
          %v1718 = vadd.f32 0.0, %v1717
          %v1719 = vpop.f32.mrb[0].mxu0
          %v1720 = vpop.f32.mrb[0].mxu0
          %v1721 = vadd.f32 0.0, %v1720
          %v1722 = vpop.f32.mrb[0].mxu0
          %1723 = vmatprep.mubr.bf16.mxu0 0
          %1724 = vmatmul.mubr.bf16.gmra.mrb[0].mxu0 %v1600
          %v1725 = vpop.f32.mrb[0].mxu0
          %v1726 = vadd.f32 0.0, %v1725
          %v1727 = vpop.f32.mrb[0].mxu0
          %v1728 = vpop.f32.mrb[0].mxu0
          %v1729 = vadd.f32 0.0, %v1728
          %v1730 = vpop.f32.mrb[0].mxu0
          %1731 = vmatprep.mubr.bf16.mxu0 0
          %1732 = vmatmul.mubr.bf16.gmra.mrb[0].mxu0 %v1601
          %v1733 = vpop.f32.mrb[0].mxu0
          %v1734 = vadd.f32 0.0, %v1733
          %v1735 = vpop.f32.mrb[0].mxu0
          %v1736 = vpop.f32.mrb[0].mxu0
          %v1737 = vadd.f32 0.0, %v1736
          %v1738 = vpop.f32.mrb[0].mxu0
          %1739 = vmatprep.mubr.bf16.mxu0 0
          %1740 = vmatmul.mubr.bf16.gmra.mrb[0].mxu0 %v1602
          %v1741 = vpop.f32.mrb[0].mxu0
          %v1742 = vadd.f32 0.0, %v1741
          %v1743 = vpop.f32.mrb[0].mxu0
          %v1744 = vpop.f32.mrb[0].mxu0
          %v1745 = vadd.f32 0.0, %v1744
          %v1746 = vpop.f32.mrb[0].mxu0
          %1747 = vdwg.mxu0
          %v1748 = vadd.f32 %v1579, %v1686
          %v1749 = vadd.f32 %v1580, %v1689
          %v1750 = vadd.f32 %v1581, %v1694
          %v1751 = vadd.f32 %v1582, %v1697
          %v1752 = vadd.f32 %v1583, %v1702
          %v1753 = vadd.f32 %v1584, %v1705
          %v1754 = vadd.f32 %v1585, %v1710
          %v1755 = vadd.f32 %v1586, %v1713
          %v1756 = vadd.f32 %v1587, %v1718
          %v1757 = vadd.f32 %v1588, %v1721
          %v1758 = vadd.f32 %v1589, %v1726
          %v1759 = vadd.f32 %v1590, %v1729
          %v1760 = vadd.f32 %v1591, %v1734
          %v1761 = vadd.f32 %v1592, %v1737
          %v1762 = vadd.f32 %v1593, %v1742
          %v1763 = vadd.f32 %v1594, %v1745
          %1764 = vst.msk [vmem:[#allocation4] sm:$0xff] %vm968, %v1748
          %1765 = vst.msk [vmem:[#allocation4 + $0x8] sm:$0xff] %vm968, %v1749
          %1766 = vst.msk [vmem:[#allocation4 + $0x10] sm:$0xff] %vm968, %v1750
          %1767 = vst.msk [vmem:[#allocation4 + $0x18] sm:$0xff] %vm968, %v1751
          %1768 = vst.msk [vmem:[#allocation4 + $0x20] sm:$0xff] %vm968, %v1752
          %1769 = vst.msk [vmem:[#allocation4 + $0x28] sm:$0xff] %vm968, %v1753
          %1770 = vst.msk [vmem:[#allocation4 + $0x30] sm:$0xff] %vm968, %v1754
          %1771 = vst.msk [vmem:[#allocation4 + $0x38] sm:$0xff] %vm968, %v1755
          %1772 = vst.msk [vmem:[#allocation4 + $0x40] sm:$0xff] %vm968, %v1756
          %1773 = vst.msk [vmem:[#allocation4 + $0x48] sm:$0xff] %vm968, %v1757
          %1774 = vst.msk [vmem:[#allocation4 + $0x50] sm:$0xff] %vm968, %v1758
          %1775 = vst.msk [vmem:[#allocation4 + $0x58] sm:$0xff] %vm968, %v1759
          %1776 = vst.msk [vmem:[#allocation4 + $0x60] sm:$0xff] %vm968, %v1760
          %1777 = vst.msk [vmem:[#allocation4 + $0x68] sm:$0xff] %vm968, %v1761
          %1778 = vst.msk [vmem:[#allocation4 + $0x70] sm:$0xff] %vm968, %v1762
          %1779 = vst.msk [vmem:[#allocation4 + $0x78] sm:$0xff] %vm968, %v1763
          %1780 = vst.msk [vmem:[#allocation2] sm:$0xff] %vm1466, %v1194
          %1781 = vst.msk [vmem:[#allocation2 + $0x8] sm:$0xff] %vm1466, %v1195
          %1782 = vst.msk [vmem:[#allocation2 + $0x10] sm:$0xff] %vm1466, %v1196
          %1783 = vst.msk [vmem:[#allocation2 + $0x18] sm:$0xff] %vm1466, %v1197
          %1784 = vst.msk [vmem:[#allocation2 + $0x20] sm:$0xff] %vm1466, %v1198
          %1785 = vst.msk [vmem:[#allocation2 + $0x28] sm:$0xff] %vm1466, %v1199
          %1786 = vst.msk [vmem:[#allocation2 + $0x30] sm:$0xff] %vm1466, %v1200
          %1787 = vst.msk [vmem:[#allocation2 + $0x38] sm:$0xff] %vm1466, %v1201
          %1788 = vst.msk [vmem:[#allocation2 + $0x40] sm:$0xff] %vm1466, %v1202
          %1789 = vst.msk [vmem:[#allocation2 + $0x48] sm:$0xff] %vm1466, %v1203
          %1790 = vst.msk [vmem:[#allocation2 + $0x50] sm:$0xff] %vm1466, %v1204
          %1791 = vst.msk [vmem:[#allocation2 + $0x58] sm:$0xff] %vm1466, %v1205
          %1792 = vst.msk [vmem:[#allocation2 + $0x60] sm:$0xff] %vm1466, %v1206
          %1793 = vst.msk [vmem:[#allocation2 + $0x68] sm:$0xff] %vm1466, %v1207
          %1794 = vst.msk [vmem:[#allocation2 + $0x70] sm:$0xff] %vm1466, %v1208
          %1795 = vst.msk [vmem:[#allocation2 + $0x78] sm:$0xff] %vm1466, %v1209
          %1796 = vrot.lane.b32.xlu0 %v920, 96
          %v1797 = vpop.permute.xlu0 %1796
          %1798 = vrot.lane.b32.xlu0 %v921, 96
          %v1799 = vpop.permute.xlu0 %1798
          %1800 = vrot.lane.b32.xlu0 %v922, 96
          %v1801 = vpop.permute.xlu0 %1800
          %1802 = vrot.lane.b32.xlu0 %v923, 96
          %v1803 = vpop.permute.xlu0 %1802
          %1804 = vrot.lane.b32.xlu0 %v924, 96
          %v1805 = vpop.permute.xlu0 %1804
          %1806 = vrot.lane.b32.xlu0 %v925, 96
          %v1807 = vpop.permute.xlu0 %1806
          %1808 = vrot.lane.b32.xlu0 %v926, 96
          %v1809 = vpop.permute.xlu0 %1808
          %1810 = vrot.lane.b32.xlu0 %v927, 96
          %v1811 = vpop.permute.xlu0 %1810
          %1812 = vrot.lane.b32.xlu0 %v960, 96
          %v1813 = vpop.permute.xlu0 %1812
          %1814 = vrot.lane.b32.xlu0 %v961, 96
          %v1815 = vpop.permute.xlu0 %1814
          %1816 = vrot.lane.b32.xlu0 %v962, 96
          %v1817 = vpop.permute.xlu0 %1816
          %1818 = vrot.lane.b32.xlu0 %v963, 96
          %v1819 = vpop.permute.xlu0 %1818
          %1820 = vrot.lane.b32.xlu0 %v964, 96
          %v1821 = vpop.permute.xlu0 %1820
          %1822 = vrot.lane.b32.xlu0 %v965, 96
          %v1823 = vpop.permute.xlu0 %1822
          %1824 = vrot.lane.b32.xlu0 %v966, 96
          %v1825 = vpop.permute.xlu0 %1824
          %1826 = vrot.lane.b32.xlu0 %v967, 96
          %v1827 = vpop.permute.xlu0 %1826
          %v1829 = vsel %vm968, %v1797, 0
          %v1832 = vsel %vm968, %v1799, 0
          %v1835 = vsel %vm968, %v1801, 0
          %v1838 = vsel %vm968, %v1803, 0
          %v1841 = vsel %vm968, %v1805, 0
          %v1844 = vsel %vm968, %v1807, 0
          %v1847 = vsel %vm968, %v1809, 0
          %v1850 = vsel %vm968, %v1811, 0
          %v1853 = vsel %vm968, %v1813, 0
          %v1856 = vsel %vm968, %v1815, 0
          %v1859 = vsel %vm968, %v1817, 0
          %v1862 = vsel %vm968, %v1819, 0
          %v1865 = vsel %vm968, %v1821, 0
          %v1868 = vsel %vm968, %v1823, 0
          %v1871 = vsel %vm968, %v1825, 0
          %v1874 = vsel %vm968, %v1827, 0
          %1876 = vmatprep.subr.bf16.mxu0 0
          %1877 = vmatpush1.bf16.xpose.msra.mxu0 %v1853
          %1878 = vmatprep.subr.bf16.mxu0 0
          %1879 = vmatpush1.bf16.xpose.msra.mxu0 %v1856
          %1880 = vmatprep.subr.bf16.mxu0 0
          %1881 = vmatpush1.bf16.xpose.msra.mxu0 %v1859
          %1882 = vmatprep.subr.bf16.mxu0 0
          %1883 = vmatpush1.bf16.xpose.msra.mxu0 %v1862
          %1884 = vmatprep.subr.bf16.mxu0 0
          %1885 = vmatpush1.bf16.xpose.msra.mxu0 %v1865
          %1886 = vmatprep.subr.bf16.mxu0 0
          %1887 = vmatpush1.bf16.xpose.msra.mxu0 %v1868
          %1888 = vmatprep.subr.bf16.mxu0 0
          %1889 = vmatpush1.bf16.xpose.msra.mxu0 %v1871
          %1890 = vmatprep.subr.bf16.mxu0 0
          %1891 = vmatpush1.bf16.xpose.msra.mxu0 %v1874
          %1892 = vmatprep.subr.bf16.mxu0 0
          %1893 = vmatpush1.bf16.xpose.msra.mxu0 0
          %1894 = vmatprep.subr.bf16.mxu0 0
          %1895 = vmatpush1.bf16.xpose.msra.mxu0 0
          %1896 = vmatprep.subr.bf16.mxu0 0
          %1897 = vmatpush1.bf16.xpose.msra.mxu0 0
          %1898 = vmatprep.subr.bf16.mxu0 0
          %1899 = vmatpush1.bf16.xpose.msra.mxu0 0
          %1900 = vmatprep.subr.bf16.mxu0 0
          %1901 = vmatpush1.bf16.xpose.msra.mxu0 0
          %1902 = vmatprep.subr.bf16.mxu0 0
          %1903 = vmatpush1.bf16.xpose.msra.mxu0 0
          %1904 = vmatprep.subr.bf16.mxu0 0
          %1905 = vmatpush1.bf16.xpose.msra.mxu0 0
          %1906 = vmatprep.subr.bf16.mxu0 0
          %1907 = vmatpush1.bf16.xpose.msra.mxu0 0
          %1908 = vmatprep.mubr.bf16.mxu0 0
          %1909 = vmatmul.mubr.bf16.gmra.mrb[0].mxu0 %v1829
          %v1910 = vpop.f32.mrb[0].mxu0
          %v1911 = vadd.f32 0.0, %v1910
          %v1912 = vpop.f32.mrb[0].mxu0
          %v1913 = vpop.f32.mrb[0].mxu0
          %v1914 = vadd.f32 0.0, %v1913
          %v1915 = vpop.f32.mrb[0].mxu0
          %1916 = vmatprep.mubr.bf16.mxu0 0
          %1917 = vmatmul.mubr.bf16.gmra.mrb[0].mxu0 %v1832
          %v1918 = vpop.f32.mrb[0].mxu0
          %v1919 = vadd.f32 0.0, %v1918
          %v1920 = vpop.f32.mrb[0].mxu0
          %v1921 = vpop.f32.mrb[0].mxu0
          %v1922 = vadd.f32 0.0, %v1921
          %v1923 = vpop.f32.mrb[0].mxu0
          %1924 = vmatprep.mubr.bf16.mxu0 0
          %1925 = vmatmul.mubr.bf16.gmra.mrb[0].mxu0 %v1835
          %v1926 = vpop.f32.mrb[0].mxu0
          %v1927 = vadd.f32 0.0, %v1926
          %v1928 = vpop.f32.mrb[0].mxu0
          %v1929 = vpop.f32.mrb[0].mxu0
          %v1930 = vadd.f32 0.0, %v1929
          %v1931 = vpop.f32.mrb[0].mxu0
          %1932 = vmatprep.mubr.bf16.mxu0 0
          %1933 = vmatmul.mubr.bf16.gmra.mrb[0].mxu0 %v1838
          %v1934 = vpop.f32.mrb[0].mxu0
          %v1935 = vadd.f32 0.0, %v1934
          %v1936 = vpop.f32.mrb[0].mxu0
          %v1937 = vpop.f32.mrb[0].mxu0
          %v1938 = vadd.f32 0.0, %v1937
          %v1939 = vpop.f32.mrb[0].mxu0
          %1940 = vmatprep.mubr.bf16.mxu0 0
          %1941 = vmatmul.mubr.bf16.gmra.mrb[0].mxu0 %v1841
          %v1942 = vpop.f32.mrb[0].mxu0
          %v1943 = vadd.f32 0.0, %v1942
          %v1944 = vpop.f32.mrb[0].mxu0
          %v1945 = vpop.f32.mrb[0].mxu0
          %v1946 = vadd.f32 0.0, %v1945
          %v1947 = vpop.f32.mrb[0].mxu0
          %1948 = vmatprep.mubr.bf16.mxu0 0
          %1949 = vmatmul.mubr.bf16.gmra.mrb[0].mxu0 %v1844
          %v1950 = vpop.f32.mrb[0].mxu0
          %v1951 = vadd.f32 0.0, %v1950
          %v1952 = vpop.f32.mrb[0].mxu0
          %v1953 = vpop.f32.mrb[0].mxu0
          %v1954 = vadd.f32 0.0, %v1953
          %v1955 = vpop.f32.mrb[0].mxu0
          %1956 = vmatprep.mubr.bf16.mxu0 0
          %1957 = vmatmul.mubr.bf16.gmra.mrb[0].mxu0 %v1847
          %v1958 = vpop.f32.mrb[0].mxu0
          %v1959 = vadd.f32 0.0, %v1958
          %v1960 = vpop.f32.mrb[0].mxu0
          %v1961 = vpop.f32.mrb[0].mxu0
          %v1962 = vadd.f32 0.0, %v1961
          %v1963 = vpop.f32.mrb[0].mxu0
          %1964 = vmatprep.mubr.bf16.mxu0 0
          %1965 = vmatmul.mubr.bf16.gmra.mrb[0].mxu0 %v1850
          %v1966 = vpop.f32.mrb[0].mxu0
          %v1967 = vadd.f32 0.0, %v1966
          %v1968 = vpop.f32.mrb[0].mxu0
          %v1969 = vpop.f32.mrb[0].mxu0
          %v1970 = vadd.f32 0.0, %v1969
          %v1971 = vpop.f32.mrb[0].mxu0
          %1972 = vdwg.mxu0
          %v1973 = vmul.f32 %v1911, 0.17677669
          %v1974 = vmul.f32 %v1914, 0.17677669
          %v1975 = vmul.f32 %v1919, 0.17677669
          %v1976 = vmul.f32 %v1922, 0.17677669
          %v1977 = vmul.f32 %v1927, 0.17677669
          %v1978 = vmul.f32 %v1930, 0.17677669
          %v1979 = vmul.f32 %v1935, 0.17677669
          %v1980 = vmul.f32 %v1938, 0.17677669
          %v1981 = vmul.f32 %v1943, 0.17677669
          %v1982 = vmul.f32 %v1946, 0.17677669
          %v1983 = vmul.f32 %v1951, 0.17677669
          %v1984 = vmul.f32 %v1954, 0.17677669
          %v1985 = vmul.f32 %v1959, 0.17677669
          %v1986 = vmul.f32 %v1962, 0.17677669
          %v1987 = vmul.f32 %v1967, 0.17677669
          %v1988 = vmul.f32 %v1970, 0.17677669
          %v1989 = vsel %vm872, %v1973, -3.4028235e+38
          %v1990 = vsel %vm873, %v1974, -3.4028235e+38
          %v1991 = vsel %vm874, %v1975, -3.4028235e+38
          %v1992 = vsel %vm875, %v1976, -3.4028235e+38
          %v1993 = vsel %vm876, %v1977, -3.4028235e+38
          %v1994 = vsel %vm877, %v1978, -3.4028235e+38
          %v1995 = vsel %vm878, %v1979, -3.4028235e+38
          %v1996 = vsel %vm879, %v1980, -3.4028235e+38
          %v1997 = vsel %vm880, %v1981, -3.4028235e+38
          %v1998 = vsel %vm881, %v1982, -3.4028235e+38
          %v1999 = vsel %vm882, %v1983, -3.4028235e+38
          %v2000 = vsel %vm883, %v1984, -3.4028235e+38
          %v2001 = vsel %vm884, %v1985, -3.4028235e+38
          %v2002 = vsel %vm885, %v1986, -3.4028235e+38
          %v2003 = vsel %vm886, %v1987, -3.4028235e+38
          %v2004 = vsel %vm887, %v1988, -3.4028235e+38
          %s2005 = scalar_lea.vmem [#allocation2], 128
          %v2006 = vld [vmem:[%s2005] sm:$0xff]
          %v2007 = vld [vmem:[%s2005 + $0x8] sm:$0xff]
          %v2008 = vld [vmem:[%s2005 + $0x10] sm:$0xff]
          %v2009 = vld [vmem:[%s2005 + $0x18] sm:$0xff]
          %v2010 = vld [vmem:[%s2005 + $0x20] sm:$0xff]
          %v2011 = vld [vmem:[%s2005 + $0x28] sm:$0xff]
          %v2012 = vld [vmem:[%s2005 + $0x30] sm:$0xff]
          %v2013 = vld [vmem:[%s2005 + $0x38] sm:$0xff]
          %v2014 = vld [vmem:[%s2005 + $0x40] sm:$0xff]
          %v2015 = vld [vmem:[%s2005 + $0x48] sm:$0xff]
          %v2016 = vld [vmem:[%s2005 + $0x50] sm:$0xff]
          %v2017 = vld [vmem:[%s2005 + $0x58] sm:$0xff]
          %v2018 = vld [vmem:[%s2005 + $0x60] sm:$0xff]
          %v2019 = vld [vmem:[%s2005 + $0x68] sm:$0xff]
          %v2020 = vld [vmem:[%s2005 + $0x70] sm:$0xff]
          %v2021 = vld [vmem:[%s2005 + $0x78] sm:$0xff]
          %2022 = vmax.xlane.f32.xlu0 %v1989
          %v2023 = vpop.xlane.xlu0 %2022
          %2024 = vmax.xlane.f32.xlu0 %v1990
          %v2025 = vpop.xlane.xlu0 %2024
          %2026 = vmax.xlane.f32.xlu0 %v1991
          %v2027 = vpop.xlane.xlu0 %2026
          %2028 = vmax.xlane.f32.xlu0 %v1992
          %v2029 = vpop.xlane.xlu0 %2028
          %2030 = vmax.xlane.f32.xlu0 %v1993
          %v2031 = vpop.xlane.xlu0 %2030
          %2032 = vmax.xlane.f32.xlu0 %v1994
          %v2033 = vpop.xlane.xlu0 %2032
          %2034 = vmax.xlane.f32.xlu0 %v1995
          %v2035 = vpop.xlane.xlu0 %2034
          %2036 = vmax.xlane.f32.xlu0 %v1996
          %v2037 = vpop.xlane.xlu0 %2036
          %2038 = vmax.xlane.f32.xlu0 %v1997
          %v2039 = vpop.xlane.xlu0 %2038
          %2040 = vmax.xlane.f32.xlu0 %v1998
          %v2041 = vpop.xlane.xlu0 %2040
          %2042 = vmax.xlane.f32.xlu0 %v1999
          %v2043 = vpop.xlane.xlu0 %2042
          %2044 = vmax.xlane.f32.xlu0 %v2000
          %v2045 = vpop.xlane.xlu0 %2044
          %2046 = vmax.xlane.f32.xlu0 %v2001
          %v2047 = vpop.xlane.xlu0 %2046
          %2048 = vmax.xlane.f32.xlu0 %v2002
          %v2049 = vpop.xlane.xlu0 %2048
          %2050 = vmax.xlane.f32.xlu0 %v2003
          %v2051 = vpop.xlane.xlu0 %2050
          %2052 = vmax.xlane.f32.xlu0 %v2004
          %v2053 = vpop.xlane.xlu0 %2052
          %v2054 = vmax.f32 %v2006, %v2023
          %v2055 = vmax.f32 %v2007, %v2025
          %v2056 = vmax.f32 %v2008, %v2027
          %v2057 = vmax.f32 %v2009, %v2029
          %v2058 = vmax.f32 %v2010, %v2031
          %v2059 = vmax.f32 %v2011, %v2033
          %v2060 = vmax.f32 %v2012, %v2035
          %v2061 = vmax.f32 %v2013, %v2037
          %v2062 = vmax.f32 %v2014, %v2039
          %v2063 = vmax.f32 %v2015, %v2041
          %v2064 = vmax.f32 %v2016, %v2043
          %v2065 = vmax.f32 %v2017, %v2045
          %v2066 = vmax.f32 %v2018, %v2047
          %v2067 = vmax.f32 %v2019, %v2049
          %v2068 = vmax.f32 %v2020, %v2051
          %v2069 = vmax.f32 %v2021, %v2053
          %v2070 = vsub.f32 %v2006, %v2054
          %v2071 = vsub.f32 %v2007, %v2055
          %v2072 = vsub.f32 %v2008, %v2056
          %v2073 = vsub.f32 %v2009, %v2057
          %v2074 = vsub.f32 %v2010, %v2058
          %v2075 = vsub.f32 %v2011, %v2059
          %v2076 = vsub.f32 %v2012, %v2060
          %v2077 = vsub.f32 %v2013, %v2061
          %v2078 = vsub.f32 %v2014, %v2062
          %v2079 = vsub.f32 %v2015, %v2063
          %v2080 = vsub.f32 %v2016, %v2064
          %v2081 = vsub.f32 %v2017, %v2065
          %v2082 = vsub.f32 %v2018, %v2066
          %v2083 = vsub.f32 %v2019, %v2067
          %v2084 = vsub.f32 %v2020, %v2068
          %v2085 = vsub.f32 %v2021, %v2069
          %v2086 = vmul.f32 %v2070, 1.442695
          %v2087 = vpow.pop %v2086
          %v2088 = vmul.f32 %v2071, 1.442695
          %v2089 = vpow.pop %v2088
          %v2090 = vmul.f32 %v2072, 1.442695
          %v2091 = vpow.pop %v2090
          %v2092 = vmul.f32 %v2073, 1.442695
          %v2093 = vpow.pop %v2092
          %v2094 = vmul.f32 %v2074, 1.442695
          %v2095 = vpow.pop %v2094
          %v2096 = vmul.f32 %v2075, 1.442695
          %v2097 = vpow.pop %v2096
          %v2098 = vmul.f32 %v2076, 1.442695
          %v2099 = vpow.pop %v2098
          %v2100 = vmul.f32 %v2077, 1.442695
          %v2101 = vpow.pop %v2100
          %v2102 = vmul.f32 %v2078, 1.442695
          %v2103 = vpow.pop %v2102
          %v2104 = vmul.f32 %v2079, 1.442695
          %v2105 = vpow.pop %v2104
          %v2106 = vmul.f32 %v2080, 1.442695
          %v2107 = vpow.pop %v2106
          %v2108 = vmul.f32 %v2081, 1.442695
          %v2109 = vpow.pop %v2108
          %v2110 = vmul.f32 %v2082, 1.442695
          %v2111 = vpow.pop %v2110
          %v2112 = vmul.f32 %v2083, 1.442695
          %v2113 = vpow.pop %v2112
          %v2114 = vmul.f32 %v2084, 1.442695
          %v2115 = vpow.pop %v2114
          %v2116 = vmul.f32 %v2085, 1.442695
          %v2117 = vpow.pop %v2116
          %2119 = vset.pattern.permute.xlu0 0
          %2120 = vperm.xlu0 %2119, %v2054
          %v2121 = vpop.permute.xlu0 %2120
          %2124 = vset.pattern.permute.xlu0 0
          %2125 = vperm.xlu0 %2124, %v2055
          %v2126 = vpop.permute.xlu0 %2125
          %2129 = vset.pattern.permute.xlu0 0
          %2130 = vperm.xlu0 %2129, %v2056
          %v2131 = vpop.permute.xlu0 %2130
          %2134 = vset.pattern.permute.xlu0 0
          %2135 = vperm.xlu0 %2134, %v2057
          %v2136 = vpop.permute.xlu0 %2135
          %2139 = vset.pattern.permute.xlu0 0
          %2140 = vperm.xlu0 %2139, %v2058
          %v2141 = vpop.permute.xlu0 %2140
          %2144 = vset.pattern.permute.xlu0 0
          %2145 = vperm.xlu0 %2144, %v2059
          %v2146 = vpop.permute.xlu0 %2145
          %2149 = vset.pattern.permute.xlu0 0
          %2150 = vperm.xlu0 %2149, %v2060
          %v2151 = vpop.permute.xlu0 %2150
          %2154 = vset.pattern.permute.xlu0 0
          %2155 = vperm.xlu0 %2154, %v2061
          %v2156 = vpop.permute.xlu0 %2155
          %2159 = vset.pattern.permute.xlu0 0
          %2160 = vperm.xlu0 %2159, %v2062
          %v2161 = vpop.permute.xlu0 %2160
          %2164 = vset.pattern.permute.xlu0 0
          %2165 = vperm.xlu0 %2164, %v2063
          %v2166 = vpop.permute.xlu0 %2165
          %2169 = vset.pattern.permute.xlu0 0
          %2170 = vperm.xlu0 %2169, %v2064
          %v2171 = vpop.permute.xlu0 %2170
          %2174 = vset.pattern.permute.xlu0 0
          %2175 = vperm.xlu0 %2174, %v2065
          %v2176 = vpop.permute.xlu0 %2175
          %2179 = vset.pattern.permute.xlu0 0
          %2180 = vperm.xlu0 %2179, %v2066
          %v2181 = vpop.permute.xlu0 %2180
          %2184 = vset.pattern.permute.xlu0 0
          %2185 = vperm.xlu0 %2184, %v2067
          %v2186 = vpop.permute.xlu0 %2185
          %2189 = vset.pattern.permute.xlu0 0
          %2190 = vperm.xlu0 %2189, %v2068
          %v2191 = vpop.permute.xlu0 %2190
          %2194 = vset.pattern.permute.xlu0 0
          %2195 = vperm.xlu0 %2194, %v2069
          %v2196 = vpop.permute.xlu0 %2195
          %v2198 = vsub.f32 %v1989, %v2121
          %v2199 = vsub.f32 %v1990, %v2126
          %v2200 = vsub.f32 %v1991, %v2131
          %v2201 = vsub.f32 %v1992, %v2136
          %v2202 = vsub.f32 %v1993, %v2141
          %v2203 = vsub.f32 %v1994, %v2146
          %v2204 = vsub.f32 %v1995, %v2151
          %v2205 = vsub.f32 %v1996, %v2156
          %v2206 = vsub.f32 %v1997, %v2161
          %v2207 = vsub.f32 %v1998, %v2166
          %v2208 = vsub.f32 %v1999, %v2171
          %v2209 = vsub.f32 %v2000, %v2176
          %v2210 = vsub.f32 %v2001, %v2181
          %v2211 = vsub.f32 %v2002, %v2186
          %v2212 = vsub.f32 %v2003, %v2191
          %v2213 = vsub.f32 %v2004, %v2196
          %v2214 = vmul.f32 %v2198, 1.442695
          %v2215 = vpow.pop %v2214
          %v2216 = vmul.f32 %v2199, 1.442695
          %v2217 = vpow.pop %v2216
          %v2218 = vmul.f32 %v2200, 1.442695
          %v2219 = vpow.pop %v2218
          %v2220 = vmul.f32 %v2201, 1.442695
          %v2221 = vpow.pop %v2220
          %v2222 = vmul.f32 %v2202, 1.442695
          %v2223 = vpow.pop %v2222
          %v2224 = vmul.f32 %v2203, 1.442695
          %v2225 = vpow.pop %v2224
          %v2226 = vmul.f32 %v2204, 1.442695
          %v2227 = vpow.pop %v2226
          %v2228 = vmul.f32 %v2205, 1.442695
          %v2229 = vpow.pop %v2228
          %v2230 = vmul.f32 %v2206, 1.442695
          %v2231 = vpow.pop %v2230
          %v2232 = vmul.f32 %v2207, 1.442695
          %v2233 = vpow.pop %v2232
          %v2234 = vmul.f32 %v2208, 1.442695
          %v2235 = vpow.pop %v2234
          %v2236 = vmul.f32 %v2209, 1.442695
          %v2237 = vpow.pop %v2236
          %v2238 = vmul.f32 %v2210, 1.442695
          %v2239 = vpow.pop %v2238
          %v2240 = vmul.f32 %v2211, 1.442695
          %v2241 = vpow.pop %v2240
          %v2242 = vmul.f32 %v2212, 1.442695
          %v2243 = vpow.pop %v2242
          %v2244 = vmul.f32 %v2213, 1.442695
          %v2245 = vpow.pop %v2244
          %s2246 = scalar_lea.vmem [#allocation3], 128
          %v2247 = vld [vmem:[%s2246] sm:$0xff]
          %v2248 = vld [vmem:[%s2246 + $0x8] sm:$0xff]
          %v2249 = vld [vmem:[%s2246 + $0x10] sm:$0xff]
          %v2250 = vld [vmem:[%s2246 + $0x18] sm:$0xff]
          %v2251 = vld [vmem:[%s2246 + $0x20] sm:$0xff]
          %v2252 = vld [vmem:[%s2246 + $0x28] sm:$0xff]
          %v2253 = vld [vmem:[%s2246 + $0x30] sm:$0xff]
          %v2254 = vld [vmem:[%s2246 + $0x38] sm:$0xff]
          %v2255 = vld [vmem:[%s2246 + $0x40] sm:$0xff]
          %v2256 = vld [vmem:[%s2246 + $0x48] sm:$0xff]
          %v2257 = vld [vmem:[%s2246 + $0x50] sm:$0xff]
          %v2258 = vld [vmem:[%s2246 + $0x58] sm:$0xff]
          %v2259 = vld [vmem:[%s2246 + $0x60] sm:$0xff]
          %v2260 = vld [vmem:[%s2246 + $0x68] sm:$0xff]
          %v2261 = vld [vmem:[%s2246 + $0x70] sm:$0xff]
          %v2262 = vld [vmem:[%s2246 + $0x78] sm:$0xff]
          %v2263 = vmul.f32 %v2087, %v2247
          %v2264 = vmul.f32 %v2089, %v2248
          %v2265 = vmul.f32 %v2091, %v2249
          %v2266 = vmul.f32 %v2093, %v2250
          %v2267 = vmul.f32 %v2095, %v2251
          %v2268 = vmul.f32 %v2097, %v2252
          %v2269 = vmul.f32 %v2099, %v2253
          %v2270 = vmul.f32 %v2101, %v2254
          %v2271 = vmul.f32 %v2103, %v2255
          %v2272 = vmul.f32 %v2105, %v2256
          %v2273 = vmul.f32 %v2107, %v2257
          %v2274 = vmul.f32 %v2109, %v2258
          %v2275 = vmul.f32 %v2111, %v2259
          %v2276 = vmul.f32 %v2113, %v2260
          %v2277 = vmul.f32 %v2115, %v2261
          %v2278 = vmul.f32 %v2117, %v2262
          %2279 = vadd.xlane.f32.xlu0 %v2215
          %v2280 = vpop.xlane.xlu0 %2279
          %2281 = vadd.xlane.f32.xlu0 %v2217
          %v2282 = vpop.xlane.xlu0 %2281
          %2283 = vadd.xlane.f32.xlu0 %v2219
          %v2284 = vpop.xlane.xlu0 %2283
          %2285 = vadd.xlane.f32.xlu0 %v2221
          %v2286 = vpop.xlane.xlu0 %2285
          %2287 = vadd.xlane.f32.xlu0 %v2223
          %v2288 = vpop.xlane.xlu0 %2287
          %2289 = vadd.xlane.f32.xlu0 %v2225
          %v2290 = vpop.xlane.xlu0 %2289
          %2291 = vadd.xlane.f32.xlu0 %v2227
          %v2292 = vpop.xlane.xlu0 %2291
          %2293 = vadd.xlane.f32.xlu0 %v2229
          %v2294 = vpop.xlane.xlu0 %2293
          %2295 = vadd.xlane.f32.xlu0 %v2231
          %v2296 = vpop.xlane.xlu0 %2295
          %2297 = vadd.xlane.f32.xlu0 %v2233
          %v2298 = vpop.xlane.xlu0 %2297
          %2299 = vadd.xlane.f32.xlu0 %v2235
          %v2300 = vpop.xlane.xlu0 %2299
          %2301 = vadd.xlane.f32.xlu0 %v2237
          %v2302 = vpop.xlane.xlu0 %2301
          %2303 = vadd.xlane.f32.xlu0 %v2239
          %v2304 = vpop.xlane.xlu0 %2303
          %2305 = vadd.xlane.f32.xlu0 %v2241
          %v2306 = vpop.xlane.xlu0 %2305
          %2307 = vadd.xlane.f32.xlu0 %v2243
          %v2308 = vpop.xlane.xlu0 %2307
          %2309 = vadd.xlane.f32.xlu0 %v2245
          %v2310 = vpop.xlane.xlu0 %2309
          %v2311 = vadd.f32 %v2263, %v2280
          %v2312 = vadd.f32 %v2264, %v2282
          %v2313 = vadd.f32 %v2265, %v2284
          %v2314 = vadd.f32 %v2266, %v2286
          %v2315 = vadd.f32 %v2267, %v2288
          %v2316 = vadd.f32 %v2268, %v2290
          %v2317 = vadd.f32 %v2269, %v2292
          %v2318 = vadd.f32 %v2270, %v2294
          %v2319 = vadd.f32 %v2271, %v2296
          %v2320 = vadd.f32 %v2272, %v2298
          %v2321 = vadd.f32 %v2273, %v2300
          %v2322 = vadd.f32 %v2274, %v2302
          %v2323 = vadd.f32 %v2275, %v2304
          %v2324 = vadd.f32 %v2276, %v2306
          %v2325 = vadd.f32 %v2277, %v2308
          %v2326 = vadd.f32 %v2278, %v2310
          %2327 = vst.msk [vmem:[%s2246] sm:$0xff] %vm1466, %v2311
          %2328 = vst.msk [vmem:[%s2246 + $0x8] sm:$0xff] %vm1466, %v2312
          %2329 = vst.msk [vmem:[%s2246 + $0x10] sm:$0xff] %vm1466, %v2313
          %2330 = vst.msk [vmem:[%s2246 + $0x18] sm:$0xff] %vm1466, %v2314
          %2331 = vst.msk [vmem:[%s2246 + $0x20] sm:$0xff] %vm1466, %v2315
          %2332 = vst.msk [vmem:[%s2246 + $0x28] sm:$0xff] %vm1466, %v2316
          %2333 = vst.msk [vmem:[%s2246 + $0x30] sm:$0xff] %vm1466, %v2317
          %2334 = vst.msk [vmem:[%s2246 + $0x38] sm:$0xff] %vm1466, %v2318
          %2335 = vst.msk [vmem:[%s2246 + $0x40] sm:$0xff] %vm1466, %v2319
          %2336 = vst.msk [vmem:[%s2246 + $0x48] sm:$0xff] %vm1466, %v2320
          %2337 = vst.msk [vmem:[%s2246 + $0x50] sm:$0xff] %vm1466, %v2321
          %2338 = vst.msk [vmem:[%s2246 + $0x58] sm:$0xff] %vm1466, %v2322
          %2339 = vst.msk [vmem:[%s2246 + $0x60] sm:$0xff] %vm1466, %v2323
          %2340 = vst.msk [vmem:[%s2246 + $0x68] sm:$0xff] %vm1466, %v2324
          %2341 = vst.msk [vmem:[%s2246 + $0x70] sm:$0xff] %vm1466, %v2325
          %2342 = vst.msk [vmem:[%s2246 + $0x78] sm:$0xff] %vm1466, %v2326
          %s2343 = scalar_lea.vmem [#allocation4], 128
          %v2344 = vld [vmem:[%s2343] sm:$0xff]
          %v2345 = vld [vmem:[%s2343 + $0x8] sm:$0xff]
          %v2346 = vld [vmem:[%s2343 + $0x10] sm:$0xff]
          %v2347 = vld [vmem:[%s2343 + $0x18] sm:$0xff]
          %v2348 = vld [vmem:[%s2343 + $0x20] sm:$0xff]
          %v2349 = vld [vmem:[%s2343 + $0x28] sm:$0xff]
          %v2350 = vld [vmem:[%s2343 + $0x30] sm:$0xff]
          %v2351 = vld [vmem:[%s2343 + $0x38] sm:$0xff]
          %v2352 = vld [vmem:[%s2343 + $0x40] sm:$0xff]
          %v2353 = vld [vmem:[%s2343 + $0x48] sm:$0xff]
          %v2354 = vld [vmem:[%s2343 + $0x50] sm:$0xff]
          %v2355 = vld [vmem:[%s2343 + $0x58] sm:$0xff]
          %v2356 = vld [vmem:[%s2343 + $0x60] sm:$0xff]
          %v2357 = vld [vmem:[%s2343 + $0x68] sm:$0xff]
          %v2358 = vld [vmem:[%s2343 + $0x70] sm:$0xff]
          %v2359 = vld [vmem:[%s2343 + $0x78] sm:$0xff]
          %2361 = vset.pattern.permute.xlu0 0
          %2362 = vperm.xlu0 %2361, %v2087
          %v2363 = vpop.permute.xlu0 %2362
          %2366 = vset.pattern.permute.xlu0 0
          %2367 = vperm.xlu0 %2366, %v2089
          %v2368 = vpop.permute.xlu0 %2367
          %2371 = vset.pattern.permute.xlu0 0
          %2372 = vperm.xlu0 %2371, %v2091
          %v2373 = vpop.permute.xlu0 %2372
          %2376 = vset.pattern.permute.xlu0 0
          %2377 = vperm.xlu0 %2376, %v2093
          %v2378 = vpop.permute.xlu0 %2377
          %2381 = vset.pattern.permute.xlu0 0
          %2382 = vperm.xlu0 %2381, %v2095
          %v2383 = vpop.permute.xlu0 %2382
          %2386 = vset.pattern.permute.xlu0 0
          %2387 = vperm.xlu0 %2386, %v2097
          %v2388 = vpop.permute.xlu0 %2387
          %2391 = vset.pattern.permute.xlu0 0
          %2392 = vperm.xlu0 %2391, %v2099
          %v2393 = vpop.permute.xlu0 %2392
          %2396 = vset.pattern.permute.xlu0 0
          %2397 = vperm.xlu0 %2396, %v2101
          %v2398 = vpop.permute.xlu0 %2397
          %2401 = vset.pattern.permute.xlu0 0
          %2402 = vperm.xlu0 %2401, %v2103
          %v2403 = vpop.permute.xlu0 %2402
          %2406 = vset.pattern.permute.xlu0 0
          %2407 = vperm.xlu0 %2406, %v2105
          %v2408 = vpop.permute.xlu0 %2407
          %2411 = vset.pattern.permute.xlu0 0
          %2412 = vperm.xlu0 %2411, %v2107
          %v2413 = vpop.permute.xlu0 %2412
          %2416 = vset.pattern.permute.xlu0 0
          %2417 = vperm.xlu0 %2416, %v2109
          %v2418 = vpop.permute.xlu0 %2417
          %2421 = vset.pattern.permute.xlu0 0
          %2422 = vperm.xlu0 %2421, %v2111
          %v2423 = vpop.permute.xlu0 %2422
          %2426 = vset.pattern.permute.xlu0 0
          %2427 = vperm.xlu0 %2426, %v2113
          %v2428 = vpop.permute.xlu0 %2427
          %2431 = vset.pattern.permute.xlu0 0
          %2432 = vperm.xlu0 %2431, %v2115
          %v2433 = vpop.permute.xlu0 %2432
          %2436 = vset.pattern.permute.xlu0 0
          %2437 = vperm.xlu0 %2436, %v2117
          %v2438 = vpop.permute.xlu0 %2437
          %v2440 = vmul.f32 %v2363, %v2344
          %v2441 = vmul.f32 %v2368, %v2345
          %v2442 = vmul.f32 %v2373, %v2346
          %v2443 = vmul.f32 %v2378, %v2347
          %v2444 = vmul.f32 %v2383, %v2348
          %v2445 = vmul.f32 %v2388, %v2349
          %v2446 = vmul.f32 %v2393, %v2350
          %v2447 = vmul.f32 %v2398, %v2351
          %v2448 = vmul.f32 %v2403, %v2352
          %v2449 = vmul.f32 %v2408, %v2353
          %v2450 = vmul.f32 %v2413, %v2354
          %v2451 = vmul.f32 %v2418, %v2355
          %v2452 = vmul.f32 %v2423, %v2356
          %v2453 = vmul.f32 %v2428, %v2357
          %v2454 = vmul.f32 %v2433, %v2358
          %v2455 = vmul.f32 %v2438, %v2359
          %v2456 = vpack.c.bf16 %v2217, %v2215
          %v2457 = vpack.c.bf16 %v2221, %v2219
          %v2458 = vpack.c.bf16 %v2225, %v2223
          %v2459 = vpack.c.bf16 %v2229, %v2227
          %v2460 = vpack.c.bf16 %v2233, %v2231
          %v2461 = vpack.c.bf16 %v2237, %v2235
          %v2462 = vpack.c.bf16 %v2241, %v2239
          %v2463 = vpack.c.bf16 %v2245, %v2243
          %2464 = vrot.lane.b32.xlu0 %v1635, 96
          %v2465 = vpop.permute.xlu0 %2464
          %2466 = vrot.lane.b32.xlu0 %v1636, 96
          %v2467 = vpop.permute.xlu0 %2466
          %2468 = vrot.lane.b32.xlu0 %v1637, 96
          %v2469 = vpop.permute.xlu0 %2468
          %2470 = vrot.lane.b32.xlu0 %v1638, 96
          %v2471 = vpop.permute.xlu0 %2470
          %2472 = vrot.lane.b32.xlu0 %v1639, 96
          %v2473 = vpop.permute.xlu0 %2472
          %2474 = vrot.lane.b32.xlu0 %v1640, 96
          %v2475 = vpop.permute.xlu0 %2474
          %2476 = vrot.lane.b32.xlu0 %v1641, 96
          %v2477 = vpop.permute.xlu0 %2476
          %2478 = vrot.lane.b32.xlu0 %v1642, 96
          %v2479 = vpop.permute.xlu0 %2478
          %2488 = vmatprep.subr.bf16.mxu0 0
          %2489 = vmatpush1.bf16.msra.mxu0 %v2465
          %2490 = vmatprep.subr.bf16.mxu0 0
          %2491 = vmatpush1.bf16.msra.mxu0 %v2467
          %2492 = vmatprep.subr.bf16.mxu0 0
          %2493 = vmatpush1.bf16.msra.mxu0 %v2469
          %2494 = vmatprep.subr.bf16.mxu0 0
          %2495 = vmatpush1.bf16.msra.mxu0 %v2471
          %2496 = vmatprep.subr.bf16.mxu0 0
          %2497 = vmatpush1.bf16.msra.mxu0 %v2473
          %2498 = vmatprep.subr.bf16.mxu0 0
          %2499 = vmatpush1.bf16.msra.mxu0 %v2475
          %2500 = vmatprep.subr.bf16.mxu0 0
          %2501 = vmatpush1.bf16.msra.mxu0 %v2477
          %2502 = vmatprep.subr.bf16.mxu0 0
          %2503 = vmatpush1.bf16.msra.mxu0 %v2479
          %2504 = vmatprep.subr.bf16.mxu0 0
          %2505 = vmatpush1.bf16.msra.mxu0 0
          %2506 = vmatprep.subr.bf16.mxu0 0
          %2507 = vmatpush1.bf16.msra.mxu0 0
          %2508 = vmatprep.subr.bf16.mxu0 0
          %2509 = vmatpush1.bf16.msra.mxu0 0
          %2510 = vmatprep.subr.bf16.mxu0 0
          %2511 = vmatpush1.bf16.msra.mxu0 0
          %2512 = vmatprep.subr.bf16.mxu0 0
          %2513 = vmatpush1.bf16.msra.mxu0 0
          %2514 = vmatprep.subr.bf16.mxu0 0
          %2515 = vmatpush1.bf16.msra.mxu0 0
          %2516 = vmatprep.subr.bf16.mxu0 0
          %2517 = vmatpush1.bf16.msra.mxu0 0
          %2518 = vmatprep.subr.bf16.mxu0 0
          %2519 = vmatpush1.bf16.msra.mxu0 0
          %2520 = vmatprep.mubr.bf16.mxu0 0
          %2521 = vmatmul.mubr.bf16.gmra.mrb[0].mxu0 %v2456
          %v2522 = vpop.f32.mrb[0].mxu0
          %v2523 = vadd.f32 0.0, %v2522
          %v2524 = vpop.f32.mrb[0].mxu0
          %v2525 = vpop.f32.mrb[0].mxu0
          %v2526 = vadd.f32 0.0, %v2525
          %v2527 = vpop.f32.mrb[0].mxu0
          %2528 = vmatprep.mubr.bf16.mxu0 0
          %2529 = vmatmul.mubr.bf16.gmra.mrb[0].mxu0 %v2457
          %v2530 = vpop.f32.mrb[0].mxu0
          %v2531 = vadd.f32 0.0, %v2530
          %v2532 = vpop.f32.mrb[0].mxu0
          %v2533 = vpop.f32.mrb[0].mxu0
          %v2534 = vadd.f32 0.0, %v2533
          %v2535 = vpop.f32.mrb[0].mxu0
          %2536 = vmatprep.mubr.bf16.mxu0 0
          %2537 = vmatmul.mubr.bf16.gmra.mrb[0].mxu0 %v2458
          %v2538 = vpop.f32.mrb[0].mxu0
          %v2539 = vadd.f32 0.0, %v2538
          %v2540 = vpop.f32.mrb[0].mxu0
          %v2541 = vpop.f32.mrb[0].mxu0
          %v2542 = vadd.f32 0.0, %v2541
          %v2543 = vpop.f32.mrb[0].mxu0
          %2544 = vmatprep.mubr.bf16.mxu0 0
          %2545 = vmatmul.mubr.bf16.gmra.mrb[0].mxu0 %v2459
          %v2546 = vpop.f32.mrb[0].mxu0
          %v2547 = vadd.f32 0.0, %v2546
          %v2548 = vpop.f32.mrb[0].mxu0
          %v2549 = vpop.f32.mrb[0].mxu0
          %v2550 = vadd.f32 0.0, %v2549
          %v2551 = vpop.f32.mrb[0].mxu0
          %2552 = vmatprep.mubr.bf16.mxu0 0
          %2553 = vmatmul.mubr.bf16.gmra.mrb[0].mxu0 %v2460
          %v2554 = vpop.f32.mrb[0].mxu0
          %v2555 = vadd.f32 0.0, %v2554
          %v2556 = vpop.f32.mrb[0].mxu0
          %v2557 = vpop.f32.mrb[0].mxu0
          %v2558 = vadd.f32 0.0, %v2557
          %v2559 = vpop.f32.mrb[0].mxu0
          %2560 = vmatprep.mubr.bf16.mxu0 0
          %2561 = vmatmul.mubr.bf16.gmra.mrb[0].mxu0 %v2461
          %v2562 = vpop.f32.mrb[0].mxu0
          %v2563 = vadd.f32 0.0, %v2562
          %v2564 = vpop.f32.mrb[0].mxu0
          %v2565 = vpop.f32.mrb[0].mxu0
          %v2566 = vadd.f32 0.0, %v2565
          %v2567 = vpop.f32.mrb[0].mxu0
          %2568 = vmatprep.mubr.bf16.mxu0 0
          %2569 = vmatmul.mubr.bf16.gmra.mrb[0].mxu0 %v2462
          %v2570 = vpop.f32.mrb[0].mxu0
          %v2571 = vadd.f32 0.0, %v2570
          %v2572 = vpop.f32.mrb[0].mxu0
          %v2573 = vpop.f32.mrb[0].mxu0
          %v2574 = vadd.f32 0.0, %v2573
          %v2575 = vpop.f32.mrb[0].mxu0
          %2576 = vmatprep.mubr.bf16.mxu0 0
          %2577 = vmatmul.mubr.bf16.gmra.mrb[0].mxu0 %v2463
          %v2578 = vpop.f32.mrb[0].mxu0
          %v2579 = vadd.f32 0.0, %v2578
          %v2580 = vpop.f32.mrb[0].mxu0
          %v2581 = vpop.f32.mrb[0].mxu0
          %v2582 = vadd.f32 0.0, %v2581
          %v2583 = vpop.f32.mrb[0].mxu0
          %2584 = vdwg.mxu0
          %v2585 = vadd.f32 %v2440, %v2523
          %v2586 = vadd.f32 %v2441, %v2526
          %v2587 = vadd.f32 %v2442, %v2531
          %v2588 = vadd.f32 %v2443, %v2534
          %v2589 = vadd.f32 %v2444, %v2539
          %v2590 = vadd.f32 %v2445, %v2542
          %v2591 = vadd.f32 %v2446, %v2547
          %v2592 = vadd.f32 %v2447, %v2550
          %v2593 = vadd.f32 %v2448, %v2555
          %v2594 = vadd.f32 %v2449, %v2558
          %v2595 = vadd.f32 %v2450, %v2563
          %v2596 = vadd.f32 %v2451, %v2566
          %v2597 = vadd.f32 %v2452, %v2571
          %v2598 = vadd.f32 %v2453, %v2574
          %v2599 = vadd.f32 %v2454, %v2579
          %v2600 = vadd.f32 %v2455, %v2582
          %2601 = vst.msk [vmem:[%s2343] sm:$0xff] %vm968, %v2585
          %2602 = vst.msk [vmem:[%s2343 + $0x8] sm:$0xff] %vm968, %v2586
          %2603 = vst.msk [vmem:[%s2343 + $0x10] sm:$0xff] %vm968, %v2587
          %2604 = vst.msk [vmem:[%s2343 + $0x18] sm:$0xff] %vm968, %v2588
          %2605 = vst.msk [vmem:[%s2343 + $0x20] sm:$0xff] %vm968, %v2589
          %2606 = vst.msk [vmem:[%s2343 + $0x28] sm:$0xff] %vm968, %v2590
          %2607 = vst.msk [vmem:[%s2343 + $0x30] sm:$0xff] %vm968, %v2591
          %2608 = vst.msk [vmem:[%s2343 + $0x38] sm:$0xff] %vm968, %v2592
          %2609 = vst.msk [vmem:[%s2343 + $0x40] sm:$0xff] %vm968, %v2593
          %2610 = vst.msk [vmem:[%s2343 + $0x48] sm:$0xff] %vm968, %v2594
          %2611 = vst.msk [vmem:[%s2343 + $0x50] sm:$0xff] %vm968, %v2595
          %2612 = vst.msk [vmem:[%s2343 + $0x58] sm:$0xff] %vm968, %v2596
          %2613 = vst.msk [vmem:[%s2343 + $0x60] sm:$0xff] %vm968, %v2597
          %2614 = vst.msk [vmem:[%s2343 + $0x68] sm:$0xff] %vm968, %v2598
          %2615 = vst.msk [vmem:[%s2343 + $0x70] sm:$0xff] %vm968, %v2599
          %2616 = vst.msk [vmem:[%s2343 + $0x78] sm:$0xff] %vm968, %v2600
          %2617 = vst.msk [vmem:[%s2005] sm:$0xff] %vm1466, %v2054
          %2618 = vst.msk [vmem:[%s2005 + $0x8] sm:$0xff] %vm1466, %v2055
          %2619 = vst.msk [vmem:[%s2005 + $0x10] sm:$0xff] %vm1466, %v2056
          %2620 = vst.msk [vmem:[%s2005 + $0x18] sm:$0xff] %vm1466, %v2057
          %2621 = vst.msk [vmem:[%s2005 + $0x20] sm:$0xff] %vm1466, %v2058
          %2622 = vst.msk [vmem:[%s2005 + $0x28] sm:$0xff] %vm1466, %v2059
          %2623 = vst.msk [vmem:[%s2005 + $0x30] sm:$0xff] %vm1466, %v2060
          %2624 = vst.msk [vmem:[%s2005 + $0x38] sm:$0xff] %vm1466, %v2061
          %2625 = vst.msk [vmem:[%s2005 + $0x40] sm:$0xff] %vm1466, %v2062
          %2626 = vst.msk [vmem:[%s2005 + $0x48] sm:$0xff] %vm1466, %v2063
          %2627 = vst.msk [vmem:[%s2005 + $0x50] sm:$0xff] %vm1466, %v2064
          %2628 = vst.msk [vmem:[%s2005 + $0x58] sm:$0xff] %vm1466, %v2065
          %2629 = vst.msk [vmem:[%s2005 + $0x60] sm:$0xff] %vm1466, %v2066
          %2630 = vst.msk [vmem:[%s2005 + $0x68] sm:$0xff] %vm1466, %v2067
          %2631 = vst.msk [vmem:[%s2005 + $0x70] sm:$0xff] %vm1466, %v2068
          %2632 = vst.msk [vmem:[%s2005 + $0x78] sm:$0xff] %vm1466, %v2069
          %2633 = vrot.lane.b32.xlu0 %v920, 64
          %v2634 = vpop.permute.xlu0 %2633
          %2635 = vrot.lane.b32.xlu0 %v921, 64
          %v2636 = vpop.permute.xlu0 %2635
          %2637 = vrot.lane.b32.xlu0 %v922, 64
          %v2638 = vpop.permute.xlu0 %2637
          %2639 = vrot.lane.b32.xlu0 %v923, 64
          %v2640 = vpop.permute.xlu0 %2639
          %2641 = vrot.lane.b32.xlu0 %v924, 64
          %v2642 = vpop.permute.xlu0 %2641
          %2643 = vrot.lane.b32.xlu0 %v925, 64
          %v2644 = vpop.permute.xlu0 %2643
          %2645 = vrot.lane.b32.xlu0 %v926, 64
          %v2646 = vpop.permute.xlu0 %2645
          %2647 = vrot.lane.b32.xlu0 %v927, 64
          %v2648 = vpop.permute.xlu0 %2647
          %2649 = vrot.lane.b32.xlu0 %v960, 64
          %v2650 = vpop.permute.xlu0 %2649
          %2651 = vrot.lane.b32.xlu0 %v961, 64
          %v2652 = vpop.permute.xlu0 %2651
          %2653 = vrot.lane.b32.xlu0 %v962, 64
          %v2654 = vpop.permute.xlu0 %2653
          %2655 = vrot.lane.b32.xlu0 %v963, 64
          %v2656 = vpop.permute.xlu0 %2655
          %2657 = vrot.lane.b32.xlu0 %v964, 64
          %v2658 = vpop.permute.xlu0 %2657
          %2659 = vrot.lane.b32.xlu0 %v965, 64
          %v2660 = vpop.permute.xlu0 %2659
          %2661 = vrot.lane.b32.xlu0 %v966, 64
          %v2662 = vpop.permute.xlu0 %2661
          %2663 = vrot.lane.b32.xlu0 %v967, 64
          %v2664 = vpop.permute.xlu0 %2663
          %v2666 = vsel %vm968, %v2634, 0
          %v2669 = vsel %vm968, %v2636, 0
          %v2672 = vsel %vm968, %v2638, 0
          %v2675 = vsel %vm968, %v2640, 0
          %v2678 = vsel %vm968, %v2642, 0
          %v2681 = vsel %vm968, %v2644, 0
          %v2684 = vsel %vm968, %v2646, 0
          %v2687 = vsel %vm968, %v2648, 0
          %v2690 = vsel %vm968, %v2650, 0
          %v2693 = vsel %vm968, %v2652, 0
          %v2696 = vsel %vm968, %v2654, 0
          %v2699 = vsel %vm968, %v2656, 0
          %v2702 = vsel %vm968, %v2658, 0
          %v2705 = vsel %vm968, %v2660, 0
          %v2708 = vsel %vm968, %v2662, 0
          %v2711 = vsel %vm968, %v2664, 0
          %2713 = vmatprep.subr.bf16.mxu0 0
          %2714 = vmatpush1.bf16.xpose.msra.mxu0 %v2690
          %2715 = vmatprep.subr.bf16.mxu0 0
          %2716 = vmatpush1.bf16.xpose.msra.mxu0 %v2693
          %2717 = vmatprep.subr.bf16.mxu0 0
          %2718 = vmatpush1.bf16.xpose.msra.mxu0 %v2696
          %2719 = vmatprep.subr.bf16.mxu0 0
          %2720 = vmatpush1.bf16.xpose.msra.mxu0 %v2699
          %2721 = vmatprep.subr.bf16.mxu0 0
          %2722 = vmatpush1.bf16.xpose.msra.mxu0 %v2702
          %2723 = vmatprep.subr.bf16.mxu0 0
          %2724 = vmatpush1.bf16.xpose.msra.mxu0 %v2705
          %2725 = vmatprep.subr.bf16.mxu0 0
          %2726 = vmatpush1.bf16.xpose.msra.mxu0 %v2708
          %2727 = vmatprep.subr.bf16.mxu0 0
          %2728 = vmatpush1.bf16.xpose.msra.mxu0 %v2711
          %2729 = vmatprep.subr.bf16.mxu0 0
          %2730 = vmatpush1.bf16.xpose.msra.mxu0 0
          %2731 = vmatprep.subr.bf16.mxu0 0
          %2732 = vmatpush1.bf16.xpose.msra.mxu0 0
          %2733 = vmatprep.subr.bf16.mxu0 0
          %2734 = vmatpush1.bf16.xpose.msra.mxu0 0
          %2735 = vmatprep.subr.bf16.mxu0 0
          %2736 = vmatpush1.bf16.xpose.msra.mxu0 0
          %2737 = vmatprep.subr.bf16.mxu0 0
          %2738 = vmatpush1.bf16.xpose.msra.mxu0 0
          %2739 = vmatprep.subr.bf16.mxu0 0
          %2740 = vmatpush1.bf16.xpose.msra.mxu0 0
          %2741 = vmatprep.subr.bf16.mxu0 0
          %2742 = vmatpush1.bf16.xpose.msra.mxu0 0
          %2743 = vmatprep.subr.bf16.mxu0 0
          %2744 = vmatpush1.bf16.xpose.msra.mxu0 0
          %2745 = vmatprep.mubr.bf16.mxu0 0
          %2746 = vmatmul.mubr.bf16.gmra.mrb[0].mxu0 %v2666
          %v2747 = vpop.f32.mrb[0].mxu0
          %v2748 = vadd.f32 0.0, %v2747
          %v2749 = vpop.f32.mrb[0].mxu0
          %v2750 = vpop.f32.mrb[0].mxu0
          %v2751 = vadd.f32 0.0, %v2750
          %v2752 = vpop.f32.mrb[0].mxu0
          %2753 = vmatprep.mubr.bf16.mxu0 0
          %2754 = vmatmul.mubr.bf16.gmra.mrb[0].mxu0 %v2669
          %v2755 = vpop.f32.mrb[0].mxu0
          %v2756 = vadd.f32 0.0, %v2755
          %v2757 = vpop.f32.mrb[0].mxu0
          %v2758 = vpop.f32.mrb[0].mxu0
          %v2759 = vadd.f32 0.0, %v2758
          %v2760 = vpop.f32.mrb[0].mxu0
          %2761 = vmatprep.mubr.bf16.mxu0 0
          %2762 = vmatmul.mubr.bf16.gmra.mrb[0].mxu0 %v2672
          %v2763 = vpop.f32.mrb[0].mxu0
          %v2764 = vadd.f32 0.0, %v2763
          %v2765 = vpop.f32.mrb[0].mxu0
          %v2766 = vpop.f32.mrb[0].mxu0
          %v2767 = vadd.f32 0.0, %v2766
          %v2768 = vpop.f32.mrb[0].mxu0
          %2769 = vmatprep.mubr.bf16.mxu0 0
          %2770 = vmatmul.mubr.bf16.gmra.mrb[0].mxu0 %v2675
          %v2771 = vpop.f32.mrb[0].mxu0
          %v2772 = vadd.f32 0.0, %v2771
          %v2773 = vpop.f32.mrb[0].mxu0
          %v2774 = vpop.f32.mrb[0].mxu0
          %v2775 = vadd.f32 0.0, %v2774
          %v2776 = vpop.f32.mrb[0].mxu0
          %2777 = vmatprep.mubr.bf16.mxu0 0
          %2778 = vmatmul.mubr.bf16.gmra.mrb[0].mxu0 %v2678
          %v2779 = vpop.f32.mrb[0].mxu0
          %v2780 = vadd.f32 0.0, %v2779
          %v2781 = vpop.f32.mrb[0].mxu0
          %v2782 = vpop.f32.mrb[0].mxu0
          %v2783 = vadd.f32 0.0, %v2782
          %v2784 = vpop.f32.mrb[0].mxu0
          %2785 = vmatprep.mubr.bf16.mxu0 0
          %2786 = vmatmul.mubr.bf16.gmra.mrb[0].mxu0 %v2681
          %v2787 = vpop.f32.mrb[0].mxu0
          %v2788 = vadd.f32 0.0, %v2787
          %v2789 = vpop.f32.mrb[0].mxu0
          %v2790 = vpop.f32.mrb[0].mxu0
          %v2791 = vadd.f32 0.0, %v2790
          %v2792 = vpop.f32.mrb[0].mxu0
          %2793 = vmatprep.mubr.bf16.mxu0 0
          %2794 = vmatmul.mubr.bf16.gmra.mrb[0].mxu0 %v2684
          %v2795 = vpop.f32.mrb[0].mxu0
          %v2796 = vadd.f32 0.0, %v2795
          %v2797 = vpop.f32.mrb[0].mxu0
          %v2798 = vpop.f32.mrb[0].mxu0
          %v2799 = vadd.f32 0.0, %v2798
          %v2800 = vpop.f32.mrb[0].mxu0
          %2801 = vmatprep.mubr.bf16.mxu0 0
          %2802 = vmatmul.mubr.bf16.gmra.mrb[0].mxu0 %v2687
          %v2803 = vpop.f32.mrb[0].mxu0
          %v2804 = vadd.f32 0.0, %v2803
          %v2805 = vpop.f32.mrb[0].mxu0
          %v2806 = vpop.f32.mrb[0].mxu0
          %v2807 = vadd.f32 0.0, %v2806
          %v2808 = vpop.f32.mrb[0].mxu0
          %2809 = vdwg.mxu0
          %v2810 = vmul.f32 %v2748, 0.17677669
          %v2811 = vmul.f32 %v2751, 0.17677669
          %v2812 = vmul.f32 %v2756, 0.17677669
          %v2813 = vmul.f32 %v2759, 0.17677669
          %v2814 = vmul.f32 %v2764, 0.17677669
          %v2815 = vmul.f32 %v2767, 0.17677669
          %v2816 = vmul.f32 %v2772, 0.17677669
          %v2817 = vmul.f32 %v2775, 0.17677669
          %v2818 = vmul.f32 %v2780, 0.17677669
          %v2819 = vmul.f32 %v2783, 0.17677669
          %v2820 = vmul.f32 %v2788, 0.17677669
          %v2821 = vmul.f32 %v2791, 0.17677669
          %v2822 = vmul.f32 %v2796, 0.17677669
          %v2823 = vmul.f32 %v2799, 0.17677669
          %v2824 = vmul.f32 %v2804, 0.17677669
          %v2825 = vmul.f32 %v2807, 0.17677669
          %v2826 = vsel %vm872, %v2810, -3.4028235e+38
          %v2827 = vsel %vm873, %v2811, -3.4028235e+38
          %v2828 = vsel %vm874, %v2812, -3.4028235e+38
          %v2829 = vsel %vm875, %v2813, -3.4028235e+38
          %v2830 = vsel %vm876, %v2814, -3.4028235e+38
          %v2831 = vsel %vm877, %v2815, -3.4028235e+38
          %v2832 = vsel %vm878, %v2816, -3.4028235e+38
          %v2833 = vsel %vm879, %v2817, -3.4028235e+38
          %v2834 = vsel %vm880, %v2818, -3.4028235e+38
          %v2835 = vsel %vm881, %v2819, -3.4028235e+38
          %v2836 = vsel %vm882, %v2820, -3.4028235e+38
          %v2837 = vsel %vm883, %v2821, -3.4028235e+38
          %v2838 = vsel %vm884, %v2822, -3.4028235e+38
          %v2839 = vsel %vm885, %v2823, -3.4028235e+38
          %v2840 = vsel %vm886, %v2824, -3.4028235e+38
          %v2841 = vsel %vm887, %v2825, -3.4028235e+38
          %s2842 = scalar_lea.vmem [#allocation2], 256
          %v2843 = vld [vmem:[%s2842] sm:$0xff]
          %v2844 = vld [vmem:[%s2842 + $0x8] sm:$0xff]
          %v2845 = vld [vmem:[%s2842 + $0x10] sm:$0xff]
          %v2846 = vld [vmem:[%s2842 + $0x18] sm:$0xff]
          %v2847 = vld [vmem:[%s2842 + $0x20] sm:$0xff]
          %v2848 = vld [vmem:[%s2842 + $0x28] sm:$0xff]
          %v2849 = vld [vmem:[%s2842 + $0x30] sm:$0xff]
          %v2850 = vld [vmem:[%s2842 + $0x38] sm:$0xff]
          %v2851 = vld [vmem:[%s2842 + $0x40] sm:$0xff]
          %v2852 = vld [vmem:[%s2842 + $0x48] sm:$0xff]
          %v2853 = vld [vmem:[%s2842 + $0x50] sm:$0xff]
          %v2854 = vld [vmem:[%s2842 + $0x58] sm:$0xff]
          %v2855 = vld [vmem:[%s2842 + $0x60] sm:$0xff]
          %v2856 = vld [vmem:[%s2842 + $0x68] sm:$0xff]
          %v2857 = vld [vmem:[%s2842 + $0x70] sm:$0xff]
          %v2858 = vld [vmem:[%s2842 + $0x78] sm:$0xff]
          %2859 = vmax.xlane.f32.xlu0 %v2826
          %v2860 = vpop.xlane.xlu0 %2859
          %2861 = vmax.xlane.f32.xlu0 %v2827
          %v2862 = vpop.xlane.xlu0 %2861
          %2863 = vmax.xlane.f32.xlu0 %v2828
          %v2864 = vpop.xlane.xlu0 %2863
          %2865 = vmax.xlane.f32.xlu0 %v2829
          %v2866 = vpop.xlane.xlu0 %2865
          %2867 = vmax.xlane.f32.xlu0 %v2830
          %v2868 = vpop.xlane.xlu0 %2867
          %2869 = vmax.xlane.f32.xlu0 %v2831
          %v2870 = vpop.xlane.xlu0 %2869
          %2871 = vmax.xlane.f32.xlu0 %v2832
          %v2872 = vpop.xlane.xlu0 %2871
          %2873 = vmax.xlane.f32.xlu0 %v2833
          %v2874 = vpop.xlane.xlu0 %2873
          %2875 = vmax.xlane.f32.xlu0 %v2834
          %v2876 = vpop.xlane.xlu0 %2875
          %2877 = vmax.xlane.f32.xlu0 %v2835
          %v2878 = vpop.xlane.xlu0 %2877
          %2879 = vmax.xlane.f32.xlu0 %v2836
          %v2880 = vpop.xlane.xlu0 %2879
          %2881 = vmax.xlane.f32.xlu0 %v2837
          %v2882 = vpop.xlane.xlu0 %2881
          %2883 = vmax.xlane.f32.xlu0 %v2838
          %v2884 = vpop.xlane.xlu0 %2883
          %2885 = vmax.xlane.f32.xlu0 %v2839
          %v2886 = vpop.xlane.xlu0 %2885
          %2887 = vmax.xlane.f32.xlu0 %v2840
          %v2888 = vpop.xlane.xlu0 %2887
          %2889 = vmax.xlane.f32.xlu0 %v2841
          %v2890 = vpop.xlane.xlu0 %2889
          %v2891 = vmax.f32 %v2843, %v2860
          %v2892 = vmax.f32 %v2844, %v2862
          %v2893 = vmax.f32 %v2845, %v2864
          %v2894 = vmax.f32 %v2846, %v2866
          %v2895 = vmax.f32 %v2847, %v2868
          %v2896 = vmax.f32 %v2848, %v2870
          %v2897 = vmax.f32 %v2849, %v2872
          %v2898 = vmax.f32 %v2850, %v2874
          %v2899 = vmax.f32 %v2851, %v2876
          %v2900 = vmax.f32 %v2852, %v2878
          %v2901 = vmax.f32 %v2853, %v2880
          %v2902 = vmax.f32 %v2854, %v2882
          %v2903 = vmax.f32 %v2855, %v2884
          %v2904 = vmax.f32 %v2856, %v2886
          %v2905 = vmax.f32 %v2857, %v2888
          %v2906 = vmax.f32 %v2858, %v2890
          %v2907 = vsub.f32 %v2843, %v2891
          %v2908 = vsub.f32 %v2844, %v2892
          %v2909 = vsub.f32 %v2845, %v2893
          %v2910 = vsub.f32 %v2846, %v2894
          %v2911 = vsub.f32 %v2847, %v2895
          %v2912 = vsub.f32 %v2848, %v2896
          %v2913 = vsub.f32 %v2849, %v2897
          %v2914 = vsub.f32 %v2850, %v2898
          %v2915 = vsub.f32 %v2851, %v2899
          %v2916 = vsub.f32 %v2852, %v2900
          %v2917 = vsub.f32 %v2853, %v2901
          %v2918 = vsub.f32 %v2854, %v2902
          %v2919 = vsub.f32 %v2855, %v2903
          %v2920 = vsub.f32 %v2856, %v2904
          %v2921 = vsub.f32 %v2857, %v2905
          %v2922 = vsub.f32 %v2858, %v2906
          %v2923 = vmul.f32 %v2907, 1.442695
          %v2924 = vpow.pop %v2923
          %v2925 = vmul.f32 %v2908, 1.442695
          %v2926 = vpow.pop %v2925
          %v2927 = vmul.f32 %v2909, 1.442695
          %v2928 = vpow.pop %v2927
          %v2929 = vmul.f32 %v2910, 1.442695
          %v2930 = vpow.pop %v2929
          %v2931 = vmul.f32 %v2911, 1.442695
          %v2932 = vpow.pop %v2931
          %v2933 = vmul.f32 %v2912, 1.442695
          %v2934 = vpow.pop %v2933
          %v2935 = vmul.f32 %v2913, 1.442695
          %v2936 = vpow.pop %v2935
          %v2937 = vmul.f32 %v2914, 1.442695
          %v2938 = vpow.pop %v2937
          %v2939 = vmul.f32 %v2915, 1.442695
          %v2940 = vpow.pop %v2939
          %v2941 = vmul.f32 %v2916, 1.442695
          %v2942 = vpow.pop %v2941
          %v2943 = vmul.f32 %v2917, 1.442695
          %v2944 = vpow.pop %v2943
          %v2945 = vmul.f32 %v2918, 1.442695
          %v2946 = vpow.pop %v2945
          %v2947 = vmul.f32 %v2919, 1.442695
          %v2948 = vpow.pop %v2947
          %v2949 = vmul.f32 %v2920, 1.442695
          %v2950 = vpow.pop %v2949
          %v2951 = vmul.f32 %v2921, 1.442695
          %v2952 = vpow.pop %v2951
          %v2953 = vmul.f32 %v2922, 1.442695
          %v2954 = vpow.pop %v2953
          %2956 = vset.pattern.permute.xlu0 0
          %2957 = vperm.xlu0 %2956, %v2891
          %v2958 = vpop.permute.xlu0 %2957
          %2961 = vset.pattern.permute.xlu0 0
          %2962 = vperm.xlu0 %2961, %v2892
          %v2963 = vpop.permute.xlu0 %2962
          %2966 = vset.pattern.permute.xlu0 0
          %2967 = vperm.xlu0 %2966, %v2893
          %v2968 = vpop.permute.xlu0 %2967
          %2971 = vset.pattern.permute.xlu0 0
          %2972 = vperm.xlu0 %2971, %v2894
          %v2973 = vpop.permute.xlu0 %2972
          %2976 = vset.pattern.permute.xlu0 0
          %2977 = vperm.xlu0 %2976, %v2895
          %v2978 = vpop.permute.xlu0 %2977
          %2981 = vset.pattern.permute.xlu0 0
          %2982 = vperm.xlu0 %2981, %v2896
          %v2983 = vpop.permute.xlu0 %2982
          %2986 = vset.pattern.permute.xlu0 0
          %2987 = vperm.xlu0 %2986, %v2897
          %v2988 = vpop.permute.xlu0 %2987
          %2991 = vset.pattern.permute.xlu0 0
          %2992 = vperm.xlu0 %2991, %v2898
          %v2993 = vpop.permute.xlu0 %2992
          %2996 = vset.pattern.permute.xlu0 0
          %2997 = vperm.xlu0 %2996, %v2899
          %v2998 = vpop.permute.xlu0 %2997
          %3001 = vset.pattern.permute.xlu0 0
          %3002 = vperm.xlu0 %3001, %v2900
          %v3003 = vpop.permute.xlu0 %3002
          %3006 = vset.pattern.permute.xlu0 0
          %3007 = vperm.xlu0 %3006, %v2901
          %v3008 = vpop.permute.xlu0 %3007
          %3011 = vset.pattern.permute.xlu0 0
          %3012 = vperm.xlu0 %3011, %v2902
          %v3013 = vpop.permute.xlu0 %3012
          %3016 = vset.pattern.permute.xlu0 0
          %3017 = vperm.xlu0 %3016, %v2903
          %v3018 = vpop.permute.xlu0 %3017
          %3021 = vset.pattern.permute.xlu0 0
          %3022 = vperm.xlu0 %3021, %v2904
          %v3023 = vpop.permute.xlu0 %3022
          %3026 = vset.pattern.permute.xlu0 0
          %3027 = vperm.xlu0 %3026, %v2905
          %v3028 = vpop.permute.xlu0 %3027
          %3031 = vset.pattern.permute.xlu0 0
          %3032 = vperm.xlu0 %3031, %v2906
          %v3033 = vpop.permute.xlu0 %3032
          %v3035 = vsub.f32 %v2826, %v2958
          %v3036 = vsub.f32 %v2827, %v2963
          %v3037 = vsub.f32 %v2828, %v2968
          %v3038 = vsub.f32 %v2829, %v2973
          %v3039 = vsub.f32 %v2830, %v2978
          %v3040 = vsub.f32 %v2831, %v2983
          %v3041 = vsub.f32 %v2832, %v2988
          %v3042 = vsub.f32 %v2833, %v2993
          %v3043 = vsub.f32 %v2834, %v2998
          %v3044 = vsub.f32 %v2835, %v3003
          %v3045 = vsub.f32 %v2836, %v3008
          %v3046 = vsub.f32 %v2837, %v3013
          %v3047 = vsub.f32 %v2838, %v3018
          %v3048 = vsub.f32 %v2839, %v3023
          %v3049 = vsub.f32 %v2840, %v3028
          %v3050 = vsub.f32 %v2841, %v3033
          %v3051 = vmul.f32 %v3035, 1.442695
          %v3052 = vpow.pop %v3051
          %v3053 = vmul.f32 %v3036, 1.442695
          %v3054 = vpow.pop %v3053
          %v3055 = vmul.f32 %v3037, 1.442695
          %v3056 = vpow.pop %v3055
          %v3057 = vmul.f32 %v3038, 1.442695
          %v3058 = vpow.pop %v3057
          %v3059 = vmul.f32 %v3039, 1.442695
          %v3060 = vpow.pop %v3059
          %v3061 = vmul.f32 %v3040, 1.442695
          %v3062 = vpow.pop %v3061
          %v3063 = vmul.f32 %v3041, 1.442695
          %v3064 = vpow.pop %v3063
          %v3065 = vmul.f32 %v3042, 1.442695
          %v3066 = vpow.pop %v3065
          %v3067 = vmul.f32 %v3043, 1.442695
          %v3068 = vpow.pop %v3067
          %v3069 = vmul.f32 %v3044, 1.442695
          %v3070 = vpow.pop %v3069
          %v3071 = vmul.f32 %v3045, 1.442695
          %v3072 = vpow.pop %v3071
          %v3073 = vmul.f32 %v3046, 1.442695
          %v3074 = vpow.pop %v3073
          %v3075 = vmul.f32 %v3047, 1.442695
          %v3076 = vpow.pop %v3075
          %v3077 = vmul.f32 %v3048, 1.442695
          %v3078 = vpow.pop %v3077
          %v3079 = vmul.f32 %v3049, 1.442695
          %v3080 = vpow.pop %v3079
          %v3081 = vmul.f32 %v3050, 1.442695
          %v3082 = vpow.pop %v3081
          %s3083 = scalar_lea.vmem [#allocation3], 256
          %v3084 = vld [vmem:[%s3083] sm:$0xff]
          %v3085 = vld [vmem:[%s3083 + $0x8] sm:$0xff]
          %v3086 = vld [vmem:[%s3083 + $0x10] sm:$0xff]
          %v3087 = vld [vmem:[%s3083 + $0x18] sm:$0xff]
          %v3088 = vld [vmem:[%s3083 + $0x20] sm:$0xff]
          %v3089 = vld [vmem:[%s3083 + $0x28] sm:$0xff]
          %v3090 = vld [vmem:[%s3083 + $0x30] sm:$0xff]
          %v3091 = vld [vmem:[%s3083 + $0x38] sm:$0xff]
          %v3092 = vld [vmem:[%s3083 + $0x40] sm:$0xff]
          %v3093 = vld [vmem:[%s3083 + $0x48] sm:$0xff]
          %v3094 = vld [vmem:[%s3083 + $0x50] sm:$0xff]
          %v3095 = vld [vmem:[%s3083 + $0x58] sm:$0xff]
          %v3096 = vld [vmem:[%s3083 + $0x60] sm:$0xff]
          %v3097 = vld [vmem:[%s3083 + $0x68] sm:$0xff]
          %v3098 = vld [vmem:[%s3083 + $0x70] sm:$0xff]
          %v3099 = vld [vmem:[%s3083 + $0x78] sm:$0xff]
          %v3100 = vmul.f32 %v2924, %v3084
          %v3101 = vmul.f32 %v2926, %v3085
          %v3102 = vmul.f32 %v2928, %v3086
          %v3103 = vmul.f32 %v2930, %v3087
          %v3104 = vmul.f32 %v2932, %v3088
          %v3105 = vmul.f32 %v2934, %v3089
          %v3106 = vmul.f32 %v2936, %v3090
          %v3107 = vmul.f32 %v2938, %v3091
          %v3108 = vmul.f32 %v2940, %v3092
          %v3109 = vmul.f32 %v2942, %v3093
          %v3110 = vmul.f32 %v2944, %v3094
          %v3111 = vmul.f32 %v2946, %v3095
          %v3112 = vmul.f32 %v2948, %v3096
          %v3113 = vmul.f32 %v2950, %v3097
          %v3114 = vmul.f32 %v2952, %v3098
          %v3115 = vmul.f32 %v2954, %v3099
          %3116 = vadd.xlane.f32.xlu0 %v3052
          %v3117 = vpop.xlane.xlu0 %3116
          %3118 = vadd.xlane.f32.xlu0 %v3054
          %v3119 = vpop.xlane.xlu0 %3118
          %3120 = vadd.xlane.f32.xlu0 %v3056
          %v3121 = vpop.xlane.xlu0 %3120
          %3122 = vadd.xlane.f32.xlu0 %v3058
          %v3123 = vpop.xlane.xlu0 %3122
          %3124 = vadd.xlane.f32.xlu0 %v3060
          %v3125 = vpop.xlane.xlu0 %3124
          %3126 = vadd.xlane.f32.xlu0 %v3062
          %v3127 = vpop.xlane.xlu0 %3126
          %3128 = vadd.xlane.f32.xlu0 %v3064
          %v3129 = vpop.xlane.xlu0 %3128
          %3130 = vadd.xlane.f32.xlu0 %v3066
          %v3131 = vpop.xlane.xlu0 %3130
          %3132 = vadd.xlane.f32.xlu0 %v3068
          %v3133 = vpop.xlane.xlu0 %3132
          %3134 = vadd.xlane.f32.xlu0 %v3070
          %v3135 = vpop.xlane.xlu0 %3134
          %3136 = vadd.xlane.f32.xlu0 %v3072
          %v3137 = vpop.xlane.xlu0 %3136
          %3138 = vadd.xlane.f32.xlu0 %v3074
          %v3139 = vpop.xlane.xlu0 %3138
          %3140 = vadd.xlane.f32.xlu0 %v3076
          %v3141 = vpop.xlane.xlu0 %3140
          %3142 = vadd.xlane.f32.xlu0 %v3078
          %v3143 = vpop.xlane.xlu0 %3142
          %3144 = vadd.xlane.f32.xlu0 %v3080
          %v3145 = vpop.xlane.xlu0 %3144
          %3146 = vadd.xlane.f32.xlu0 %v3082
          %v3147 = vpop.xlane.xlu0 %3146
          %v3148 = vadd.f32 %v3100, %v3117
          %v3149 = vadd.f32 %v3101, %v3119
          %v3150 = vadd.f32 %v3102, %v3121
          %v3151 = vadd.f32 %v3103, %v3123
          %v3152 = vadd.f32 %v3104, %v3125
          %v3153 = vadd.f32 %v3105, %v3127
          %v3154 = vadd.f32 %v3106, %v3129
          %v3155 = vadd.f32 %v3107, %v3131
          %v3156 = vadd.f32 %v3108, %v3133
          %v3157 = vadd.f32 %v3109, %v3135
          %v3158 = vadd.f32 %v3110, %v3137
          %v3159 = vadd.f32 %v3111, %v3139
          %v3160 = vadd.f32 %v3112, %v3141
          %v3161 = vadd.f32 %v3113, %v3143
          %v3162 = vadd.f32 %v3114, %v3145
          %v3163 = vadd.f32 %v3115, %v3147
          %3164 = vst.msk [vmem:[%s3083] sm:$0xff] %vm1466, %v3148
          %3165 = vst.msk [vmem:[%s3083 + $0x8] sm:$0xff] %vm1466, %v3149
          %3166 = vst.msk [vmem:[%s3083 + $0x10] sm:$0xff] %vm1466, %v3150
          %3167 = vst.msk [vmem:[%s3083 + $0x18] sm:$0xff] %vm1466, %v3151
          %3168 = vst.msk [vmem:[%s3083 + $0x20] sm:$0xff] %vm1466, %v3152
          %3169 = vst.msk [vmem:[%s3083 + $0x28] sm:$0xff] %vm1466, %v3153
          %3170 = vst.msk [vmem:[%s3083 + $0x30] sm:$0xff] %vm1466, %v3154
          %3171 = vst.msk [vmem:[%s3083 + $0x38] sm:$0xff] %vm1466, %v3155
          %3172 = vst.msk [vmem:[%s3083 + $0x40] sm:$0xff] %vm1466, %v3156
          %3173 = vst.msk [vmem:[%s3083 + $0x48] sm:$0xff] %vm1466, %v3157
          %3174 = vst.msk [vmem:[%s3083 + $0x50] sm:$0xff] %vm1466, %v3158
          %3175 = vst.msk [vmem:[%s3083 + $0x58] sm:$0xff] %vm1466, %v3159
          %3176 = vst.msk [vmem:[%s3083 + $0x60] sm:$0xff] %vm1466, %v3160
          %3177 = vst.msk [vmem:[%s3083 + $0x68] sm:$0xff] %vm1466, %v3161
          %3178 = vst.msk [vmem:[%s3083 + $0x70] sm:$0xff] %vm1466, %v3162
          %3179 = vst.msk [vmem:[%s3083 + $0x78] sm:$0xff] %vm1466, %v3163
          %s3180 = scalar_lea.vmem [#allocation4], 256
          %v3181 = vld [vmem:[%s3180] sm:$0xff]
          %v3182 = vld [vmem:[%s3180 + $0x8] sm:$0xff]
          %v3183 = vld [vmem:[%s3180 + $0x10] sm:$0xff]
          %v3184 = vld [vmem:[%s3180 + $0x18] sm:$0xff]
          %v3185 = vld [vmem:[%s3180 + $0x20] sm:$0xff]
          %v3186 = vld [vmem:[%s3180 + $0x28] sm:$0xff]
          %v3187 = vld [vmem:[%s3180 + $0x30] sm:$0xff]
          %v3188 = vld [vmem:[%s3180 + $0x38] sm:$0xff]
          %v3189 = vld [vmem:[%s3180 + $0x40] sm:$0xff]
          %v3190 = vld [vmem:[%s3180 + $0x48] sm:$0xff]
          %v3191 = vld [vmem:[%s3180 + $0x50] sm:$0xff]
          %v3192 = vld [vmem:[%s3180 + $0x58] sm:$0xff]
          %v3193 = vld [vmem:[%s3180 + $0x60] sm:$0xff]
          %v3194 = vld [vmem:[%s3180 + $0x68] sm:$0xff]
          %v3195 = vld [vmem:[%s3180 + $0x70] sm:$0xff]
          %v3196 = vld [vmem:[%s3180 + $0x78] sm:$0xff]
          %3198 = vset.pattern.permute.xlu0 0
          %3199 = vperm.xlu0 %3198, %v2924
          %v3200 = vpop.permute.xlu0 %3199
          %3203 = vset.pattern.permute.xlu0 0
          %3204 = vperm.xlu0 %3203, %v2926
          %v3205 = vpop.permute.xlu0 %3204
          %3208 = vset.pattern.permute.xlu0 0
          %3209 = vperm.xlu0 %3208, %v2928
          %v3210 = vpop.permute.xlu0 %3209
          %3213 = vset.pattern.permute.xlu0 0
          %3214 = vperm.xlu0 %3213, %v2930
          %v3215 = vpop.permute.xlu0 %3214
          %3218 = vset.pattern.permute.xlu0 0
          %3219 = vperm.xlu0 %3218, %v2932
          %v3220 = vpop.permute.xlu0 %3219
          %3223 = vset.pattern.permute.xlu0 0
          %3224 = vperm.xlu0 %3223, %v2934
          %v3225 = vpop.permute.xlu0 %3224
          %3228 = vset.pattern.permute.xlu0 0
          %3229 = vperm.xlu0 %3228, %v2936
          %v3230 = vpop.permute.xlu0 %3229
          %3233 = vset.pattern.permute.xlu0 0
          %3234 = vperm.xlu0 %3233, %v2938
          %v3235 = vpop.permute.xlu0 %3234
          %3238 = vset.pattern.permute.xlu0 0
          %3239 = vperm.xlu0 %3238, %v2940
          %v3240 = vpop.permute.xlu0 %3239
          %3243 = vset.pattern.permute.xlu0 0
          %3244 = vperm.xlu0 %3243, %v2942
          %v3245 = vpop.permute.xlu0 %3244
          %3248 = vset.pattern.permute.xlu0 0
          %3249 = vperm.xlu0 %3248, %v2944
          %v3250 = vpop.permute.xlu0 %3249
          %3253 = vset.pattern.permute.xlu0 0
          %3254 = vperm.xlu0 %3253, %v2946
          %v3255 = vpop.permute.xlu0 %3254
          %3258 = vset.pattern.permute.xlu0 0
          %3259 = vperm.xlu0 %3258, %v2948
          %v3260 = vpop.permute.xlu0 %3259
          %3263 = vset.pattern.permute.xlu0 0
          %3264 = vperm.xlu0 %3263, %v2950
          %v3265 = vpop.permute.xlu0 %3264
          %3268 = vset.pattern.permute.xlu0 0
          %3269 = vperm.xlu0 %3268, %v2952
          %v3270 = vpop.permute.xlu0 %3269
          %3273 = vset.pattern.permute.xlu0 0
          %3274 = vperm.xlu0 %3273, %v2954
          %v3275 = vpop.permute.xlu0 %3274
          %v3277 = vmul.f32 %v3200, %v3181
          %v3278 = vmul.f32 %v3205, %v3182
          %v3279 = vmul.f32 %v3210, %v3183
          %v3280 = vmul.f32 %v3215, %v3184
          %v3281 = vmul.f32 %v3220, %v3185
          %v3282 = vmul.f32 %v3225, %v3186
          %v3283 = vmul.f32 %v3230, %v3187
          %v3284 = vmul.f32 %v3235, %v3188
          %v3285 = vmul.f32 %v3240, %v3189
          %v3286 = vmul.f32 %v3245, %v3190
          %v3287 = vmul.f32 %v3250, %v3191
          %v3288 = vmul.f32 %v3255, %v3192
          %v3289 = vmul.f32 %v3260, %v3193
          %v3290 = vmul.f32 %v3265, %v3194
          %v3291 = vmul.f32 %v3270, %v3195
          %v3292 = vmul.f32 %v3275, %v3196
          %v3293 = vpack.c.bf16 %v3054, %v3052
          %v3294 = vpack.c.bf16 %v3058, %v3056
          %v3295 = vpack.c.bf16 %v3062, %v3060
          %v3296 = vpack.c.bf16 %v3066, %v3064
          %v3297 = vpack.c.bf16 %v3070, %v3068
          %v3298 = vpack.c.bf16 %v3074, %v3072
          %v3299 = vpack.c.bf16 %v3078, %v3076
          %v3300 = vpack.c.bf16 %v3082, %v3080
          %3301 = vrot.lane.b32.xlu0 %v1635, 64
          %v3302 = vpop.permute.xlu0 %3301
          %3303 = vrot.lane.b32.xlu0 %v1636, 64
          %v3304 = vpop.permute.xlu0 %3303
          %3305 = vrot.lane.b32.xlu0 %v1637, 64
          %v3306 = vpop.permute.xlu0 %3305
          %3307 = vrot.lane.b32.xlu0 %v1638, 64
          %v3308 = vpop.permute.xlu0 %3307
          %3309 = vrot.lane.b32.xlu0 %v1639, 64
          %v3310 = vpop.permute.xlu0 %3309
          %3311 = vrot.lane.b32.xlu0 %v1640, 64
          %v3312 = vpop.permute.xlu0 %3311
          %3313 = vrot.lane.b32.xlu0 %v1641, 64
          %v3314 = vpop.permute.xlu0 %3313
          %3315 = vrot.lane.b32.xlu0 %v1642, 64
          %v3316 = vpop.permute.xlu0 %3315
          %3325 = vmatprep.subr.bf16.mxu0 0
          %3326 = vmatpush1.bf16.msra.mxu0 %v3302
          %3327 = vmatprep.subr.bf16.mxu0 0
          %3328 = vmatpush1.bf16.msra.mxu0 %v3304
          %3329 = vmatprep.subr.bf16.mxu0 0
          %3330 = vmatpush1.bf16.msra.mxu0 %v3306
          %3331 = vmatprep.subr.bf16.mxu0 0
          %3332 = vmatpush1.bf16.msra.mxu0 %v3308
          %3333 = vmatprep.subr.bf16.mxu0 0
          %3334 = vmatpush1.bf16.msra.mxu0 %v3310
          %3335 = vmatprep.subr.bf16.mxu0 0
          %3336 = vmatpush1.bf16.msra.mxu0 %v3312
          %3337 = vmatprep.subr.bf16.mxu0 0
          %3338 = vmatpush1.bf16.msra.mxu0 %v3314
          %3339 = vmatprep.subr.bf16.mxu0 0
          %3340 = vmatpush1.bf16.msra.mxu0 %v3316
          %3341 = vmatprep.subr.bf16.mxu0 0
          %3342 = vmatpush1.bf16.msra.mxu0 0
          %3343 = vmatprep.subr.bf16.mxu0 0
          %3344 = vmatpush1.bf16.msra.mxu0 0
          %3345 = vmatprep.subr.bf16.mxu0 0
          %3346 = vmatpush1.bf16.msra.mxu0 0
          %3347 = vmatprep.subr.bf16.mxu0 0
          %3348 = vmatpush1.bf16.msra.mxu0 0
          %3349 = vmatprep.subr.bf16.mxu0 0
          %3350 = vmatpush1.bf16.msra.mxu0 0
          %3351 = vmatprep.subr.bf16.mxu0 0
          %3352 = vmatpush1.bf16.msra.mxu0 0
          %3353 = vmatprep.subr.bf16.mxu0 0
          %3354 = vmatpush1.bf16.msra.mxu0 0
          %3355 = vmatprep.subr.bf16.mxu0 0
          %3356 = vmatpush1.bf16.msra.mxu0 0
          %3357 = vmatprep.mubr.bf16.mxu0 0
          %3358 = vmatmul.mubr.bf16.gmra.mrb[0].mxu0 %v3293
          %v3359 = vpop.f32.mrb[0].mxu0
          %v3360 = vadd.f32 0.0, %v3359
          %v3361 = vpop.f32.mrb[0].mxu0
          %v3362 = vpop.f32.mrb[0].mxu0
          %v3363 = vadd.f32 0.0, %v3362
          %v3364 = vpop.f32.mrb[0].mxu0
          %3365 = vmatprep.mubr.bf16.mxu0 0
          %3366 = vmatmul.mubr.bf16.gmra.mrb[0].mxu0 %v3294
          %v3367 = vpop.f32.mrb[0].mxu0
          %v3368 = vadd.f32 0.0, %v3367
          %v3369 = vpop.f32.mrb[0].mxu0
          %v3370 = vpop.f32.mrb[0].mxu0
          %v3371 = vadd.f32 0.0, %v3370
          %v3372 = vpop.f32.mrb[0].mxu0
          %3373 = vmatprep.mubr.bf16.mxu0 0
          %3374 = vmatmul.mubr.bf16.gmra.mrb[0].mxu0 %v3295
          %v3375 = vpop.f32.mrb[0].mxu0
          %v3376 = vadd.f32 0.0, %v3375
          %v3377 = vpop.f32.mrb[0].mxu0
          %v3378 = vpop.f32.mrb[0].mxu0
          %v3379 = vadd.f32 0.0, %v3378
          %v3380 = vpop.f32.mrb[0].mxu0
          %3381 = vmatprep.mubr.bf16.mxu0 0
          %3382 = vmatmul.mubr.bf16.gmra.mrb[0].mxu0 %v3296
          %v3383 = vpop.f32.mrb[0].mxu0
          %v3384 = vadd.f32 0.0, %v3383
          %v3385 = vpop.f32.mrb[0].mxu0
          %v3386 = vpop.f32.mrb[0].mxu0
          %v3387 = vadd.f32 0.0, %v3386
          %v3388 = vpop.f32.mrb[0].mxu0
          %3389 = vmatprep.mubr.bf16.mxu0 0
          %3390 = vmatmul.mubr.bf16.gmra.mrb[0].mxu0 %v3297
          %v3391 = vpop.f32.mrb[0].mxu0
          %v3392 = vadd.f32 0.0, %v3391
          %v3393 = vpop.f32.mrb[0].mxu0
          %v3394 = vpop.f32.mrb[0].mxu0
          %v3395 = vadd.f32 0.0, %v3394
          %v3396 = vpop.f32.mrb[0].mxu0
          %3397 = vmatprep.mubr.bf16.mxu0 0
          %3398 = vmatmul.mubr.bf16.gmra.mrb[0].mxu0 %v3298
          %v3399 = vpop.f32.mrb[0].mxu0
          %v3400 = vadd.f32 0.0, %v3399
          %v3401 = vpop.f32.mrb[0].mxu0
          %v3402 = vpop.f32.mrb[0].mxu0
          %v3403 = vadd.f32 0.0, %v3402
          %v3404 = vpop.f32.mrb[0].mxu0
          %3405 = vmatprep.mubr.bf16.mxu0 0
          %3406 = vmatmul.mubr.bf16.gmra.mrb[0].mxu0 %v3299
          %v3407 = vpop.f32.mrb[0].mxu0
          %v3408 = vadd.f32 0.0, %v3407
          %v3409 = vpop.f32.mrb[0].mxu0
          %v3410 = vpop.f32.mrb[0].mxu0
          %v3411 = vadd.f32 0.0, %v3410
          %v3412 = vpop.f32.mrb[0].mxu0
          %3413 = vmatprep.mubr.bf16.mxu0 0
          %3414 = vmatmul.mubr.bf16.gmra.mrb[0].mxu0 %v3300
          %v3415 = vpop.f32.mrb[0].mxu0
          %v3416 = vadd.f32 0.0, %v3415
          %v3417 = vpop.f32.mrb[0].mxu0
          %v3418 = vpop.f32.mrb[0].mxu0
          %v3419 = vadd.f32 0.0, %v3418
          %v3420 = vpop.f32.mrb[0].mxu0
          %3421 = vdwg.mxu0
          %v3422 = vadd.f32 %v3277, %v3360
          %v3423 = vadd.f32 %v3278, %v3363
          %v3424 = vadd.f32 %v3279, %v3368
          %v3425 = vadd.f32 %v3280, %v3371
          %v3426 = vadd.f32 %v3281, %v3376
          %v3427 = vadd.f32 %v3282, %v3379
          %v3428 = vadd.f32 %v3283, %v3384
          %v3429 = vadd.f32 %v3284, %v3387
          %v3430 = vadd.f32 %v3285, %v3392
          %v3431 = vadd.f32 %v3286, %v3395
          %v3432 = vadd.f32 %v3287, %v3400
          %v3433 = vadd.f32 %v3288, %v3403
          %v3434 = vadd.f32 %v3289, %v3408
          %v3435 = vadd.f32 %v3290, %v3411
          %v3436 = vadd.f32 %v3291, %v3416
          %v3437 = vadd.f32 %v3292, %v3419
          %3438 = vst.msk [vmem:[%s3180] sm:$0xff] %vm968, %v3422
          %3439 = vst.msk [vmem:[%s3180 + $0x8] sm:$0xff] %vm968, %v3423
          %3440 = vst.msk [vmem:[%s3180 + $0x10] sm:$0xff] %vm968, %v3424
          %3441 = vst.msk [vmem:[%s3180 + $0x18] sm:$0xff] %vm968, %v3425
          %3442 = vst.msk [vmem:[%s3180 + $0x20] sm:$0xff] %vm968, %v3426
          %3443 = vst.msk [vmem:[%s3180 + $0x28] sm:$0xff] %vm968, %v3427
          %3444 = vst.msk [vmem:[%s3180 + $0x30] sm:$0xff] %vm968, %v3428
          %3445 = vst.msk [vmem:[%s3180 + $0x38] sm:$0xff] %vm968, %v3429
          %3446 = vst.msk [vmem:[%s3180 + $0x40] sm:$0xff] %vm968, %v3430
          %3447 = vst.msk [vmem:[%s3180 + $0x48] sm:$0xff] %vm968, %v3431
          %3448 = vst.msk [vmem:[%s3180 + $0x50] sm:$0xff] %vm968, %v3432
          %3449 = vst.msk [vmem:[%s3180 + $0x58] sm:$0xff] %vm968, %v3433
          %3450 = vst.msk [vmem:[%s3180 + $0x60] sm:$0xff] %vm968, %v3434
          %3451 = vst.msk [vmem:[%s3180 + $0x68] sm:$0xff] %vm968, %v3435
          %3452 = vst.msk [vmem:[%s3180 + $0x70] sm:$0xff] %vm968, %v3436
          %3453 = vst.msk [vmem:[%s3180 + $0x78] sm:$0xff] %vm968, %v3437
          %3454 = vst.msk [vmem:[%s2842] sm:$0xff] %vm1466, %v2891
          %3455 = vst.msk [vmem:[%s2842 + $0x8] sm:$0xff] %vm1466, %v2892
          %3456 = vst.msk [vmem:[%s2842 + $0x10] sm:$0xff] %vm1466, %v2893
          %3457 = vst.msk [vmem:[%s2842 + $0x18] sm:$0xff] %vm1466, %v2894
          %3458 = vst.msk [vmem:[%s2842 + $0x20] sm:$0xff] %vm1466, %v2895
          %3459 = vst.msk [vmem:[%s2842 + $0x28] sm:$0xff] %vm1466, %v2896
          %3460 = vst.msk [vmem:[%s2842 + $0x30] sm:$0xff] %vm1466, %v2897
          %3461 = vst.msk [vmem:[%s2842 + $0x38] sm:$0xff] %vm1466, %v2898
          %3462 = vst.msk [vmem:[%s2842 + $0x40] sm:$0xff] %vm1466, %v2899
          %3463 = vst.msk [vmem:[%s2842 + $0x48] sm:$0xff] %vm1466, %v2900
          %3464 = vst.msk [vmem:[%s2842 + $0x50] sm:$0xff] %vm1466, %v2901
          %3465 = vst.msk [vmem:[%s2842 + $0x58] sm:$0xff] %vm1466, %v2902
          %3466 = vst.msk [vmem:[%s2842 + $0x60] sm:$0xff] %vm1466, %v2903
          %3467 = vst.msk [vmem:[%s2842 + $0x68] sm:$0xff] %vm1466, %v2904
          %3468 = vst.msk [vmem:[%s2842 + $0x70] sm:$0xff] %vm1466, %v2905
          %3469 = vst.msk [vmem:[%s2842 + $0x78] sm:$0xff] %vm1466, %v2906
          %3470 = vrot.lane.b32.xlu0 %v920, 32
          %v3471 = vpop.permute.xlu0 %3470
          %3472 = vrot.lane.b32.xlu0 %v921, 32
          %v3473 = vpop.permute.xlu0 %3472
          %3474 = vrot.lane.b32.xlu0 %v922, 32
          %v3475 = vpop.permute.xlu0 %3474
          %3476 = vrot.lane.b32.xlu0 %v923, 32
          %v3477 = vpop.permute.xlu0 %3476
          %3478 = vrot.lane.b32.xlu0 %v924, 32
          %v3479 = vpop.permute.xlu0 %3478
          %3480 = vrot.lane.b32.xlu0 %v925, 32
          %v3481 = vpop.permute.xlu0 %3480
          %3482 = vrot.lane.b32.xlu0 %v926, 32
          %v3483 = vpop.permute.xlu0 %3482
          %3484 = vrot.lane.b32.xlu0 %v927, 32
          %v3485 = vpop.permute.xlu0 %3484
          %3486 = vrot.lane.b32.xlu0 %v960, 32
          %v3487 = vpop.permute.xlu0 %3486
          %3488 = vrot.lane.b32.xlu0 %v961, 32
          %v3489 = vpop.permute.xlu0 %3488
          %3490 = vrot.lane.b32.xlu0 %v962, 32
          %v3491 = vpop.permute.xlu0 %3490
          %3492 = vrot.lane.b32.xlu0 %v963, 32
          %v3493 = vpop.permute.xlu0 %3492
          %3494 = vrot.lane.b32.xlu0 %v964, 32
          %v3495 = vpop.permute.xlu0 %3494
          %3496 = vrot.lane.b32.xlu0 %v965, 32
          %v3497 = vpop.permute.xlu0 %3496
          %3498 = vrot.lane.b32.xlu0 %v966, 32
          %v3499 = vpop.permute.xlu0 %3498
          %3500 = vrot.lane.b32.xlu0 %v967, 32
          %v3501 = vpop.permute.xlu0 %3500
          %v3503 = vsel %vm968, %v3471, 0
          %v3506 = vsel %vm968, %v3473, 0
          %v3509 = vsel %vm968, %v3475, 0
          %v3512 = vsel %vm968, %v3477, 0
          %v3515 = vsel %vm968, %v3479, 0
          %v3518 = vsel %vm968, %v3481, 0
          %v3521 = vsel %vm968, %v3483, 0
          %v3524 = vsel %vm968, %v3485, 0
          %v3527 = vsel %vm968, %v3487, 0
          %v3530 = vsel %vm968, %v3489, 0
          %v3533 = vsel %vm968, %v3491, 0
          %v3536 = vsel %vm968, %v3493, 0
          %v3539 = vsel %vm968, %v3495, 0
          %v3542 = vsel %vm968, %v3497, 0
          %v3545 = vsel %vm968, %v3499, 0
          %v3548 = vsel %vm968, %v3501, 0
          %3550 = vmatprep.subr.bf16.mxu0 0
          %3551 = vmatpush1.bf16.xpose.msra.mxu0 %v3527
          %3552 = vmatprep.subr.bf16.mxu0 0
          %3553 = vmatpush1.bf16.xpose.msra.mxu0 %v3530
          %3554 = vmatprep.subr.bf16.mxu0 0
          %3555 = vmatpush1.bf16.xpose.msra.mxu0 %v3533
          %3556 = vmatprep.subr.bf16.mxu0 0
          %3557 = vmatpush1.bf16.xpose.msra.mxu0 %v3536
          %3558 = vmatprep.subr.bf16.mxu0 0
          %3559 = vmatpush1.bf16.xpose.msra.mxu0 %v3539
          %3560 = vmatprep.subr.bf16.mxu0 0
          %3561 = vmatpush1.bf16.xpose.msra.mxu0 %v3542
          %3562 = vmatprep.subr.bf16.mxu0 0
          %3563 = vmatpush1.bf16.xpose.msra.mxu0 %v3545
          %3564 = vmatprep.subr.bf16.mxu0 0
          %3565 = vmatpush1.bf16.xpose.msra.mxu0 %v3548
          %3566 = vmatprep.subr.bf16.mxu0 0
          %3567 = vmatpush1.bf16.xpose.msra.mxu0 0
          %3568 = vmatprep.subr.bf16.mxu0 0
          %3569 = vmatpush1.bf16.xpose.msra.mxu0 0
          %3570 = vmatprep.subr.bf16.mxu0 0
          %3571 = vmatpush1.bf16.xpose.msra.mxu0 0
          %3572 = vmatprep.subr.bf16.mxu0 0
          %3573 = vmatpush1.bf16.xpose.msra.mxu0 0
          %3574 = vmatprep.subr.bf16.mxu0 0
          %3575 = vmatpush1.bf16.xpose.msra.mxu0 0
          %3576 = vmatprep.subr.bf16.mxu0 0
          %3577 = vmatpush1.bf16.xpose.msra.mxu0 0
          %3578 = vmatprep.subr.bf16.mxu0 0
          %3579 = vmatpush1.bf16.xpose.msra.mxu0 0
          %3580 = vmatprep.subr.bf16.mxu0 0
          %3581 = vmatpush1.bf16.xpose.msra.mxu0 0
          %3582 = vmatprep.mubr.bf16.mxu0 0
          %3583 = vmatmul.mubr.bf16.gmra.mrb[0].mxu0 %v3503
          %v3584 = vpop.f32.mrb[0].mxu0
          %v3585 = vadd.f32 0.0, %v3584
          %v3586 = vpop.f32.mrb[0].mxu0
          %v3587 = vpop.f32.mrb[0].mxu0
          %v3588 = vadd.f32 0.0, %v3587
          %v3589 = vpop.f32.mrb[0].mxu0
          %3590 = vmatprep.mubr.bf16.mxu0 0
          %3591 = vmatmul.mubr.bf16.gmra.mrb[0].mxu0 %v3506
          %v3592 = vpop.f32.mrb[0].mxu0
          %v3593 = vadd.f32 0.0, %v3592
          %v3594 = vpop.f32.mrb[0].mxu0
          %v3595 = vpop.f32.mrb[0].mxu0
          %v3596 = vadd.f32 0.0, %v3595
          %v3597 = vpop.f32.mrb[0].mxu0
          %3598 = vmatprep.mubr.bf16.mxu0 0
          %3599 = vmatmul.mubr.bf16.gmra.mrb[0].mxu0 %v3509
          %v3600 = vpop.f32.mrb[0].mxu0
          %v3601 = vadd.f32 0.0, %v3600
          %v3602 = vpop.f32.mrb[0].mxu0
          %v3603 = vpop.f32.mrb[0].mxu0
          %v3604 = vadd.f32 0.0, %v3603
          %v3605 = vpop.f32.mrb[0].mxu0
          %3606 = vmatprep.mubr.bf16.mxu0 0
          %3607 = vmatmul.mubr.bf16.gmra.mrb[0].mxu0 %v3512
          %v3608 = vpop.f32.mrb[0].mxu0
          %v3609 = vadd.f32 0.0, %v3608
          %v3610 = vpop.f32.mrb[0].mxu0
          %v3611 = vpop.f32.mrb[0].mxu0
          %v3612 = vadd.f32 0.0, %v3611
          %v3613 = vpop.f32.mrb[0].mxu0
          %3614 = vmatprep.mubr.bf16.mxu0 0
          %3615 = vmatmul.mubr.bf16.gmra.mrb[0].mxu0 %v3515
          %v3616 = vpop.f32.mrb[0].mxu0
          %v3617 = vadd.f32 0.0, %v3616
          %v3618 = vpop.f32.mrb[0].mxu0
          %v3619 = vpop.f32.mrb[0].mxu0
          %v3620 = vadd.f32 0.0, %v3619
          %v3621 = vpop.f32.mrb[0].mxu0
          %3622 = vmatprep.mubr.bf16.mxu0 0
          %3623 = vmatmul.mubr.bf16.gmra.mrb[0].mxu0 %v3518
          %v3624 = vpop.f32.mrb[0].mxu0
          %v3625 = vadd.f32 0.0, %v3624
          %v3626 = vpop.f32.mrb[0].mxu0
          %v3627 = vpop.f32.mrb[0].mxu0
          %v3628 = vadd.f32 0.0, %v3627
          %v3629 = vpop.f32.mrb[0].mxu0
          %3630 = vmatprep.mubr.bf16.mxu0 0
          %3631 = vmatmul.mubr.bf16.gmra.mrb[0].mxu0 %v3521
          %v3632 = vpop.f32.mrb[0].mxu0
          %v3633 = vadd.f32 0.0, %v3632
          %v3634 = vpop.f32.mrb[0].mxu0
          %v3635 = vpop.f32.mrb[0].mxu0
          %v3636 = vadd.f32 0.0, %v3635
          %v3637 = vpop.f32.mrb[0].mxu0
          %3638 = vmatprep.mubr.bf16.mxu0 0
          %3639 = vmatmul.mubr.bf16.gmra.mrb[0].mxu0 %v3524
          %v3640 = vpop.f32.mrb[0].mxu0
          %v3641 = vadd.f32 0.0, %v3640
          %v3642 = vpop.f32.mrb[0].mxu0
          %v3643 = vpop.f32.mrb[0].mxu0
          %v3644 = vadd.f32 0.0, %v3643
          %v3645 = vpop.f32.mrb[0].mxu0
          %3646 = vdwg.mxu0
          %v3647 = vmul.f32 %v3585, 0.17677669
          %v3648 = vmul.f32 %v3588, 0.17677669
          %v3649 = vmul.f32 %v3593, 0.17677669
          %v3650 = vmul.f32 %v3596, 0.17677669
          %v3651 = vmul.f32 %v3601, 0.17677669
          %v3652 = vmul.f32 %v3604, 0.17677669
          %v3653 = vmul.f32 %v3609, 0.17677669
          %v3654 = vmul.f32 %v3612, 0.17677669
          %v3655 = vmul.f32 %v3617, 0.17677669
          %v3656 = vmul.f32 %v3620, 0.17677669
          %v3657 = vmul.f32 %v3625, 0.17677669
          %v3658 = vmul.f32 %v3628, 0.17677669
          %v3659 = vmul.f32 %v3633, 0.17677669
          %v3660 = vmul.f32 %v3636, 0.17677669
          %v3661 = vmul.f32 %v3641, 0.17677669
          %v3662 = vmul.f32 %v3644, 0.17677669
          %v3663 = vsel %vm872, %v3647, -3.4028235e+38
          %v3664 = vsel %vm873, %v3648, -3.4028235e+38
          %v3665 = vsel %vm874, %v3649, -3.4028235e+38
          %v3666 = vsel %vm875, %v3650, -3.4028235e+38
          %v3667 = vsel %vm876, %v3651, -3.4028235e+38
          %v3668 = vsel %vm877, %v3652, -3.4028235e+38
          %v3669 = vsel %vm878, %v3653, -3.4028235e+38
          %v3670 = vsel %vm879, %v3654, -3.4028235e+38
          %v3671 = vsel %vm880, %v3655, -3.4028235e+38
          %v3672 = vsel %vm881, %v3656, -3.4028235e+38
          %v3673 = vsel %vm882, %v3657, -3.4028235e+38
          %v3674 = vsel %vm883, %v3658, -3.4028235e+38
          %v3675 = vsel %vm884, %v3659, -3.4028235e+38
          %v3676 = vsel %vm885, %v3660, -3.4028235e+38
          %v3677 = vsel %vm886, %v3661, -3.4028235e+38
          %v3678 = vsel %vm887, %v3662, -3.4028235e+38
          %s3679 = scalar_lea.vmem [#allocation2], 384
          %v3680 = vld [vmem:[%s3679] sm:$0xff]
          %v3681 = vld [vmem:[%s3679 + $0x8] sm:$0xff]
          %v3682 = vld [vmem:[%s3679 + $0x10] sm:$0xff]
          %v3683 = vld [vmem:[%s3679 + $0x18] sm:$0xff]
          %v3684 = vld [vmem:[%s3679 + $0x20] sm:$0xff]
          %v3685 = vld [vmem:[%s3679 + $0x28] sm:$0xff]
          %v3686 = vld [vmem:[%s3679 + $0x30] sm:$0xff]
          %v3687 = vld [vmem:[%s3679 + $0x38] sm:$0xff]
          %v3688 = vld [vmem:[%s3679 + $0x40] sm:$0xff]
          %v3689 = vld [vmem:[%s3679 + $0x48] sm:$0xff]
          %v3690 = vld [vmem:[%s3679 + $0x50] sm:$0xff]
          %v3691 = vld [vmem:[%s3679 + $0x58] sm:$0xff]
          %v3692 = vld [vmem:[%s3679 + $0x60] sm:$0xff]
          %v3693 = vld [vmem:[%s3679 + $0x68] sm:$0xff]
          %v3694 = vld [vmem:[%s3679 + $0x70] sm:$0xff]
          %v3695 = vld [vmem:[%s3679 + $0x78] sm:$0xff]
          %3696 = vmax.xlane.f32.xlu0 %v3663
          %v3697 = vpop.xlane.xlu0 %3696
          %3698 = vmax.xlane.f32.xlu0 %v3664
          %v3699 = vpop.xlane.xlu0 %3698
          %3700 = vmax.xlane.f32.xlu0 %v3665
          %v3701 = vpop.xlane.xlu0 %3700
          %3702 = vmax.xlane.f32.xlu0 %v3666
          %v3703 = vpop.xlane.xlu0 %3702
          %3704 = vmax.xlane.f32.xlu0 %v3667
          %v3705 = vpop.xlane.xlu0 %3704
          %3706 = vmax.xlane.f32.xlu0 %v3668
          %v3707 = vpop.xlane.xlu0 %3706
          %3708 = vmax.xlane.f32.xlu0 %v3669
          %v3709 = vpop.xlane.xlu0 %3708
          %3710 = vmax.xlane.f32.xlu0 %v3670
          %v3711 = vpop.xlane.xlu0 %3710
          %3712 = vmax.xlane.f32.xlu0 %v3671
          %v3713 = vpop.xlane.xlu0 %3712
          %3714 = vmax.xlane.f32.xlu0 %v3672
          %v3715 = vpop.xlane.xlu0 %3714
          %3716 = vmax.xlane.f32.xlu0 %v3673
          %v3717 = vpop.xlane.xlu0 %3716
          %3718 = vmax.xlane.f32.xlu0 %v3674
          %v3719 = vpop.xlane.xlu0 %3718
          %3720 = vmax.xlane.f32.xlu0 %v3675
          %v3721 = vpop.xlane.xlu0 %3720
          %3722 = vmax.xlane.f32.xlu0 %v3676
          %v3723 = vpop.xlane.xlu0 %3722
          %3724 = vmax.xlane.f32.xlu0 %v3677
          %v3725 = vpop.xlane.xlu0 %3724
          %3726 = vmax.xlane.f32.xlu0 %v3678
          %v3727 = vpop.xlane.xlu0 %3726
          %v3728 = vmax.f32 %v3680, %v3697
          %v3729 = vmax.f32 %v3681, %v3699
          %v3730 = vmax.f32 %v3682, %v3701
          %v3731 = vmax.f32 %v3683, %v3703
          %v3732 = vmax.f32 %v3684, %v3705
          %v3733 = vmax.f32 %v3685, %v3707
          %v3734 = vmax.f32 %v3686, %v3709
          %v3735 = vmax.f32 %v3687, %v3711
          %v3736 = vmax.f32 %v3688, %v3713
          %v3737 = vmax.f32 %v3689, %v3715
          %v3738 = vmax.f32 %v3690, %v3717
          %v3739 = vmax.f32 %v3691, %v3719
          %v3740 = vmax.f32 %v3692, %v3721
          %v3741 = vmax.f32 %v3693, %v3723
          %v3742 = vmax.f32 %v3694, %v3725
          %v3743 = vmax.f32 %v3695, %v3727
          %v3744 = vsub.f32 %v3680, %v3728
          %v3745 = vsub.f32 %v3681, %v3729
          %v3746 = vsub.f32 %v3682, %v3730
          %v3747 = vsub.f32 %v3683, %v3731
          %v3748 = vsub.f32 %v3684, %v3732
          %v3749 = vsub.f32 %v3685, %v3733
          %v3750 = vsub.f32 %v3686, %v3734
          %v3751 = vsub.f32 %v3687, %v3735
          %v3752 = vsub.f32 %v3688, %v3736
          %v3753 = vsub.f32 %v3689, %v3737
          %v3754 = vsub.f32 %v3690, %v3738
          %v3755 = vsub.f32 %v3691, %v3739
          %v3756 = vsub.f32 %v3692, %v3740
          %v3757 = vsub.f32 %v3693, %v3741
          %v3758 = vsub.f32 %v3694, %v3742
          %v3759 = vsub.f32 %v3695, %v3743
          %v3760 = vmul.f32 %v3744, 1.442695
          %v3761 = vpow.pop %v3760
          %v3762 = vmul.f32 %v3745, 1.442695
          %v3763 = vpow.pop %v3762
          %v3764 = vmul.f32 %v3746, 1.442695
          %v3765 = vpow.pop %v3764
          %v3766 = vmul.f32 %v3747, 1.442695
          %v3767 = vpow.pop %v3766
          %v3768 = vmul.f32 %v3748, 1.442695
          %v3769 = vpow.pop %v3768
          %v3770 = vmul.f32 %v3749, 1.442695
          %v3771 = vpow.pop %v3770
          %v3772 = vmul.f32 %v3750, 1.442695
          %v3773 = vpow.pop %v3772
          %v3774 = vmul.f32 %v3751, 1.442695
          %v3775 = vpow.pop %v3774
          %v3776 = vmul.f32 %v3752, 1.442695
          %v3777 = vpow.pop %v3776
          %v3778 = vmul.f32 %v3753, 1.442695
          %v3779 = vpow.pop %v3778
          %v3780 = vmul.f32 %v3754, 1.442695
          %v3781 = vpow.pop %v3780
          %v3782 = vmul.f32 %v3755, 1.442695
          %v3783 = vpow.pop %v3782
          %v3784 = vmul.f32 %v3756, 1.442695
          %v3785 = vpow.pop %v3784
          %v3786 = vmul.f32 %v3757, 1.442695
          %v3787 = vpow.pop %v3786
          %v3788 = vmul.f32 %v3758, 1.442695
          %v3789 = vpow.pop %v3788
          %v3790 = vmul.f32 %v3759, 1.442695
          %v3791 = vpow.pop %v3790
          %3793 = vset.pattern.permute.xlu0 0
          %3794 = vperm.xlu0 %3793, %v3728
          %v3795 = vpop.permute.xlu0 %3794
          %3798 = vset.pattern.permute.xlu0 0
          %3799 = vperm.xlu0 %3798, %v3729
          %v3800 = vpop.permute.xlu0 %3799
          %3803 = vset.pattern.permute.xlu0 0
          %3804 = vperm.xlu0 %3803, %v3730
          %v3805 = vpop.permute.xlu0 %3804
          %3808 = vset.pattern.permute.xlu0 0
          %3809 = vperm.xlu0 %3808, %v3731
          %v3810 = vpop.permute.xlu0 %3809
          %3813 = vset.pattern.permute.xlu0 0
          %3814 = vperm.xlu0 %3813, %v3732
          %v3815 = vpop.permute.xlu0 %3814
          %3818 = vset.pattern.permute.xlu0 0
          %3819 = vperm.xlu0 %3818, %v3733
          %v3820 = vpop.permute.xlu0 %3819
          %3823 = vset.pattern.permute.xlu0 0
          %3824 = vperm.xlu0 %3823, %v3734
          %v3825 = vpop.permute.xlu0 %3824
          %3828 = vset.pattern.permute.xlu0 0
          %3829 = vperm.xlu0 %3828, %v3735
          %v3830 = vpop.permute.xlu0 %3829
          %3833 = vset.pattern.permute.xlu0 0
          %3834 = vperm.xlu0 %3833, %v3736
          %v3835 = vpop.permute.xlu0 %3834
          %3838 = vset.pattern.permute.xlu0 0
          %3839 = vperm.xlu0 %3838, %v3737
          %v3840 = vpop.permute.xlu0 %3839
          %3843 = vset.pattern.permute.xlu0 0
          %3844 = vperm.xlu0 %3843, %v3738
          %v3845 = vpop.permute.xlu0 %3844
          %3848 = vset.pattern.permute.xlu0 0
          %3849 = vperm.xlu0 %3848, %v3739
          %v3850 = vpop.permute.xlu0 %3849
          %3853 = vset.pattern.permute.xlu0 0
          %3854 = vperm.xlu0 %3853, %v3740
          %v3855 = vpop.permute.xlu0 %3854
          %3858 = vset.pattern.permute.xlu0 0
          %3859 = vperm.xlu0 %3858, %v3741
          %v3860 = vpop.permute.xlu0 %3859
          %3863 = vset.pattern.permute.xlu0 0
          %3864 = vperm.xlu0 %3863, %v3742
          %v3865 = vpop.permute.xlu0 %3864
          %3868 = vset.pattern.permute.xlu0 0
          %3869 = vperm.xlu0 %3868, %v3743
          %v3870 = vpop.permute.xlu0 %3869
          %v3872 = vsub.f32 %v3663, %v3795
          %v3873 = vsub.f32 %v3664, %v3800
          %v3874 = vsub.f32 %v3665, %v3805
          %v3875 = vsub.f32 %v3666, %v3810
          %v3876 = vsub.f32 %v3667, %v3815
          %v3877 = vsub.f32 %v3668, %v3820
          %v3878 = vsub.f32 %v3669, %v3825
          %v3879 = vsub.f32 %v3670, %v3830
          %v3880 = vsub.f32 %v3671, %v3835
          %v3881 = vsub.f32 %v3672, %v3840
          %v3882 = vsub.f32 %v3673, %v3845
          %v3883 = vsub.f32 %v3674, %v3850
          %v3884 = vsub.f32 %v3675, %v3855
          %v3885 = vsub.f32 %v3676, %v3860
          %v3886 = vsub.f32 %v3677, %v3865
          %v3887 = vsub.f32 %v3678, %v3870
          %v3888 = vmul.f32 %v3872, 1.442695
          %v3889 = vpow.pop %v3888
          %v3890 = vmul.f32 %v3873, 1.442695
          %v3891 = vpow.pop %v3890
          %v3892 = vmul.f32 %v3874, 1.442695
          %v3893 = vpow.pop %v3892
          %v3894 = vmul.f32 %v3875, 1.442695
          %v3895 = vpow.pop %v3894
          %v3896 = vmul.f32 %v3876, 1.442695
          %v3897 = vpow.pop %v3896
          %v3898 = vmul.f32 %v3877, 1.442695
          %v3899 = vpow.pop %v3898
          %v3900 = vmul.f32 %v3878, 1.442695
          %v3901 = vpow.pop %v3900
          %v3902 = vmul.f32 %v3879, 1.442695
          %v3903 = vpow.pop %v3902
          %v3904 = vmul.f32 %v3880, 1.442695
          %v3905 = vpow.pop %v3904
          %v3906 = vmul.f32 %v3881, 1.442695
          %v3907 = vpow.pop %v3906
          %v3908 = vmul.f32 %v3882, 1.442695
          %v3909 = vpow.pop %v3908
          %v3910 = vmul.f32 %v3883, 1.442695
          %v3911 = vpow.pop %v3910
          %v3912 = vmul.f32 %v3884, 1.442695
          %v3913 = vpow.pop %v3912
          %v3914 = vmul.f32 %v3885, 1.442695
          %v3915 = vpow.pop %v3914
          %v3916 = vmul.f32 %v3886, 1.442695
          %v3917 = vpow.pop %v3916
          %v3918 = vmul.f32 %v3887, 1.442695
          %v3919 = vpow.pop %v3918
          %s3920 = scalar_lea.vmem [#allocation3], 384
          %v3921 = vld [vmem:[%s3920] sm:$0xff]
          %v3922 = vld [vmem:[%s3920 + $0x8] sm:$0xff]
          %v3923 = vld [vmem:[%s3920 + $0x10] sm:$0xff]
          %v3924 = vld [vmem:[%s3920 + $0x18] sm:$0xff]
          %v3925 = vld [vmem:[%s3920 + $0x20] sm:$0xff]
          %v3926 = vld [vmem:[%s3920 + $0x28] sm:$0xff]
          %v3927 = vld [vmem:[%s3920 + $0x30] sm:$0xff]
          %v3928 = vld [vmem:[%s3920 + $0x38] sm:$0xff]
          %v3929 = vld [vmem:[%s3920 + $0x40] sm:$0xff]
          %v3930 = vld [vmem:[%s3920 + $0x48] sm:$0xff]
          %v3931 = vld [vmem:[%s3920 + $0x50] sm:$0xff]
          %v3932 = vld [vmem:[%s3920 + $0x58] sm:$0xff]
          %v3933 = vld [vmem:[%s3920 + $0x60] sm:$0xff]
          %v3934 = vld [vmem:[%s3920 + $0x68] sm:$0xff]
          %v3935 = vld [vmem:[%s3920 + $0x70] sm:$0xff]
          %v3936 = vld [vmem:[%s3920 + $0x78] sm:$0xff]
          %v3937 = vmul.f32 %v3761, %v3921
          %v3938 = vmul.f32 %v3763, %v3922
          %v3939 = vmul.f32 %v3765, %v3923
          %v3940 = vmul.f32 %v3767, %v3924
          %v3941 = vmul.f32 %v3769, %v3925
          %v3942 = vmul.f32 %v3771, %v3926
          %v3943 = vmul.f32 %v3773, %v3927
          %v3944 = vmul.f32 %v3775, %v3928
          %v3945 = vmul.f32 %v3777, %v3929
          %v3946 = vmul.f32 %v3779, %v3930
          %v3947 = vmul.f32 %v3781, %v3931
          %v3948 = vmul.f32 %v3783, %v3932
          %v3949 = vmul.f32 %v3785, %v3933
          %v3950 = vmul.f32 %v3787, %v3934
          %v3951 = vmul.f32 %v3789, %v3935
          %v3952 = vmul.f32 %v3791, %v3936
          %3953 = vadd.xlane.f32.xlu0 %v3889
          %v3954 = vpop.xlane.xlu0 %3953
          %3955 = vadd.xlane.f32.xlu0 %v3891
          %v3956 = vpop.xlane.xlu0 %3955
          %3957 = vadd.xlane.f32.xlu0 %v3893
          %v3958 = vpop.xlane.xlu0 %3957
          %3959 = vadd.xlane.f32.xlu0 %v3895
          %v3960 = vpop.xlane.xlu0 %3959
          %3961 = vadd.xlane.f32.xlu0 %v3897
          %v3962 = vpop.xlane.xlu0 %3961
          %3963 = vadd.xlane.f32.xlu0 %v3899
          %v3964 = vpop.xlane.xlu0 %3963
          %3965 = vadd.xlane.f32.xlu0 %v3901
          %v3966 = vpop.xlane.xlu0 %3965
          %3967 = vadd.xlane.f32.xlu0 %v3903
          %v3968 = vpop.xlane.xlu0 %3967
          %3969 = vadd.xlane.f32.xlu0 %v3905
          %v3970 = vpop.xlane.xlu0 %3969
          %3971 = vadd.xlane.f32.xlu0 %v3907
          %v3972 = vpop.xlane.xlu0 %3971
          %3973 = vadd.xlane.f32.xlu0 %v3909
          %v3974 = vpop.xlane.xlu0 %3973
          %3975 = vadd.xlane.f32.xlu0 %v3911
          %v3976 = vpop.xlane.xlu0 %3975
          %3977 = vadd.xlane.f32.xlu0 %v3913
          %v3978 = vpop.xlane.xlu0 %3977
          %3979 = vadd.xlane.f32.xlu0 %v3915
          %v3980 = vpop.xlane.xlu0 %3979
          %3981 = vadd.xlane.f32.xlu0 %v3917
          %v3982 = vpop.xlane.xlu0 %3981
          %3983 = vadd.xlane.f32.xlu0 %v3919
          %v3984 = vpop.xlane.xlu0 %3983
          %v3985 = vadd.f32 %v3937, %v3954
          %v3986 = vadd.f32 %v3938, %v3956
          %v3987 = vadd.f32 %v3939, %v3958
          %v3988 = vadd.f32 %v3940, %v3960
          %v3989 = vadd.f32 %v3941, %v3962
          %v3990 = vadd.f32 %v3942, %v3964
          %v3991 = vadd.f32 %v3943, %v3966
          %v3992 = vadd.f32 %v3944, %v3968
          %v3993 = vadd.f32 %v3945, %v3970
          %v3994 = vadd.f32 %v3946, %v3972
          %v3995 = vadd.f32 %v3947, %v3974
          %v3996 = vadd.f32 %v3948, %v3976
          %v3997 = vadd.f32 %v3949, %v3978
          %v3998 = vadd.f32 %v3950, %v3980
          %v3999 = vadd.f32 %v3951, %v3982
          %v4000 = vadd.f32 %v3952, %v3984
          %4001 = vst.msk [vmem:[%s3920] sm:$0xff] %vm1466, %v3985
          %4002 = vst.msk [vmem:[%s3920 + $0x8] sm:$0xff] %vm1466, %v3986
          %4003 = vst.msk [vmem:[%s3920 + $0x10] sm:$0xff] %vm1466, %v3987
          %4004 = vst.msk [vmem:[%s3920 + $0x18] sm:$0xff] %vm1466, %v3988
          %4005 = vst.msk [vmem:[%s3920 + $0x20] sm:$0xff] %vm1466, %v3989
          %4006 = vst.msk [vmem:[%s3920 + $0x28] sm:$0xff] %vm1466, %v3990
          %4007 = vst.msk [vmem:[%s3920 + $0x30] sm:$0xff] %vm1466, %v3991
          %4008 = vst.msk [vmem:[%s3920 + $0x38] sm:$0xff] %vm1466, %v3992
          %4009 = vst.msk [vmem:[%s3920 + $0x40] sm:$0xff] %vm1466, %v3993
          %4010 = vst.msk [vmem:[%s3920 + $0x48] sm:$0xff] %vm1466, %v3994
          %4011 = vst.msk [vmem:[%s3920 + $0x50] sm:$0xff] %vm1466, %v3995
          %4012 = vst.msk [vmem:[%s3920 + $0x58] sm:$0xff] %vm1466, %v3996
          %4013 = vst.msk [vmem:[%s3920 + $0x60] sm:$0xff] %vm1466, %v3997
          %4014 = vst.msk [vmem:[%s3920 + $0x68] sm:$0xff] %vm1466, %v3998
          %4015 = vst.msk [vmem:[%s3920 + $0x70] sm:$0xff] %vm1466, %v3999
          %4016 = vst.msk [vmem:[%s3920 + $0x78] sm:$0xff] %vm1466, %v4000
          %s4017 = scalar_lea.vmem [#allocation4], 384
          %v4018 = vld [vmem:[%s4017] sm:$0xff]
          %v4019 = vld [vmem:[%s4017 + $0x8] sm:$0xff]
          %v4020 = vld [vmem:[%s4017 + $0x10] sm:$0xff]
          %v4021 = vld [vmem:[%s4017 + $0x18] sm:$0xff]
          %v4022 = vld [vmem:[%s4017 + $0x20] sm:$0xff]
          %v4023 = vld [vmem:[%s4017 + $0x28] sm:$0xff]
          %v4024 = vld [vmem:[%s4017 + $0x30] sm:$0xff]
          %v4025 = vld [vmem:[%s4017 + $0x38] sm:$0xff]
          %v4026 = vld [vmem:[%s4017 + $0x40] sm:$0xff]
          %v4027 = vld [vmem:[%s4017 + $0x48] sm:$0xff]
          %v4028 = vld [vmem:[%s4017 + $0x50] sm:$0xff]
          %v4029 = vld [vmem:[%s4017 + $0x58] sm:$0xff]
          %v4030 = vld [vmem:[%s4017 + $0x60] sm:$0xff]
          %v4031 = vld [vmem:[%s4017 + $0x68] sm:$0xff]
          %v4032 = vld [vmem:[%s4017 + $0x70] sm:$0xff]
          %v4033 = vld [vmem:[%s4017 + $0x78] sm:$0xff]
          %4035 = vset.pattern.permute.xlu0 0
          %4036 = vperm.xlu0 %4035, %v3761
          %v4037 = vpop.permute.xlu0 %4036
          %4040 = vset.pattern.permute.xlu0 0
          %4041 = vperm.xlu0 %4040, %v3763
          %v4042 = vpop.permute.xlu0 %4041
          %4045 = vset.pattern.permute.xlu0 0
          %4046 = vperm.xlu0 %4045, %v3765
          %v4047 = vpop.permute.xlu0 %4046
          %4050 = vset.pattern.permute.xlu0 0
          %4051 = vperm.xlu0 %4050, %v3767
          %v4052 = vpop.permute.xlu0 %4051
          %4055 = vset.pattern.permute.xlu0 0
          %4056 = vperm.xlu0 %4055, %v3769
          %v4057 = vpop.permute.xlu0 %4056
          %4060 = vset.pattern.permute.xlu0 0
          %4061 = vperm.xlu0 %4060, %v3771
          %v4062 = vpop.permute.xlu0 %4061
          %4065 = vset.pattern.permute.xlu0 0
          %4066 = vperm.xlu0 %4065, %v3773
          %v4067 = vpop.permute.xlu0 %4066
          %4070 = vset.pattern.permute.xlu0 0
          %4071 = vperm.xlu0 %4070, %v3775
          %v4072 = vpop.permute.xlu0 %4071
          %4075 = vset.pattern.permute.xlu0 0
          %4076 = vperm.xlu0 %4075, %v3777
          %v4077 = vpop.permute.xlu0 %4076
          %4080 = vset.pattern.permute.xlu0 0
          %4081 = vperm.xlu0 %4080, %v3779
          %v4082 = vpop.permute.xlu0 %4081
          %4085 = vset.pattern.permute.xlu0 0
          %4086 = vperm.xlu0 %4085, %v3781
          %v4087 = vpop.permute.xlu0 %4086
          %4090 = vset.pattern.permute.xlu0 0
          %4091 = vperm.xlu0 %4090, %v3783
          %v4092 = vpop.permute.xlu0 %4091
          %4095 = vset.pattern.permute.xlu0 0
          %4096 = vperm.xlu0 %4095, %v3785
          %v4097 = vpop.permute.xlu0 %4096
          %4100 = vset.pattern.permute.xlu0 0
          %4101 = vperm.xlu0 %4100, %v3787
          %v4102 = vpop.permute.xlu0 %4101
          %4105 = vset.pattern.permute.xlu0 0
          %4106 = vperm.xlu0 %4105, %v3789
          %v4107 = vpop.permute.xlu0 %4106
          %4110 = vset.pattern.permute.xlu0 0
          %4111 = vperm.xlu0 %4110, %v3791
          %v4112 = vpop.permute.xlu0 %4111
          %v4114 = vmul.f32 %v4037, %v4018
          %v4115 = vmul.f32 %v4042, %v4019
          %v4116 = vmul.f32 %v4047, %v4020
          %v4117 = vmul.f32 %v4052, %v4021
          %v4118 = vmul.f32 %v4057, %v4022
          %v4119 = vmul.f32 %v4062, %v4023
          %v4120 = vmul.f32 %v4067, %v4024
          %v4121 = vmul.f32 %v4072, %v4025
          %v4122 = vmul.f32 %v4077, %v4026
          %v4123 = vmul.f32 %v4082, %v4027
          %v4124 = vmul.f32 %v4087, %v4028
          %v4125 = vmul.f32 %v4092, %v4029
          %v4126 = vmul.f32 %v4097, %v4030
          %v4127 = vmul.f32 %v4102, %v4031
          %v4128 = vmul.f32 %v4107, %v4032
          %v4129 = vmul.f32 %v4112, %v4033
          %v4130 = vpack.c.bf16 %v3891, %v3889
          %v4131 = vpack.c.bf16 %v3895, %v3893
          %v4132 = vpack.c.bf16 %v3899, %v3897
          %v4133 = vpack.c.bf16 %v3903, %v3901
          %v4134 = vpack.c.bf16 %v3907, %v3905
          %v4135 = vpack.c.bf16 %v3911, %v3909
          %v4136 = vpack.c.bf16 %v3915, %v3913
          %v4137 = vpack.c.bf16 %v3919, %v3917
          %4138 = vrot.lane.b32.xlu0 %v1635, 32
          %v4139 = vpop.permute.xlu0 %4138
          %4140 = vrot.lane.b32.xlu0 %v1636, 32
          %v4141 = vpop.permute.xlu0 %4140
          %4142 = vrot.lane.b32.xlu0 %v1637, 32
          %v4143 = vpop.permute.xlu0 %4142
          %4144 = vrot.lane.b32.xlu0 %v1638, 32
          %v4145 = vpop.permute.xlu0 %4144
          %4146 = vrot.lane.b32.xlu0 %v1639, 32
          %v4147 = vpop.permute.xlu0 %4146
          %4148 = vrot.lane.b32.xlu0 %v1640, 32
          %v4149 = vpop.permute.xlu0 %4148
          %4150 = vrot.lane.b32.xlu0 %v1641, 32
          %v4151 = vpop.permute.xlu0 %4150
          %4152 = vrot.lane.b32.xlu0 %v1642, 32
          %v4153 = vpop.permute.xlu0 %4152
          %4162 = vmatprep.subr.bf16.mxu0 0
          %4163 = vmatpush1.bf16.msra.mxu0 %v4139
          %4164 = vmatprep.subr.bf16.mxu0 0
          %4165 = vmatpush1.bf16.msra.mxu0 %v4141
          %4166 = vmatprep.subr.bf16.mxu0 0
          %4167 = vmatpush1.bf16.msra.mxu0 %v4143
          %4168 = vmatprep.subr.bf16.mxu0 0
          %4169 = vmatpush1.bf16.msra.mxu0 %v4145
          %4170 = vmatprep.subr.bf16.mxu0 0
          %4171 = vmatpush1.bf16.msra.mxu0 %v4147
          %4172 = vmatprep.subr.bf16.mxu0 0
          %4173 = vmatpush1.bf16.msra.mxu0 %v4149
          %4174 = vmatprep.subr.bf16.mxu0 0
          %4175 = vmatpush1.bf16.msra.mxu0 %v4151
          %4176 = vmatprep.subr.bf16.mxu0 0
          %4177 = vmatpush1.bf16.msra.mxu0 %v4153
          %4178 = vmatprep.subr.bf16.mxu0 0
          %4179 = vmatpush1.bf16.msra.mxu0 0
          %4180 = vmatprep.subr.bf16.mxu0 0
          %4181 = vmatpush1.bf16.msra.mxu0 0
          %4182 = vmatprep.subr.bf16.mxu0 0
          %4183 = vmatpush1.bf16.msra.mxu0 0
          %4184 = vmatprep.subr.bf16.mxu0 0
          %4185 = vmatpush1.bf16.msra.mxu0 0
          %4186 = vmatprep.subr.bf16.mxu0 0
          %4187 = vmatpush1.bf16.msra.mxu0 0
          %4188 = vmatprep.subr.bf16.mxu0 0
          %4189 = vmatpush1.bf16.msra.mxu0 0
          %4190 = vmatprep.subr.bf16.mxu0 0
          %4191 = vmatpush1.bf16.msra.mxu0 0
          %4192 = vmatprep.subr.bf16.mxu0 0
          %4193 = vmatpush1.bf16.msra.mxu0 0
          %4194 = vmatprep.mubr.bf16.mxu0 0
          %4195 = vmatmul.mubr.bf16.gmra.mrb[0].mxu0 %v4130
          %v4196 = vpop.f32.mrb[0].mxu0
          %v4197 = vadd.f32 0.0, %v4196
          %v4198 = vpop.f32.mrb[0].mxu0
          %v4199 = vpop.f32.mrb[0].mxu0
          %v4200 = vadd.f32 0.0, %v4199
          %v4201 = vpop.f32.mrb[0].mxu0
          %4202 = vmatprep.mubr.bf16.mxu0 0
          %4203 = vmatmul.mubr.bf16.gmra.mrb[0].mxu0 %v4131
          %v4204 = vpop.f32.mrb[0].mxu0
          %v4205 = vadd.f32 0.0, %v4204
          %v4206 = vpop.f32.mrb[0].mxu0
          %v4207 = vpop.f32.mrb[0].mxu0
          %v4208 = vadd.f32 0.0, %v4207
          %v4209 = vpop.f32.mrb[0].mxu0
          %4210 = vmatprep.mubr.bf16.mxu0 0
          %4211 = vmatmul.mubr.bf16.gmra.mrb[0].mxu0 %v4132
          %v4212 = vpop.f32.mrb[0].mxu0
          %v4213 = vadd.f32 0.0, %v4212
          %v4214 = vpop.f32.mrb[0].mxu0
          %v4215 = vpop.f32.mrb[0].mxu0
          %v4216 = vadd.f32 0.0, %v4215
          %v4217 = vpop.f32.mrb[0].mxu0
          %4218 = vmatprep.mubr.bf16.mxu0 0
          %4219 = vmatmul.mubr.bf16.gmra.mrb[0].mxu0 %v4133
          %v4220 = vpop.f32.mrb[0].mxu0
          %v4221 = vadd.f32 0.0, %v4220
          %v4222 = vpop.f32.mrb[0].mxu0
          %v4223 = vpop.f32.mrb[0].mxu0
          %v4224 = vadd.f32 0.0, %v4223
          %v4225 = vpop.f32.mrb[0].mxu0
          %4226 = vmatprep.mubr.bf16.mxu0 0
          %4227 = vmatmul.mubr.bf16.gmra.mrb[0].mxu0 %v4134
          %v4228 = vpop.f32.mrb[0].mxu0
          %v4229 = vadd.f32 0.0, %v4228
          %v4230 = vpop.f32.mrb[0].mxu0
          %v4231 = vpop.f32.mrb[0].mxu0
          %v4232 = vadd.f32 0.0, %v4231
          %v4233 = vpop.f32.mrb[0].mxu0
          %4234 = vmatprep.mubr.bf16.mxu0 0
          %4235 = vmatmul.mubr.bf16.gmra.mrb[0].mxu0 %v4135
          %v4236 = vpop.f32.mrb[0].mxu0
          %v4237 = vadd.f32 0.0, %v4236
          %v4238 = vpop.f32.mrb[0].mxu0
          %v4239 = vpop.f32.mrb[0].mxu0
          %v4240 = vadd.f32 0.0, %v4239
          %v4241 = vpop.f32.mrb[0].mxu0
          %4242 = vmatprep.mubr.bf16.mxu0 0
          %4243 = vmatmul.mubr.bf16.gmra.mrb[0].mxu0 %v4136
          %v4244 = vpop.f32.mrb[0].mxu0
          %v4245 = vadd.f32 0.0, %v4244
          %v4246 = vpop.f32.mrb[0].mxu0
          %v4247 = vpop.f32.mrb[0].mxu0
          %v4248 = vadd.f32 0.0, %v4247
          %v4249 = vpop.f32.mrb[0].mxu0
          %4250 = vmatprep.mubr.bf16.mxu0 0
          %4251 = vmatmul.mubr.bf16.gmra.mrb[0].mxu0 %v4137
          %v4252 = vpop.f32.mrb[0].mxu0
          %v4253 = vadd.f32 0.0, %v4252
          %v4254 = vpop.f32.mrb[0].mxu0
          %v4255 = vpop.f32.mrb[0].mxu0
          %v4256 = vadd.f32 0.0, %v4255
          %v4257 = vpop.f32.mrb[0].mxu0
          %4258 = vdwg.mxu0
          %v4259 = vadd.f32 %v4114, %v4197
          %v4260 = vadd.f32 %v4115, %v4200
          %v4261 = vadd.f32 %v4116, %v4205
          %v4262 = vadd.f32 %v4117, %v4208
          %v4263 = vadd.f32 %v4118, %v4213
          %v4264 = vadd.f32 %v4119, %v4216
          %v4265 = vadd.f32 %v4120, %v4221
          %v4266 = vadd.f32 %v4121, %v4224
          %v4267 = vadd.f32 %v4122, %v4229
          %v4268 = vadd.f32 %v4123, %v4232
          %v4269 = vadd.f32 %v4124, %v4237
          %v4270 = vadd.f32 %v4125, %v4240
          %v4271 = vadd.f32 %v4126, %v4245
          %v4272 = vadd.f32 %v4127, %v4248
          %v4273 = vadd.f32 %v4128, %v4253
          %v4274 = vadd.f32 %v4129, %v4256
          %4275 = vst.msk [vmem:[%s4017] sm:$0xff] %vm968, %v4259
          %4276 = vst.msk [vmem:[%s4017 + $0x8] sm:$0xff] %vm968, %v4260
          %4277 = vst.msk [vmem:[%s4017 + $0x10] sm:$0xff] %vm968, %v4261
          %4278 = vst.msk [vmem:[%s4017 + $0x18] sm:$0xff] %vm968, %v4262
          %4279 = vst.msk [vmem:[%s4017 + $0x20] sm:$0xff] %vm968, %v4263
          %4280 = vst.msk [vmem:[%s4017 + $0x28] sm:$0xff] %vm968, %v4264
          %4281 = vst.msk [vmem:[%s4017 + $0x30] sm:$0xff] %vm968, %v4265
          %4282 = vst.msk [vmem:[%s4017 + $0x38] sm:$0xff] %vm968, %v4266
          %4283 = vst.msk [vmem:[%s4017 + $0x40] sm:$0xff] %vm968, %v4267
          %4284 = vst.msk [vmem:[%s4017 + $0x48] sm:$0xff] %vm968, %v4268
          %4285 = vst.msk [vmem:[%s4017 + $0x50] sm:$0xff] %vm968, %v4269
          %4286 = vst.msk [vmem:[%s4017 + $0x58] sm:$0xff] %vm968, %v4270
          %4287 = vst.msk [vmem:[%s4017 + $0x60] sm:$0xff] %vm968, %v4271
          %4288 = vst.msk [vmem:[%s4017 + $0x68] sm:$0xff] %vm968, %v4272
          %4289 = vst.msk [vmem:[%s4017 + $0x70] sm:$0xff] %vm968, %v4273
          %4290 = vst.msk [vmem:[%s4017 + $0x78] sm:$0xff] %vm968, %v4274
          %4291 = vst.msk [vmem:[%s3679] sm:$0xff] %vm1466, %v3728
          %4292 = vst.msk [vmem:[%s3679 + $0x8] sm:$0xff] %vm1466, %v3729
          %4293 = vst.msk [vmem:[%s3679 + $0x10] sm:$0xff] %vm1466, %v3730
          %4294 = vst.msk [vmem:[%s3679 + $0x18] sm:$0xff] %vm1466, %v3731
          %4295 = vst.msk [vmem:[%s3679 + $0x20] sm:$0xff] %vm1466, %v3732
          %4296 = vst.msk [vmem:[%s3679 + $0x28] sm:$0xff] %vm1466, %v3733
          %4297 = vst.msk [vmem:[%s3679 + $0x30] sm:$0xff] %vm1466, %v3734
          %4298 = vst.msk [vmem:[%s3679 + $0x38] sm:$0xff] %vm1466, %v3735
          %4299 = vst.msk [vmem:[%s3679 + $0x40] sm:$0xff] %vm1466, %v3736
          %4300 = vst.msk [vmem:[%s3679 + $0x48] sm:$0xff] %vm1466, %v3737
          %4301 = vst.msk [vmem:[%s3679 + $0x50] sm:$0xff] %vm1466, %v3738
          %4302 = vst.msk [vmem:[%s3679 + $0x58] sm:$0xff] %vm1466, %v3739
          %4303 = vst.msk [vmem:[%s3679 + $0x60] sm:$0xff] %vm1466, %v3740
          %4304 = vst.msk [vmem:[%s3679 + $0x68] sm:$0xff] %vm1466, %v3741
          %4305 = vst.msk [vmem:[%s3679 + $0x70] sm:$0xff] %vm1466, %v3742
          %4306 = vst.msk [vmem:[%s3679 + $0x78] sm:$0xff] %vm1466, %v3743
        $region163: #{self_attention_forward.4} parent=142 // pred_fallthru
          _
        %p4307 = scmp.eq.s32.totalorder %s21, %s20
        // Predicated region
        $region164: #{self_attention_forward.4} parent=142 // pred_check
          %p4308 = pneg %p4307
        $region165: #{self_attention_forward.4} parent=142 // pred_check_branch
          %4310 = sbr.rel (%p4308) target = $region167
        $region166: #{self_attention_forward.4} parent=142 // pred_region
          %v4311 = vld [vmem:[#allocation3] sm:$0xff]
          %v4312 = vld [vmem:[#allocation3 + $0x8] sm:$0xff]
          %v4313 = vld [vmem:[#allocation3 + $0x10] sm:$0xff]
          %v4314 = vld [vmem:[#allocation3 + $0x18] sm:$0xff]
          %v4315 = vld [vmem:[#allocation3 + $0x20] sm:$0xff]
          %v4316 = vld [vmem:[#allocation3 + $0x28] sm:$0xff]
          %v4317 = vld [vmem:[#allocation3 + $0x30] sm:$0xff]
          %v4318 = vld [vmem:[#allocation3 + $0x38] sm:$0xff]
          %v4319 = vld [vmem:[#allocation3 + $0x40] sm:$0xff]
          %v4320 = vld [vmem:[#allocation3 + $0x48] sm:$0xff]
          %v4321 = vld [vmem:[#allocation3 + $0x50] sm:$0xff]
          %v4322 = vld [vmem:[#allocation3 + $0x58] sm:$0xff]
          %v4323 = vld [vmem:[#allocation3 + $0x60] sm:$0xff]
          %v4324 = vld [vmem:[#allocation3 + $0x68] sm:$0xff]
          %v4325 = vld [vmem:[#allocation3 + $0x70] sm:$0xff]
          %v4326 = vld [vmem:[#allocation3 + $0x78] sm:$0xff]
          %v4327 = vrcp.pop %v4311
          %v4328 = vrcp.pop %v4312
          %v4329 = vrcp.pop %v4313
          %v4330 = vrcp.pop %v4314
          %v4331 = vrcp.pop %v4315
          %v4332 = vrcp.pop %v4316
          %v4333 = vrcp.pop %v4317
          %v4334 = vrcp.pop %v4318
          %v4335 = vrcp.pop %v4319
          %v4336 = vrcp.pop %v4320
          %v4337 = vrcp.pop %v4321
          %v4338 = vrcp.pop %v4322
          %v4339 = vrcp.pop %v4323
          %v4340 = vrcp.pop %v4324
          %v4341 = vrcp.pop %v4325
          %v4342 = vrcp.pop %v4326
          %v4343 = vld [vmem:[#allocation4] sm:$0xff]
          %v4344 = vld [vmem:[#allocation4 + $0x8] sm:$0xff]
          %v4345 = vld [vmem:[#allocation4 + $0x10] sm:$0xff]
          %v4346 = vld [vmem:[#allocation4 + $0x18] sm:$0xff]
          %v4347 = vld [vmem:[#allocation4 + $0x20] sm:$0xff]
          %v4348 = vld [vmem:[#allocation4 + $0x28] sm:$0xff]
          %v4349 = vld [vmem:[#allocation4 + $0x30] sm:$0xff]
          %v4350 = vld [vmem:[#allocation4 + $0x38] sm:$0xff]
          %v4351 = vld [vmem:[#allocation4 + $0x40] sm:$0xff]
          %v4352 = vld [vmem:[#allocation4 + $0x48] sm:$0xff]
          %v4353 = vld [vmem:[#allocation4 + $0x50] sm:$0xff]
          %v4354 = vld [vmem:[#allocation4 + $0x58] sm:$0xff]
          %v4355 = vld [vmem:[#allocation4 + $0x60] sm:$0xff]
          %v4356 = vld [vmem:[#allocation4 + $0x68] sm:$0xff]
          %v4357 = vld [vmem:[#allocation4 + $0x70] sm:$0xff]
          %v4358 = vld [vmem:[#allocation4 + $0x78] sm:$0xff]
          %4360 = vset.pattern.permute.xlu0 0
          %4361 = vperm.xlu0 %4360, %v4327
          %v4362 = vpop.permute.xlu0 %4361
          %4365 = vset.pattern.permute.xlu0 0
          %4366 = vperm.xlu0 %4365, %v4328
          %v4367 = vpop.permute.xlu0 %4366
          %4370 = vset.pattern.permute.xlu0 0
          %4371 = vperm.xlu0 %4370, %v4329
          %v4372 = vpop.permute.xlu0 %4371
          %4375 = vset.pattern.permute.xlu0 0
          %4376 = vperm.xlu0 %4375, %v4330
          %v4377 = vpop.permute.xlu0 %4376
          %4380 = vset.pattern.permute.xlu0 0
          %4381 = vperm.xlu0 %4380, %v4331
          %v4382 = vpop.permute.xlu0 %4381
          %4385 = vset.pattern.permute.xlu0 0
          %4386 = vperm.xlu0 %4385, %v4332
          %v4387 = vpop.permute.xlu0 %4386
          %4390 = vset.pattern.permute.xlu0 0
          %4391 = vperm.xlu0 %4390, %v4333
          %v4392 = vpop.permute.xlu0 %4391
          %4395 = vset.pattern.permute.xlu0 0
          %4396 = vperm.xlu0 %4395, %v4334
          %v4397 = vpop.permute.xlu0 %4396
          %4400 = vset.pattern.permute.xlu0 0
          %4401 = vperm.xlu0 %4400, %v4335
          %v4402 = vpop.permute.xlu0 %4401
          %4405 = vset.pattern.permute.xlu0 0
          %4406 = vperm.xlu0 %4405, %v4336
          %v4407 = vpop.permute.xlu0 %4406
          %4410 = vset.pattern.permute.xlu0 0
          %4411 = vperm.xlu0 %4410, %v4337
          %v4412 = vpop.permute.xlu0 %4411
          %4415 = vset.pattern.permute.xlu0 0
          %4416 = vperm.xlu0 %4415, %v4338
          %v4417 = vpop.permute.xlu0 %4416
          %4420 = vset.pattern.permute.xlu0 0
          %4421 = vperm.xlu0 %4420, %v4339
          %v4422 = vpop.permute.xlu0 %4421
          %4425 = vset.pattern.permute.xlu0 0
          %4426 = vperm.xlu0 %4425, %v4340
          %v4427 = vpop.permute.xlu0 %4426
          %4430 = vset.pattern.permute.xlu0 0
          %4431 = vperm.xlu0 %4430, %v4341
          %v4432 = vpop.permute.xlu0 %4431
          %4435 = vset.pattern.permute.xlu0 0
          %4436 = vperm.xlu0 %4435, %v4342
          %v4437 = vpop.permute.xlu0 %4436
          %v4439 = vmul.f32 %v4343, %v4362
          %v4440 = vmul.f32 %v4344, %v4367
          %v4441 = vmul.f32 %v4345, %v4372
          %v4442 = vmul.f32 %v4346, %v4377
          %v4443 = vmul.f32 %v4347, %v4382
          %v4444 = vmul.f32 %v4348, %v4387
          %v4445 = vmul.f32 %v4349, %v4392
          %v4446 = vmul.f32 %v4350, %v4397
          %v4447 = vmul.f32 %v4351, %v4402
          %v4448 = vmul.f32 %v4352, %v4407
          %v4449 = vmul.f32 %v4353, %v4412
          %v4450 = vmul.f32 %v4354, %v4417
          %v4451 = vmul.f32 %v4355, %v4422
          %v4452 = vmul.f32 %v4356, %v4427
          %v4453 = vmul.f32 %v4357, %v4432
          %v4454 = vmul.f32 %v4358, %v4437
          %v4455 = vpack.c.bf16 %v4440, %v4439
          %v4456 = vpack.c.bf16 %v4442, %v4441
          %v4457 = vpack.c.bf16 %v4444, %v4443
          %v4458 = vpack.c.bf16 %v4446, %v4445
          %v4459 = vpack.c.bf16 %v4448, %v4447
          %v4460 = vpack.c.bf16 %v4450, %v4449
          %v4461 = vpack.c.bf16 %v4452, %v4451
          %v4462 = vpack.c.bf16 %v4454, %v4453
          %v4471 = vunpack.c.l.b16 %v4455
          %v4472 = vunpack.c.h.b16 %v4455
          %v4473 = vunpack.c.l.b16 %v4456
          %v4474 = vunpack.c.h.b16 %v4456
          %v4475 = vunpack.c.l.b16 %v4457
          %v4476 = vunpack.c.h.b16 %v4457
          %v4477 = vunpack.c.l.b16 %v4458
          %v4478 = vunpack.c.h.b16 %v4458
          %v4479 = vunpack.c.l.b16 %v4459
          %v4480 = vunpack.c.h.b16 %v4459
          %v4481 = vunpack.c.l.b16 %v4460
          %v4482 = vunpack.c.h.b16 %v4460
          %v4483 = vunpack.c.l.b16 %v4461
          %v4484 = vunpack.c.h.b16 %v4461
          %v4485 = vunpack.c.l.b16 %v4462
          %v4486 = vunpack.c.h.b16 %v4462
          %v4487 = vpack.c.b16 %v4471, %v4471
          %v4488 = vpack.c.b16 %v4472, %v4472
          %v4489 = vpack.c.b16 %v4473, %v4473
          %v4490 = vpack.c.b16 %v4474, %v4474
          %v4491 = vpack.c.b16 %v4475, %v4475
          %v4492 = vpack.c.b16 %v4476, %v4476
          %v4493 = vpack.c.b16 %v4477, %v4477
          %v4494 = vpack.c.b16 %v4478, %v4478
          %v4495 = vpack.c.b16 %v4479, %v4479
          %v4496 = vpack.c.b16 %v4480, %v4480
          %v4497 = vpack.c.b16 %v4481, %v4481
          %v4498 = vpack.c.b16 %v4482, %v4482
          %v4499 = vpack.c.b16 %v4483, %v4483
          %v4500 = vpack.c.b16 %v4484, %v4484
          %v4501 = vpack.c.b16 %v4485, %v4485
          %v4502 = vpack.c.b16 %v4486, %v4486
          %vm4519 = vcmask 257024
          %4520 = vst.msk [vmem:[%s581] sm:$0xf] %vm4519, %v4487
          %4521 = vst.msk [vmem:[%s581 + $0x4] sm:$0xf] %vm4519, %v4488
          %4522 = vst.msk [vmem:[%s581 + $0x8] sm:$0xf] %vm4519, %v4489
          %4523 = vst.msk [vmem:[%s581 + $0xc] sm:$0xf] %vm4519, %v4490
          %4524 = vst.msk [vmem:[%s581 + $0x10] sm:$0xf] %vm4519, %v4491
          %4525 = vst.msk [vmem:[%s581 + $0x14] sm:$0xf] %vm4519, %v4492
          %4526 = vst.msk [vmem:[%s581 + $0x18] sm:$0xf] %vm4519, %v4493
          %4527 = vst.msk [vmem:[%s581 + $0x1c] sm:$0xf] %vm4519, %v4494
          %4528 = vst.msk [vmem:[%s581 + $0x20] sm:$0xf] %vm4519, %v4495
          %4529 = vst.msk [vmem:[%s581 + $0x24] sm:$0xf] %vm4519, %v4496
          %4530 = vst.msk [vmem:[%s581 + $0x28] sm:$0xf] %vm4519, %v4497
          %4531 = vst.msk [vmem:[%s581 + $0x2c] sm:$0xf] %vm4519, %v4498
          %4532 = vst.msk [vmem:[%s581 + $0x30] sm:$0xf] %vm4519, %v4499
          %4533 = vst.msk [vmem:[%s581 + $0x34] sm:$0xf] %vm4519, %v4500
          %4534 = vst.msk [vmem:[%s581 + $0x38] sm:$0xf] %vm4519, %v4501
          %4535 = vst.msk [vmem:[%s581 + $0x3c] sm:$0xf] %vm4519, %v4502
          %s4536 = scalar_lea.vmem [#allocation3], 128
          %v4537 = vld [vmem:[%s4536] sm:$0xff]
          %v4538 = vld [vmem:[%s4536 + $0x8] sm:$0xff]
          %v4539 = vld [vmem:[%s4536 + $0x10] sm:$0xff]
          %v4540 = vld [vmem:[%s4536 + $0x18] sm:$0xff]
          %v4541 = vld [vmem:[%s4536 + $0x20] sm:$0xff]
          %v4542 = vld [vmem:[%s4536 + $0x28] sm:$0xff]
          %v4543 = vld [vmem:[%s4536 + $0x30] sm:$0xff]
          %v4544 = vld [vmem:[%s4536 + $0x38] sm:$0xff]
          %v4545 = vld [vmem:[%s4536 + $0x40] sm:$0xff]
          %v4546 = vld [vmem:[%s4536 + $0x48] sm:$0xff]
          %v4547 = vld [vmem:[%s4536 + $0x50] sm:$0xff]
          %v4548 = vld [vmem:[%s4536 + $0x58] sm:$0xff]
          %v4549 = vld [vmem:[%s4536 + $0x60] sm:$0xff]
          %v4550 = vld [vmem:[%s4536 + $0x68] sm:$0xff]
          %v4551 = vld [vmem:[%s4536 + $0x70] sm:$0xff]
          %v4552 = vld [vmem:[%s4536 + $0x78] sm:$0xff]
          %v4553 = vrcp.pop %v4537
          %v4554 = vrcp.pop %v4538
          %v4555 = vrcp.pop %v4539
          %v4556 = vrcp.pop %v4540
          %v4557 = vrcp.pop %v4541
          %v4558 = vrcp.pop %v4542
          %v4559 = vrcp.pop %v4543
          %v4560 = vrcp.pop %v4544
          %v4561 = vrcp.pop %v4545
          %v4562 = vrcp.pop %v4546
          %v4563 = vrcp.pop %v4547
          %v4564 = vrcp.pop %v4548
          %v4565 = vrcp.pop %v4549
          %v4566 = vrcp.pop %v4550
          %v4567 = vrcp.pop %v4551
          %v4568 = vrcp.pop %v4552
          %s4569 = scalar_lea.vmem [#allocation4], 128
          %v4570 = vld [vmem:[%s4569] sm:$0xff]
          %v4571 = vld [vmem:[%s4569 + $0x8] sm:$0xff]
          %v4572 = vld [vmem:[%s4569 + $0x10] sm:$0xff]
          %v4573 = vld [vmem:[%s4569 + $0x18] sm:$0xff]
          %v4574 = vld [vmem:[%s4569 + $0x20] sm:$0xff]
          %v4575 = vld [vmem:[%s4569 + $0x28] sm:$0xff]
          %v4576 = vld [vmem:[%s4569 + $0x30] sm:$0xff]
          %v4577 = vld [vmem:[%s4569 + $0x38] sm:$0xff]
          %v4578 = vld [vmem:[%s4569 + $0x40] sm:$0xff]
          %v4579 = vld [vmem:[%s4569 + $0x48] sm:$0xff]
          %v4580 = vld [vmem:[%s4569 + $0x50] sm:$0xff]
          %v4581 = vld [vmem:[%s4569 + $0x58] sm:$0xff]
          %v4582 = vld [vmem:[%s4569 + $0x60] sm:$0xff]
          %v4583 = vld [vmem:[%s4569 + $0x68] sm:$0xff]
          %v4584 = vld [vmem:[%s4569 + $0x70] sm:$0xff]
          %v4585 = vld [vmem:[%s4569 + $0x78] sm:$0xff]
          %4587 = vset.pattern.permute.xlu0 0
          %4588 = vperm.xlu0 %4587, %v4553
          %v4589 = vpop.permute.xlu0 %4588
          %4592 = vset.pattern.permute.xlu0 0
          %4593 = vperm.xlu0 %4592, %v4554
          %v4594 = vpop.permute.xlu0 %4593
          %4597 = vset.pattern.permute.xlu0 0
          %4598 = vperm.xlu0 %4597, %v4555
          %v4599 = vpop.permute.xlu0 %4598
          %4602 = vset.pattern.permute.xlu0 0
          %4603 = vperm.xlu0 %4602, %v4556
          %v4604 = vpop.permute.xlu0 %4603
          %4607 = vset.pattern.permute.xlu0 0
          %4608 = vperm.xlu0 %4607, %v4557
          %v4609 = vpop.permute.xlu0 %4608
          %4612 = vset.pattern.permute.xlu0 0
          %4613 = vperm.xlu0 %4612, %v4558
          %v4614 = vpop.permute.xlu0 %4613
          %4617 = vset.pattern.permute.xlu0 0
          %4618 = vperm.xlu0 %4617, %v4559
          %v4619 = vpop.permute.xlu0 %4618
          %4622 = vset.pattern.permute.xlu0 0
          %4623 = vperm.xlu0 %4622, %v4560
          %v4624 = vpop.permute.xlu0 %4623
          %4627 = vset.pattern.permute.xlu0 0
          %4628 = vperm.xlu0 %4627, %v4561
          %v4629 = vpop.permute.xlu0 %4628
          %4632 = vset.pattern.permute.xlu0 0
          %4633 = vperm.xlu0 %4632, %v4562
          %v4634 = vpop.permute.xlu0 %4633
          %4637 = vset.pattern.permute.xlu0 0
          %4638 = vperm.xlu0 %4637, %v4563
          %v4639 = vpop.permute.xlu0 %4638
          %4642 = vset.pattern.permute.xlu0 0
          %4643 = vperm.xlu0 %4642, %v4564
          %v4644 = vpop.permute.xlu0 %4643
          %4647 = vset.pattern.permute.xlu0 0
          %4648 = vperm.xlu0 %4647, %v4565
          %v4649 = vpop.permute.xlu0 %4648
          %4652 = vset.pattern.permute.xlu0 0
          %4653 = vperm.xlu0 %4652, %v4566
          %v4654 = vpop.permute.xlu0 %4653
          %4657 = vset.pattern.permute.xlu0 0
          %4658 = vperm.xlu0 %4657, %v4567
          %v4659 = vpop.permute.xlu0 %4658
          %4662 = vset.pattern.permute.xlu0 0
          %4663 = vperm.xlu0 %4662, %v4568
          %v4664 = vpop.permute.xlu0 %4663
          %v4666 = vmul.f32 %v4570, %v4589
          %v4667 = vmul.f32 %v4571, %v4594
          %v4668 = vmul.f32 %v4572, %v4599
          %v4669 = vmul.f32 %v4573, %v4604
          %v4670 = vmul.f32 %v4574, %v4609
          %v4671 = vmul.f32 %v4575, %v4614
          %v4672 = vmul.f32 %v4576, %v4619
          %v4673 = vmul.f32 %v4577, %v4624
          %v4674 = vmul.f32 %v4578, %v4629
          %v4675 = vmul.f32 %v4579, %v4634
          %v4676 = vmul.f32 %v4580, %v4639
          %v4677 = vmul.f32 %v4581, %v4644
          %v4678 = vmul.f32 %v4582, %v4649
          %v4679 = vmul.f32 %v4583, %v4654
          %v4680 = vmul.f32 %v4584, %v4659
          %v4681 = vmul.f32 %v4585, %v4664
          %v4682 = vpack.c.bf16 %v4667, %v4666
          %v4683 = vpack.c.bf16 %v4669, %v4668
          %v4684 = vpack.c.bf16 %v4671, %v4670
          %v4685 = vpack.c.bf16 %v4673, %v4672
          %v4686 = vpack.c.bf16 %v4675, %v4674
          %v4687 = vpack.c.bf16 %v4677, %v4676
          %v4688 = vpack.c.bf16 %v4679, %v4678
          %v4689 = vpack.c.bf16 %v4681, %v4680
          %v4698 = vunpack.c.l.b16 %v4682
          %v4699 = vunpack.c.h.b16 %v4682
          %v4700 = vunpack.c.l.b16 %v4683
          %v4701 = vunpack.c.h.b16 %v4683
          %v4702 = vunpack.c.l.b16 %v4684
          %v4703 = vunpack.c.h.b16 %v4684
          %v4704 = vunpack.c.l.b16 %v4685
          %v4705 = vunpack.c.h.b16 %v4685
          %v4706 = vunpack.c.l.b16 %v4686
          %v4707 = vunpack.c.h.b16 %v4686
          %v4708 = vunpack.c.l.b16 %v4687
          %v4709 = vunpack.c.h.b16 %v4687
          %v4710 = vunpack.c.l.b16 %v4688
          %v4711 = vunpack.c.h.b16 %v4688
          %v4712 = vunpack.c.l.b16 %v4689
          %v4713 = vunpack.c.h.b16 %v4689
          %v4714 = vpack.c.b16 %v4698, %v4698
          %v4715 = vpack.c.b16 %v4699, %v4699
          %v4716 = vpack.c.b16 %v4700, %v4700
          %v4717 = vpack.c.b16 %v4701, %v4701
          %v4718 = vpack.c.b16 %v4702, %v4702
          %v4719 = vpack.c.b16 %v4703, %v4703
          %v4720 = vpack.c.b16 %v4704, %v4704
          %v4721 = vpack.c.b16 %v4705, %v4705
          %v4722 = vpack.c.b16 %v4706, %v4706
          %v4723 = vpack.c.b16 %v4707, %v4707
          %v4724 = vpack.c.b16 %v4708, %v4708
          %v4725 = vpack.c.b16 %v4709, %v4709
          %v4726 = vpack.c.b16 %v4710, %v4710
          %v4727 = vpack.c.b16 %v4711, %v4711
          %v4728 = vpack.c.b16 %v4712, %v4712
          %v4729 = vpack.c.b16 %v4713, %v4713
          %4730 = vrot.lane.b32.xlu0 %v4714, 32
          %v4731 = vpop.permute.xlu0 %4730
          %4732 = vrot.lane.b32.xlu0 %v4715, 32
          %v4733 = vpop.permute.xlu0 %4732
          %4734 = vrot.lane.b32.xlu0 %v4716, 32
          %v4735 = vpop.permute.xlu0 %4734
          %4736 = vrot.lane.b32.xlu0 %v4717, 32
          %v4737 = vpop.permute.xlu0 %4736
          %4738 = vrot.lane.b32.xlu0 %v4718, 32
          %v4739 = vpop.permute.xlu0 %4738
          %4740 = vrot.lane.b32.xlu0 %v4719, 32
          %v4741 = vpop.permute.xlu0 %4740
          %4742 = vrot.lane.b32.xlu0 %v4720, 32
          %v4743 = vpop.permute.xlu0 %4742
          %4744 = vrot.lane.b32.xlu0 %v4721, 32
          %v4745 = vpop.permute.xlu0 %4744
          %4746 = vrot.lane.b32.xlu0 %v4722, 32
          %v4747 = vpop.permute.xlu0 %4746
          %4748 = vrot.lane.b32.xlu0 %v4723, 32
          %v4749 = vpop.permute.xlu0 %4748
          %4750 = vrot.lane.b32.xlu0 %v4724, 32
          %v4751 = vpop.permute.xlu0 %4750
          %4752 = vrot.lane.b32.xlu0 %v4725, 32
          %v4753 = vpop.permute.xlu0 %4752
          %4754 = vrot.lane.b32.xlu0 %v4726, 32
          %v4755 = vpop.permute.xlu0 %4754
          %4756 = vrot.lane.b32.xlu0 %v4727, 32
          %v4757 = vpop.permute.xlu0 %4756
          %4758 = vrot.lane.b32.xlu0 %v4728, 32
          %v4759 = vpop.permute.xlu0 %4758
          %4760 = vrot.lane.b32.xlu0 %v4729, 32
          %v4761 = vpop.permute.xlu0 %4760
          %vm4778 = vcmask 519424
          %4779 = vst.msk [vmem:[%s581] sm:$0xf] %vm4778, %v4731
          %4780 = vst.msk [vmem:[%s581 + $0x4] sm:$0xf] %vm4778, %v4733
          %4781 = vst.msk [vmem:[%s581 + $0x8] sm:$0xf] %vm4778, %v4735
          %4782 = vst.msk [vmem:[%s581 + $0xc] sm:$0xf] %vm4778, %v4737
          %4783 = vst.msk [vmem:[%s581 + $0x10] sm:$0xf] %vm4778, %v4739
          %4784 = vst.msk [vmem:[%s581 + $0x14] sm:$0xf] %vm4778, %v4741
          %4785 = vst.msk [vmem:[%s581 + $0x18] sm:$0xf] %vm4778, %v4743
          %4786 = vst.msk [vmem:[%s581 + $0x1c] sm:$0xf] %vm4778, %v4745
          %4787 = vst.msk [vmem:[%s581 + $0x20] sm:$0xf] %vm4778, %v4747
          %4788 = vst.msk [vmem:[%s581 + $0x24] sm:$0xf] %vm4778, %v4749
          %4789 = vst.msk [vmem:[%s581 + $0x28] sm:$0xf] %vm4778, %v4751
          %4790 = vst.msk [vmem:[%s581 + $0x2c] sm:$0xf] %vm4778, %v4753
          %4791 = vst.msk [vmem:[%s581 + $0x30] sm:$0xf] %vm4778, %v4755
          %4792 = vst.msk [vmem:[%s581 + $0x34] sm:$0xf] %vm4778, %v4757
          %4793 = vst.msk [vmem:[%s581 + $0x38] sm:$0xf] %vm4778, %v4759
          %4794 = vst.msk [vmem:[%s581 + $0x3c] sm:$0xf] %vm4778, %v4761
          %s4795 = scalar_lea.vmem [#allocation3], 256
          %v4796 = vld [vmem:[%s4795] sm:$0xff]
          %v4797 = vld [vmem:[%s4795 + $0x8] sm:$0xff]
          %v4798 = vld [vmem:[%s4795 + $0x10] sm:$0xff]
          %v4799 = vld [vmem:[%s4795 + $0x18] sm:$0xff]
          %v4800 = vld [vmem:[%s4795 + $0x20] sm:$0xff]
          %v4801 = vld [vmem:[%s4795 + $0x28] sm:$0xff]
          %v4802 = vld [vmem:[%s4795 + $0x30] sm:$0xff]
          %v4803 = vld [vmem:[%s4795 + $0x38] sm:$0xff]
          %v4804 = vld [vmem:[%s4795 + $0x40] sm:$0xff]
          %v4805 = vld [vmem:[%s4795 + $0x48] sm:$0xff]
          %v4806 = vld [vmem:[%s4795 + $0x50] sm:$0xff]
          %v4807 = vld [vmem:[%s4795 + $0x58] sm:$0xff]
          %v4808 = vld [vmem:[%s4795 + $0x60] sm:$0xff]
          %v4809 = vld [vmem:[%s4795 + $0x68] sm:$0xff]
          %v4810 = vld [vmem:[%s4795 + $0x70] sm:$0xff]
          %v4811 = vld [vmem:[%s4795 + $0x78] sm:$0xff]
          %v4812 = vrcp.pop %v4796
          %v4813 = vrcp.pop %v4797
          %v4814 = vrcp.pop %v4798
          %v4815 = vrcp.pop %v4799
          %v4816 = vrcp.pop %v4800
          %v4817 = vrcp.pop %v4801
          %v4818 = vrcp.pop %v4802
          %v4819 = vrcp.pop %v4803
          %v4820 = vrcp.pop %v4804
          %v4821 = vrcp.pop %v4805
          %v4822 = vrcp.pop %v4806
          %v4823 = vrcp.pop %v4807
          %v4824 = vrcp.pop %v4808
          %v4825 = vrcp.pop %v4809
          %v4826 = vrcp.pop %v4810
          %v4827 = vrcp.pop %v4811
          %s4828 = scalar_lea.vmem [#allocation4], 256
          %v4829 = vld [vmem:[%s4828] sm:$0xff]
          %v4830 = vld [vmem:[%s4828 + $0x8] sm:$0xff]
          %v4831 = vld [vmem:[%s4828 + $0x10] sm:$0xff]
          %v4832 = vld [vmem:[%s4828 + $0x18] sm:$0xff]
          %v4833 = vld [vmem:[%s4828 + $0x20] sm:$0xff]
          %v4834 = vld [vmem:[%s4828 + $0x28] sm:$0xff]
          %v4835 = vld [vmem:[%s4828 + $0x30] sm:$0xff]
          %v4836 = vld [vmem:[%s4828 + $0x38] sm:$0xff]
          %v4837 = vld [vmem:[%s4828 + $0x40] sm:$0xff]
          %v4838 = vld [vmem:[%s4828 + $0x48] sm:$0xff]
          %v4839 = vld [vmem:[%s4828 + $0x50] sm:$0xff]
          %v4840 = vld [vmem:[%s4828 + $0x58] sm:$0xff]
          %v4841 = vld [vmem:[%s4828 + $0x60] sm:$0xff]
          %v4842 = vld [vmem:[%s4828 + $0x68] sm:$0xff]
          %v4843 = vld [vmem:[%s4828 + $0x70] sm:$0xff]
          %v4844 = vld [vmem:[%s4828 + $0x78] sm:$0xff]
          %4846 = vset.pattern.permute.xlu0 0
          %4847 = vperm.xlu0 %4846, %v4812
          %v4848 = vpop.permute.xlu0 %4847
          %4851 = vset.pattern.permute.xlu0 0
          %4852 = vperm.xlu0 %4851, %v4813
          %v4853 = vpop.permute.xlu0 %4852
          %4856 = vset.pattern.permute.xlu0 0
          %4857 = vperm.xlu0 %4856, %v4814
          %v4858 = vpop.permute.xlu0 %4857
          %4861 = vset.pattern.permute.xlu0 0
          %4862 = vperm.xlu0 %4861, %v4815
          %v4863 = vpop.permute.xlu0 %4862
          %4866 = vset.pattern.permute.xlu0 0
          %4867 = vperm.xlu0 %4866, %v4816
          %v4868 = vpop.permute.xlu0 %4867
          %4871 = vset.pattern.permute.xlu0 0
          %4872 = vperm.xlu0 %4871, %v4817
          %v4873 = vpop.permute.xlu0 %4872
          %4876 = vset.pattern.permute.xlu0 0
          %4877 = vperm.xlu0 %4876, %v4818
          %v4878 = vpop.permute.xlu0 %4877
          %4881 = vset.pattern.permute.xlu0 0
          %4882 = vperm.xlu0 %4881, %v4819
          %v4883 = vpop.permute.xlu0 %4882
          %4886 = vset.pattern.permute.xlu0 0
          %4887 = vperm.xlu0 %4886, %v4820
          %v4888 = vpop.permute.xlu0 %4887
          %4891 = vset.pattern.permute.xlu0 0
          %4892 = vperm.xlu0 %4891, %v4821
          %v4893 = vpop.permute.xlu0 %4892
          %4896 = vset.pattern.permute.xlu0 0
          %4897 = vperm.xlu0 %4896, %v4822
          %v4898 = vpop.permute.xlu0 %4897
          %4901 = vset.pattern.permute.xlu0 0
          %4902 = vperm.xlu0 %4901, %v4823
          %v4903 = vpop.permute.xlu0 %4902
          %4906 = vset.pattern.permute.xlu0 0
          %4907 = vperm.xlu0 %4906, %v4824
          %v4908 = vpop.permute.xlu0 %4907
          %4911 = vset.pattern.permute.xlu0 0
          %4912 = vperm.xlu0 %4911, %v4825
          %v4913 = vpop.permute.xlu0 %4912
          %4916 = vset.pattern.permute.xlu0 0
          %4917 = vperm.xlu0 %4916, %v4826
          %v4918 = vpop.permute.xlu0 %4917
          %4921 = vset.pattern.permute.xlu0 0
          %4922 = vperm.xlu0 %4921, %v4827
          %v4923 = vpop.permute.xlu0 %4922
          %v4925 = vmul.f32 %v4829, %v4848
          %v4926 = vmul.f32 %v4830, %v4853
          %v4927 = vmul.f32 %v4831, %v4858
          %v4928 = vmul.f32 %v4832, %v4863
          %v4929 = vmul.f32 %v4833, %v4868
          %v4930 = vmul.f32 %v4834, %v4873
          %v4931 = vmul.f32 %v4835, %v4878
          %v4932 = vmul.f32 %v4836, %v4883
          %v4933 = vmul.f32 %v4837, %v4888
          %v4934 = vmul.f32 %v4838, %v4893
          %v4935 = vmul.f32 %v4839, %v4898
          %v4936 = vmul.f32 %v4840, %v4903
          %v4937 = vmul.f32 %v4841, %v4908
          %v4938 = vmul.f32 %v4842, %v4913
          %v4939 = vmul.f32 %v4843, %v4918
          %v4940 = vmul.f32 %v4844, %v4923
          %v4941 = vpack.c.bf16 %v4926, %v4925
          %v4942 = vpack.c.bf16 %v4928, %v4927
          %v4943 = vpack.c.bf16 %v4930, %v4929
          %v4944 = vpack.c.bf16 %v4932, %v4931
          %v4945 = vpack.c.bf16 %v4934, %v4933
          %v4946 = vpack.c.bf16 %v4936, %v4935
          %v4947 = vpack.c.bf16 %v4938, %v4937
          %v4948 = vpack.c.bf16 %v4940, %v4939
          %v4957 = vunpack.c.l.b16 %v4941
          %v4958 = vunpack.c.h.b16 %v4941
          %v4959 = vunpack.c.l.b16 %v4942
          %v4960 = vunpack.c.h.b16 %v4942
          %v4961 = vunpack.c.l.b16 %v4943
          %v4962 = vunpack.c.h.b16 %v4943
          %v4963 = vunpack.c.l.b16 %v4944
          %v4964 = vunpack.c.h.b16 %v4944
          %v4965 = vunpack.c.l.b16 %v4945
          %v4966 = vunpack.c.h.b16 %v4945
          %v4967 = vunpack.c.l.b16 %v4946
          %v4968 = vunpack.c.h.b16 %v4946
          %v4969 = vunpack.c.l.b16 %v4947
          %v4970 = vunpack.c.h.b16 %v4947
          %v4971 = vunpack.c.l.b16 %v4948
          %v4972 = vunpack.c.h.b16 %v4948
          %v4973 = vpack.c.b16 %v4957, %v4957
          %v4974 = vpack.c.b16 %v4958, %v4958
          %v4975 = vpack.c.b16 %v4959, %v4959
          %v4976 = vpack.c.b16 %v4960, %v4960
          %v4977 = vpack.c.b16 %v4961, %v4961
          %v4978 = vpack.c.b16 %v4962, %v4962
          %v4979 = vpack.c.b16 %v4963, %v4963
          %v4980 = vpack.c.b16 %v4964, %v4964
          %v4981 = vpack.c.b16 %v4965, %v4965
          %v4982 = vpack.c.b16 %v4966, %v4966
          %v4983 = vpack.c.b16 %v4967, %v4967
          %v4984 = vpack.c.b16 %v4968, %v4968
          %v4985 = vpack.c.b16 %v4969, %v4969
          %v4986 = vpack.c.b16 %v4970, %v4970
          %v4987 = vpack.c.b16 %v4971, %v4971
          %v4988 = vpack.c.b16 %v4972, %v4972
          %4989 = vrot.lane.b32.xlu0 %v4973, 64
          %v4990 = vpop.permute.xlu0 %4989
          %4991 = vrot.lane.b32.xlu0 %v4974, 64
          %v4992 = vpop.permute.xlu0 %4991
          %4993 = vrot.lane.b32.xlu0 %v4975, 64
          %v4994 = vpop.permute.xlu0 %4993
          %4995 = vrot.lane.b32.xlu0 %v4976, 64
          %v4996 = vpop.permute.xlu0 %4995
          %4997 = vrot.lane.b32.xlu0 %v4977, 64
          %v4998 = vpop.permute.xlu0 %4997
          %4999 = vrot.lane.b32.xlu0 %v4978, 64
          %v5000 = vpop.permute.xlu0 %4999
          %5001 = vrot.lane.b32.xlu0 %v4979, 64
          %v5002 = vpop.permute.xlu0 %5001
          %5003 = vrot.lane.b32.xlu0 %v4980, 64
          %v5004 = vpop.permute.xlu0 %5003
          %5005 = vrot.lane.b32.xlu0 %v4981, 64
          %v5006 = vpop.permute.xlu0 %5005
          %5007 = vrot.lane.b32.xlu0 %v4982, 64
          %v5008 = vpop.permute.xlu0 %5007
          %5009 = vrot.lane.b32.xlu0 %v4983, 64
          %v5010 = vpop.permute.xlu0 %5009
          %5011 = vrot.lane.b32.xlu0 %v4984, 64
          %v5012 = vpop.permute.xlu0 %5011
          %5013 = vrot.lane.b32.xlu0 %v4985, 64
          %v5014 = vpop.permute.xlu0 %5013
          %5015 = vrot.lane.b32.xlu0 %v4986, 64
          %v5016 = vpop.permute.xlu0 %5015
          %5017 = vrot.lane.b32.xlu0 %v4987, 64
          %v5018 = vpop.permute.xlu0 %5017
          %5019 = vrot.lane.b32.xlu0 %v4988, 64
          %v5020 = vpop.permute.xlu0 %5019
          %vm5037 = vcmask 781824
          %5038 = vst.msk [vmem:[%s581] sm:$0xf] %vm5037, %v4990
          %5039 = vst.msk [vmem:[%s581 + $0x4] sm:$0xf] %vm5037, %v4992
          %5040 = vst.msk [vmem:[%s581 + $0x8] sm:$0xf] %vm5037, %v4994
          %5041 = vst.msk [vmem:[%s581 + $0xc] sm:$0xf] %vm5037, %v4996
          %5042 = vst.msk [vmem:[%s581 + $0x10] sm:$0xf] %vm5037, %v4998
          %5043 = vst.msk [vmem:[%s581 + $0x14] sm:$0xf] %vm5037, %v5000
          %5044 = vst.msk [vmem:[%s581 + $0x18] sm:$0xf] %vm5037, %v5002
          %5045 = vst.msk [vmem:[%s581 + $0x1c] sm:$0xf] %vm5037, %v5004
          %5046 = vst.msk [vmem:[%s581 + $0x20] sm:$0xf] %vm5037, %v5006
          %5047 = vst.msk [vmem:[%s581 + $0x24] sm:$0xf] %vm5037, %v5008
          %5048 = vst.msk [vmem:[%s581 + $0x28] sm:$0xf] %vm5037, %v5010
          %5049 = vst.msk [vmem:[%s581 + $0x2c] sm:$0xf] %vm5037, %v5012
          %5050 = vst.msk [vmem:[%s581 + $0x30] sm:$0xf] %vm5037, %v5014
          %5051 = vst.msk [vmem:[%s581 + $0x34] sm:$0xf] %vm5037, %v5016
          %5052 = vst.msk [vmem:[%s581 + $0x38] sm:$0xf] %vm5037, %v5018
          %5053 = vst.msk [vmem:[%s581 + $0x3c] sm:$0xf] %vm5037, %v5020
          %s5054 = scalar_lea.vmem [#allocation3], 384
          %v5055 = vld [vmem:[%s5054] sm:$0xff]
          %v5056 = vld [vmem:[%s5054 + $0x8] sm:$0xff]
          %v5057 = vld [vmem:[%s5054 + $0x10] sm:$0xff]
          %v5058 = vld [vmem:[%s5054 + $0x18] sm:$0xff]
          %v5059 = vld [vmem:[%s5054 + $0x20] sm:$0xff]
          %v5060 = vld [vmem:[%s5054 + $0x28] sm:$0xff]
          %v5061 = vld [vmem:[%s5054 + $0x30] sm:$0xff]
          %v5062 = vld [vmem:[%s5054 + $0x38] sm:$0xff]
          %v5063 = vld [vmem:[%s5054 + $0x40] sm:$0xff]
          %v5064 = vld [vmem:[%s5054 + $0x48] sm:$0xff]
          %v5065 = vld [vmem:[%s5054 + $0x50] sm:$0xff]
          %v5066 = vld [vmem:[%s5054 + $0x58] sm:$0xff]
          %v5067 = vld [vmem:[%s5054 + $0x60] sm:$0xff]
          %v5068 = vld [vmem:[%s5054 + $0x68] sm:$0xff]
          %v5069 = vld [vmem:[%s5054 + $0x70] sm:$0xff]
          %v5070 = vld [vmem:[%s5054 + $0x78] sm:$0xff]
          %v5071 = vrcp.pop %v5055
          %v5072 = vrcp.pop %v5056
          %v5073 = vrcp.pop %v5057
          %v5074 = vrcp.pop %v5058
          %v5075 = vrcp.pop %v5059
          %v5076 = vrcp.pop %v5060
          %v5077 = vrcp.pop %v5061
          %v5078 = vrcp.pop %v5062
          %v5079 = vrcp.pop %v5063
          %v5080 = vrcp.pop %v5064
          %v5081 = vrcp.pop %v5065
          %v5082 = vrcp.pop %v5066
          %v5083 = vrcp.pop %v5067
          %v5084 = vrcp.pop %v5068
          %v5085 = vrcp.pop %v5069
          %v5086 = vrcp.pop %v5070
          %s5087 = scalar_lea.vmem [#allocation4], 384
          %v5088 = vld [vmem:[%s5087] sm:$0xff]
          %v5089 = vld [vmem:[%s5087 + $0x8] sm:$0xff]
          %v5090 = vld [vmem:[%s5087 + $0x10] sm:$0xff]
          %v5091 = vld [vmem:[%s5087 + $0x18] sm:$0xff]
          %v5092 = vld [vmem:[%s5087 + $0x20] sm:$0xff]
          %v5093 = vld [vmem:[%s5087 + $0x28] sm:$0xff]
          %v5094 = vld [vmem:[%s5087 + $0x30] sm:$0xff]
          %v5095 = vld [vmem:[%s5087 + $0x38] sm:$0xff]
          %v5096 = vld [vmem:[%s5087 + $0x40] sm:$0xff]
          %v5097 = vld [vmem:[%s5087 + $0x48] sm:$0xff]
          %v5098 = vld [vmem:[%s5087 + $0x50] sm:$0xff]
          %v5099 = vld [vmem:[%s5087 + $0x58] sm:$0xff]
          %v5100 = vld [vmem:[%s5087 + $0x60] sm:$0xff]
          %v5101 = vld [vmem:[%s5087 + $0x68] sm:$0xff]
          %v5102 = vld [vmem:[%s5087 + $0x70] sm:$0xff]
          %v5103 = vld [vmem:[%s5087 + $0x78] sm:$0xff]
          %5105 = vset.pattern.permute.xlu0 0
          %5106 = vperm.xlu0 %5105, %v5071
          %v5107 = vpop.permute.xlu0 %5106
          %5110 = vset.pattern.permute.xlu0 0
          %5111 = vperm.xlu0 %5110, %v5072
          %v5112 = vpop.permute.xlu0 %5111
          %5115 = vset.pattern.permute.xlu0 0
          %5116 = vperm.xlu0 %5115, %v5073
          %v5117 = vpop.permute.xlu0 %5116
          %5120 = vset.pattern.permute.xlu0 0
          %5121 = vperm.xlu0 %5120, %v5074
          %v5122 = vpop.permute.xlu0 %5121
          %5125 = vset.pattern.permute.xlu0 0
          %5126 = vperm.xlu0 %5125, %v5075
          %v5127 = vpop.permute.xlu0 %5126
          %5130 = vset.pattern.permute.xlu0 0
          %5131 = vperm.xlu0 %5130, %v5076
          %v5132 = vpop.permute.xlu0 %5131
          %5135 = vset.pattern.permute.xlu0 0
          %5136 = vperm.xlu0 %5135, %v5077
          %v5137 = vpop.permute.xlu0 %5136
          %5140 = vset.pattern.permute.xlu0 0
          %5141 = vperm.xlu0 %5140, %v5078
          %v5142 = vpop.permute.xlu0 %5141
          %5145 = vset.pattern.permute.xlu0 0
          %5146 = vperm.xlu0 %5145, %v5079
          %v5147 = vpop.permute.xlu0 %5146
          %5150 = vset.pattern.permute.xlu0 0
          %5151 = vperm.xlu0 %5150, %v5080
          %v5152 = vpop.permute.xlu0 %5151
          %5155 = vset.pattern.permute.xlu0 0
          %5156 = vperm.xlu0 %5155, %v5081
          %v5157 = vpop.permute.xlu0 %5156
          %5160 = vset.pattern.permute.xlu0 0
          %5161 = vperm.xlu0 %5160, %v5082
          %v5162 = vpop.permute.xlu0 %5161
          %5165 = vset.pattern.permute.xlu0 0
          %5166 = vperm.xlu0 %5165, %v5083
          %v5167 = vpop.permute.xlu0 %5166
          %5170 = vset.pattern.permute.xlu0 0
          %5171 = vperm.xlu0 %5170, %v5084
          %v5172 = vpop.permute.xlu0 %5171
          %5175 = vset.pattern.permute.xlu0 0
          %5176 = vperm.xlu0 %5175, %v5085
          %v5177 = vpop.permute.xlu0 %5176
          %5180 = vset.pattern.permute.xlu0 0
          %5181 = vperm.xlu0 %5180, %v5086
          %v5182 = vpop.permute.xlu0 %5181
          %v5184 = vmul.f32 %v5088, %v5107
          %v5185 = vmul.f32 %v5089, %v5112
          %v5186 = vmul.f32 %v5090, %v5117
          %v5187 = vmul.f32 %v5091, %v5122
          %v5188 = vmul.f32 %v5092, %v5127
          %v5189 = vmul.f32 %v5093, %v5132
          %v5190 = vmul.f32 %v5094, %v5137
          %v5191 = vmul.f32 %v5095, %v5142
          %v5192 = vmul.f32 %v5096, %v5147
          %v5193 = vmul.f32 %v5097, %v5152
          %v5194 = vmul.f32 %v5098, %v5157
          %v5195 = vmul.f32 %v5099, %v5162
          %v5196 = vmul.f32 %v5100, %v5167
          %v5197 = vmul.f32 %v5101, %v5172
          %v5198 = vmul.f32 %v5102, %v5177
          %v5199 = vmul.f32 %v5103, %v5182
          %v5200 = vpack.c.bf16 %v5185, %v5184
          %v5201 = vpack.c.bf16 %v5187, %v5186
          %v5202 = vpack.c.bf16 %v5189, %v5188
          %v5203 = vpack.c.bf16 %v5191, %v5190
          %v5204 = vpack.c.bf16 %v5193, %v5192
          %v5205 = vpack.c.bf16 %v5195, %v5194
          %v5206 = vpack.c.bf16 %v5197, %v5196
          %v5207 = vpack.c.bf16 %v5199, %v5198
          %v5216 = vunpack.c.l.b16 %v5200
          %v5217 = vunpack.c.h.b16 %v5200
          %v5218 = vunpack.c.l.b16 %v5201
          %v5219 = vunpack.c.h.b16 %v5201
          %v5220 = vunpack.c.l.b16 %v5202
          %v5221 = vunpack.c.h.b16 %v5202
          %v5222 = vunpack.c.l.b16 %v5203
          %v5223 = vunpack.c.h.b16 %v5203
          %v5224 = vunpack.c.l.b16 %v5204
          %v5225 = vunpack.c.h.b16 %v5204
          %v5226 = vunpack.c.l.b16 %v5205
          %v5227 = vunpack.c.h.b16 %v5205
          %v5228 = vunpack.c.l.b16 %v5206
          %v5229 = vunpack.c.h.b16 %v5206
          %v5230 = vunpack.c.l.b16 %v5207
          %v5231 = vunpack.c.h.b16 %v5207
          %v5232 = vpack.c.b16 %v5216, %v5216
          %v5233 = vpack.c.b16 %v5217, %v5217
          %v5234 = vpack.c.b16 %v5218, %v5218
          %v5235 = vpack.c.b16 %v5219, %v5219
          %v5236 = vpack.c.b16 %v5220, %v5220
          %v5237 = vpack.c.b16 %v5221, %v5221
          %v5238 = vpack.c.b16 %v5222, %v5222
          %v5239 = vpack.c.b16 %v5223, %v5223
          %v5240 = vpack.c.b16 %v5224, %v5224
          %v5241 = vpack.c.b16 %v5225, %v5225
          %v5242 = vpack.c.b16 %v5226, %v5226
          %v5243 = vpack.c.b16 %v5227, %v5227
          %v5244 = vpack.c.b16 %v5228, %v5228
          %v5245 = vpack.c.b16 %v5229, %v5229
          %v5246 = vpack.c.b16 %v5230, %v5230
          %v5247 = vpack.c.b16 %v5231, %v5231
          %5248 = vrot.lane.b32.xlu0 %v5232, 96
          %v5249 = vpop.permute.xlu0 %5248
          %5250 = vrot.lane.b32.xlu0 %v5233, 96
          %v5251 = vpop.permute.xlu0 %5250
          %5252 = vrot.lane.b32.xlu0 %v5234, 96
          %v5253 = vpop.permute.xlu0 %5252
          %5254 = vrot.lane.b32.xlu0 %v5235, 96
          %v5255 = vpop.permute.xlu0 %5254
          %5256 = vrot.lane.b32.xlu0 %v5236, 96
          %v5257 = vpop.permute.xlu0 %5256
          %5258 = vrot.lane.b32.xlu0 %v5237, 96
          %v5259 = vpop.permute.xlu0 %5258
          %5260 = vrot.lane.b32.xlu0 %v5238, 96
          %v5261 = vpop.permute.xlu0 %5260
          %5262 = vrot.lane.b32.xlu0 %v5239, 96
          %v5263 = vpop.permute.xlu0 %5262
          %5264 = vrot.lane.b32.xlu0 %v5240, 96
          %v5265 = vpop.permute.xlu0 %5264
          %5266 = vrot.lane.b32.xlu0 %v5241, 96
          %v5267 = vpop.permute.xlu0 %5266
          %5268 = vrot.lane.b32.xlu0 %v5242, 96
          %v5269 = vpop.permute.xlu0 %5268
          %5270 = vrot.lane.b32.xlu0 %v5243, 96
          %v5271 = vpop.permute.xlu0 %5270
          %5272 = vrot.lane.b32.xlu0 %v5244, 96
          %v5273 = vpop.permute.xlu0 %5272
          %5274 = vrot.lane.b32.xlu0 %v5245, 96
          %v5275 = vpop.permute.xlu0 %5274
          %5276 = vrot.lane.b32.xlu0 %v5246, 96
          %v5277 = vpop.permute.xlu0 %5276
          %5278 = vrot.lane.b32.xlu0 %v5247, 96
          %v5279 = vpop.permute.xlu0 %5278
          %vm5296 = vcmask 1044224
          %5297 = vst.msk [vmem:[%s581] sm:$0xf] %vm5296, %v5249
          %5298 = vst.msk [vmem:[%s581 + $0x4] sm:$0xf] %vm5296, %v5251
          %5299 = vst.msk [vmem:[%s581 + $0x8] sm:$0xf] %vm5296, %v5253
          %5300 = vst.msk [vmem:[%s581 + $0xc] sm:$0xf] %vm5296, %v5255
          %5301 = vst.msk [vmem:[%s581 + $0x10] sm:$0xf] %vm5296, %v5257
          %5302 = vst.msk [vmem:[%s581 + $0x14] sm:$0xf] %vm5296, %v5259
          %5303 = vst.msk [vmem:[%s581 + $0x18] sm:$0xf] %vm5296, %v5261
          %5304 = vst.msk [vmem:[%s581 + $0x1c] sm:$0xf] %vm5296, %v5263
          %5305 = vst.msk [vmem:[%s581 + $0x20] sm:$0xf] %vm5296, %v5265
          %5306 = vst.msk [vmem:[%s581 + $0x24] sm:$0xf] %vm5296, %v5267
          %5307 = vst.msk [vmem:[%s581 + $0x28] sm:$0xf] %vm5296, %v5269
          %5308 = vst.msk [vmem:[%s581 + $0x2c] sm:$0xf] %vm5296, %v5271
          %5309 = vst.msk [vmem:[%s581 + $0x30] sm:$0xf] %vm5296, %v5273
          %5310 = vst.msk [vmem:[%s581 + $0x34] sm:$0xf] %vm5296, %v5275
          %5311 = vst.msk [vmem:[%s581 + $0x38] sm:$0xf] %vm5296, %v5277
          %5312 = vst.msk [vmem:[%s581 + $0x3c] sm:$0xf] %vm5296, %v5279
        $region167: #{self_attention_forward.4} parent=142 // pred_fallthru
          _
        %s5313 = smul.u32 16, %s20
        %p5314 = scmp.lt.s32.totalorder %s19, 1
        %s5315 = scalar_select %p5314, %s19, 1
        %p5316 = scmp.lt.s32.totalorder %s5313, 31
        %s5317 = scalar_select %p5316, %s5313, 31
        %s5318 = smul.addr %s5315, 32
        %s5319 = sadd.s32 %s5317, %s5318
        %s5320 = smul.addr %s5319, 4
        %s5321 = scalar_lea.vmem %s3, %s5320
        // Predicated region
        $region168: #{self_attention_forward.4} parent=142 // pred_check
          %p5322 = pneg %p145
        $region169: #{self_attention_forward.4} parent=142 // pred_check_branch
          %5324 = sbr.rel (%p5322) target = $region171
        $region170: #{self_attention_forward.4} parent=142 // pred_region
          %s5325 = smul.u32 16, %s20
        $region171: #{self_attention_forward.4} parent=142 // pred_fallthru
          _
      $region143: #{self_attention_forward.4} parent=5 // pred_fallthru
        _
      %p5326 = scmp.le.s32.totalorder 2, %s9
      // Predicated region
      $region172: #{self_attention_forward.4} parent=5 // pred_check
        %p5327 = pneg %p5326
      $region173: #{self_attention_forward.4} parent=5 // pred_check_branch
        %5329 = sbr.rel (%p5327) target = $region175
      $region174: #{self_attention_forward.4} parent=5 // pred_region
        %s5330 = ssub.s32 %s9, 2
        // Predicated region
        $region176: #{self_attention_forward.4} parent=174 // pred_check
          %p5331 = pneg %p151
        $region177: #{self_attention_forward.4} parent=174 // pred_check_branch
          %5333 = sbr.rel (%p5331) target = $region179
        $region178: #{self_attention_forward.4} parent=174 // pred_region
          %s5334 = smul.u32 16, %s23
          %p5335 = scmp.lt.s32.totalorder %s22, 1
          %s5336 = scalar_select %p5335, %s22, 1
          %p5337 = scmp.lt.s32.totalorder %s5334, 31
          %s5338 = scalar_select %p5337, %s5334, 31
          %s5339 = smul.addr %s5336, 32
          %s5340 = sadd.s32 %s5338, %s5339
          %s5341 = smul.addr %s5340, 4
          %s5342 = scalar_lea.vmem %s3, %s5341
        $region179: #{self_attention_forward.4} parent=174 // pred_fallthru
          _
      $region175: #{self_attention_forward.4} parent=5 // pred_fallthru
        _
    $region6: #{self_attention_forward.4} parent=1 // loop_footer
      %s13 = sadd.s32 1, %s9
    $region7: #{self_attention_forward.4} parent=1 // loop_footer_branch
      %8 = sbr.rel target = $region3
    $region8: #{self_attention_forward.4} parent=1 // loop_exit
      _

</llo_original>
